<compile_context>
chip_gen: v7x
topology: tpu7x:2x2x1
jax: 0.10.0
libtpu: 0.0.40
codegen_flags: <defaults>
</compile_context>

<pallas_src>
import jax
import jax.numpy as jnp
from jax.experimental import pallas as pl
from jax.experimental.pallas import tpu as pltpu


def _round_up_128(x):
    return ((x + 127) // 128) * 128


# ------------------------- fused VGG block kernel (one image) -------------------------
def _vgg_block_kernel(x_ref, w_ref, b_ref, o_ref, xpad_ref, patch_ref):
    # x_ref:     (1, H, W, Cin)        unpadded input image (original channels)
    # w_ref:     (L, 9*Cp, Cp)         per-conv im2col weights, channel-padded
    # b_ref:     (L, 1, Cp)            per-conv bias, channel-padded
    # o_ref:     (1, H//2, W//2, Cp)   pooled output (channel-padded)
    # xpad_ref:  (H+2, W+2, Cp)        VMEM scratch: halo-padded activation
    # patch_ref: (H*W, 9*Cp)           VMEM scratch: im2col patch matrix
    _, H, W, Cin = x_ref.shape
    Cp = xpad_ref.shape[-1]
    L = w_ref.shape[0]
    _, Ho, Wo, _ = o_ref.shape
    HW = H * W

    # In-kernel padding: zero halo border + zero padded channels, copy real input inside.
    xpad_ref[...] = jnp.zeros_like(xpad_ref)
    xpad_ref[1:H + 1, 1:W + 1, :Cin] = x_ref[0]

    act = None
    for l in range(L):                      # static unroll over convs in the block
        # Build the (H*W, 9*Cp) im2col patch once in VMEM (9 contiguous, lane-aligned
        # column slabs; no strided loads).
        for k in range(9):
            dy, dx = k // 3, k % 3
            win = xpad_ref[dy:dy + H, dx:dx + W, :]            # (H, W, Cp)
            patch_ref[:, k * Cp:(k + 1) * Cp] = win.reshape(HW, Cp)

        # Single MXU matmul per conv: (H*W, 9*Cp) @ (9*Cp, Cp).
        acc = jnp.dot(patch_ref[...], w_ref[l],
                      preferred_element_type=jnp.float32)
        acc = jnp.maximum(acc + b_ref[l], 0.0)                 # bias + ReLU in f32

        if l + 1 < L:
            # Keep the intermediate activation VMEM-resident for the next conv.
            xpad_ref[1:H + 1, 1:W + 1, :] = acc.reshape(H, W, Cp).astype(xpad_ref.dtype)
        else:
            act = acc

    # Fused MaxPool2d(2,2) epilogue: reshape-and-reduce (no strided slices).
    pooled = jnp.max(act.reshape(Ho, 2, Wo, 2, Cp), axis=(1, 3))
    o_ref[0] = pooled.astype(o_ref.dtype)


# ------------------------------------ wrapper ------------------------------------------
def convs_forward(img_nchw, params):
    """PyTorch Convs.forward: num_convs x (conv3x3 pad1 + ReLU), then MaxPool2d(2,2)."""
    x = jnp.transpose(img_nchw, (0, 2, 3, 1)).astype(jnp.float32)   # NCHW -> NHWC
    N, H, W, Cin = x.shape
    Cout = params[0][0].shape[-1]
    assert H % 2 == 0 and W % 2 == 0, "MaxPool2d(2,2) path assumes even H, W"

    # Lane-dense channel count shared by every layer in the block.
    Cp = _round_up_128(max(Cin, Cout))
    L = len(params)

    ws, bs = [], []
    for w, b in params:                       # w: (3,3,cin,cout) HWIO, b: (cout,)
        cin_l, cout_l = w.shape[2], w.shape[3]
        wp = jnp.pad(w, ((0, 0), (0, 0), (0, Cp - cin_l), (0, Cp - cout_l)))
        ws.append(wp.reshape(9 * Cp, Cp))     # row index = (dy*3+dx)*Cp + ci
        bs.append(jnp.pad(b, (0, Cp - cout_l)))
    w_all = jnp.stack(ws)                     # (L, 9*Cp, Cp)
    b_all = jnp.stack(bs).reshape(L, 1, Cp)   # (L, 1, Cp)

    Ho, Wo = H // 2, W // 2
    out = pl.pallas_call(
        _vgg_block_kernel,
        out_shape=jax.ShapeDtypeStruct((N, Ho, Wo, Cp), x.dtype),
        grid=(N,),
        in_specs=[
            pl.BlockSpec((1, H, W, Cin), lambda n: (n, 0, 0, 0)),
            pl.BlockSpec((L, 9 * Cp, Cp), lambda n: (0, 0, 0)),
            pl.BlockSpec((L, 1, Cp), lambda n: (0, 0, 0)),
        ],
        out_specs=pl.BlockSpec((1, Ho, Wo, Cp), lambda n: (n, 0, 0, 0)),
        scratch_shapes=[
            pltpu.VMEM((H + 2, W + 2, Cp), jnp.float32),   # halo-padded activation
            pltpu.VMEM((H * W, 9 * Cp), jnp.float32),      # im2col patch matrix
        ],
        compiler_params=pltpu.CompilerParams(
            dimension_semantics=("parallel",)),
    )(x, w_all, b_all)

    out = out[..., :Cout]                                   # drop channel padding
    return jnp.transpose(out, (0, 3, 1, 2))                 # NHWC -> NCHW


# ----------------------------------- params & ref ---------------------------------------
def init_convs_params(key, in_channels, out_channels, num_convs):
    """Deterministic init matching nn.Conv2d parameter shapes (stored as HWIO)."""
    params = []
    cin = in_channels
    for _ in range(num_convs):
        key, kw, kb = jax.random.split(key, 3)
        fan_in = float(cin * 3 * 3)
        bound = 1.0 / (fan_in ** 0.5)
        w = jax.random.uniform(kw, (3, 3, cin, out_channels), jnp.float32,
                               minval=-bound, maxval=bound)
        b = jax.random.uniform(kb, (out_channels,), jnp.float32,
                               minval=-bound, maxval=bound)
        params.append((w, b))
        cin = out_channels
    return params


def convs_reference(img_nchw, params):
    """Pure-JAX reference (NCHW, same semantics as the PyTorch module)."""
    x = img_nchw
    for w, b in params:
        w_oihw = jnp.transpose(w, (3, 2, 0, 1))             # HWIO -> OIHW
        x = jax.lax.conv_general_dilated(
            x, w_oihw, window_strides=(1, 1), padding=((1, 1), (1, 1)),
            dimension_numbers=("NCHW", "OIHW", "NCHW"))
        x = jnp.maximum(x + b.reshape(1, -1, 1, 1), 0.0)
    N, C, H, W = x.shape
    return x.reshape(N, C, H // 2, 2, W // 2, 2).max(axis=(3, 5))


if __name__ == "__main__":
    batch, in_ch, out_ch, num_convs, hw = 2, 4, 8, 2, 16

    key = jax.random.PRNGKey(0)
    key, kx = jax.random.split(key)
    img = jax.random.normal(kx, (batch, in_ch, hw, hw), jnp.float32)  # NCHW like PyTorch
    params = init_convs_params(key, in_ch, out_ch, num_convs)

    out = convs_forward(img, params)
    out = jax.block_until_ready(out)

    assert out.shape == (batch, out_ch, hw // 2, hw // 2), out.shape
    ref = convs_reference(img, params)
    err = float(jnp.max(jnp.abs(out - ref)))
    assert jnp.allclose(out, ref, atol=1e-4, rtol=1e-4), err
    print("KERNEL_OK")
</pallas_src>

<mosaic_0001>
module attributes {stable_mosaic.version = 11 : i64} {
  func.func @_vgg_block_kernel(%arg0: i32, %arg1: memref<1x16x16x4xf32, #tpu.memory_space<vmem>>, %arg2: memref<2x1152x128xf32, #tpu.memory_space<vmem>>, %arg3: memref<2x1x128xf32, #tpu.memory_space<vmem>>, %arg4: memref<1x8x8x128xf32, #tpu.memory_space<vmem>>, %arg5: memref<18x18x128xf32, #tpu.memory_space<vmem>>, %arg6: memref<256x1152xf32, #tpu.memory_space<vmem>>) attributes {dimension_semantics = [#tpu.dimension_semantics<parallel>], iteration_bounds = array<i64: 2>, scalar_prefetch = 0 : i64, scratch_operands = 2 : i64, tpu.core_type = #tpu.core_type<tc>, window_params = [{transform_indices = @transform_0, window_bounds = array<i64: 1, 16, 16, 4>}, {pipeline_mode = #tpu.pipeline_mode<synchronous>, transform_indices = @transform_1, window_bounds = array<i64: 2, 1152, 128>}, {pipeline_mode = #tpu.pipeline_mode<synchronous>, transform_indices = @transform_2, window_bounds = array<i64: 2, 1, 128>}, {transform_indices = @transform_3, window_bounds = array<i64: 1, 8, 8, 128>}]} {
    %cst = arith.constant 0.000000e+00 : f32
    %0 = vector.broadcast %cst : f32 to vector<18x18x128xf32>
    %c0 = arith.constant 0 : index
    %c0_0 = arith.constant 0 : index
    %c0_1 = arith.constant 0 : index
    %1 = vector.load %arg5[%c0, %c0_0, %c0_1] : memref<18x18x128xf32, #tpu.memory_space<vmem>>, vector<18x18x128xf32>
    tpu.vector_store %arg5[%c0, %c0_0, %c0_1], %0 {strides = array<i32>} : memref<18x18x128xf32, #tpu.memory_space<vmem>>, vector<18x18x128xf32>,
    %c0_2 = arith.constant 0 : index
    %c0_3 = arith.constant 0 : index
    %c0_4 = arith.constant 0 : index
    %c0_5 = arith.constant 0 : index
    %2 = vector.load %arg1[%c0_2, %c0_3, %c0_4, %c0_5] : memref<1x16x16x4xf32, #tpu.memory_space<vmem>>, vector<1x16x16x4xf32>
    %3 = vector.shape_cast %2 : vector<1x16x16x4xf32> to vector<16x16x4xf32>
    %c1 = arith.constant 1 : index
    %c1_6 = arith.constant 1 : index
    %c0_7 = arith.constant 0 : index
    %4 = vector.load %arg5[%c1, %c1_6, %c0_7] : memref<18x18x128xf32, #tpu.memory_space<vmem>>, vector<16x16x4xf32>
    tpu.vector_store %arg5[%c1, %c1_6, %c0_7], %3 {strides = array<i32>} : memref<18x18x128xf32, #tpu.memory_space<vmem>>, vector<16x16x4xf32>,
    %c0_8 = arith.constant 0 : index
    %c0_9 = arith.constant 0 : index
    %c0_10 = arith.constant 0 : index
    %5 = vector.load %arg5[%c0_8, %c0_9, %c0_10] : memref<18x18x128xf32, #tpu.memory_space<vmem>>, vector<16x16x128xf32>
    %6 = vector.shape_cast %5 : vector<16x16x128xf32> to vector<256x128xf32>
    %c0_11 = arith.constant 0 : index
    %c0_12 = arith.constant 0 : index
    %7 = vector.load %arg6[%c0_11, %c0_12] : memref<256x1152xf32, #tpu.memory_space<vmem>>, vector<256x128xf32>
    tpu.vector_store %arg6[%c0_11, %c0_12], %6 {strides = array<i32>} : memref<256x1152xf32, #tpu.memory_space<vmem>>, vector<256x128xf32>,
    %c0_13 = arith.constant 0 : index
    %c1_14 = arith.constant 1 : index
    %c0_15 = arith.constant 0 : index
    %8 = vector.load %arg5[%c0_13, %c1_14, %c0_15] : memref<18x18x128xf32, #tpu.memory_space<vmem>>, vector<16x16x128xf32>
    %9 = vector.shape_cast %8 : vector<16x16x128xf32> to vector<256x128xf32>
    %c0_16 = arith.constant 0 : index
    %c128 = arith.constant 128 : index
    %10 = vector.load %arg6[%c0_16, %c128] : memref<256x1152xf32, #tpu.memory_space<vmem>>, vector<256x128xf32>
    tpu.vector_store %arg6[%c0_16, %c128], %9 {strides = array<i32>} : memref<256x1152xf32, #tpu.memory_space<vmem>>, vector<256x128xf32>,
    %c0_17 = arith.constant 0 : index
    %c2 = arith.constant 2 : index
    %c0_18 = arith.constant 0 : index
    %11 = vector.load %arg5[%c0_17, %c2, %c0_18] : memref<18x18x128xf32, #tpu.memory_space<vmem>>, vector<16x16x128xf32>
    %12 = vector.shape_cast %11 : vector<16x16x128xf32> to vector<256x128xf32>
    %c0_19 = arith.constant 0 : index
    %c256 = arith.constant 256 : index
    %13 = vector.load %arg6[%c0_19, %c256] : memref<256x1152xf32, #tpu.memory_space<vmem>>, vector<256x128xf32>
    tpu.vector_store %arg6[%c0_19, %c256], %12 {strides = array<i32>} : memref<256x1152xf32, #tpu.memory_space<vmem>>, vector<256x128xf32>,
    %c1_20 = arith.constant 1 : index
    %c0_21 = arith.constant 0 : index
    %c0_22 = arith.constant 0 : index
    %14 = vector.load %arg5[%c1_20, %c0_21, %c0_22] : memref<18x18x128xf32, #tpu.memory_space<vmem>>, vector<16x16x128xf32>
    %15 = vector.shape_cast %14 : vector<16x16x128xf32> to vector<256x128xf32>
    %c0_23 = arith.constant 0 : index
    %c384 = arith.constant 384 : index
    %16 = vector.load %arg6[%c0_23, %c384] : memref<256x1152xf32, #tpu.memory_space<vmem>>, vector<256x128xf32>
    tpu.vector_store %arg6[%c0_23, %c384], %15 {strides = array<i32>} : memref<256x1152xf32, #tpu.memory_space<vmem>>, vector<256x128xf32>,
    %c1_24 = arith.constant 1 : index
    %c1_25 = arith.constant 1 : index
    %c0_26 = arith.constant 0 : index
    %17 = vector.load %arg5[%c1_24, %c1_25, %c0_26] : memref<18x18x128xf32, #tpu.memory_space<vmem>>, vector<16x16x128xf32>
    %18 = vector.shape_cast %17 : vector<16x16x128xf32> to vector<256x128xf32>
    %c0_27 = arith.constant 0 : index
    %c512 = arith.constant 512 : index
    %19 = vector.load %arg6[%c0_27, %c512] : memref<256x1152xf32, #tpu.memory_space<vmem>>, vector<256x128xf32>
    tpu.vector_store %arg6[%c0_27, %c512], %18 {strides = array<i32>} : memref<256x1152xf32, #tpu.memory_space<vmem>>, vector<256x128xf32>,
    %c1_28 = arith.constant 1 : index
    %c2_29 = arith.constant 2 : index
    %c0_30 = arith.constant 0 : index
    %20 = vector.load %arg5[%c1_28, %c2_29, %c0_30] : memref<18x18x128xf32, #tpu.memory_space<vmem>>, vector<16x16x128xf32>
    %21 = vector.shape_cast %20 : vector<16x16x128xf32> to vector<256x128xf32>
    %c0_31 = arith.constant 0 : index
    %c640 = arith.constant 640 : index
    %22 = vector.load %arg6[%c0_31, %c640] : memref<256x1152xf32, #tpu.memory_space<vmem>>, vector<256x128xf32>
    tpu.vector_store %arg6[%c0_31, %c640], %21 {strides = array<i32>} : memref<256x1152xf32, #tpu.memory_space<vmem>>, vector<256x128xf32>,
    %c2_32 = arith.constant 2 : index
    %c0_33 = arith.constant 0 : index
    %c0_34 = arith.constant 0 : index
    %23 = vector.load %arg5[%c2_32, %c0_33, %c0_34] : memref<18x18x128xf32, #tpu.memory_space<vmem>>, vector<16x16x128xf32>
    %24 = vector.shape_cast %23 : vector<16x16x128xf32> to vector<256x128xf32>
    %c0_35 = arith.constant 0 : index
    %c768 = arith.constant 768 : index
    %25 = vector.load %arg6[%c0_35, %c768] : memref<256x1152xf32, #tpu.memory_space<vmem>>, vector<256x128xf32>
    tpu.vector_store %arg6[%c0_35, %c768], %24 {strides = array<i32>} : memref<256x1152xf32, #tpu.memory_space<vmem>>, vector<256x128xf32>,
    %c2_36 = arith.constant 2 : index
    %c1_37 = arith.constant 1 : index
    %c0_38 = arith.constant 0 : index
    %26 = vector.load %arg5[%c2_36, %c1_37, %c0_38] : memref<18x18x128xf32, #tpu.memory_space<vmem>>, vector<16x16x128xf32>
    %27 = vector.shape_cast %26 : vector<16x16x128xf32> to vector<256x128xf32>
    %c0_39 = arith.constant 0 : index
    %c896 = arith.constant 896 : index
    %28 = vector.load %arg6[%c0_39, %c896] : memref<256x1152xf32, #tpu.memory_space<vmem>>, vector<256x128xf32>
    tpu.vector_store %arg6[%c0_39, %c896], %27 {strides = array<i32>} : memref<256x1152xf32, #tpu.memory_space<vmem>>, vector<256x128xf32>,
    %c2_40 = arith.constant 2 : index
    %c2_41 = arith.constant 2 : index
    %c0_42 = arith.constant 0 : index
    %29 = vector.load %arg5[%c2_40, %c2_41, %c0_42] : memref<18x18x128xf32, #tpu.memory_space<vmem>>, vector<16x16x128xf32>
    %30 = vector.shape_cast %29 : vector<16x16x128xf32> to vector<256x128xf32>
    %c0_43 = arith.constant 0 : index
    %c1024 = arith.constant 1024 : index
    %31 = vector.load %arg6[%c0_43, %c1024] : memref<256x1152xf32, #tpu.memory_space<vmem>>, vector<256x128xf32>
    tpu.vector_store %arg6[%c0_43, %c1024], %30 {strides = array<i32>} : memref<256x1152xf32, #tpu.memory_space<vmem>>, vector<256x128xf32>,
    %c0_44 = arith.constant 0 : index
    %c0_45 = arith.constant 0 : index
    %32 = vector.load %arg6[%c0_44, %c0_45] : memref<256x1152xf32, #tpu.memory_space<vmem>>, vector<256x1152xf32>
    %c0_46 = arith.constant 0 : index
    %c0_47 = arith.constant 0 : index
    %c0_48 = arith.constant 0 : index
    %33 = vector.load %arg2[%c0_46, %c0_47, %c0_48] : memref<2x1152x128xf32, #tpu.memory_space<vmem>>, vector<1x1152x128xf32>
    %34 = vector.shape_cast %33 : vector<1x1152x128xf32> to vector<1152x128xf32>
    %cst_49 = arith.constant dense<0.000000e+00> : vector<256x128xf32>
    %35 = tpu.matmul %32, %34, %cst_49 {dimension_numbers = #tpu.dot_dimension_numbers<[1], [0], [0], [1], [0, 0, 1, 1], [], []>} : vector<256x1152xf32>, vector<1152x128xf32>, vector<256x128xf32> -> vector<256x128xf32>
    %c0_50 = arith.constant 0 : index
    %c0_51 = arith.constant 0 : index
    %c0_52 = arith.constant 0 : index
    %36 = vector.load %arg3[%c0_50, %c0_51, %c0_52] : memref<2x1x128xf32, #tpu.memory_space<vmem>>, vector<1x1x128xf32>
    %37 = vector.shape_cast %36 : vector<1x1x128xf32> to vector<1x128xf32>
    %38 = vector.broadcast %37 : vector<1x128xf32> to vector<256x128xf32>
    %39 = arith.addf %35, %38 : vector<256x128xf32>
    %cst_53 = arith.constant 0.000000e+00 : f32
    %40 = vector.broadcast %cst_53 : f32 to vector<256x128xf32>
    %41 = arith.maximumf %39, %40 : vector<256x128xf32>
    %42 = vector.shape_cast %41 : vector<256x128xf32> to vector<16x16x128xf32>
    %c1_54 = arith.constant 1 : index
    %c1_55 = arith.constant 1 : index
    %c0_56 = arith.constant 0 : index
    %43 = vector.load %arg5[%c1_54, %c1_55, %c0_56] : memref<18x18x128xf32, #tpu.memory_space<vmem>>, vector<16x16x128xf32>
    tpu.vector_store %arg5[%c1_54, %c1_55, %c0_56], %42 {strides = array<i32>} : memref<18x18x128xf32, #tpu.memory_space<vmem>>, vector<16x16x128xf32>,
    %c0_57 = arith.constant 0 : index
    %c0_58 = arith.constant 0 : index
    %c0_59 = arith.constant 0 : index
    %44 = vector.load %arg5[%c0_57, %c0_58, %c0_59] : memref<18x18x128xf32, #tpu.memory_space<vmem>>, vector<16x16x128xf32>
    %45 = vector.shape_cast %44 : vector<16x16x128xf32> to vector<256x128xf32>
    %c0_60 = arith.constant 0 : index
    %c0_61 = arith.constant 0 : index
    %46 = vector.load %arg6[%c0_60, %c0_61] : memref<256x1152xf32, #tpu.memory_space<vmem>>, vector<256x128xf32>
    tpu.vector_store %arg6[%c0_60, %c0_61], %45 {strides = array<i32>} : memref<256x1152xf32, #tpu.memory_space<vmem>>, vector<256x128xf32>,
    %c0_62 = arith.constant 0 : index
    %c1_63 = arith.constant 1 : index
    %c0_64 = arith.constant 0 : index
    %47 = vector.load %arg5[%c0_62, %c1_63, %c0_64] : memref<18x18x128xf32, #tpu.memory_space<vmem>>, vector<16x16x128xf32>
    %48 = vector.shape_cast %47 : vector<16x16x128xf32> to vector<256x128xf32>
    %c0_65 = arith.constant 0 : index
    %c128_66 = arith.constant 128 : index
    %49 = vector.load %arg6[%c0_65, %c128_66] : memref<256x1152xf32, #tpu.memory_space<vmem>>, vector<256x128xf32>
    tpu.vector_store %arg6[%c0_65, %c128_66], %48 {strides = array<i32>} : memref<256x1152xf32, #tpu.memory_space<vmem>>, vector<256x128xf32>,
    %c0_67 = arith.constant 0 : index
    %c2_68 = arith.constant 2 : index
    %c0_69 = arith.constant 0 : index
    %50 = vector.load %arg5[%c0_67, %c2_68, %c0_69] : memref<18x18x128xf32, #tpu.memory_space<vmem>>, vector<16x16x128xf32>
    %51 = vector.shape_cast %50 : vector<16x16x128xf32> to vector<256x128xf32>
    %c0_70 = arith.constant 0 : index
    %c256_71 = arith.constant 256 : index
    %52 = vector.load %arg6[%c0_70, %c256_71] : memref<256x1152xf32, #tpu.memory_space<vmem>>, vector<256x128xf32>
    tpu.vector_store %arg6[%c0_70, %c256_71], %51 {strides = array<i32>} : memref<256x1152xf32, #tpu.memory_space<vmem>>, vector<256x128xf32>,
    %c1_72 = arith.constant 1 : index
    %c0_73 = arith.constant 0 : index
    %c0_74 = arith.constant 0 : index
    %53 = vector.load %arg5[%c1_72, %c0_73, %c0_74] : memref<18x18x128xf32, #tpu.memory_space<vmem>>, vector<16x16x128xf32>
    %54 = vector.shape_cast %53 : vector<16x16x128xf32> to vector<256x128xf32>
    %c0_75 = arith.constant 0 : index
    %c384_76 = arith.constant 384 : index
    %55 = vector.load %arg6[%c0_75, %c384_76] : memref<256x1152xf32, #tpu.memory_space<vmem>>, vector<256x128xf32>
    tpu.vector_store %arg6[%c0_75, %c384_76], %54 {strides = array<i32>} : memref<256x1152xf32, #tpu.memory_space<vmem>>, vector<256x128xf32>,
    %c1_77 = arith.constant 1 : index
    %c1_78 = arith.constant 1 : index
    %c0_79 = arith.constant 0 : index
    %56 = vector.load %arg5[%c1_77, %c1_78, %c0_79] : memref<18x18x128xf32, #tpu.memory_space<vmem>>, vector<16x16x128xf32>
    %57 = vector.shape_cast %56 : vector<16x16x128xf32> to vector<256x128xf32>
    %c0_80 = arith.constant 0 : index
    %c512_81 = arith.constant 512 : index
    %58 = vector.load %arg6[%c0_80, %c512_81] : memref<256x1152xf32, #tpu.memory_space<vmem>>, vector<256x128xf32>
    tpu.vector_store %arg6[%c0_80, %c512_81], %57 {strides = array<i32>} : memref<256x1152xf32, #tpu.memory_space<vmem>>, vector<256x128xf32>,
    %c1_82 = arith.constant 1 : index
    %c2_83 = arith.constant 2 : index
    %c0_84 = arith.constant 0 : index
    %59 = vector.load %arg5[%c1_82, %c2_83, %c0_84] : memref<18x18x128xf32, #tpu.memory_space<vmem>>, vector<16x16x128xf32>
    %60 = vector.shape_cast %59 : vector<16x16x128xf32> to vector<256x128xf32>
    %c0_85 = arith.constant 0 : index
    %c640_86 = arith.constant 640 : index
    %61 = vector.load %arg6[%c0_85, %c640_86] : memref<256x1152xf32, #tpu.memory_space<vmem>>, vector<256x128xf32>
    tpu.vector_store %arg6[%c0_85, %c640_86], %60 {strides = array<i32>} : memref<256x1152xf32, #tpu.memory_space<vmem>>, vector<256x128xf32>,
    %c2_87 = arith.constant 2 : index
    %c0_88 = arith.constant 0 : index
    %c0_89 = arith.constant 0 : index
    %62 = vector.load %arg5[%c2_87, %c0_88, %c0_89] : memref<18x18x128xf32, #tpu.memory_space<vmem>>, vector<16x16x128xf32>
    %63 = vector.shape_cast %62 : vector<16x16x128xf32> to vector<256x128xf32>
    %c0_90 = arith.constant 0 : index
    %c768_91 = arith.constant 768 : index
    %64 = vector.load %arg6[%c0_90, %c768_91] : memref<256x1152xf32, #tpu.memory_space<vmem>>, vector<256x128xf32>
    tpu.vector_store %arg6[%c0_90, %c768_91], %63 {strides = array<i32>} : memref<256x1152xf32, #tpu.memory_space<vmem>>, vector<256x128xf32>,
    %c2_92 = arith.constant 2 : index
    %c1_93 = arith.constant 1 : index
    %c0_94 = arith.constant 0 : index
    %65 = vector.load %arg5[%c2_92, %c1_93, %c0_94] : memref<18x18x128xf32, #tpu.memory_space<vmem>>, vector<16x16x128xf32>
    %66 = vector.shape_cast %65 : vector<16x16x128xf32> to vector<256x128xf32>
    %c0_95 = arith.constant 0 : index
    %c896_96 = arith.constant 896 : index
    %67 = vector.load %arg6[%c0_95, %c896_96] : memref<256x1152xf32, #tpu.memory_space<vmem>>, vector<256x128xf32>
    tpu.vector_store %arg6[%c0_95, %c896_96], %66 {strides = array<i32>} : memref<256x1152xf32, #tpu.memory_space<vmem>>, vector<256x128xf32>,
    %c2_97 = arith.constant 2 : index
    %c2_98 = arith.constant 2 : index
    %c0_99 = arith.constant 0 : index
    %68 = vector.load %arg5[%c2_97, %c2_98, %c0_99] : memref<18x18x128xf32, #tpu.memory_space<vmem>>, vector<16x16x128xf32>
    %69 = vector.shape_cast %68 : vector<16x16x128xf32> to vector<256x128xf32>
    %c0_100 = arith.constant 0 : index
    %c1024_101 = arith.constant 1024 : index
    %70 = vector.load %arg6[%c0_100, %c1024_101] : memref<256x1152xf32, #tpu.memory_space<vmem>>, vector<256x128xf32>
    tpu.vector_store %arg6[%c0_100, %c1024_101], %69 {strides = array<i32>} : memref<256x1152xf32, #tpu.memory_space<vmem>>, vector<256x128xf32>,
    %c0_102 = arith.constant 0 : index
    %c0_103 = arith.constant 0 : index
    %71 = vector.load %arg6[%c0_102, %c0_103] : memref<256x1152xf32, #tpu.memory_space<vmem>>, vector<256x1152xf32>
    %c1_104 = arith.constant 1 : index
    %c0_105 = arith.constant 0 : index
    %c0_106 = arith.constant 0 : index
    %72 = vector.load %arg2[%c1_104, %c0_105, %c0_106] : memref<2x1152x128xf32, #tpu.memory_space<vmem>>, vector<1x1152x128xf32>
    %73 = vector.shape_cast %72 : vector<1x1152x128xf32> to vector<1152x128xf32>
    %cst_107 = arith.constant dense<0.000000e+00> : vector<256x128xf32>
    %74 = tpu.matmul %71, %73, %cst_107 {dimension_numbers = #tpu.dot_dimension_numbers<[1], [0], [0], [1], [0, 0, 1, 1], [], []>} : vector<256x1152xf32>, vector<1152x128xf32>, vector<256x128xf32> -> vector<256x128xf32>
    %c1_108 = arith.constant 1 : index
    %c0_109 = arith.constant 0 : index
    %c0_110 = arith.constant 0 : index
    %75 = vector.load %arg3[%c1_108, %c0_109, %c0_110] : memref<2x1x128xf32, #tpu.memory_space<vmem>>, vector<1x1x128xf32>
    %76 = vector.shape_cast %75 : vector<1x1x128xf32> to vector<1x128xf32>
    %77 = vector.broadcast %76 : vector<1x128xf32> to vector<256x128xf32>
    %78 = arith.addf %74, %77 : vector<256x128xf32>
    %cst_111 = arith.constant 0.000000e+00 : f32
    %79 = vector.broadcast %cst_111 : f32 to vector<256x128xf32>
    %80 = arith.maximumf %78, %79 : vector<256x128xf32>
    %81 = vector.shape_cast %80 : vector<256x128xf32> to vector<8x2x8x2x128xf32>
    %cst_112 = arith.constant dense<0xFF800000> : vector<8x8x128xf32>
    %82 = vector.multi_reduction <maximumf>, %81, %cst_112 [1, 3] : vector<8x2x8x2x128xf32> to vector<8x8x128xf32>
    %c0_113 = arith.constant 0 : index
    %c0_114 = arith.constant 0 : index
    %c0_115 = arith.constant 0 : index
    %c0_116 = arith.constant 0 : index
    %83 = vector.load %arg4[%c0_113, %c0_114, %c0_115, %c0_116] : memref<1x8x8x128xf32, #tpu.memory_space<vmem>>, vector<1x8x8x128xf32>
    %84 = vector.shape_cast %83 : vector<1x8x8x128xf32> to vector<8x8x128xf32>
    %85 = vector.shape_cast %82 : vector<8x8x128xf32> to vector<1x8x8x128xf32>
    tpu.vector_store %arg4[%c0_113, %c0_114, %c0_115, %c0_116], %85 {strides = array<i32>} : memref<1x8x8x128xf32, #tpu.memory_space<vmem>>, vector<1x8x8x128xf32>,
    return
  }
  func.func @transform_0(%arg0: i32) -> (i32, i32, i32, i32) {
    %c0_i32 = arith.constant 0 : i32
    %c0_i32_0 = arith.constant 0 : i32
    %c0_i32_1 = arith.constant 0 : i32
    %c0_i32_2 = arith.constant 0 : i32
    return %arg0, %c0_i32, %c0_i32_0, %c0_i32_1 : i32, i32, i32, i32
  }
  func.func @transform_1(%arg0: i32) -> (i32, i32, i32) {
    %c0_i32 = arith.constant 0 : i32
    %c0_i32_0 = arith.constant 0 : i32
    %c0_i32_1 = arith.constant 0 : i32
    %c0_i32_2 = arith.constant 0 : i32
    return %c0_i32, %c0_i32_0, %c0_i32_1 : i32, i32, i32
  }
  func.func @transform_2(%arg0: i32) -> (i32, i32, i32) {
    %c0_i32 = arith.constant 0 : i32
    %c0_i32_0 = arith.constant 0 : i32
    %c0_i32_1 = arith.constant 0 : i32
    %c0_i32_2 = arith.constant 0 : i32
    return %c0_i32, %c0_i32_0, %c0_i32_1 : i32, i32, i32
  }
  func.func @transform_3(%arg0: i32) -> (i32, i32, i32, i32) {
    %c0_i32 = arith.constant 0 : i32
    %c0_i32_0 = arith.constant 0 : i32
    %c0_i32_1 = arith.constant 0 : i32
    %c0_i32_2 = arith.constant 0 : i32
    return %arg0, %c0_i32, %c0_i32_0, %c0_i32_1 : i32, i32, i32, i32
  }
}

</mosaic_0001>

<llo_original>
// kernel: tpu_custom_call.1
$region0: #{tpu_custom_call.1}
  #allocation0 [shape = 'u32[]', space=smem, size = 0x4, offset = 0x4, fixed_abs, tag = 'smem constant byte address 0x4 - core index']
  #allocation1 [shape = 'u32[144,128]{1,0:T(1,128)}', space=vmem, size = 0x12000, scoped, tag = 'internal scratch']
  #allocation2 [shape = 'f32[18,18,128]{2,1,0:T(8,128)}', space=vmem, size = 0x36000, scoped, tag = 'scratch operand']
  #allocation3 [shape = 'f32[256,1152]{1,0:T(8,128)}', space=vmem, size = 0x120000, scoped, tag = 'scratch operand']
  %s0 = inlined_call_operand.vmem [shape: f32[2,16,16,4], index: 0, kind: input, shape index: {}]
  %s1 = inlined_call_operand.hbm [shape: f32[2,1152,128], index: 1, kind: input, shape index: {}]
  %s2 = inlined_call_operand.hbm [shape: f32[2,1,128], index: 2, kind: input, shape index: {}]
  %s3 = inlined_call_operand.hbm [shape: f32[2,8,8,128], index: 3, kind: output, shape index: {}]
  %s4 = sld [smem:[#allocation0]]
  $region53: #{tpu_custom_call.1} parent=0
    _
  %s6 = ssub.s32 1, %s4
  %s7 = scalar_select 0, %s6, %s4
  $region1: #{tpu_custom_call.1} parent=0
    #allocation4 [shape = 'u8[1179648]{0}', space=vmem, size = 0x120000, scoped, tag = 'input window, operand 1, single buffered']
    #allocation5 [shape = 's32[2]{0}', space=sflag, size = 0x8, scoped, tag = 'scoped memory for tpu_custom_call.1']
    #allocation6 [shape = 's32[2]{0}', space=sflag, size = 0x8, scoped, tag = 'scoped memory for tpu_custom_call.1']
    #allocation7 [shape = 'u8[1024]{0}', space=vmem, size = 0x400, scoped, tag = 'input window, operand 2, single buffered']
    #allocation8 [shape = 's32[1]{0}', space=sflag, size = 0x4, scoped, tag = 'scoped memory for tpu_custom_call.1']
    #allocation9 [shape = 'u8[65536]{0}', space=vmem, size = 0x10000, scoped, tag = 'output window, operand 0']
    %8 = vsyncpa [#allocation5], 0
    %9 = vsyncpa [#allocation8], 0
    %10 = vsyncpa [#allocation6], 0
    %s11 = scalar_lea.sflag [#allocation6], 1
    %12 = vsyncpa %s11, 0
    loop: start=0, step=1, limit=4
    $region2: #{tpu_custom_call.1} parent=1 // loop_pre_header
      _
    $region3: #{tpu_custom_call.1} parent=1 // loop_header
      %s14 = sphi 0, %s18
      %p15 = scmp.ge.s32.totalorder %s14, 4
      %s24 = sphi 0, %s26
      %s27 = sphi 0, %s24
      %s28 = sphi 0, %s27
      %s44 = sphi 0, %s28
      %s48 = sphi 0, %s48
      %s50 = sphi 0, %s48
      %s51 = sphi 0, %s50
      %s65 = sphi 0, %s51
      %s69 = sphi 0, %s69
      %s71 = sphi 0, %s69
      %s72 = sphi 0, %s71
      %s86 = sphi 0, %s72
      %s92 = sphi 0, %s94
      %s95 = sphi 0, %s92
      %s96 = sphi 0, %s95
      %s112 = sphi 0, %s96
    $region4: #{tpu_custom_call.1} parent=1 // loop_header_branch
      %17 = sbr.rel (%p15) target = $region8
    $region5: #{tpu_custom_call.1} parent=1 // loop_body
      %s19 = ssub.s32 %s14, 1
      %s20 = ssub.s32 %s14, 2
      %s21 = sadd.s32 %s14, 1
      %s22 = ssub.s32 %s14, %s21
      %p23 = scmp.eq.s32.totalorder %s22, 0
      %s25 = sadd.s32 %s24, 1
      %s26 = scalar_select %p23, %s24, %s25
      %p29 = pneg %p23
      %p30 = scmp.eq.s32.totalorder %s14, 1
      %p31 = por %p29, %p30
      %p32 = scmp.ne.s32.totalorder %s24, %s27
      %p33 = scmp.eq.s32.totalorder %s14, 0
      %p34 = por %p32, %p33
      %p35 = scmp.ne.s32.totalorder %s24, %s27
      %p36 = scmp.eq.s32.totalorder %s19, 1
      %p37 = por %p35, %p36
      %p38 = scmp.ne.s32.totalorder %s27, %s28
      %p39 = scmp.eq.s32.totalorder %s19, 0
      %p40 = por %p38, %p39
      %p41 = scmp.ne.s32.totalorder %s27, %s28
      %p42 = scmp.eq.s32.totalorder %s20, 1
      %p43 = por %p41, %p42
      %p45 = scmp.ne.s32.totalorder %s28, %s44
      %p46 = scmp.eq.s32.totalorder %s20, 0
      %p47 = por %p45, %p46
      %s49 = sadd.s32 %s48, 1
      %p52 = scmp.eq.s32.totalorder %s14, 1
      %p53 = scmp.ne.s32.totalorder %s48, %s50
      %p54 = scmp.eq.s32.totalorder %s14, 0
      %p55 = por %p53, %p54
      %p56 = scmp.ne.s32.totalorder %s48, %s50
      %p57 = scmp.eq.s32.totalorder %s19, 1
      %p58 = por %p56, %p57
      %p59 = scmp.ne.s32.totalorder %s50, %s51
      %p60 = scmp.eq.s32.totalorder %s19, 0
      %p61 = por %p59, %p60
      %p62 = scmp.ne.s32.totalorder %s50, %s51
      %p63 = scmp.eq.s32.totalorder %s20, 1
      %p64 = por %p62, %p63
      %p66 = scmp.ne.s32.totalorder %s51, %s65
      %p67 = scmp.eq.s32.totalorder %s20, 0
      %p68 = por %p66, %p67
      %s70 = sadd.s32 %s69, 1
      %p73 = scmp.eq.s32.totalorder %s14, 1
      %p74 = scmp.ne.s32.totalorder %s69, %s71
      %p75 = scmp.eq.s32.totalorder %s14, 0
      %p76 = por %p74, %p75
      %p77 = scmp.ne.s32.totalorder %s69, %s71
      %p78 = scmp.eq.s32.totalorder %s19, 1
      %p79 = por %p77, %p78
      %p80 = scmp.ne.s32.totalorder %s71, %s72
      %p81 = scmp.eq.s32.totalorder %s19, 0
      %p82 = por %p80, %p81
      %p83 = scmp.ne.s32.totalorder %s71, %s72
      %p84 = scmp.eq.s32.totalorder %s20, 1
      %p85 = por %p83, %p84
      %p87 = scmp.ne.s32.totalorder %s72, %s86
      %p88 = scmp.eq.s32.totalorder %s20, 0
      %p89 = por %p87, %p88
      %s90 = ssub.s32 %s14, %s21
      %p91 = scmp.eq.s32.totalorder %s90, 0
      %s93 = sadd.s32 %s92, 1
      %s94 = scalar_select %p91, %s92, %s93
      %p97 = pneg %p91
      %p98 = scmp.eq.s32.totalorder %s14, 1
      %p99 = por %p97, %p98
      %p100 = scmp.ne.s32.totalorder %s92, %s95
      %p101 = scmp.eq.s32.totalorder %s14, 0
      %p102 = por %p100, %p101
      %p103 = scmp.ne.s32.totalorder %s92, %s95
      %p104 = scmp.eq.s32.totalorder %s19, 1
      %p105 = por %p103, %p104
      %p106 = scmp.ne.s32.totalorder %s95, %s96
      %p107 = scmp.eq.s32.totalorder %s19, 0
      %p108 = por %p106, %p107
      %p109 = scmp.ne.s32.totalorder %s95, %s96
      %p110 = scmp.eq.s32.totalorder %s20, 1
      %p111 = por %p109, %p110
      %p113 = scmp.ne.s32.totalorder %s96, %s112
      %p114 = scmp.eq.s32.totalorder %s20, 0
      %p115 = por %p113, %p114
      %p116 = scmp.le.s32.totalorder 1, %s14
      %p117 = scmp.lt.s32.totalorder %s14, 3
      %p118 = pnand %p116, %p117
      %p119 = pneg %p118
      // Predicated region
      $region9: #{tpu_custom_call.1} parent=5 // pred_check
        _
      $region10: #{tpu_custom_call.1} parent=5 // pred_check_branch
        %121 = sbr.rel (%p118) target = $region12
      $region11: #{tpu_custom_call.1} parent=5 // pred_region
        %s122 = ssub.s32 %s14, 1
        // Predicated region
        $region13: #{tpu_custom_call.1} parent=11 // pred_check
          %p123 = pneg %p61
        $region14: #{tpu_custom_call.1} parent=11 // pred_check_branch
          %125 = sbr.rel (%p123) target = $region16
        $region15: #{tpu_custom_call.1} parent=11 // pred_region
          %s127 = ssub.s32 36864, 36864
          %128 = vsyncadd [#allocation5], %s127
          %s129 = sshll.u32 [#allocation4], 4
          %s130 = int_to_ptr.vmem [resolvable:$true] %s129
          %135 = dma.hbm_to_vmem [thread:$0]  %s1, 36864, %s130, [#allocation5], 128, 128, 8
        $region16: #{tpu_custom_call.1} parent=11 // pred_fallthru
          _
        // Predicated region
        $region17: #{tpu_custom_call.1} parent=11 // pred_check
          %p136 = pneg %p82
        $region18: #{tpu_custom_call.1} parent=11 // pred_check_branch
          %138 = sbr.rel (%p136) target = $region20
        $region19: #{tpu_custom_call.1} parent=11 // pred_region
          %s140 = ssub.s32 32, 32
          %141 = vsyncadd [#allocation8], %s140
          %s142 = sshll.u32 [#allocation7], 4
          %s143 = int_to_ptr.vmem [resolvable:$true] %s142
          %148 = dma.hbm_to_vmem [thread:$0]  %s2, 32, %s143, [#allocation8], 16, 16, 1
        $region20: #{tpu_custom_call.1} parent=11 // pred_fallthru
          _
      $region12: #{tpu_custom_call.1} parent=5 // pred_fallthru
        _
      %p149 = scmp.lt.s32.totalorder %s14, 2
      // Predicated region
      $region21: #{tpu_custom_call.1} parent=5 // pred_check
        %p150 = pneg %p149
      $region22: #{tpu_custom_call.1} parent=5 // pred_check_branch
        %152 = sbr.rel (%p150) target = $region24
      $region23: #{tpu_custom_call.1} parent=5 // pred_region
        // Predicated region
        $region25: #{tpu_custom_call.1} parent=23 // pred_check
          %p153 = pneg %p34
        $region26: #{tpu_custom_call.1} parent=23 // pred_check_branch
          %155 = sbr.rel (%p153) target = $region28
        $region27: #{tpu_custom_call.1} parent=23 // pred_region
          %p156 = scmp.lt.s32.totalorder %s14, 1
          %s157 = scalar_select %p156, %s14, 1
          %s158 = smul.addr %s157, 32
          %s159 = smul.addr %s158, 8
          %s160 = scalar_lea.vmem %s0, %s159
        $region28: #{tpu_custom_call.1} parent=23 // pred_fallthru
          _
      $region24: #{tpu_custom_call.1} parent=5 // pred_fallthru
        _
      %p161 = scmp.le.s32.totalorder 1, %s14
      %p162 = scmp.lt.s32.totalorder %s14, 3
      %p163 = pnand %p161, %p162
      %p164 = pneg %p163
      // Predicated region
      $region29: #{tpu_custom_call.1} parent=5 // pred_check
        _
      $region30: #{tpu_custom_call.1} parent=5 // pred_check_branch
        %166 = sbr.rel (%p163) target = $region32
      $region31: #{tpu_custom_call.1} parent=5 // pred_region
        %s167 = ssub.s32 %s14, 1
        // Predicated region
        $region33: #{tpu_custom_call.1} parent=31 // pred_check
          %p168 = pneg %p61
        $region34: #{tpu_custom_call.1} parent=31 // pred_check_branch
          %170 = sbr.rel (%p168) target = $region36
        $region35: #{tpu_custom_call.1} parent=31 // pred_region
          %171 = dma.done [#allocation5], 36864
        $region36: #{tpu_custom_call.1} parent=31 // pred_fallthru
          _
        // Predicated region
        $region37: #{tpu_custom_call.1} parent=31 // pred_check
          %p172 = pneg %p82
        $region38: #{tpu_custom_call.1} parent=31 // pred_check_branch
          %174 = sbr.rel (%p172) target = $region40
        $region39: #{tpu_custom_call.1} parent=31 // pred_region
          %175 = dma.done [#allocation8], 32
        $region40: #{tpu_custom_call.1} parent=31 // pred_fallthru
          _
        %p176 = scmp.lt.s32.totalorder %s19, 1
        %s177 = scalar_select %p176, %s19, 1
        %s178 = smul.addr %s177, 32
        %s179 = smul.addr %s178, 8
        %s180 = scalar_lea.vmem %s0, %s179
        %p181 = pneg %p40
        %p182 = pneg %p37
        %p183 = pneg %p61
        %p184 = pneg %p58
        %p185 = pneg %p82
        %p186 = pneg %p79
        %p187 = pneg %p108
        %p188 = pneg %p105
        %s189 = sand.u32 %s95, 1
        %s190 = scalar_lea.sflag [#allocation6], %s189
        %s191 = sand.u32 %s95, 1
        %s192 = smul.addr %s191, 64
        %s193 = scalar_lea.vmem [#allocation9], %s192
        %p194 = scmp.lt.s32.totalorder %s19, 1
        %s195 = scalar_select %p194, %s19, 1
        %s196 = smul.addr %s195, 32
        %s197 = smul.addr %s196, 8
        %s198 = scalar_lea.vmem %s0, %s197
        %199 = vst [vmem:[#allocation2] sm:$0xff] 0.0
        %200 = vst [vmem:[#allocation2 + $0x8] sm:$0xff] 0.0
        %201 = vst [vmem:[#allocation2 + $0x10] sm:$0x3] 0.0
        %202 = vst [vmem:[#allocation2 + $0x18] sm:$0xff] 0.0
        %203 = vst [vmem:[#allocation2 + $0x20] sm:$0xff] 0.0
        %204 = vst [vmem:[#allocation2 + $0x28] sm:$0x3] 0.0
        %205 = vst [vmem:[#allocation2 + $0x30] sm:$0xff] 0.0
        %206 = vst [vmem:[#allocation2 + $0x38] sm:$0xff] 0.0
        %207 = vst [vmem:[#allocation2 + $0x40] sm:$0x3] 0.0
        %208 = vst [vmem:[#allocation2 + $0x48] sm:$0xff] 0.0
        %209 = vst [vmem:[#allocation2 + $0x50] sm:$0xff] 0.0
        %210 = vst [vmem:[#allocation2 + $0x58] sm:$0x3] 0.0
        %211 = vst [vmem:[#allocation2 + $0x60] sm:$0xff] 0.0
        %212 = vst [vmem:[#allocation2 + $0x68] sm:$0xff] 0.0
        %213 = vst [vmem:[#allocation2 + $0x70] sm:$0x3] 0.0
        %214 = vst [vmem:[#allocation2 + $0x78] sm:$0xff] 0.0
        %215 = vst [vmem:[#allocation2 + $0x80] sm:$0xff] 0.0
        %216 = vst [vmem:[#allocation2 + $0x88] sm:$0x3] 0.0
        %217 = vst [vmem:[#allocation2 + $0x90] sm:$0xff] 0.0
        %218 = vst [vmem:[#allocation2 + $0x98] sm:$0xff] 0.0
        %219 = vst [vmem:[#allocation2 + $0xa0] sm:$0x3] 0.0
        %220 = vst [vmem:[#allocation2 + $0xa8] sm:$0xff] 0.0
        %221 = vst [vmem:[#allocation2 + $0xb0] sm:$0xff] 0.0
        %222 = vst [vmem:[#allocation2 + $0xb8] sm:$0x3] 0.0
        %223 = vst [vmem:[#allocation2 + $0xc0] sm:$0xff] 0.0
        %224 = vst [vmem:[#allocation2 + $0xc8] sm:$0xff] 0.0
        %225 = vst [vmem:[#allocation2 + $0xd0] sm:$0x3] 0.0
        %226 = vst [vmem:[#allocation2 + $0xd8] sm:$0xff] 0.0
        %227 = vst [vmem:[#allocation2 + $0xe0] sm:$0xff] 0.0
        %228 = vst [vmem:[#allocation2 + $0xe8] sm:$0x3] 0.0
        %229 = vst [vmem:[#allocation2 + $0xf0] sm:$0xff] 0.0
        %230 = vst [vmem:[#allocation2 + $0xf8] sm:$0xff] 0.0
        %231 = vst [vmem:[#allocation2 + $0x100] sm:$0x3] 0.0
        %232 = vst [vmem:[#allocation2 + $0x108] sm:$0xff] 0.0
        %233 = vst [vmem:[#allocation2 + $0x110] sm:$0xff] 0.0
        %234 = vst [vmem:[#allocation2 + $0x118] sm:$0x3] 0.0
        %235 = vst [vmem:[#allocation2 + $0x120] sm:$0xff] 0.0
        %236 = vst [vmem:[#allocation2 + $0x128] sm:$0xff] 0.0
        %237 = vst [vmem:[#allocation2 + $0x130] sm:$0x3] 0.0
        %238 = vst [vmem:[#allocation2 + $0x138] sm:$0xff] 0.0
        %239 = vst [vmem:[#allocation2 + $0x140] sm:$0xff] 0.0
        %240 = vst [vmem:[#allocation2 + $0x148] sm:$0x3] 0.0
        %241 = vst [vmem:[#allocation2 + $0x150] sm:$0xff] 0.0
        %242 = vst [vmem:[#allocation2 + $0x158] sm:$0xff] 0.0
        %243 = vst [vmem:[#allocation2 + $0x160] sm:$0x3] 0.0
        %244 = vst [vmem:[#allocation2 + $0x168] sm:$0xff] 0.0
        %245 = vst [vmem:[#allocation2 + $0x170] sm:$0xff] 0.0
        %246 = vst [vmem:[#allocation2 + $0x178] sm:$0x3] 0.0
        %247 = vst [vmem:[#allocation2 + $0x180] sm:$0xff] 0.0
        %248 = vst [vmem:[#allocation2 + $0x188] sm:$0xff] 0.0
        %249 = vst [vmem:[#allocation2 + $0x190] sm:$0x3] 0.0
        %250 = vst [vmem:[#allocation2 + $0x198] sm:$0xff] 0.0
        %251 = vst [vmem:[#allocation2 + $0x1a0] sm:$0xff] 0.0
        %252 = vst [vmem:[#allocation2 + $0x1a8] sm:$0x3] 0.0
        %v253 = vld [vmem:[%s198] sm:$0xff]
        %v254 = vld [vmem:[%s198 + $0x8] sm:$0xff]
        %v255 = vld [vmem:[%s198 + $0x10] sm:$0xff]
        %v256 = vld [vmem:[%s198 + $0x18] sm:$0xff]
        %v257 = vld [vmem:[%s198 + $0x20] sm:$0xff]
        %v258 = vld [vmem:[%s198 + $0x28] sm:$0xff]
        %v259 = vld [vmem:[%s198 + $0x30] sm:$0xff]
        %v260 = vld [vmem:[%s198 + $0x38] sm:$0xff]
        %v261 = vld [vmem:[%s198 + $0x40] sm:$0xff]
        %v262 = vld [vmem:[%s198 + $0x48] sm:$0xff]
        %v263 = vld [vmem:[%s198 + $0x50] sm:$0xff]
        %v264 = vld [vmem:[%s198 + $0x58] sm:$0xff]
        %v265 = vld [vmem:[%s198 + $0x60] sm:$0xff]
        %v266 = vld [vmem:[%s198 + $0x68] sm:$0xff]
        %v267 = vld [vmem:[%s198 + $0x70] sm:$0xff]
        %v268 = vld [vmem:[%s198 + $0x78] sm:$0xff]
        %v269 = vld [vmem:[%s198 + $0x80] sm:$0xff]
        %v270 = vld [vmem:[%s198 + $0x88] sm:$0xff]
        %v271 = vld [vmem:[%s198 + $0x90] sm:$0xff]
        %v272 = vld [vmem:[%s198 + $0x98] sm:$0xff]
        %v273 = vld [vmem:[%s198 + $0xa0] sm:$0xff]
        %v274 = vld [vmem:[%s198 + $0xa8] sm:$0xff]
        %v275 = vld [vmem:[%s198 + $0xb0] sm:$0xff]
        %v276 = vld [vmem:[%s198 + $0xb8] sm:$0xff]
        %v277 = vld [vmem:[%s198 + $0xc0] sm:$0xff]
        %v278 = vld [vmem:[%s198 + $0xc8] sm:$0xff]
        %v279 = vld [vmem:[%s198 + $0xd0] sm:$0xff]
        %v280 = vld [vmem:[%s198 + $0xd8] sm:$0xff]
        %v281 = vld [vmem:[%s198 + $0xe0] sm:$0xff]
        %v282 = vld [vmem:[%s198 + $0xe8] sm:$0xff]
        %v283 = vld [vmem:[%s198 + $0xf0] sm:$0xff]
        %v284 = vld [vmem:[%s198 + $0xf8] sm:$0xff]
        %s285 = scalar_lea.vmem [#allocation2], 24
        %vm286 = vcmask 31744
        %287 = vst.msk [vmem:[%s285 + $0x1] sm:$0xff] %vm286, %v253
        %288 = vst.msk [vmem:[%s285 + $0x9] sm:$0xff] %vm286, %v254
        %289 = vst.msk [vmem:[%s285 + $0x19] sm:$0xff] %vm286, %v255
        %290 = vst.msk [vmem:[%s285 + $0x21] sm:$0xff] %vm286, %v256
        %291 = vst.msk [vmem:[%s285 + $0x31] sm:$0xff] %vm286, %v257
        %292 = vst.msk [vmem:[%s285 + $0x39] sm:$0xff] %vm286, %v258
        %293 = vst.msk [vmem:[%s285 + $0x49] sm:$0xff] %vm286, %v259
        %294 = vst.msk [vmem:[%s285 + $0x51] sm:$0xff] %vm286, %v260
        %295 = vst.msk [vmem:[%s285 + $0x61] sm:$0xff] %vm286, %v261
        %296 = vst.msk [vmem:[%s285 + $0x69] sm:$0xff] %vm286, %v262
        %297 = vst.msk [vmem:[%s285 + $0x79] sm:$0xff] %vm286, %v263
        %298 = vst.msk [vmem:[%s285 + $0x81] sm:$0xff] %vm286, %v264
        %299 = vst.msk [vmem:[%s285 + $0x91] sm:$0xff] %vm286, %v265
        %300 = vst.msk [vmem:[%s285 + $0x99] sm:$0xff] %vm286, %v266
        %301 = vst.msk [vmem:[%s285 + $0xa9] sm:$0xff] %vm286, %v267
        %302 = vst.msk [vmem:[%s285 + $0xb1] sm:$0xff] %vm286, %v268
        %303 = vst.msk [vmem:[%s285 + $0xc1] sm:$0xff] %vm286, %v269
        %304 = vst.msk [vmem:[%s285 + $0xc9] sm:$0xff] %vm286, %v270
        %305 = vst.msk [vmem:[%s285 + $0xd9] sm:$0xff] %vm286, %v271
        %306 = vst.msk [vmem:[%s285 + $0xe1] sm:$0xff] %vm286, %v272
        %307 = vst.msk [vmem:[%s285 + $0xf1] sm:$0xff] %vm286, %v273
        %308 = vst.msk [vmem:[%s285 + $0xf9] sm:$0xff] %vm286, %v274
        %309 = vst.msk [vmem:[%s285 + $0x109] sm:$0xff] %vm286, %v275
        %310 = vst.msk [vmem:[%s285 + $0x111] sm:$0xff] %vm286, %v276
        %311 = vst.msk [vmem:[%s285 + $0x121] sm:$0xff] %vm286, %v277
        %312 = vst.msk [vmem:[%s285 + $0x129] sm:$0xff] %vm286, %v278
        %313 = vst.msk [vmem:[%s285 + $0x139] sm:$0xff] %vm286, %v279
        %314 = vst.msk [vmem:[%s285 + $0x141] sm:$0xff] %vm286, %v280
        %315 = vst.msk [vmem:[%s285 + $0x151] sm:$0xff] %vm286, %v281
        %316 = vst.msk [vmem:[%s285 + $0x159] sm:$0xff] %vm286, %v282
        %317 = vst.msk [vmem:[%s285 + $0x169] sm:$0xff] %vm286, %v283
        %318 = vst.msk [vmem:[%s285 + $0x171] sm:$0xff] %vm286, %v284
        %v319 = vld [vmem:[#allocation2] sm:$0xff]
        %v320 = vld [vmem:[#allocation2 + $0x8] sm:$0xff]
        %v321 = vld [vmem:[#allocation2 + $0x18] sm:$0xff]
        %v322 = vld [vmem:[#allocation2 + $0x20] sm:$0xff]
        %v323 = vld [vmem:[#allocation2 + $0x30] sm:$0xff]
        %v324 = vld [vmem:[#allocation2 + $0x38] sm:$0xff]
        %v325 = vld [vmem:[#allocation2 + $0x48] sm:$0xff]
        %v326 = vld [vmem:[#allocation2 + $0x50] sm:$0xff]
        %v327 = vld [vmem:[#allocation2 + $0x60] sm:$0xff]
        %v328 = vld [vmem:[#allocation2 + $0x68] sm:$0xff]
        %v329 = vld [vmem:[#allocation2 + $0x78] sm:$0xff]
        %v330 = vld [vmem:[#allocation2 + $0x80] sm:$0xff]
        %v331 = vld [vmem:[#allocation2 + $0x90] sm:$0xff]
        %v332 = vld [vmem:[#allocation2 + $0x98] sm:$0xff]
        %v333 = vld [vmem:[#allocation2 + $0xa8] sm:$0xff]
        %v334 = vld [vmem:[#allocation2 + $0xb0] sm:$0xff]
        %v335 = vld [vmem:[#allocation2 + $0xc0] sm:$0xff]
        %v336 = vld [vmem:[#allocation2 + $0xc8] sm:$0xff]
        %v337 = vld [vmem:[#allocation2 + $0xd8] sm:$0xff]
        %v338 = vld [vmem:[#allocation2 + $0xe0] sm:$0xff]
        %v339 = vld [vmem:[#allocation2 + $0xf0] sm:$0xff]
        %v340 = vld [vmem:[#allocation2 + $0xf8] sm:$0xff]
        %v341 = vld [vmem:[#allocation2 + $0x108] sm:$0xff]
        %v342 = vld [vmem:[#allocation2 + $0x110] sm:$0xff]
        %v343 = vld [vmem:[#allocation2 + $0x120] sm:$0xff]
        %v344 = vld [vmem:[#allocation2 + $0x128] sm:$0xff]
        %v345 = vld [vmem:[#allocation2 + $0x138] sm:$0xff]
        %v346 = vld [vmem:[#allocation2 + $0x140] sm:$0xff]
        %v347 = vld [vmem:[#allocation2 + $0x150] sm:$0xff]
        %v348 = vld [vmem:[#allocation2 + $0x158] sm:$0xff]
        %v349 = vld [vmem:[#allocation2 + $0x168] sm:$0xff]
        %v350 = vld [vmem:[#allocation2 + $0x170] sm:$0xff]
        %351 = vst [vmem:[#allocation3] sm:$0xff] %v319
        %352 = vst [vmem:[#allocation3 + $0x48] sm:$0xff] %v320
        %353 = vst [vmem:[#allocation3 + $0x90] sm:$0xff] %v321
        %354 = vst [vmem:[#allocation3 + $0xd8] sm:$0xff] %v322
        %355 = vst [vmem:[#allocation3 + $0x120] sm:$0xff] %v323
        %356 = vst [vmem:[#allocation3 + $0x168] sm:$0xff] %v324
        %357 = vst [vmem:[#allocation3 + $0x1b0] sm:$0xff] %v325
        %358 = vst [vmem:[#allocation3 + $0x1f8] sm:$0xff] %v326
        %359 = vst [vmem:[#allocation3 + $0x240] sm:$0xff] %v327
        %360 = vst [vmem:[#allocation3 + $0x288] sm:$0xff] %v328
        %361 = vst [vmem:[#allocation3 + $0x2d0] sm:$0xff] %v329
        %362 = vst [vmem:[#allocation3 + $0x318] sm:$0xff] %v330
        %363 = vst [vmem:[#allocation3 + $0x360] sm:$0xff] %v331
        %364 = vst [vmem:[#allocation3 + $0x3a8] sm:$0xff] %v332
        %365 = vst [vmem:[#allocation3 + $0x3f0] sm:$0xff] %v333
        %366 = vst [vmem:[#allocation3 + $0x438] sm:$0xff] %v334
        %367 = vst [vmem:[#allocation3 + $0x480] sm:$0xff] %v335
        %368 = vst [vmem:[#allocation3 + $0x4c8] sm:$0xff] %v336
        %369 = vst [vmem:[#allocation3 + $0x510] sm:$0xff] %v337
        %370 = vst [vmem:[#allocation3 + $0x558] sm:$0xff] %v338
        %371 = vst [vmem:[#allocation3 + $0x5a0] sm:$0xff] %v339
        %372 = vst [vmem:[#allocation3 + $0x5e8] sm:$0xff] %v340
        %373 = vst [vmem:[#allocation3 + $0x630] sm:$0xff] %v341
        %374 = vst [vmem:[#allocation3 + $0x678] sm:$0xff] %v342
        %375 = vst [vmem:[#allocation3 + $0x6c0] sm:$0xff] %v343
        %376 = vst [vmem:[#allocation3 + $0x708] sm:$0xff] %v344
        %377 = vst [vmem:[#allocation3 + $0x750] sm:$0xff] %v345
        %378 = vst [vmem:[#allocation3 + $0x798] sm:$0xff] %v346
        %379 = vst [vmem:[#allocation3 + $0x7e0] sm:$0xff] %v347
        %380 = vst [vmem:[#allocation3 + $0x828] sm:$0xff] %v348
        %381 = vst [vmem:[#allocation3 + $0x870] sm:$0xff] %v349
        %382 = vst [vmem:[#allocation3 + $0x8b8] sm:$0xff] %v350
        %v383 = vld [vmem:[#allocation2 + $0x1] sm:$0xff]
        %v384 = vld [vmem:[#allocation2 + $0x9] sm:$0xff]
        %v385 = vld [vmem:[#allocation2 + $0x19] sm:$0xff]
        %v386 = vld [vmem:[#allocation2 + $0x21] sm:$0xff]
        %v387 = vld [vmem:[#allocation2 + $0x31] sm:$0xff]
        %v388 = vld [vmem:[#allocation2 + $0x39] sm:$0xff]
        %v389 = vld [vmem:[#allocation2 + $0x49] sm:$0xff]
        %v390 = vld [vmem:[#allocation2 + $0x51] sm:$0xff]
        %v391 = vld [vmem:[#allocation2 + $0x61] sm:$0xff]
        %v392 = vld [vmem:[#allocation2 + $0x69] sm:$0xff]
        %v393 = vld [vmem:[#allocation2 + $0x79] sm:$0xff]
        %v394 = vld [vmem:[#allocation2 + $0x81] sm:$0xff]
        %v395 = vld [vmem:[#allocation2 + $0x91] sm:$0xff]
        %v396 = vld [vmem:[#allocation2 + $0x99] sm:$0xff]
        %v397 = vld [vmem:[#allocation2 + $0xa9] sm:$0xff]
        %v398 = vld [vmem:[#allocation2 + $0xb1] sm:$0xff]
        %v399 = vld [vmem:[#allocation2 + $0xc1] sm:$0xff]
        %v400 = vld [vmem:[#allocation2 + $0xc9] sm:$0xff]
        %v401 = vld [vmem:[#allocation2 + $0xd9] sm:$0xff]
        %v402 = vld [vmem:[#allocation2 + $0xe1] sm:$0xff]
        %v403 = vld [vmem:[#allocation2 + $0xf1] sm:$0xff]
        %v404 = vld [vmem:[#allocation2 + $0xf9] sm:$0xff]
        %v405 = vld [vmem:[#allocation2 + $0x109] sm:$0xff]
        %v406 = vld [vmem:[#allocation2 + $0x111] sm:$0xff]
        %v407 = vld [vmem:[#allocation2 + $0x121] sm:$0xff]
        %v408 = vld [vmem:[#allocation2 + $0x129] sm:$0xff]
        %v409 = vld [vmem:[#allocation2 + $0x139] sm:$0xff]
        %v410 = vld [vmem:[#allocation2 + $0x141] sm:$0xff]
        %v411 = vld [vmem:[#allocation2 + $0x151] sm:$0xff]
        %v412 = vld [vmem:[#allocation2 + $0x159] sm:$0xff]
        %v413 = vld [vmem:[#allocation2 + $0x169] sm:$0xff]
        %v414 = vld [vmem:[#allocation2 + $0x171] sm:$0xff]
        %415 = vst [vmem:[#allocation3 + $0x8] sm:$0xff] %v383
        %416 = vst [vmem:[#allocation3 + $0x50] sm:$0xff] %v384
        %417 = vst [vmem:[#allocation3 + $0x98] sm:$0xff] %v385
        %418 = vst [vmem:[#allocation3 + $0xe0] sm:$0xff] %v386
        %419 = vst [vmem:[#allocation3 + $0x128] sm:$0xff] %v387
        %420 = vst [vmem:[#allocation3 + $0x170] sm:$0xff] %v388
        %421 = vst [vmem:[#allocation3 + $0x1b8] sm:$0xff] %v389
        %422 = vst [vmem:[#allocation3 + $0x200] sm:$0xff] %v390
        %423 = vst [vmem:[#allocation3 + $0x248] sm:$0xff] %v391
        %424 = vst [vmem:[#allocation3 + $0x290] sm:$0xff] %v392
        %425 = vst [vmem:[#allocation3 + $0x2d8] sm:$0xff] %v393
        %426 = vst [vmem:[#allocation3 + $0x320] sm:$0xff] %v394
        %427 = vst [vmem:[#allocation3 + $0x368] sm:$0xff] %v395
        %428 = vst [vmem:[#allocation3 + $0x3b0] sm:$0xff] %v396
        %429 = vst [vmem:[#allocation3 + $0x3f8] sm:$0xff] %v397
        %430 = vst [vmem:[#allocation3 + $0x440] sm:$0xff] %v398
        %431 = vst [vmem:[#allocation3 + $0x488] sm:$0xff] %v399
        %432 = vst [vmem:[#allocation3 + $0x4d0] sm:$0xff] %v400
        %433 = vst [vmem:[#allocation3 + $0x518] sm:$0xff] %v401
        %434 = vst [vmem:[#allocation3 + $0x560] sm:$0xff] %v402
        %435 = vst [vmem:[#allocation3 + $0x5a8] sm:$0xff] %v403
        %436 = vst [vmem:[#allocation3 + $0x5f0] sm:$0xff] %v404
        %437 = vst [vmem:[#allocation3 + $0x638] sm:$0xff] %v405
        %438 = vst [vmem:[#allocation3 + $0x680] sm:$0xff] %v406
        %439 = vst [vmem:[#allocation3 + $0x6c8] sm:$0xff] %v407
        %440 = vst [vmem:[#allocation3 + $0x710] sm:$0xff] %v408
        %441 = vst [vmem:[#allocation3 + $0x758] sm:$0xff] %v409
        %442 = vst [vmem:[#allocation3 + $0x7a0] sm:$0xff] %v410
        %443 = vst [vmem:[#allocation3 + $0x7e8] sm:$0xff] %v411
        %444 = vst [vmem:[#allocation3 + $0x830] sm:$0xff] %v412
        %445 = vst [vmem:[#allocation3 + $0x878] sm:$0xff] %v413
        %446 = vst [vmem:[#allocation3 + $0x8c0] sm:$0xff] %v414
        %v447 = vld [vmem:[#allocation2 + $0x2] sm:$0xff]
        %v448 = vld [vmem:[#allocation2 + $0xa] sm:$0xff]
        %v449 = vld [vmem:[#allocation2 + $0x1a] sm:$0xff]
        %v450 = vld [vmem:[#allocation2 + $0x22] sm:$0xff]
        %v451 = vld [vmem:[#allocation2 + $0x32] sm:$0xff]
        %v452 = vld [vmem:[#allocation2 + $0x3a] sm:$0xff]
        %v453 = vld [vmem:[#allocation2 + $0x4a] sm:$0xff]
        %v454 = vld [vmem:[#allocation2 + $0x52] sm:$0xff]
        %v455 = vld [vmem:[#allocation2 + $0x62] sm:$0xff]
        %v456 = vld [vmem:[#allocation2 + $0x6a] sm:$0xff]
        %v457 = vld [vmem:[#allocation2 + $0x7a] sm:$0xff]
        %v458 = vld [vmem:[#allocation2 + $0x82] sm:$0xff]
        %v459 = vld [vmem:[#allocation2 + $0x92] sm:$0xff]
        %v460 = vld [vmem:[#allocation2 + $0x9a] sm:$0xff]
        %v461 = vld [vmem:[#allocation2 + $0xaa] sm:$0xff]
        %v462 = vld [vmem:[#allocation2 + $0xb2] sm:$0xff]
        %v463 = vld [vmem:[#allocation2 + $0xc2] sm:$0xff]
        %v464 = vld [vmem:[#allocation2 + $0xca] sm:$0xff]
        %v465 = vld [vmem:[#allocation2 + $0xda] sm:$0xff]
        %v466 = vld [vmem:[#allocation2 + $0xe2] sm:$0xff]
        %v467 = vld [vmem:[#allocation2 + $0xf2] sm:$0xff]
        %v468 = vld [vmem:[#allocation2 + $0xfa] sm:$0xff]
        %v469 = vld [vmem:[#allocation2 + $0x10a] sm:$0xff]
        %v470 = vld [vmem:[#allocation2 + $0x112] sm:$0xff]
        %v471 = vld [vmem:[#allocation2 + $0x122] sm:$0xff]
        %v472 = vld [vmem:[#allocation2 + $0x12a] sm:$0xff]
        %v473 = vld [vmem:[#allocation2 + $0x13a] sm:$0xff]
        %v474 = vld [vmem:[#allocation2 + $0x142] sm:$0xff]
        %v475 = vld [vmem:[#allocation2 + $0x152] sm:$0xff]
        %v476 = vld [vmem:[#allocation2 + $0x15a] sm:$0xff]
        %v477 = vld [vmem:[#allocation2 + $0x16a] sm:$0xff]
        %v478 = vld [vmem:[#allocation2 + $0x172] sm:$0xff]
        %479 = vst [vmem:[#allocation3 + $0x10] sm:$0xff] %v447
        %480 = vst [vmem:[#allocation3 + $0x58] sm:$0xff] %v448
        %481 = vst [vmem:[#allocation3 + $0xa0] sm:$0xff] %v449
        %482 = vst [vmem:[#allocation3 + $0xe8] sm:$0xff] %v450
        %483 = vst [vmem:[#allocation3 + $0x130] sm:$0xff] %v451
        %484 = vst [vmem:[#allocation3 + $0x178] sm:$0xff] %v452
        %485 = vst [vmem:[#allocation3 + $0x1c0] sm:$0xff] %v453
        %486 = vst [vmem:[#allocation3 + $0x208] sm:$0xff] %v454
        %487 = vst [vmem:[#allocation3 + $0x250] sm:$0xff] %v455
        %488 = vst [vmem:[#allocation3 + $0x298] sm:$0xff] %v456
        %489 = vst [vmem:[#allocation3 + $0x2e0] sm:$0xff] %v457
        %490 = vst [vmem:[#allocation3 + $0x328] sm:$0xff] %v458
        %491 = vst [vmem:[#allocation3 + $0x370] sm:$0xff] %v459
        %492 = vst [vmem:[#allocation3 + $0x3b8] sm:$0xff] %v460
        %493 = vst [vmem:[#allocation3 + $0x400] sm:$0xff] %v461
        %494 = vst [vmem:[#allocation3 + $0x448] sm:$0xff] %v462
        %495 = vst [vmem:[#allocation3 + $0x490] sm:$0xff] %v463
        %496 = vst [vmem:[#allocation3 + $0x4d8] sm:$0xff] %v464
        %497 = vst [vmem:[#allocation3 + $0x520] sm:$0xff] %v465
        %498 = vst [vmem:[#allocation3 + $0x568] sm:$0xff] %v466
        %499 = vst [vmem:[#allocation3 + $0x5b0] sm:$0xff] %v467
        %500 = vst [vmem:[#allocation3 + $0x5f8] sm:$0xff] %v468
        %501 = vst [vmem:[#allocation3 + $0x640] sm:$0xff] %v469
        %502 = vst [vmem:[#allocation3 + $0x688] sm:$0xff] %v470
        %503 = vst [vmem:[#allocation3 + $0x6d0] sm:$0xff] %v471
        %504 = vst [vmem:[#allocation3 + $0x718] sm:$0xff] %v472
        %505 = vst [vmem:[#allocation3 + $0x760] sm:$0xff] %v473
        %506 = vst [vmem:[#allocation3 + $0x7a8] sm:$0xff] %v474
        %507 = vst [vmem:[#allocation3 + $0x7f0] sm:$0xff] %v475
        %508 = vst [vmem:[#allocation3 + $0x838] sm:$0xff] %v476
        %509 = vst [vmem:[#allocation3 + $0x880] sm:$0xff] %v477
        %510 = vst [vmem:[#allocation3 + $0x8c8] sm:$0xff] %v478
        %v511 = vld [vmem:[%s285] sm:$0xff]
        %v512 = vld [vmem:[%s285 + $0x8] sm:$0xff]
        %v513 = vld [vmem:[%s285 + $0x18] sm:$0xff]
        %v514 = vld [vmem:[%s285 + $0x20] sm:$0xff]
        %v515 = vld [vmem:[%s285 + $0x30] sm:$0xff]
        %v516 = vld [vmem:[%s285 + $0x38] sm:$0xff]
        %v517 = vld [vmem:[%s285 + $0x48] sm:$0xff]
        %v518 = vld [vmem:[%s285 + $0x50] sm:$0xff]
        %v519 = vld [vmem:[%s285 + $0x60] sm:$0xff]
        %v520 = vld [vmem:[%s285 + $0x68] sm:$0xff]
        %v521 = vld [vmem:[%s285 + $0x78] sm:$0xff]
        %v522 = vld [vmem:[%s285 + $0x80] sm:$0xff]
        %v523 = vld [vmem:[%s285 + $0x90] sm:$0xff]
        %v524 = vld [vmem:[%s285 + $0x98] sm:$0xff]
        %v525 = vld [vmem:[%s285 + $0xa8] sm:$0xff]
        %v526 = vld [vmem:[%s285 + $0xb0] sm:$0xff]
        %v527 = vld [vmem:[%s285 + $0xc0] sm:$0xff]
        %v528 = vld [vmem:[%s285 + $0xc8] sm:$0xff]
        %v529 = vld [vmem:[%s285 + $0xd8] sm:$0xff]
        %v530 = vld [vmem:[%s285 + $0xe0] sm:$0xff]
        %v531 = vld [vmem:[%s285 + $0xf0] sm:$0xff]
        %v532 = vld [vmem:[%s285 + $0xf8] sm:$0xff]
        %v533 = vld [vmem:[%s285 + $0x108] sm:$0xff]
        %v534 = vld [vmem:[%s285 + $0x110] sm:$0xff]
        %v535 = vld [vmem:[%s285 + $0x120] sm:$0xff]
        %v536 = vld [vmem:[%s285 + $0x128] sm:$0xff]
        %v537 = vld [vmem:[%s285 + $0x138] sm:$0xff]
        %v538 = vld [vmem:[%s285 + $0x140] sm:$0xff]
        %v539 = vld [vmem:[%s285 + $0x150] sm:$0xff]
        %v540 = vld [vmem:[%s285 + $0x158] sm:$0xff]
        %v541 = vld [vmem:[%s285 + $0x168] sm:$0xff]
        %v542 = vld [vmem:[%s285 + $0x170] sm:$0xff]
        %543 = vst [vmem:[#allocation3 + $0x18] sm:$0xff] %v511
        %544 = vst [vmem:[#allocation3 + $0x60] sm:$0xff] %v512
        %545 = vst [vmem:[#allocation3 + $0xa8] sm:$0xff] %v513
        %546 = vst [vmem:[#allocation3 + $0xf0] sm:$0xff] %v514
        %547 = vst [vmem:[#allocation3 + $0x138] sm:$0xff] %v515
        %548 = vst [vmem:[#allocation3 + $0x180] sm:$0xff] %v516
        %549 = vst [vmem:[#allocation3 + $0x1c8] sm:$0xff] %v517
        %550 = vst [vmem:[#allocation3 + $0x210] sm:$0xff] %v518
        %551 = vst [vmem:[#allocation3 + $0x258] sm:$0xff] %v519
        %552 = vst [vmem:[#allocation3 + $0x2a0] sm:$0xff] %v520
        %553 = vst [vmem:[#allocation3 + $0x2e8] sm:$0xff] %v521
        %554 = vst [vmem:[#allocation3 + $0x330] sm:$0xff] %v522
        %555 = vst [vmem:[#allocation3 + $0x378] sm:$0xff] %v523
        %556 = vst [vmem:[#allocation3 + $0x3c0] sm:$0xff] %v524
        %557 = vst [vmem:[#allocation3 + $0x408] sm:$0xff] %v525
        %558 = vst [vmem:[#allocation3 + $0x450] sm:$0xff] %v526
        %559 = vst [vmem:[#allocation3 + $0x498] sm:$0xff] %v527
        %560 = vst [vmem:[#allocation3 + $0x4e0] sm:$0xff] %v528
        %561 = vst [vmem:[#allocation3 + $0x528] sm:$0xff] %v529
        %562 = vst [vmem:[#allocation3 + $0x570] sm:$0xff] %v530
        %563 = vst [vmem:[#allocation3 + $0x5b8] sm:$0xff] %v531
        %564 = vst [vmem:[#allocation3 + $0x600] sm:$0xff] %v532
        %565 = vst [vmem:[#allocation3 + $0x648] sm:$0xff] %v533
        %566 = vst [vmem:[#allocation3 + $0x690] sm:$0xff] %v534
        %567 = vst [vmem:[#allocation3 + $0x6d8] sm:$0xff] %v535
        %568 = vst [vmem:[#allocation3 + $0x720] sm:$0xff] %v536
        %569 = vst [vmem:[#allocation3 + $0x768] sm:$0xff] %v537
        %570 = vst [vmem:[#allocation3 + $0x7b0] sm:$0xff] %v538
        %571 = vst [vmem:[#allocation3 + $0x7f8] sm:$0xff] %v539
        %572 = vst [vmem:[#allocation3 + $0x840] sm:$0xff] %v540
        %573 = vst [vmem:[#allocation3 + $0x888] sm:$0xff] %v541
        %574 = vst [vmem:[#allocation3 + $0x8d0] sm:$0xff] %v542
        %v575 = vld [vmem:[%s285 + $0x1] sm:$0xff]
        %v576 = vld [vmem:[%s285 + $0x9] sm:$0xff]
        %v577 = vld [vmem:[%s285 + $0x19] sm:$0xff]
        %v578 = vld [vmem:[%s285 + $0x21] sm:$0xff]
        %v579 = vld [vmem:[%s285 + $0x31] sm:$0xff]
        %v580 = vld [vmem:[%s285 + $0x39] sm:$0xff]
        %v581 = vld [vmem:[%s285 + $0x49] sm:$0xff]
        %v582 = vld [vmem:[%s285 + $0x51] sm:$0xff]
        %v583 = vld [vmem:[%s285 + $0x61] sm:$0xff]
        %v584 = vld [vmem:[%s285 + $0x69] sm:$0xff]
        %v585 = vld [vmem:[%s285 + $0x79] sm:$0xff]
        %v586 = vld [vmem:[%s285 + $0x81] sm:$0xff]
        %v587 = vld [vmem:[%s285 + $0x91] sm:$0xff]
        %v588 = vld [vmem:[%s285 + $0x99] sm:$0xff]
        %v589 = vld [vmem:[%s285 + $0xa9] sm:$0xff]
        %v590 = vld [vmem:[%s285 + $0xb1] sm:$0xff]
        %v591 = vld [vmem:[%s285 + $0xc1] sm:$0xff]
        %v592 = vld [vmem:[%s285 + $0xc9] sm:$0xff]
        %v593 = vld [vmem:[%s285 + $0xd9] sm:$0xff]
        %v594 = vld [vmem:[%s285 + $0xe1] sm:$0xff]
        %v595 = vld [vmem:[%s285 + $0xf1] sm:$0xff]
        %v596 = vld [vmem:[%s285 + $0xf9] sm:$0xff]
        %v597 = vld [vmem:[%s285 + $0x109] sm:$0xff]
        %v598 = vld [vmem:[%s285 + $0x111] sm:$0xff]
        %v599 = vld [vmem:[%s285 + $0x121] sm:$0xff]
        %v600 = vld [vmem:[%s285 + $0x129] sm:$0xff]
        %v601 = vld [vmem:[%s285 + $0x139] sm:$0xff]
        %v602 = vld [vmem:[%s285 + $0x141] sm:$0xff]
        %v603 = vld [vmem:[%s285 + $0x151] sm:$0xff]
        %v604 = vld [vmem:[%s285 + $0x159] sm:$0xff]
        %v605 = vld [vmem:[%s285 + $0x169] sm:$0xff]
        %v606 = vld [vmem:[%s285 + $0x171] sm:$0xff]
        %607 = vst [vmem:[#allocation3 + $0x20] sm:$0xff] %v575
        %608 = vst [vmem:[#allocation3 + $0x68] sm:$0xff] %v576
        %609 = vst [vmem:[#allocation3 + $0xb0] sm:$0xff] %v577
        %610 = vst [vmem:[#allocation3 + $0xf8] sm:$0xff] %v578
        %611 = vst [vmem:[#allocation3 + $0x140] sm:$0xff] %v579
        %612 = vst [vmem:[#allocation3 + $0x188] sm:$0xff] %v580
        %613 = vst [vmem:[#allocation3 + $0x1d0] sm:$0xff] %v581
        %614 = vst [vmem:[#allocation3 + $0x218] sm:$0xff] %v582
        %615 = vst [vmem:[#allocation3 + $0x260] sm:$0xff] %v583
        %616 = vst [vmem:[#allocation3 + $0x2a8] sm:$0xff] %v584
        %617 = vst [vmem:[#allocation3 + $0x2f0] sm:$0xff] %v585
        %618 = vst [vmem:[#allocation3 + $0x338] sm:$0xff] %v586
        %619 = vst [vmem:[#allocation3 + $0x380] sm:$0xff] %v587
        %620 = vst [vmem:[#allocation3 + $0x3c8] sm:$0xff] %v588
        %621 = vst [vmem:[#allocation3 + $0x410] sm:$0xff] %v589
        %622 = vst [vmem:[#allocation3 + $0x458] sm:$0xff] %v590
        %623 = vst [vmem:[#allocation3 + $0x4a0] sm:$0xff] %v591
        %624 = vst [vmem:[#allocation3 + $0x4e8] sm:$0xff] %v592
        %625 = vst [vmem:[#allocation3 + $0x530] sm:$0xff] %v593
        %626 = vst [vmem:[#allocation3 + $0x578] sm:$0xff] %v594
        %627 = vst [vmem:[#allocation3 + $0x5c0] sm:$0xff] %v595
        %628 = vst [vmem:[#allocation3 + $0x608] sm:$0xff] %v596
        %629 = vst [vmem:[#allocation3 + $0x650] sm:$0xff] %v597
        %630 = vst [vmem:[#allocation3 + $0x698] sm:$0xff] %v598
        %631 = vst [vmem:[#allocation3 + $0x6e0] sm:$0xff] %v599
        %632 = vst [vmem:[#allocation3 + $0x728] sm:$0xff] %v600
        %633 = vst [vmem:[#allocation3 + $0x770] sm:$0xff] %v601
        %634 = vst [vmem:[#allocation3 + $0x7b8] sm:$0xff] %v602
        %635 = vst [vmem:[#allocation3 + $0x800] sm:$0xff] %v603
        %636 = vst [vmem:[#allocation3 + $0x848] sm:$0xff] %v604
        %637 = vst [vmem:[#allocation3 + $0x890] sm:$0xff] %v605
        %638 = vst [vmem:[#allocation3 + $0x8d8] sm:$0xff] %v606
        %v639 = vld [vmem:[%s285 + $0x2] sm:$0xff]
        %v640 = vld [vmem:[%s285 + $0xa] sm:$0xff]
        %v641 = vld [vmem:[%s285 + $0x1a] sm:$0xff]
        %v642 = vld [vmem:[%s285 + $0x22] sm:$0xff]
        %v643 = vld [vmem:[%s285 + $0x32] sm:$0xff]
        %v644 = vld [vmem:[%s285 + $0x3a] sm:$0xff]
        %v645 = vld [vmem:[%s285 + $0x4a] sm:$0xff]
        %v646 = vld [vmem:[%s285 + $0x52] sm:$0xff]
        %v647 = vld [vmem:[%s285 + $0x62] sm:$0xff]
        %v648 = vld [vmem:[%s285 + $0x6a] sm:$0xff]
        %v649 = vld [vmem:[%s285 + $0x7a] sm:$0xff]
        %v650 = vld [vmem:[%s285 + $0x82] sm:$0xff]
        %v651 = vld [vmem:[%s285 + $0x92] sm:$0xff]
        %v652 = vld [vmem:[%s285 + $0x9a] sm:$0xff]
        %v653 = vld [vmem:[%s285 + $0xaa] sm:$0xff]
        %v654 = vld [vmem:[%s285 + $0xb2] sm:$0xff]
        %v655 = vld [vmem:[%s285 + $0xc2] sm:$0xff]
        %v656 = vld [vmem:[%s285 + $0xca] sm:$0xff]
        %v657 = vld [vmem:[%s285 + $0xda] sm:$0xff]
        %v658 = vld [vmem:[%s285 + $0xe2] sm:$0xff]
        %v659 = vld [vmem:[%s285 + $0xf2] sm:$0xff]
        %v660 = vld [vmem:[%s285 + $0xfa] sm:$0xff]
        %v661 = vld [vmem:[%s285 + $0x10a] sm:$0xff]
        %v662 = vld [vmem:[%s285 + $0x112] sm:$0xff]
        %v663 = vld [vmem:[%s285 + $0x122] sm:$0xff]
        %v664 = vld [vmem:[%s285 + $0x12a] sm:$0xff]
        %v665 = vld [vmem:[%s285 + $0x13a] sm:$0xff]
        %v666 = vld [vmem:[%s285 + $0x142] sm:$0xff]
        %v667 = vld [vmem:[%s285 + $0x152] sm:$0xff]
        %v668 = vld [vmem:[%s285 + $0x15a] sm:$0xff]
        %v669 = vld [vmem:[%s285 + $0x16a] sm:$0xff]
        %v670 = vld [vmem:[%s285 + $0x172] sm:$0xff]
        %671 = vst [vmem:[#allocation3 + $0x28] sm:$0xff] %v639
        %672 = vst [vmem:[#allocation3 + $0x70] sm:$0xff] %v640
        %673 = vst [vmem:[#allocation3 + $0xb8] sm:$0xff] %v641
        %674 = vst [vmem:[#allocation3 + $0x100] sm:$0xff] %v642
        %675 = vst [vmem:[#allocation3 + $0x148] sm:$0xff] %v643
        %676 = vst [vmem:[#allocation3 + $0x190] sm:$0xff] %v644
        %677 = vst [vmem:[#allocation3 + $0x1d8] sm:$0xff] %v645
        %678 = vst [vmem:[#allocation3 + $0x220] sm:$0xff] %v646
        %679 = vst [vmem:[#allocation3 + $0x268] sm:$0xff] %v647
        %680 = vst [vmem:[#allocation3 + $0x2b0] sm:$0xff] %v648
        %681 = vst [vmem:[#allocation3 + $0x2f8] sm:$0xff] %v649
        %682 = vst [vmem:[#allocation3 + $0x340] sm:$0xff] %v650
        %683 = vst [vmem:[#allocation3 + $0x388] sm:$0xff] %v651
        %684 = vst [vmem:[#allocation3 + $0x3d0] sm:$0xff] %v652
        %685 = vst [vmem:[#allocation3 + $0x418] sm:$0xff] %v653
        %686 = vst [vmem:[#allocation3 + $0x460] sm:$0xff] %v654
        %687 = vst [vmem:[#allocation3 + $0x4a8] sm:$0xff] %v655
        %688 = vst [vmem:[#allocation3 + $0x4f0] sm:$0xff] %v656
        %689 = vst [vmem:[#allocation3 + $0x538] sm:$0xff] %v657
        %690 = vst [vmem:[#allocation3 + $0x580] sm:$0xff] %v658
        %691 = vst [vmem:[#allocation3 + $0x5c8] sm:$0xff] %v659
        %692 = vst [vmem:[#allocation3 + $0x610] sm:$0xff] %v660
        %693 = vst [vmem:[#allocation3 + $0x658] sm:$0xff] %v661
        %694 = vst [vmem:[#allocation3 + $0x6a0] sm:$0xff] %v662
        %695 = vst [vmem:[#allocation3 + $0x6e8] sm:$0xff] %v663
        %696 = vst [vmem:[#allocation3 + $0x730] sm:$0xff] %v664
        %697 = vst [vmem:[#allocation3 + $0x778] sm:$0xff] %v665
        %698 = vst [vmem:[#allocation3 + $0x7c0] sm:$0xff] %v666
        %699 = vst [vmem:[#allocation3 + $0x808] sm:$0xff] %v667
        %700 = vst [vmem:[#allocation3 + $0x850] sm:$0xff] %v668
        %701 = vst [vmem:[#allocation3 + $0x898] sm:$0xff] %v669
        %702 = vst [vmem:[#allocation3 + $0x8e0] sm:$0xff] %v670
        %s703 = scalar_lea.vmem [#allocation2], 48
        %v704 = vld [vmem:[%s703] sm:$0xff]
        %v705 = vld [vmem:[%s703 + $0x8] sm:$0xff]
        %v706 = vld [vmem:[%s703 + $0x18] sm:$0xff]
        %v707 = vld [vmem:[%s703 + $0x20] sm:$0xff]
        %v708 = vld [vmem:[%s703 + $0x30] sm:$0xff]
        %v709 = vld [vmem:[%s703 + $0x38] sm:$0xff]
        %v710 = vld [vmem:[%s703 + $0x48] sm:$0xff]
        %v711 = vld [vmem:[%s703 + $0x50] sm:$0xff]
        %v712 = vld [vmem:[%s703 + $0x60] sm:$0xff]
        %v713 = vld [vmem:[%s703 + $0x68] sm:$0xff]
        %v714 = vld [vmem:[%s703 + $0x78] sm:$0xff]
        %v715 = vld [vmem:[%s703 + $0x80] sm:$0xff]
        %v716 = vld [vmem:[%s703 + $0x90] sm:$0xff]
        %v717 = vld [vmem:[%s703 + $0x98] sm:$0xff]
        %v718 = vld [vmem:[%s703 + $0xa8] sm:$0xff]
        %v719 = vld [vmem:[%s703 + $0xb0] sm:$0xff]
        %v720 = vld [vmem:[%s703 + $0xc0] sm:$0xff]
        %v721 = vld [vmem:[%s703 + $0xc8] sm:$0xff]
        %v722 = vld [vmem:[%s703 + $0xd8] sm:$0xff]
        %v723 = vld [vmem:[%s703 + $0xe0] sm:$0xff]
        %v724 = vld [vmem:[%s703 + $0xf0] sm:$0xff]
        %v725 = vld [vmem:[%s703 + $0xf8] sm:$0xff]
        %v726 = vld [vmem:[%s703 + $0x108] sm:$0xff]
        %v727 = vld [vmem:[%s703 + $0x110] sm:$0xff]
        %v728 = vld [vmem:[%s703 + $0x120] sm:$0xff]
        %v729 = vld [vmem:[%s703 + $0x128] sm:$0xff]
        %v730 = vld [vmem:[%s703 + $0x138] sm:$0xff]
        %v731 = vld [vmem:[%s703 + $0x140] sm:$0xff]
        %v732 = vld [vmem:[%s703 + $0x150] sm:$0xff]
        %v733 = vld [vmem:[%s703 + $0x158] sm:$0xff]
        %v734 = vld [vmem:[%s703 + $0x168] sm:$0xff]
        %v735 = vld [vmem:[%s703 + $0x170] sm:$0xff]
        %736 = vst [vmem:[#allocation3 + $0x30] sm:$0xff] %v704
        %737 = vst [vmem:[#allocation3 + $0x78] sm:$0xff] %v705
        %738 = vst [vmem:[#allocation3 + $0xc0] sm:$0xff] %v706
        %739 = vst [vmem:[#allocation3 + $0x108] sm:$0xff] %v707
        %740 = vst [vmem:[#allocation3 + $0x150] sm:$0xff] %v708
        %741 = vst [vmem:[#allocation3 + $0x198] sm:$0xff] %v709
        %742 = vst [vmem:[#allocation3 + $0x1e0] sm:$0xff] %v710
        %743 = vst [vmem:[#allocation3 + $0x228] sm:$0xff] %v711
        %744 = vst [vmem:[#allocation3 + $0x270] sm:$0xff] %v712
        %745 = vst [vmem:[#allocation3 + $0x2b8] sm:$0xff] %v713
        %746 = vst [vmem:[#allocation3 + $0x300] sm:$0xff] %v714
        %747 = vst [vmem:[#allocation3 + $0x348] sm:$0xff] %v715
        %748 = vst [vmem:[#allocation3 + $0x390] sm:$0xff] %v716
        %749 = vst [vmem:[#allocation3 + $0x3d8] sm:$0xff] %v717
        %750 = vst [vmem:[#allocation3 + $0x420] sm:$0xff] %v718
        %751 = vst [vmem:[#allocation3 + $0x468] sm:$0xff] %v719
        %752 = vst [vmem:[#allocation3 + $0x4b0] sm:$0xff] %v720
        %753 = vst [vmem:[#allocation3 + $0x4f8] sm:$0xff] %v721
        %754 = vst [vmem:[#allocation3 + $0x540] sm:$0xff] %v722
        %755 = vst [vmem:[#allocation3 + $0x588] sm:$0xff] %v723
        %756 = vst [vmem:[#allocation3 + $0x5d0] sm:$0xff] %v724
        %757 = vst [vmem:[#allocation3 + $0x618] sm:$0xff] %v725
        %758 = vst [vmem:[#allocation3 + $0x660] sm:$0xff] %v726
        %759 = vst [vmem:[#allocation3 + $0x6a8] sm:$0xff] %v727
        %760 = vst [vmem:[#allocation3 + $0x6f0] sm:$0xff] %v728
        %761 = vst [vmem:[#allocation3 + $0x738] sm:$0xff] %v729
        %762 = vst [vmem:[#allocation3 + $0x780] sm:$0xff] %v730
        %763 = vst [vmem:[#allocation3 + $0x7c8] sm:$0xff] %v731
        %764 = vst [vmem:[#allocation3 + $0x810] sm:$0xff] %v732
        %765 = vst [vmem:[#allocation3 + $0x858] sm:$0xff] %v733
        %766 = vst [vmem:[#allocation3 + $0x8a0] sm:$0xff] %v734
        %767 = vst [vmem:[#allocation3 + $0x8e8] sm:$0xff] %v735
        %v768 = vld [vmem:[%s703 + $0x1] sm:$0xff]
        %v769 = vld [vmem:[%s703 + $0x9] sm:$0xff]
        %v770 = vld [vmem:[%s703 + $0x19] sm:$0xff]
        %v771 = vld [vmem:[%s703 + $0x21] sm:$0xff]
        %v772 = vld [vmem:[%s703 + $0x31] sm:$0xff]
        %v773 = vld [vmem:[%s703 + $0x39] sm:$0xff]
        %v774 = vld [vmem:[%s703 + $0x49] sm:$0xff]
        %v775 = vld [vmem:[%s703 + $0x51] sm:$0xff]
        %v776 = vld [vmem:[%s703 + $0x61] sm:$0xff]
        %v777 = vld [vmem:[%s703 + $0x69] sm:$0xff]
        %v778 = vld [vmem:[%s703 + $0x79] sm:$0xff]
        %v779 = vld [vmem:[%s703 + $0x81] sm:$0xff]
        %v780 = vld [vmem:[%s703 + $0x91] sm:$0xff]
        %v781 = vld [vmem:[%s703 + $0x99] sm:$0xff]
        %v782 = vld [vmem:[%s703 + $0xa9] sm:$0xff]
        %v783 = vld [vmem:[%s703 + $0xb1] sm:$0xff]
        %v784 = vld [vmem:[%s703 + $0xc1] sm:$0xff]
        %v785 = vld [vmem:[%s703 + $0xc9] sm:$0xff]
        %v786 = vld [vmem:[%s703 + $0xd9] sm:$0xff]
        %v787 = vld [vmem:[%s703 + $0xe1] sm:$0xff]
        %v788 = vld [vmem:[%s703 + $0xf1] sm:$0xff]
        %v789 = vld [vmem:[%s703 + $0xf9] sm:$0xff]
        %v790 = vld [vmem:[%s703 + $0x109] sm:$0xff]
        %v791 = vld [vmem:[%s703 + $0x111] sm:$0xff]
        %v792 = vld [vmem:[%s703 + $0x121] sm:$0xff]
        %v793 = vld [vmem:[%s703 + $0x129] sm:$0xff]
        %v794 = vld [vmem:[%s703 + $0x139] sm:$0xff]
        %v795 = vld [vmem:[%s703 + $0x141] sm:$0xff]
        %v796 = vld [vmem:[%s703 + $0x151] sm:$0xff]
        %v797 = vld [vmem:[%s703 + $0x159] sm:$0xff]
        %v798 = vld [vmem:[%s703 + $0x169] sm:$0xff]
        %v799 = vld [vmem:[%s703 + $0x171] sm:$0xff]
        %800 = vst [vmem:[#allocation3 + $0x38] sm:$0xff] %v768
        %801 = vst [vmem:[#allocation3 + $0x80] sm:$0xff] %v769
        %802 = vst [vmem:[#allocation3 + $0xc8] sm:$0xff] %v770
        %803 = vst [vmem:[#allocation3 + $0x110] sm:$0xff] %v771
        %804 = vst [vmem:[#allocation3 + $0x158] sm:$0xff] %v772
        %805 = vst [vmem:[#allocation3 + $0x1a0] sm:$0xff] %v773
        %806 = vst [vmem:[#allocation3 + $0x1e8] sm:$0xff] %v774
        %807 = vst [vmem:[#allocation3 + $0x230] sm:$0xff] %v775
        %808 = vst [vmem:[#allocation3 + $0x278] sm:$0xff] %v776
        %809 = vst [vmem:[#allocation3 + $0x2c0] sm:$0xff] %v777
        %810 = vst [vmem:[#allocation3 + $0x308] sm:$0xff] %v778
        %811 = vst [vmem:[#allocation3 + $0x350] sm:$0xff] %v779
        %812 = vst [vmem:[#allocation3 + $0x398] sm:$0xff] %v780
        %813 = vst [vmem:[#allocation3 + $0x3e0] sm:$0xff] %v781
        %814 = vst [vmem:[#allocation3 + $0x428] sm:$0xff] %v782
        %815 = vst [vmem:[#allocation3 + $0x470] sm:$0xff] %v783
        %816 = vst [vmem:[#allocation3 + $0x4b8] sm:$0xff] %v784
        %817 = vst [vmem:[#allocation3 + $0x500] sm:$0xff] %v785
        %818 = vst [vmem:[#allocation3 + $0x548] sm:$0xff] %v786
        %819 = vst [vmem:[#allocation3 + $0x590] sm:$0xff] %v787
        %820 = vst [vmem:[#allocation3 + $0x5d8] sm:$0xff] %v788
        %821 = vst [vmem:[#allocation3 + $0x620] sm:$0xff] %v789
        %822 = vst [vmem:[#allocation3 + $0x668] sm:$0xff] %v790
        %823 = vst [vmem:[#allocation3 + $0x6b0] sm:$0xff] %v791
        %824 = vst [vmem:[#allocation3 + $0x6f8] sm:$0xff] %v792
        %825 = vst [vmem:[#allocation3 + $0x740] sm:$0xff] %v793
        %826 = vst [vmem:[#allocation3 + $0x788] sm:$0xff] %v794
        %827 = vst [vmem:[#allocation3 + $0x7d0] sm:$0xff] %v795
        %828 = vst [vmem:[#allocation3 + $0x818] sm:$0xff] %v796
        %829 = vst [vmem:[#allocation3 + $0x860] sm:$0xff] %v797
        %830 = vst [vmem:[#allocation3 + $0x8a8] sm:$0xff] %v798
        %831 = vst [vmem:[#allocation3 + $0x8f0] sm:$0xff] %v799
        %v832 = vld [vmem:[%s703 + $0x2] sm:$0xff]
        %v833 = vld [vmem:[%s703 + $0xa] sm:$0xff]
        %v834 = vld [vmem:[%s703 + $0x1a] sm:$0xff]
        %v835 = vld [vmem:[%s703 + $0x22] sm:$0xff]
        %v836 = vld [vmem:[%s703 + $0x32] sm:$0xff]
        %v837 = vld [vmem:[%s703 + $0x3a] sm:$0xff]
        %v838 = vld [vmem:[%s703 + $0x4a] sm:$0xff]
        %v839 = vld [vmem:[%s703 + $0x52] sm:$0xff]
        %v840 = vld [vmem:[%s703 + $0x62] sm:$0xff]
        %v841 = vld [vmem:[%s703 + $0x6a] sm:$0xff]
        %v842 = vld [vmem:[%s703 + $0x7a] sm:$0xff]
        %v843 = vld [vmem:[%s703 + $0x82] sm:$0xff]
        %v844 = vld [vmem:[%s703 + $0x92] sm:$0xff]
        %v845 = vld [vmem:[%s703 + $0x9a] sm:$0xff]
        %v846 = vld [vmem:[%s703 + $0xaa] sm:$0xff]
        %v847 = vld [vmem:[%s703 + $0xb2] sm:$0xff]
        %v848 = vld [vmem:[%s703 + $0xc2] sm:$0xff]
        %v849 = vld [vmem:[%s703 + $0xca] sm:$0xff]
        %v850 = vld [vmem:[%s703 + $0xda] sm:$0xff]
        %v851 = vld [vmem:[%s703 + $0xe2] sm:$0xff]
        %v852 = vld [vmem:[%s703 + $0xf2] sm:$0xff]
        %v853 = vld [vmem:[%s703 + $0xfa] sm:$0xff]
        %v854 = vld [vmem:[%s703 + $0x10a] sm:$0xff]
        %v855 = vld [vmem:[%s703 + $0x112] sm:$0xff]
        %v856 = vld [vmem:[%s703 + $0x122] sm:$0xff]
        %v857 = vld [vmem:[%s703 + $0x12a] sm:$0xff]
        %v858 = vld [vmem:[%s703 + $0x13a] sm:$0xff]
        %v859 = vld [vmem:[%s703 + $0x142] sm:$0xff]
        %v860 = vld [vmem:[%s703 + $0x152] sm:$0xff]
        %v861 = vld [vmem:[%s703 + $0x15a] sm:$0xff]
        %v862 = vld [vmem:[%s703 + $0x16a] sm:$0xff]
        %v863 = vld [vmem:[%s703 + $0x172] sm:$0xff]
        %864 = vst [vmem:[#allocation3 + $0x40] sm:$0xff] %v832
        %865 = vst [vmem:[#allocation3 + $0x88] sm:$0xff] %v833
        %866 = vst [vmem:[#allocation3 + $0xd0] sm:$0xff] %v834
        %867 = vst [vmem:[#allocation3 + $0x118] sm:$0xff] %v835
        %868 = vst [vmem:[#allocation3 + $0x160] sm:$0xff] %v836
        %869 = vst [vmem:[#allocation3 + $0x1a8] sm:$0xff] %v837
        %870 = vst [vmem:[#allocation3 + $0x1f0] sm:$0xff] %v838
        %871 = vst [vmem:[#allocation3 + $0x238] sm:$0xff] %v839
        %872 = vst [vmem:[#allocation3 + $0x280] sm:$0xff] %v840
        %873 = vst [vmem:[#allocation3 + $0x2c8] sm:$0xff] %v841
        %874 = vst [vmem:[#allocation3 + $0x310] sm:$0xff] %v842
        %875 = vst [vmem:[#allocation3 + $0x358] sm:$0xff] %v843
        %876 = vst [vmem:[#allocation3 + $0x3a0] sm:$0xff] %v844
        %877 = vst [vmem:[#allocation3 + $0x3e8] sm:$0xff] %v845
        %878 = vst [vmem:[#allocation3 + $0x430] sm:$0xff] %v846
        %879 = vst [vmem:[#allocation3 + $0x478] sm:$0xff] %v847
        %880 = vst [vmem:[#allocation3 + $0x4c0] sm:$0xff] %v848
        %881 = vst [vmem:[#allocation3 + $0x508] sm:$0xff] %v849
        %882 = vst [vmem:[#allocation3 + $0x550] sm:$0xff] %v850
        %883 = vst [vmem:[#allocation3 + $0x598] sm:$0xff] %v851
        %884 = vst [vmem:[#allocation3 + $0x5e0] sm:$0xff] %v852
        %885 = vst [vmem:[#allocation3 + $0x628] sm:$0xff] %v853
        %886 = vst [vmem:[#allocation3 + $0x670] sm:$0xff] %v854
        %887 = vst [vmem:[#allocation3 + $0x6b8] sm:$0xff] %v855
        %888 = vst [vmem:[#allocation3 + $0x700] sm:$0xff] %v856
        %889 = vst [vmem:[#allocation3 + $0x748] sm:$0xff] %v857
        %890 = vst [vmem:[#allocation3 + $0x790] sm:$0xff] %v858
        %891 = vst [vmem:[#allocation3 + $0x7d8] sm:$0xff] %v859
        %892 = vst [vmem:[#allocation3 + $0x820] sm:$0xff] %v860
        %893 = vst [vmem:[#allocation3 + $0x868] sm:$0xff] %v861
        %894 = vst [vmem:[#allocation3 + $0x8b0] sm:$0xff] %v862
        %895 = vst [vmem:[#allocation3 + $0x8f8] sm:$0xff] %v863
        %v896 = vld [vmem:[#allocation3] sm:$0xff]
        %v897 = vld [vmem:[#allocation3 + $0x8] sm:$0xff]
        %v898 = vld [vmem:[#allocation3 + $0x10] sm:$0xff]
        %v899 = vld [vmem:[#allocation3 + $0x18] sm:$0xff]
        %v900 = vld [vmem:[#allocation3 + $0x20] sm:$0xff]
        %v901 = vld [vmem:[#allocation3 + $0x28] sm:$0xff]
        %v902 = vld [vmem:[#allocation3 + $0x30] sm:$0xff]
        %v903 = vld [vmem:[#allocation3 + $0x38] sm:$0xff]
        %v904 = vld [vmem:[#allocation3 + $0x40] sm:$0xff]
        %v905 = vld [vmem:[#allocation3 + $0x48] sm:$0xff]
        %v906 = vld [vmem:[#allocation3 + $0x50] sm:$0xff]
        %v907 = vld [vmem:[#allocation3 + $0x58] sm:$0xff]
        %v908 = vld [vmem:[#allocation3 + $0x60] sm:$0xff]
        %v909 = vld [vmem:[#allocation3 + $0x68] sm:$0xff]
        %v910 = vld [vmem:[#allocation3 + $0x70] sm:$0xff]
        %v911 = vld [vmem:[#allocation3 + $0x78] sm:$0xff]
        %v912 = vld [vmem:[#allocation3 + $0x80] sm:$0xff]
        %v913 = vld [vmem:[#allocation3 + $0x88] sm:$0xff]
        %v914 = vld [vmem:[#allocation3 + $0x90] sm:$0xff]
        %v915 = vld [vmem:[#allocation3 + $0x98] sm:$0xff]
        %v916 = vld [vmem:[#allocation3 + $0xa0] sm:$0xff]
        %v917 = vld [vmem:[#allocation3 + $0xa8] sm:$0xff]
        %v918 = vld [vmem:[#allocation3 + $0xb0] sm:$0xff]
        %v919 = vld [vmem:[#allocation3 + $0xb8] sm:$0xff]
        %v920 = vld [vmem:[#allocation3 + $0xc0] sm:$0xff]
        %v921 = vld [vmem:[#allocation3 + $0xc8] sm:$0xff]
        %v922 = vld [vmem:[#allocation3 + $0xd0] sm:$0xff]
        %v923 = vld [vmem:[#allocation3 + $0xd8] sm:$0xff]
        %v924 = vld [vmem:[#allocation3 + $0xe0] sm:$0xff]
        %v925 = vld [vmem:[#allocation3 + $0xe8] sm:$0xff]
        %v926 = vld [vmem:[#allocation3 + $0xf0] sm:$0xff]
        %v927 = vld [vmem:[#allocation3 + $0xf8] sm:$0xff]
        %v928 = vld [vmem:[#allocation3 + $0x100] sm:$0xff]
        %v929 = vld [vmem:[#allocation3 + $0x108] sm:$0xff]
        %v930 = vld [vmem:[#allocation3 + $0x110] sm:$0xff]
        %v931 = vld [vmem:[#allocation3 + $0x118] sm:$0xff]
        %v932 = vld [vmem:[#allocation3 + $0x120] sm:$0xff]
        %v933 = vld [vmem:[#allocation3 + $0x128] sm:$0xff]
        %v934 = vld [vmem:[#allocation3 + $0x130] sm:$0xff]
        %v935 = vld [vmem:[#allocation3 + $0x138] sm:$0xff]
        %v936 = vld [vmem:[#allocation3 + $0x140] sm:$0xff]
        %v937 = vld [vmem:[#allocation3 + $0x148] sm:$0xff]
        %v938 = vld [vmem:[#allocation3 + $0x150] sm:$0xff]
        %v939 = vld [vmem:[#allocation3 + $0x158] sm:$0xff]
        %v940 = vld [vmem:[#allocation3 + $0x160] sm:$0xff]
        %v941 = vld [vmem:[#allocation3 + $0x168] sm:$0xff]
        %v942 = vld [vmem:[#allocation3 + $0x170] sm:$0xff]
        %v943 = vld [vmem:[#allocation3 + $0x178] sm:$0xff]
        %v944 = vld [vmem:[#allocation3 + $0x180] sm:$0xff]
        %v945 = vld [vmem:[#allocation3 + $0x188] sm:$0xff]
        %v946 = vld [vmem:[#allocation3 + $0x190] sm:$0xff]
        %v947 = vld [vmem:[#allocation3 + $0x198] sm:$0xff]
        %v948 = vld [vmem:[#allocation3 + $0x1a0] sm:$0xff]
        %v949 = vld [vmem:[#allocation3 + $0x1a8] sm:$0xff]
        %v950 = vld [vmem:[#allocation3 + $0x1b0] sm:$0xff]
        %v951 = vld [vmem:[#allocation3 + $0x1b8] sm:$0xff]
        %v952 = vld [vmem:[#allocation3 + $0x1c0] sm:$0xff]
        %v953 = vld [vmem:[#allocation3 + $0x1c8] sm:$0xff]
        %v954 = vld [vmem:[#allocation3 + $0x1d0] sm:$0xff]
        %v955 = vld [vmem:[#allocation3 + $0x1d8] sm:$0xff]
        %v956 = vld [vmem:[#allocation3 + $0x1e0] sm:$0xff]
        %v957 = vld [vmem:[#allocation3 + $0x1e8] sm:$0xff]
        %v958 = vld [vmem:[#allocation3 + $0x1f0] sm:$0xff]
        %v959 = vld [vmem:[#allocation3 + $0x1f8] sm:$0xff]
        %v960 = vld [vmem:[#allocation3 + $0x200] sm:$0xff]
        %v961 = vld [vmem:[#allocation3 + $0x208] sm:$0xff]
        %v962 = vld [vmem:[#allocation3 + $0x210] sm:$0xff]
        %v963 = vld [vmem:[#allocation3 + $0x218] sm:$0xff]
        %v964 = vld [vmem:[#allocation3 + $0x220] sm:$0xff]
        %v965 = vld [vmem:[#allocation3 + $0x228] sm:$0xff]
        %v966 = vld [vmem:[#allocation3 + $0x230] sm:$0xff]
        %v967 = vld [vmem:[#allocation3 + $0x238] sm:$0xff]
        %v968 = vld [vmem:[#allocation3 + $0x240] sm:$0xff]
        %v969 = vld [vmem:[#allocation3 + $0x248] sm:$0xff]
        %v970 = vld [vmem:[#allocation3 + $0x250] sm:$0xff]
        %v971 = vld [vmem:[#allocation3 + $0x258] sm:$0xff]
        %v972 = vld [vmem:[#allocation3 + $0x260] sm:$0xff]
        %v973 = vld [vmem:[#allocation3 + $0x268] sm:$0xff]
        %v974 = vld [vmem:[#allocation3 + $0x270] sm:$0xff]
        %v975 = vld [vmem:[#allocation3 + $0x278] sm:$0xff]
        %v976 = vld [vmem:[#allocation3 + $0x280] sm:$0xff]
        %v977 = vld [vmem:[#allocation3 + $0x288] sm:$0xff]
        %v978 = vld [vmem:[#allocation3 + $0x290] sm:$0xff]
        %v979 = vld [vmem:[#allocation3 + $0x298] sm:$0xff]
        %v980 = vld [vmem:[#allocation3 + $0x2a0] sm:$0xff]
        %v981 = vld [vmem:[#allocation3 + $0x2a8] sm:$0xff]
        %v982 = vld [vmem:[#allocation3 + $0x2b0] sm:$0xff]
        %v983 = vld [vmem:[#allocation3 + $0x2b8] sm:$0xff]
        %v984 = vld [vmem:[#allocation3 + $0x2c0] sm:$0xff]
        %v985 = vld [vmem:[#allocation3 + $0x2c8] sm:$0xff]
        %v986 = vld [vmem:[#allocation3 + $0x2d0] sm:$0xff]
        %v987 = vld [vmem:[#allocation3 + $0x2d8] sm:$0xff]
        %v988 = vld [vmem:[#allocation3 + $0x2e0] sm:$0xff]
        %v989 = vld [vmem:[#allocation3 + $0x2e8] sm:$0xff]
        %v990 = vld [vmem:[#allocation3 + $0x2f0] sm:$0xff]
        %v991 = vld [vmem:[#allocation3 + $0x2f8] sm:$0xff]
        %v992 = vld [vmem:[#allocation3 + $0x300] sm:$0xff]
        %v993 = vld [vmem:[#allocation3 + $0x308] sm:$0xff]
        %v994 = vld [vmem:[#allocation3 + $0x310] sm:$0xff]
        %v995 = vld [vmem:[#allocation3 + $0x318] sm:$0xff]
        %v996 = vld [vmem:[#allocation3 + $0x320] sm:$0xff]
        %v997 = vld [vmem:[#allocation3 + $0x328] sm:$0xff]
        %v998 = vld [vmem:[#allocation3 + $0x330] sm:$0xff]
        %v999 = vld [vmem:[#allocation3 + $0x338] sm:$0xff]
        %v1000 = vld [vmem:[#allocation3 + $0x340] sm:$0xff]
        %v1001 = vld [vmem:[#allocation3 + $0x348] sm:$0xff]
        %v1002 = vld [vmem:[#allocation3 + $0x350] sm:$0xff]
        %v1003 = vld [vmem:[#allocation3 + $0x358] sm:$0xff]
        %v1004 = vld [vmem:[#allocation3 + $0x360] sm:$0xff]
        %v1005 = vld [vmem:[#allocation3 + $0x368] sm:$0xff]
        %v1006 = vld [vmem:[#allocation3 + $0x370] sm:$0xff]
        %v1007 = vld [vmem:[#allocation3 + $0x378] sm:$0xff]
        %v1008 = vld [vmem:[#allocation3 + $0x380] sm:$0xff]
        %v1009 = vld [vmem:[#allocation3 + $0x388] sm:$0xff]
        %v1010 = vld [vmem:[#allocation3 + $0x390] sm:$0xff]
        %v1011 = vld [vmem:[#allocation3 + $0x398] sm:$0xff]
        %v1012 = vld [vmem:[#allocation3 + $0x3a0] sm:$0xff]
        %v1013 = vld [vmem:[#allocation3 + $0x3a8] sm:$0xff]
        %v1014 = vld [vmem:[#allocation3 + $0x3b0] sm:$0xff]
        %v1015 = vld [vmem:[#allocation3 + $0x3b8] sm:$0xff]
        %v1016 = vld [vmem:[#allocation3 + $0x3c0] sm:$0xff]
        %v1017 = vld [vmem:[#allocation3 + $0x3c8] sm:$0xff]
        %v1018 = vld [vmem:[#allocation3 + $0x3d0] sm:$0xff]
        %v1019 = vld [vmem:[#allocation3 + $0x3d8] sm:$0xff]
        %v1020 = vld [vmem:[#allocation3 + $0x3e0] sm:$0xff]
        %v1021 = vld [vmem:[#allocation3 + $0x3e8] sm:$0xff]
        %v1022 = vld [vmem:[#allocation3 + $0x3f0] sm:$0xff]
        %v1023 = vld [vmem:[#allocation3 + $0x3f8] sm:$0xff]
        %v1024 = vld [vmem:[#allocation3 + $0x400] sm:$0xff]
        %v1025 = vld [vmem:[#allocation3 + $0x408] sm:$0xff]
        %v1026 = vld [vmem:[#allocation3 + $0x410] sm:$0xff]
        %v1027 = vld [vmem:[#allocation3 + $0x418] sm:$0xff]
        %v1028 = vld [vmem:[#allocation3 + $0x420] sm:$0xff]
        %v1029 = vld [vmem:[#allocation3 + $0x428] sm:$0xff]
        %v1030 = vld [vmem:[#allocation3 + $0x430] sm:$0xff]
        %v1031 = vld [vmem:[#allocation3 + $0x438] sm:$0xff]
        %v1032 = vld [vmem:[#allocation3 + $0x440] sm:$0xff]
        %v1033 = vld [vmem:[#allocation3 + $0x448] sm:$0xff]
        %v1034 = vld [vmem:[#allocation3 + $0x450] sm:$0xff]
        %v1035 = vld [vmem:[#allocation3 + $0x458] sm:$0xff]
        %v1036 = vld [vmem:[#allocation3 + $0x460] sm:$0xff]
        %v1037 = vld [vmem:[#allocation3 + $0x468] sm:$0xff]
        %v1038 = vld [vmem:[#allocation3 + $0x470] sm:$0xff]
        %v1039 = vld [vmem:[#allocation3 + $0x478] sm:$0xff]
        %v1040 = vld [vmem:[#allocation3 + $0x480] sm:$0xff]
        %v1041 = vld [vmem:[#allocation3 + $0x488] sm:$0xff]
        %v1042 = vld [vmem:[#allocation3 + $0x490] sm:$0xff]
        %v1043 = vld [vmem:[#allocation3 + $0x498] sm:$0xff]
        %v1044 = vld [vmem:[#allocation3 + $0x4a0] sm:$0xff]
        %v1045 = vld [vmem:[#allocation3 + $0x4a8] sm:$0xff]
        %v1046 = vld [vmem:[#allocation3 + $0x4b0] sm:$0xff]
        %v1047 = vld [vmem:[#allocation3 + $0x4b8] sm:$0xff]
        %v1048 = vld [vmem:[#allocation3 + $0x4c0] sm:$0xff]
        %v1049 = vld [vmem:[#allocation3 + $0x4c8] sm:$0xff]
        %v1050 = vld [vmem:[#allocation3 + $0x4d0] sm:$0xff]
        %v1051 = vld [vmem:[#allocation3 + $0x4d8] sm:$0xff]
        %v1052 = vld [vmem:[#allocation3 + $0x4e0] sm:$0xff]
        %v1053 = vld [vmem:[#allocation3 + $0x4e8] sm:$0xff]
        %v1054 = vld [vmem:[#allocation3 + $0x4f0] sm:$0xff]
        %v1055 = vld [vmem:[#allocation3 + $0x4f8] sm:$0xff]
        %v1056 = vld [vmem:[#allocation3 + $0x500] sm:$0xff]
        %v1057 = vld [vmem:[#allocation3 + $0x508] sm:$0xff]
        %v1058 = vld [vmem:[#allocation3 + $0x510] sm:$0xff]
        %v1059 = vld [vmem:[#allocation3 + $0x518] sm:$0xff]
        %v1060 = vld [vmem:[#allocation3 + $0x520] sm:$0xff]
        %v1061 = vld [vmem:[#allocation3 + $0x528] sm:$0xff]
        %v1062 = vld [vmem:[#allocation3 + $0x530] sm:$0xff]
        %v1063 = vld [vmem:[#allocation3 + $0x538] sm:$0xff]
        %v1064 = vld [vmem:[#allocation3 + $0x540] sm:$0xff]
        %v1065 = vld [vmem:[#allocation3 + $0x548] sm:$0xff]
        %v1066 = vld [vmem:[#allocation3 + $0x550] sm:$0xff]
        %v1067 = vld [vmem:[#allocation3 + $0x558] sm:$0xff]
        %v1068 = vld [vmem:[#allocation3 + $0x560] sm:$0xff]
        %v1069 = vld [vmem:[#allocation3 + $0x568] sm:$0xff]
        %v1070 = vld [vmem:[#allocation3 + $0x570] sm:$0xff]
        %v1071 = vld [vmem:[#allocation3 + $0x578] sm:$0xff]
        %v1072 = vld [vmem:[#allocation3 + $0x580] sm:$0xff]
        %v1073 = vld [vmem:[#allocation3 + $0x588] sm:$0xff]
        %v1074 = vld [vmem:[#allocation3 + $0x590] sm:$0xff]
        %v1075 = vld [vmem:[#allocation3 + $0x598] sm:$0xff]
        %v1076 = vld [vmem:[#allocation3 + $0x5a0] sm:$0xff]
        %v1077 = vld [vmem:[#allocation3 + $0x5a8] sm:$0xff]
        %v1078 = vld [vmem:[#allocation3 + $0x5b0] sm:$0xff]
        %v1079 = vld [vmem:[#allocation3 + $0x5b8] sm:$0xff]
        %v1080 = vld [vmem:[#allocation3 + $0x5c0] sm:$0xff]
        %v1081 = vld [vmem:[#allocation3 + $0x5c8] sm:$0xff]
        %v1082 = vld [vmem:[#allocation3 + $0x5d0] sm:$0xff]
        %v1083 = vld [vmem:[#allocation3 + $0x5d8] sm:$0xff]
        %v1084 = vld [vmem:[#allocation3 + $0x5e0] sm:$0xff]
        %v1085 = vld [vmem:[#allocation3 + $0x5e8] sm:$0xff]
        %v1086 = vld [vmem:[#allocation3 + $0x5f0] sm:$0xff]
        %v1087 = vld [vmem:[#allocation3 + $0x5f8] sm:$0xff]
        %v1088 = vld [vmem:[#allocation3 + $0x600] sm:$0xff]
        %v1089 = vld [vmem:[#allocation3 + $0x608] sm:$0xff]
        %v1090 = vld [vmem:[#allocation3 + $0x610] sm:$0xff]
        %v1091 = vld [vmem:[#allocation3 + $0x618] sm:$0xff]
        %v1092 = vld [vmem:[#allocation3 + $0x620] sm:$0xff]
        %v1093 = vld [vmem:[#allocation3 + $0x628] sm:$0xff]
        %v1094 = vld [vmem:[#allocation3 + $0x630] sm:$0xff]
        %v1095 = vld [vmem:[#allocation3 + $0x638] sm:$0xff]
        %v1096 = vld [vmem:[#allocation3 + $0x640] sm:$0xff]
        %v1097 = vld [vmem:[#allocation3 + $0x648] sm:$0xff]
        %v1098 = vld [vmem:[#allocation3 + $0x650] sm:$0xff]
        %v1099 = vld [vmem:[#allocation3 + $0x658] sm:$0xff]
        %v1100 = vld [vmem:[#allocation3 + $0x660] sm:$0xff]
        %v1101 = vld [vmem:[#allocation3 + $0x668] sm:$0xff]
        %v1102 = vld [vmem:[#allocation3 + $0x670] sm:$0xff]
        %v1103 = vld [vmem:[#allocation3 + $0x678] sm:$0xff]
        %v1104 = vld [vmem:[#allocation3 + $0x680] sm:$0xff]
        %v1105 = vld [vmem:[#allocation3 + $0x688] sm:$0xff]
        %v1106 = vld [vmem:[#allocation3 + $0x690] sm:$0xff]
        %v1107 = vld [vmem:[#allocation3 + $0x698] sm:$0xff]
        %v1108 = vld [vmem:[#allocation3 + $0x6a0] sm:$0xff]
        %v1109 = vld [vmem:[#allocation3 + $0x6a8] sm:$0xff]
        %v1110 = vld [vmem:[#allocation3 + $0x6b0] sm:$0xff]
        %v1111 = vld [vmem:[#allocation3 + $0x6b8] sm:$0xff]
        %v1112 = vld [vmem:[#allocation3 + $0x6c0] sm:$0xff]
        %v1113 = vld [vmem:[#allocation3 + $0x6c8] sm:$0xff]
        %v1114 = vld [vmem:[#allocation3 + $0x6d0] sm:$0xff]
        %v1115 = vld [vmem:[#allocation3 + $0x6d8] sm:$0xff]
        %v1116 = vld [vmem:[#allocation3 + $0x6e0] sm:$0xff]
        %v1117 = vld [vmem:[#allocation3 + $0x6e8] sm:$0xff]
        %v1118 = vld [vmem:[#allocation3 + $0x6f0] sm:$0xff]
        %v1119 = vld [vmem:[#allocation3 + $0x6f8] sm:$0xff]
        %v1120 = vld [vmem:[#allocation3 + $0x700] sm:$0xff]
        %v1121 = vld [vmem:[#allocation3 + $0x708] sm:$0xff]
        %v1122 = vld [vmem:[#allocation3 + $0x710] sm:$0xff]
        %v1123 = vld [vmem:[#allocation3 + $0x718] sm:$0xff]
        %v1124 = vld [vmem:[#allocation3 + $0x720] sm:$0xff]
        %v1125 = vld [vmem:[#allocation3 + $0x728] sm:$0xff]
        %v1126 = vld [vmem:[#allocation3 + $0x730] sm:$0xff]
        %v1127 = vld [vmem:[#allocation3 + $0x738] sm:$0xff]
        %v1128 = vld [vmem:[#allocation3 + $0x740] sm:$0xff]
        %v1129 = vld [vmem:[#allocation3 + $0x748] sm:$0xff]
        %v1130 = vld [vmem:[#allocation3 + $0x750] sm:$0xff]
        %v1131 = vld [vmem:[#allocation3 + $0x758] sm:$0xff]
        %v1132 = vld [vmem:[#allocation3 + $0x760] sm:$0xff]
        %v1133 = vld [vmem:[#allocation3 + $0x768] sm:$0xff]
        %v1134 = vld [vmem:[#allocation3 + $0x770] sm:$0xff]
        %v1135 = vld [vmem:[#allocation3 + $0x778] sm:$0xff]
        %v1136 = vld [vmem:[#allocation3 + $0x780] sm:$0xff]
        %v1137 = vld [vmem:[#allocation3 + $0x788] sm:$0xff]
        %v1138 = vld [vmem:[#allocation3 + $0x790] sm:$0xff]
        %v1139 = vld [vmem:[#allocation3 + $0x798] sm:$0xff]
        %v1140 = vld [vmem:[#allocation3 + $0x7a0] sm:$0xff]
        %v1141 = vld [vmem:[#allocation3 + $0x7a8] sm:$0xff]
        %v1142 = vld [vmem:[#allocation3 + $0x7b0] sm:$0xff]
        %v1143 = vld [vmem:[#allocation3 + $0x7b8] sm:$0xff]
        %v1144 = vld [vmem:[#allocation3 + $0x7c0] sm:$0xff]
        %v1145 = vld [vmem:[#allocation3 + $0x7c8] sm:$0xff]
        %v1146 = vld [vmem:[#allocation3 + $0x7d0] sm:$0xff]
        %v1147 = vld [vmem:[#allocation3 + $0x7d8] sm:$0xff]
        %v1148 = vld [vmem:[#allocation3 + $0x7e0] sm:$0xff]
        %v1149 = vld [vmem:[#allocation3 + $0x7e8] sm:$0xff]
        %v1150 = vld [vmem:[#allocation3 + $0x7f0] sm:$0xff]
        %v1151 = vld [vmem:[#allocation3 + $0x7f8] sm:$0xff]
        %v1152 = vld [vmem:[#allocation3 + $0x800] sm:$0xff]
        %v1153 = vld [vmem:[#allocation3 + $0x808] sm:$0xff]
        %v1154 = vld [vmem:[#allocation3 + $0x810] sm:$0xff]
        %v1155 = vld [vmem:[#allocation3 + $0x818] sm:$0xff]
        %v1156 = vld [vmem:[#allocation3 + $0x820] sm:$0xff]
        %v1157 = vld [vmem:[#allocation3 + $0x828] sm:$0xff]
        %v1158 = vld [vmem:[#allocation3 + $0x830] sm:$0xff]
        %v1159 = vld [vmem:[#allocation3 + $0x838] sm:$0xff]
        %v1160 = vld [vmem:[#allocation3 + $0x840] sm:$0xff]
        %v1161 = vld [vmem:[#allocation3 + $0x848] sm:$0xff]
        %v1162 = vld [vmem:[#allocation3 + $0x850] sm:$0xff]
        %v1163 = vld [vmem:[#allocation3 + $0x858] sm:$0xff]
        %v1164 = vld [vmem:[#allocation3 + $0x860] sm:$0xff]
        %v1165 = vld [vmem:[#allocation3 + $0x868] sm:$0xff]
        %v1166 = vld [vmem:[#allocation3 + $0x870] sm:$0xff]
        %v1167 = vld [vmem:[#allocation3 + $0x878] sm:$0xff]
        %v1168 = vld [vmem:[#allocation3 + $0x880] sm:$0xff]
        %v1169 = vld [vmem:[#allocation3 + $0x888] sm:$0xff]
        %v1170 = vld [vmem:[#allocation3 + $0x890] sm:$0xff]
        %v1171 = vld [vmem:[#allocation3 + $0x898] sm:$0xff]
        %v1172 = vld [vmem:[#allocation3 + $0x8a0] sm:$0xff]
        %v1173 = vld [vmem:[#allocation3 + $0x8a8] sm:$0xff]
        %v1174 = vld [vmem:[#allocation3 + $0x8b0] sm:$0xff]
        %v1175 = vld [vmem:[#allocation3 + $0x8b8] sm:$0xff]
        %v1176 = vld [vmem:[#allocation3 + $0x8c0] sm:$0xff]
        %v1177 = vld [vmem:[#allocation3 + $0x8c8] sm:$0xff]
        %v1178 = vld [vmem:[#allocation3 + $0x8d0] sm:$0xff]
        %v1179 = vld [vmem:[#allocation3 + $0x8d8] sm:$0xff]
        %v1180 = vld [vmem:[#allocation3 + $0x8e0] sm:$0xff]
        %v1181 = vld [vmem:[#allocation3 + $0x8e8] sm:$0xff]
        %v1182 = vld [vmem:[#allocation3 + $0x8f0] sm:$0xff]
        %v1183 = vld [vmem:[#allocation3 + $0x8f8] sm:$0xff]
        %v1184 = vld [vmem:[#allocation4] sm:$0xff]
        %v1185 = vld [vmem:[#allocation4 + $0x8] sm:$0xff]
        %v1186 = vld [vmem:[#allocation4 + $0x10] sm:$0xff]
        %v1187 = vld [vmem:[#allocation4 + $0x18] sm:$0xff]
        %v1188 = vld [vmem:[#allocation4 + $0x20] sm:$0xff]
        %v1189 = vld [vmem:[#allocation4 + $0x28] sm:$0xff]
        %v1190 = vld [vmem:[#allocation4 + $0x30] sm:$0xff]
        %v1191 = vld [vmem:[#allocation4 + $0x38] sm:$0xff]
        %v1192 = vld [vmem:[#allocation4 + $0x40] sm:$0xff]
        %v1193 = vld [vmem:[#allocation4 + $0x48] sm:$0xff]
        %v1194 = vld [vmem:[#allocation4 + $0x50] sm:$0xff]
        %v1195 = vld [vmem:[#allocation4 + $0x58] sm:$0xff]
        %v1196 = vld [vmem:[#allocation4 + $0x60] sm:$0xff]
        %v1197 = vld [vmem:[#allocation4 + $0x68] sm:$0xff]
        %v1198 = vld [vmem:[#allocation4 + $0x70] sm:$0xff]
        %v1199 = vld [vmem:[#allocation4 + $0x78] sm:$0xff]
        %v1200 = vld [vmem:[#allocation4 + $0x80] sm:$0xff]
        %v1201 = vld [vmem:[#allocation4 + $0x88] sm:$0xff]
        %v1202 = vld [vmem:[#allocation4 + $0x90] sm:$0xff]
        %v1203 = vld [vmem:[#allocation4 + $0x98] sm:$0xff]
        %v1204 = vld [vmem:[#allocation4 + $0xa0] sm:$0xff]
        %v1205 = vld [vmem:[#allocation4 + $0xa8] sm:$0xff]
        %v1206 = vld [vmem:[#allocation4 + $0xb0] sm:$0xff]
        %v1207 = vld [vmem:[#allocation4 + $0xb8] sm:$0xff]
        %v1208 = vld [vmem:[#allocation4 + $0xc0] sm:$0xff]
        %v1209 = vld [vmem:[#allocation4 + $0xc8] sm:$0xff]
        %v1210 = vld [vmem:[#allocation4 + $0xd0] sm:$0xff]
        %v1211 = vld [vmem:[#allocation4 + $0xd8] sm:$0xff]
        %v1212 = vld [vmem:[#allocation4 + $0xe0] sm:$0xff]
        %v1213 = vld [vmem:[#allocation4 + $0xe8] sm:$0xff]
        %v1214 = vld [vmem:[#allocation4 + $0xf0] sm:$0xff]
        %v1215 = vld [vmem:[#allocation4 + $0xf8] sm:$0xff]
        %v1216 = vld [vmem:[#allocation4 + $0x100] sm:$0xff]
        %v1217 = vld [vmem:[#allocation4 + $0x108] sm:$0xff]
        %v1218 = vld [vmem:[#allocation4 + $0x110] sm:$0xff]
        %v1219 = vld [vmem:[#allocation4 + $0x118] sm:$0xff]
        %v1220 = vld [vmem:[#allocation4 + $0x120] sm:$0xff]
        %v1221 = vld [vmem:[#allocation4 + $0x128] sm:$0xff]
        %v1222 = vld [vmem:[#allocation4 + $0x130] sm:$0xff]
        %v1223 = vld [vmem:[#allocation4 + $0x138] sm:$0xff]
        %v1224 = vld [vmem:[#allocation4 + $0x140] sm:$0xff]
        %v1225 = vld [vmem:[#allocation4 + $0x148] sm:$0xff]
        %v1226 = vld [vmem:[#allocation4 + $0x150] sm:$0xff]
        %v1227 = vld [vmem:[#allocation4 + $0x158] sm:$0xff]
        %v1228 = vld [vmem:[#allocation4 + $0x160] sm:$0xff]
        %v1229 = vld [vmem:[#allocation4 + $0x168] sm:$0xff]
        %v1230 = vld [vmem:[#allocation4 + $0x170] sm:$0xff]
        %v1231 = vld [vmem:[#allocation4 + $0x178] sm:$0xff]
        %v1232 = vld [vmem:[#allocation4 + $0x180] sm:$0xff]
        %v1233 = vld [vmem:[#allocation4 + $0x188] sm:$0xff]
        %v1234 = vld [vmem:[#allocation4 + $0x190] sm:$0xff]
        %v1235 = vld [vmem:[#allocation4 + $0x198] sm:$0xff]
        %v1236 = vld [vmem:[#allocation4 + $0x1a0] sm:$0xff]
        %v1237 = vld [vmem:[#allocation4 + $0x1a8] sm:$0xff]
        %v1238 = vld [vmem:[#allocation4 + $0x1b0] sm:$0xff]
        %v1239 = vld [vmem:[#allocation4 + $0x1b8] sm:$0xff]
        %v1240 = vld [vmem:[#allocation4 + $0x1c0] sm:$0xff]
        %v1241 = vld [vmem:[#allocation4 + $0x1c8] sm:$0xff]
        %v1242 = vld [vmem:[#allocation4 + $0x1d0] sm:$0xff]
        %v1243 = vld [vmem:[#allocation4 + $0x1d8] sm:$0xff]
        %v1244 = vld [vmem:[#allocation4 + $0x1e0] sm:$0xff]
        %v1245 = vld [vmem:[#allocation4 + $0x1e8] sm:$0xff]
        %v1246 = vld [vmem:[#allocation4 + $0x1f0] sm:$0xff]
        %v1247 = vld [vmem:[#allocation4 + $0x1f8] sm:$0xff]
        %v1248 = vld [vmem:[#allocation4 + $0x200] sm:$0xff]
        %v1249 = vld [vmem:[#allocation4 + $0x208] sm:$0xff]
        %v1250 = vld [vmem:[#allocation4 + $0x210] sm:$0xff]
        %v1251 = vld [vmem:[#allocation4 + $0x218] sm:$0xff]
        %v1252 = vld [vmem:[#allocation4 + $0x220] sm:$0xff]
        %v1253 = vld [vmem:[#allocation4 + $0x228] sm:$0xff]
        %v1254 = vld [vmem:[#allocation4 + $0x230] sm:$0xff]
        %v1255 = vld [vmem:[#allocation4 + $0x238] sm:$0xff]
        %v1256 = vld [vmem:[#allocation4 + $0x240] sm:$0xff]
        %v1257 = vld [vmem:[#allocation4 + $0x248] sm:$0xff]
        %v1258 = vld [vmem:[#allocation4 + $0x250] sm:$0xff]
        %v1259 = vld [vmem:[#allocation4 + $0x258] sm:$0xff]
        %v1260 = vld [vmem:[#allocation4 + $0x260] sm:$0xff]
        %v1261 = vld [vmem:[#allocation4 + $0x268] sm:$0xff]
        %v1262 = vld [vmem:[#allocation4 + $0x270] sm:$0xff]
        %v1263 = vld [vmem:[#allocation4 + $0x278] sm:$0xff]
        %v1264 = vld [vmem:[#allocation4 + $0x280] sm:$0xff]
        %v1265 = vld [vmem:[#allocation4 + $0x288] sm:$0xff]
        %v1266 = vld [vmem:[#allocation4 + $0x290] sm:$0xff]
        %v1267 = vld [vmem:[#allocation4 + $0x298] sm:$0xff]
        %v1268 = vld [vmem:[#allocation4 + $0x2a0] sm:$0xff]
        %v1269 = vld [vmem:[#allocation4 + $0x2a8] sm:$0xff]
        %v1270 = vld [vmem:[#allocation4 + $0x2b0] sm:$0xff]
        %v1271 = vld [vmem:[#allocation4 + $0x2b8] sm:$0xff]
        %v1272 = vld [vmem:[#allocation4 + $0x2c0] sm:$0xff]
        %v1273 = vld [vmem:[#allocation4 + $0x2c8] sm:$0xff]
        %v1274 = vld [vmem:[#allocation4 + $0x2d0] sm:$0xff]
        %v1275 = vld [vmem:[#allocation4 + $0x2d8] sm:$0xff]
        %v1276 = vld [vmem:[#allocation4 + $0x2e0] sm:$0xff]
        %v1277 = vld [vmem:[#allocation4 + $0x2e8] sm:$0xff]
        %v1278 = vld [vmem:[#allocation4 + $0x2f0] sm:$0xff]
        %v1279 = vld [vmem:[#allocation4 + $0x2f8] sm:$0xff]
        %v1280 = vld [vmem:[#allocation4 + $0x300] sm:$0xff]
        %v1281 = vld [vmem:[#allocation4 + $0x308] sm:$0xff]
        %v1282 = vld [vmem:[#allocation4 + $0x310] sm:$0xff]
        %v1283 = vld [vmem:[#allocation4 + $0x318] sm:$0xff]
        %v1284 = vld [vmem:[#allocation4 + $0x320] sm:$0xff]
        %v1285 = vld [vmem:[#allocation4 + $0x328] sm:$0xff]
        %v1286 = vld [vmem:[#allocation4 + $0x330] sm:$0xff]
        %v1287 = vld [vmem:[#allocation4 + $0x338] sm:$0xff]
        %v1288 = vld [vmem:[#allocation4 + $0x340] sm:$0xff]
        %v1289 = vld [vmem:[#allocation4 + $0x348] sm:$0xff]
        %v1290 = vld [vmem:[#allocation4 + $0x350] sm:$0xff]
        %v1291 = vld [vmem:[#allocation4 + $0x358] sm:$0xff]
        %v1292 = vld [vmem:[#allocation4 + $0x360] sm:$0xff]
        %v1293 = vld [vmem:[#allocation4 + $0x368] sm:$0xff]
        %v1294 = vld [vmem:[#allocation4 + $0x370] sm:$0xff]
        %v1295 = vld [vmem:[#allocation4 + $0x378] sm:$0xff]
        %v1296 = vld [vmem:[#allocation4 + $0x380] sm:$0xff]
        %v1297 = vld [vmem:[#allocation4 + $0x388] sm:$0xff]
        %v1298 = vld [vmem:[#allocation4 + $0x390] sm:$0xff]
        %v1299 = vld [vmem:[#allocation4 + $0x398] sm:$0xff]
        %v1300 = vld [vmem:[#allocation4 + $0x3a0] sm:$0xff]
        %v1301 = vld [vmem:[#allocation4 + $0x3a8] sm:$0xff]
        %v1302 = vld [vmem:[#allocation4 + $0x3b0] sm:$0xff]
        %v1303 = vld [vmem:[#allocation4 + $0x3b8] sm:$0xff]
        %v1304 = vld [vmem:[#allocation4 + $0x3c0] sm:$0xff]
        %v1305 = vld [vmem:[#allocation4 + $0x3c8] sm:$0xff]
        %v1306 = vld [vmem:[#allocation4 + $0x3d0] sm:$0xff]
        %v1307 = vld [vmem:[#allocation4 + $0x3d8] sm:$0xff]
        %v1308 = vld [vmem:[#allocation4 + $0x3e0] sm:$0xff]
        %v1309 = vld [vmem:[#allocation4 + $0x3e8] sm:$0xff]
        %v1310 = vld [vmem:[#allocation4 + $0x3f0] sm:$0xff]
        %v1311 = vld [vmem:[#allocation4 + $0x3f8] sm:$0xff]
        %v1312 = vld [vmem:[#allocation4 + $0x400] sm:$0xff]
        %v1313 = vld [vmem:[#allocation4 + $0x408] sm:$0xff]
        %v1314 = vld [vmem:[#allocation4 + $0x410] sm:$0xff]
        %v1315 = vld [vmem:[#allocation4 + $0x418] sm:$0xff]
        %v1316 = vld [vmem:[#allocation4 + $0x420] sm:$0xff]
        %v1317 = vld [vmem:[#allocation4 + $0x428] sm:$0xff]
        %v1318 = vld [vmem:[#allocation4 + $0x430] sm:$0xff]
        %v1319 = vld [vmem:[#allocation4 + $0x438] sm:$0xff]
        %v1320 = vld [vmem:[#allocation4 + $0x440] sm:$0xff]
        %v1321 = vld [vmem:[#allocation4 + $0x448] sm:$0xff]
        %v1322 = vld [vmem:[#allocation4 + $0x450] sm:$0xff]
        %v1323 = vld [vmem:[#allocation4 + $0x458] sm:$0xff]
        %v1324 = vld [vmem:[#allocation4 + $0x460] sm:$0xff]
        %v1325 = vld [vmem:[#allocation4 + $0x468] sm:$0xff]
        %v1326 = vld [vmem:[#allocation4 + $0x470] sm:$0xff]
        %v1327 = vld [vmem:[#allocation4 + $0x478] sm:$0xff]
        %v1328 = vld [vmem:[#allocation7] sm:$0x1]
        %v1330 = vlaneseq
        %v1331 = vshrl.u32 %v1330, 7
        %v1332 = vsub.s32 0, %v1331
        %v1333 = vrot.slane %v1328, %v1332
        %1335 = vmatprep.subr.mxu0 0.0
        %1336 = vmatpush1.msra.mxu0 %v1184
        %1337 = vmatprep.subr.mxu0 0.0
        %1338 = vmatpush1.msra.mxu0 %v1185
        %1339 = vmatprep.subr.mxu0 0.0
        %1340 = vmatpush1.msra.mxu0 %v1186
        %1341 = vmatprep.subr.mxu0 0.0
        %1342 = vmatpush1.msra.mxu0 %v1187
        %1343 = vmatprep.subr.mxu0 0.0
        %1344 = vmatpush1.msra.mxu0 %v1188
        %1345 = vmatprep.subr.mxu0 0.0
        %1346 = vmatpush1.msra.mxu0 %v1189
        %1347 = vmatprep.subr.mxu0 0.0
        %1348 = vmatpush1.msra.mxu0 %v1190
        %1349 = vmatprep.subr.mxu0 0.0
        %1350 = vmatpush1.msra.mxu0 %v1191
        %1351 = vmatprep.subr.mxu0 0.0
        %1352 = vmatpush1.msra.mxu0 %v1192
        %1353 = vmatprep.subr.mxu0 0.0
        %1354 = vmatpush1.msra.mxu0 %v1193
        %1355 = vmatprep.subr.mxu0 0.0
        %1356 = vmatpush1.msra.mxu0 %v1194
        %1357 = vmatprep.subr.mxu0 0.0
        %1358 = vmatpush1.msra.mxu0 %v1195
        %1359 = vmatprep.subr.mxu0 0.0
        %1360 = vmatpush1.msra.mxu0 %v1196
        %1361 = vmatprep.subr.mxu0 0.0
        %1362 = vmatpush1.msra.mxu0 %v1197
        %1363 = vmatprep.subr.mxu0 0.0
        %1364 = vmatpush1.msra.mxu0 %v1198
        %1365 = vmatprep.subr.mxu0 0.0
        %1366 = vmatpush1.msra.mxu0 %v1199
        %1367 = vmatprep.subr.mxu0 0.0
        %1368 = vmatpush1.msra.mxu0 %v1200
        %1369 = vmatprep.subr.mxu0 0.0
        %1370 = vmatpush1.msra.mxu0 %v1201
        %1371 = vmatprep.subr.mxu0 0.0
        %1372 = vmatpush1.msra.mxu0 %v1202
        %1373 = vmatprep.subr.mxu0 0.0
        %1374 = vmatpush1.msra.mxu0 %v1203
        %1375 = vmatprep.subr.mxu0 0.0
        %1376 = vmatpush1.msra.mxu0 %v1204
        %1377 = vmatprep.subr.mxu0 0.0
        %1378 = vmatpush1.msra.mxu0 %v1205
        %1379 = vmatprep.subr.mxu0 0.0
        %1380 = vmatpush1.msra.mxu0 %v1206
        %1381 = vmatprep.subr.mxu0 0.0
        %1382 = vmatpush1.msra.mxu0 %v1207
        %1383 = vmatprep.subr.mxu0 0.0
        %1384 = vmatpush1.msra.mxu0 %v1208
        %1385 = vmatprep.subr.mxu0 0.0
        %1386 = vmatpush1.msra.mxu0 %v1209
        %1387 = vmatprep.subr.mxu0 0.0
        %1388 = vmatpush1.msra.mxu0 %v1210
        %1389 = vmatprep.subr.mxu0 0.0
        %1390 = vmatpush1.msra.mxu0 %v1211
        %1391 = vmatprep.subr.mxu0 0.0
        %1392 = vmatpush1.msra.mxu0 %v1212
        %1393 = vmatprep.subr.mxu0 0.0
        %1394 = vmatpush1.msra.mxu0 %v1213
        %1395 = vmatprep.subr.mxu0 0.0
        %1396 = vmatpush1.msra.mxu0 %v1214
        %1397 = vmatprep.subr.mxu0 0.0
        %1398 = vmatpush1.msra.mxu0 %v1215
        %1399 = vmatprep.mubr.f32.mxu0 %v897
        %1400 = vmatmul.mubr.f32.gmra.mrb[0].mxu0 %v896
        %v1401 = vpop.f32.mrb[0].mxu0
        %v1402 = vadd.f32 %v1333, %v1401
        %v1403 = vpop.f32.mrb[0].mxu0
        %1404 = vmatprep.mubr.f32.mxu0 %v906
        %1405 = vmatmul.mubr.f32.gmra.mrb[0].mxu0 %v905
        %v1406 = vpop.f32.mrb[0].mxu0
        %v1407 = vadd.f32 %v1333, %v1406
        %v1408 = vpop.f32.mrb[0].mxu0
        %1409 = vmatprep.mubr.f32.mxu0 %v915
        %1410 = vmatmul.mubr.f32.gmra.mrb[0].mxu0 %v914
        %v1411 = vpop.f32.mrb[0].mxu0
        %v1412 = vadd.f32 %v1333, %v1411
        %v1413 = vpop.f32.mrb[0].mxu0
        %1414 = vmatprep.mubr.f32.mxu0 %v924
        %1415 = vmatmul.mubr.f32.gmra.mrb[0].mxu0 %v923
        %v1416 = vpop.f32.mrb[0].mxu0
        %v1417 = vadd.f32 %v1333, %v1416
        %v1418 = vpop.f32.mrb[0].mxu0
        %1419 = vmatprep.mubr.f32.mxu0 %v933
        %1420 = vmatmul.mubr.f32.gmra.mrb[0].mxu0 %v932
        %v1421 = vpop.f32.mrb[0].mxu0
        %v1422 = vadd.f32 %v1333, %v1421
        %v1423 = vpop.f32.mrb[0].mxu0
        %1424 = vmatprep.mubr.f32.mxu0 %v942
        %1425 = vmatmul.mubr.f32.gmra.mrb[0].mxu0 %v941
        %v1426 = vpop.f32.mrb[0].mxu0
        %v1427 = vadd.f32 %v1333, %v1426
        %v1428 = vpop.f32.mrb[0].mxu0
        %1429 = vmatprep.mubr.f32.mxu0 %v951
        %1430 = vmatmul.mubr.f32.gmra.mrb[0].mxu0 %v950
        %v1431 = vpop.f32.mrb[0].mxu0
        %v1432 = vadd.f32 %v1333, %v1431
        %v1433 = vpop.f32.mrb[0].mxu0
        %1434 = vmatprep.mubr.f32.mxu0 %v960
        %1435 = vmatmul.mubr.f32.gmra.mrb[0].mxu0 %v959
        %v1436 = vpop.f32.mrb[0].mxu0
        %v1437 = vadd.f32 %v1333, %v1436
        %v1438 = vpop.f32.mrb[0].mxu0
        %1439 = vmatprep.mubr.f32.mxu0 %v969
        %1440 = vmatmul.mubr.f32.gmra.mrb[0].mxu0 %v968
        %v1441 = vpop.f32.mrb[0].mxu0
        %v1442 = vadd.f32 %v1333, %v1441
        %v1443 = vpop.f32.mrb[0].mxu0
        %1444 = vmatprep.mubr.f32.mxu0 %v978
        %1445 = vmatmul.mubr.f32.gmra.mrb[0].mxu0 %v977
        %v1446 = vpop.f32.mrb[0].mxu0
        %v1447 = vadd.f32 %v1333, %v1446
        %v1448 = vpop.f32.mrb[0].mxu0
        %1449 = vmatprep.mubr.f32.mxu0 %v987
        %1450 = vmatmul.mubr.f32.gmra.mrb[0].mxu0 %v986
        %v1451 = vpop.f32.mrb[0].mxu0
        %v1452 = vadd.f32 %v1333, %v1451
        %v1453 = vpop.f32.mrb[0].mxu0
        %1454 = vmatprep.mubr.f32.mxu0 %v996
        %1455 = vmatmul.mubr.f32.gmra.mrb[0].mxu0 %v995
        %v1456 = vpop.f32.mrb[0].mxu0
        %v1457 = vadd.f32 %v1333, %v1456
        %v1458 = vpop.f32.mrb[0].mxu0
        %1459 = vmatprep.mubr.f32.mxu0 %v1005
        %1460 = vmatmul.mubr.f32.gmra.mrb[0].mxu0 %v1004
        %v1461 = vpop.f32.mrb[0].mxu0
        %v1462 = vadd.f32 %v1333, %v1461
        %v1463 = vpop.f32.mrb[0].mxu0
        %1464 = vmatprep.mubr.f32.mxu0 %v1014
        %1465 = vmatmul.mubr.f32.gmra.mrb[0].mxu0 %v1013
        %v1466 = vpop.f32.mrb[0].mxu0
        %v1467 = vadd.f32 %v1333, %v1466
        %v1468 = vpop.f32.mrb[0].mxu0
        %1469 = vmatprep.mubr.f32.mxu0 %v1023
        %1470 = vmatmul.mubr.f32.gmra.mrb[0].mxu0 %v1022
        %v1471 = vpop.f32.mrb[0].mxu0
        %v1472 = vadd.f32 %v1333, %v1471
        %v1473 = vpop.f32.mrb[0].mxu0
        %1474 = vmatprep.mubr.f32.mxu0 %v1032
        %1475 = vmatmul.mubr.f32.gmra.mrb[0].mxu0 %v1031
        %v1476 = vpop.f32.mrb[0].mxu0
        %v1477 = vadd.f32 %v1333, %v1476
        %v1478 = vpop.f32.mrb[0].mxu0
        %1479 = vmatprep.mubr.f32.mxu0 %v1041
        %1480 = vmatmul.mubr.f32.gmra.mrb[0].mxu0 %v1040
        %v1481 = vpop.f32.mrb[0].mxu0
        %v1482 = vadd.f32 %v1333, %v1481
        %v1483 = vpop.f32.mrb[0].mxu0
        %1484 = vmatprep.mubr.f32.mxu0 %v1050
        %1485 = vmatmul.mubr.f32.gmra.mrb[0].mxu0 %v1049
        %v1486 = vpop.f32.mrb[0].mxu0
        %v1487 = vadd.f32 %v1333, %v1486
        %v1488 = vpop.f32.mrb[0].mxu0
        %1489 = vmatprep.mubr.f32.mxu0 %v1059
        %1490 = vmatmul.mubr.f32.gmra.mrb[0].mxu0 %v1058
        %v1491 = vpop.f32.mrb[0].mxu0
        %v1492 = vadd.f32 %v1333, %v1491
        %v1493 = vpop.f32.mrb[0].mxu0
        %1494 = vmatprep.mubr.f32.mxu0 %v1068
        %1495 = vmatmul.mubr.f32.gmra.mrb[0].mxu0 %v1067
        %v1496 = vpop.f32.mrb[0].mxu0
        %v1497 = vadd.f32 %v1333, %v1496
        %v1498 = vpop.f32.mrb[0].mxu0
        %1499 = vmatprep.mubr.f32.mxu0 %v1077
        %1500 = vmatmul.mubr.f32.gmra.mrb[0].mxu0 %v1076
        %v1501 = vpop.f32.mrb[0].mxu0
        %v1502 = vadd.f32 %v1333, %v1501
        %v1503 = vpop.f32.mrb[0].mxu0
        %1504 = vmatprep.mubr.f32.mxu0 %v1086
        %1505 = vmatmul.mubr.f32.gmra.mrb[0].mxu0 %v1085
        %v1506 = vpop.f32.mrb[0].mxu0
        %v1507 = vadd.f32 %v1333, %v1506
        %v1508 = vpop.f32.mrb[0].mxu0
        %1509 = vmatprep.mubr.f32.mxu0 %v1095
        %1510 = vmatmul.mubr.f32.gmra.mrb[0].mxu0 %v1094
        %v1511 = vpop.f32.mrb[0].mxu0
        %v1512 = vadd.f32 %v1333, %v1511
        %v1513 = vpop.f32.mrb[0].mxu0
        %1514 = vmatprep.mubr.f32.mxu0 %v1104
        %1515 = vmatmul.mubr.f32.gmra.mrb[0].mxu0 %v1103
        %v1516 = vpop.f32.mrb[0].mxu0
        %v1517 = vadd.f32 %v1333, %v1516
        %v1518 = vpop.f32.mrb[0].mxu0
        %1519 = vmatprep.mubr.f32.mxu0 %v1113
        %1520 = vmatmul.mubr.f32.gmra.mrb[0].mxu0 %v1112
        %v1521 = vpop.f32.mrb[0].mxu0
        %v1522 = vadd.f32 %v1333, %v1521
        %v1523 = vpop.f32.mrb[0].mxu0
        %1524 = vmatprep.mubr.f32.mxu0 %v1122
        %1525 = vmatmul.mubr.f32.gmra.mrb[0].mxu0 %v1121
        %v1526 = vpop.f32.mrb[0].mxu0
        %v1527 = vadd.f32 %v1333, %v1526
        %v1528 = vpop.f32.mrb[0].mxu0
        %1529 = vmatprep.mubr.f32.mxu0 %v1131
        %1530 = vmatmul.mubr.f32.gmra.mrb[0].mxu0 %v1130
        %v1531 = vpop.f32.mrb[0].mxu0
        %v1532 = vadd.f32 %v1333, %v1531
        %v1533 = vpop.f32.mrb[0].mxu0
        %1534 = vmatprep.mubr.f32.mxu0 %v1140
        %1535 = vmatmul.mubr.f32.gmra.mrb[0].mxu0 %v1139
        %v1536 = vpop.f32.mrb[0].mxu0
        %v1537 = vadd.f32 %v1333, %v1536
        %v1538 = vpop.f32.mrb[0].mxu0
        %1539 = vmatprep.mubr.f32.mxu0 %v1149
        %1540 = vmatmul.mubr.f32.gmra.mrb[0].mxu0 %v1148
        %v1541 = vpop.f32.mrb[0].mxu0
        %v1542 = vadd.f32 %v1333, %v1541
        %v1543 = vpop.f32.mrb[0].mxu0
        %1544 = vmatprep.mubr.f32.mxu0 %v1158
        %1545 = vmatmul.mubr.f32.gmra.mrb[0].mxu0 %v1157
        %v1546 = vpop.f32.mrb[0].mxu0
        %v1547 = vadd.f32 %v1333, %v1546
        %v1548 = vpop.f32.mrb[0].mxu0
        %1549 = vmatprep.mubr.f32.mxu0 %v1167
        %1550 = vmatmul.mubr.f32.gmra.mrb[0].mxu0 %v1166
        %v1551 = vpop.f32.mrb[0].mxu0
        %v1552 = vadd.f32 %v1333, %v1551
        %v1553 = vpop.f32.mrb[0].mxu0
        %1554 = vmatprep.mubr.f32.mxu0 %v1176
        %1555 = vmatmul.mubr.f32.gmra.mrb[0].mxu0 %v1175
        %v1556 = vpop.f32.mrb[0].mxu0
        %v1557 = vadd.f32 %v1333, %v1556
        %v1558 = vpop.f32.mrb[0].mxu0
        %1559 = vdwg.mxu0
        %1560 = vmatprep.subr.mxu0 0.0
        %1561 = vmatpush1.msra.mxu0 %v1216
        %1562 = vmatprep.subr.mxu0 0.0
        %1563 = vmatpush1.msra.mxu0 %v1217
        %1564 = vmatprep.subr.mxu0 0.0
        %1565 = vmatpush1.msra.mxu0 %v1218
        %1566 = vmatprep.subr.mxu0 0.0
        %1567 = vmatpush1.msra.mxu0 %v1219
        %1568 = vmatprep.subr.mxu0 0.0
        %1569 = vmatpush1.msra.mxu0 %v1220
        %1570 = vmatprep.subr.mxu0 0.0
        %1571 = vmatpush1.msra.mxu0 %v1221
        %1572 = vmatprep.subr.mxu0 0.0
        %1573 = vmatpush1.msra.mxu0 %v1222
        %1574 = vmatprep.subr.mxu0 0.0
        %1575 = vmatpush1.msra.mxu0 %v1223
        %1576 = vmatprep.subr.mxu0 0.0
        %1577 = vmatpush1.msra.mxu0 %v1224
        %1578 = vmatprep.subr.mxu0 0.0
        %1579 = vmatpush1.msra.mxu0 %v1225
        %1580 = vmatprep.subr.mxu0 0.0
        %1581 = vmatpush1.msra.mxu0 %v1226
        %1582 = vmatprep.subr.mxu0 0.0
        %1583 = vmatpush1.msra.mxu0 %v1227
        %1584 = vmatprep.subr.mxu0 0.0
        %1585 = vmatpush1.msra.mxu0 %v1228
        %1586 = vmatprep.subr.mxu0 0.0
        %1587 = vmatpush1.msra.mxu0 %v1229
        %1588 = vmatprep.subr.mxu0 0.0
        %1589 = vmatpush1.msra.mxu0 %v1230
        %1590 = vmatprep.subr.mxu0 0.0
        %1591 = vmatpush1.msra.mxu0 %v1231
        %1592 = vmatprep.subr.mxu0 0.0
        %1593 = vmatpush1.msra.mxu0 %v1232
        %1594 = vmatprep.subr.mxu0 0.0
        %1595 = vmatpush1.msra.mxu0 %v1233
        %1596 = vmatprep.subr.mxu0 0.0
        %1597 = vmatpush1.msra.mxu0 %v1234
        %1598 = vmatprep.subr.mxu0 0.0
        %1599 = vmatpush1.msra.mxu0 %v1235
        %1600 = vmatprep.subr.mxu0 0.0
        %1601 = vmatpush1.msra.mxu0 %v1236
        %1602 = vmatprep.subr.mxu0 0.0
        %1603 = vmatpush1.msra.mxu0 %v1237
        %1604 = vmatprep.subr.mxu0 0.0
        %1605 = vmatpush1.msra.mxu0 %v1238
        %1606 = vmatprep.subr.mxu0 0.0
        %1607 = vmatpush1.msra.mxu0 %v1239
        %1608 = vmatprep.subr.mxu0 0.0
        %1609 = vmatpush1.msra.mxu0 %v1240
        %1610 = vmatprep.subr.mxu0 0.0
        %1611 = vmatpush1.msra.mxu0 %v1241
        %1612 = vmatprep.subr.mxu0 0.0
        %1613 = vmatpush1.msra.mxu0 %v1242
        %1614 = vmatprep.subr.mxu0 0.0
        %1615 = vmatpush1.msra.mxu0 %v1243
        %1616 = vmatprep.subr.mxu0 0.0
        %1617 = vmatpush1.msra.mxu0 %v1244
        %1618 = vmatprep.subr.mxu0 0.0
        %1619 = vmatpush1.msra.mxu0 %v1245
        %1620 = vmatprep.subr.mxu0 0.0
        %1621 = vmatpush1.msra.mxu0 %v1246
        %1622 = vmatprep.subr.mxu0 0.0
        %1623 = vmatpush1.msra.mxu0 %v1247
        %1624 = vmatprep.mubr.f32.mxu0 %v899
        %1625 = vmatmul.mubr.f32.gmra.mrb[0].mxu0 %v898
        %v1626 = vpop.f32.mrb[0].mxu0
        %v1627 = vadd.f32 %v1402, %v1626
        %v1628 = vpop.f32.mrb[0].mxu0
        %1629 = vmatprep.mubr.f32.mxu0 %v908
        %1630 = vmatmul.mubr.f32.gmra.mrb[0].mxu0 %v907
        %v1631 = vpop.f32.mrb[0].mxu0
        %v1632 = vadd.f32 %v1407, %v1631
        %v1633 = vpop.f32.mrb[0].mxu0
        %1634 = vmatprep.mubr.f32.mxu0 %v917
        %1635 = vmatmul.mubr.f32.gmra.mrb[0].mxu0 %v916
        %v1636 = vpop.f32.mrb[0].mxu0
        %v1637 = vadd.f32 %v1412, %v1636
        %v1638 = vpop.f32.mrb[0].mxu0
        %1639 = vmatprep.mubr.f32.mxu0 %v926
        %1640 = vmatmul.mubr.f32.gmra.mrb[0].mxu0 %v925
        %v1641 = vpop.f32.mrb[0].mxu0
        %v1642 = vadd.f32 %v1417, %v1641
        %v1643 = vpop.f32.mrb[0].mxu0
        %1644 = vmatprep.mubr.f32.mxu0 %v935
        %1645 = vmatmul.mubr.f32.gmra.mrb[0].mxu0 %v934
        %v1646 = vpop.f32.mrb[0].mxu0
        %v1647 = vadd.f32 %v1422, %v1646
        %v1648 = vpop.f32.mrb[0].mxu0
        %1649 = vmatprep.mubr.f32.mxu0 %v944
        %1650 = vmatmul.mubr.f32.gmra.mrb[0].mxu0 %v943
        %v1651 = vpop.f32.mrb[0].mxu0
        %v1652 = vadd.f32 %v1427, %v1651
        %v1653 = vpop.f32.mrb[0].mxu0
        %1654 = vmatprep.mubr.f32.mxu0 %v953
        %1655 = vmatmul.mubr.f32.gmra.mrb[0].mxu0 %v952
        %v1656 = vpop.f32.mrb[0].mxu0
        %v1657 = vadd.f32 %v1432, %v1656
        %v1658 = vpop.f32.mrb[0].mxu0
        %1659 = vmatprep.mubr.f32.mxu0 %v962
        %1660 = vmatmul.mubr.f32.gmra.mrb[0].mxu0 %v961
        %v1661 = vpop.f32.mrb[0].mxu0
        %v1662 = vadd.f32 %v1437, %v1661
        %v1663 = vpop.f32.mrb[0].mxu0
        %1664 = vmatprep.mubr.f32.mxu0 %v971
        %1665 = vmatmul.mubr.f32.gmra.mrb[0].mxu0 %v970
        %v1666 = vpop.f32.mrb[0].mxu0
        %v1667 = vadd.f32 %v1442, %v1666
        %v1668 = vpop.f32.mrb[0].mxu0
        %1669 = vmatprep.mubr.f32.mxu0 %v980
        %1670 = vmatmul.mubr.f32.gmra.mrb[0].mxu0 %v979
        %v1671 = vpop.f32.mrb[0].mxu0
        %v1672 = vadd.f32 %v1447, %v1671
        %v1673 = vpop.f32.mrb[0].mxu0
        %1674 = vmatprep.mubr.f32.mxu0 %v989
        %1675 = vmatmul.mubr.f32.gmra.mrb[0].mxu0 %v988
        %v1676 = vpop.f32.mrb[0].mxu0
        %v1677 = vadd.f32 %v1452, %v1676
        %v1678 = vpop.f32.mrb[0].mxu0
        %1679 = vmatprep.mubr.f32.mxu0 %v998
        %1680 = vmatmul.mubr.f32.gmra.mrb[0].mxu0 %v997
        %v1681 = vpop.f32.mrb[0].mxu0
        %v1682 = vadd.f32 %v1457, %v1681
        %v1683 = vpop.f32.mrb[0].mxu0
        %1684 = vmatprep.mubr.f32.mxu0 %v1007
        %1685 = vmatmul.mubr.f32.gmra.mrb[0].mxu0 %v1006
        %v1686 = vpop.f32.mrb[0].mxu0
        %v1687 = vadd.f32 %v1462, %v1686
        %v1688 = vpop.f32.mrb[0].mxu0
        %1689 = vmatprep.mubr.f32.mxu0 %v1016
        %1690 = vmatmul.mubr.f32.gmra.mrb[0].mxu0 %v1015
        %v1691 = vpop.f32.mrb[0].mxu0
        %v1692 = vadd.f32 %v1467, %v1691
        %v1693 = vpop.f32.mrb[0].mxu0
        %1694 = vmatprep.mubr.f32.mxu0 %v1025
        %1695 = vmatmul.mubr.f32.gmra.mrb[0].mxu0 %v1024
        %v1696 = vpop.f32.mrb[0].mxu0
        %v1697 = vadd.f32 %v1472, %v1696
        %v1698 = vpop.f32.mrb[0].mxu0
        %1699 = vmatprep.mubr.f32.mxu0 %v1034
        %1700 = vmatmul.mubr.f32.gmra.mrb[0].mxu0 %v1033
        %v1701 = vpop.f32.mrb[0].mxu0
        %v1702 = vadd.f32 %v1477, %v1701
        %v1703 = vpop.f32.mrb[0].mxu0
        %1704 = vmatprep.mubr.f32.mxu0 %v1043
        %1705 = vmatmul.mubr.f32.gmra.mrb[0].mxu0 %v1042
        %v1706 = vpop.f32.mrb[0].mxu0
        %v1707 = vadd.f32 %v1482, %v1706
        %v1708 = vpop.f32.mrb[0].mxu0
        %1709 = vmatprep.mubr.f32.mxu0 %v1052
        %1710 = vmatmul.mubr.f32.gmra.mrb[0].mxu0 %v1051
        %v1711 = vpop.f32.mrb[0].mxu0
        %v1712 = vadd.f32 %v1487, %v1711
        %v1713 = vpop.f32.mrb[0].mxu0
        %1714 = vmatprep.mubr.f32.mxu0 %v1061
        %1715 = vmatmul.mubr.f32.gmra.mrb[0].mxu0 %v1060
        %v1716 = vpop.f32.mrb[0].mxu0
        %v1717 = vadd.f32 %v1492, %v1716
        %v1718 = vpop.f32.mrb[0].mxu0
        %1719 = vmatprep.mubr.f32.mxu0 %v1070
        %1720 = vmatmul.mubr.f32.gmra.mrb[0].mxu0 %v1069
        %v1721 = vpop.f32.mrb[0].mxu0
        %v1722 = vadd.f32 %v1497, %v1721
        %v1723 = vpop.f32.mrb[0].mxu0
        %1724 = vmatprep.mubr.f32.mxu0 %v1079
        %1725 = vmatmul.mubr.f32.gmra.mrb[0].mxu0 %v1078
        %v1726 = vpop.f32.mrb[0].mxu0
        %v1727 = vadd.f32 %v1502, %v1726
        %v1728 = vpop.f32.mrb[0].mxu0
        %1729 = vmatprep.mubr.f32.mxu0 %v1088
        %1730 = vmatmul.mubr.f32.gmra.mrb[0].mxu0 %v1087
        %v1731 = vpop.f32.mrb[0].mxu0
        %v1732 = vadd.f32 %v1507, %v1731
        %v1733 = vpop.f32.mrb[0].mxu0
        %1734 = vmatprep.mubr.f32.mxu0 %v1097
        %1735 = vmatmul.mubr.f32.gmra.mrb[0].mxu0 %v1096
        %v1736 = vpop.f32.mrb[0].mxu0
        %v1737 = vadd.f32 %v1512, %v1736
        %v1738 = vpop.f32.mrb[0].mxu0
        %1739 = vmatprep.mubr.f32.mxu0 %v1106
        %1740 = vmatmul.mubr.f32.gmra.mrb[0].mxu0 %v1105
        %v1741 = vpop.f32.mrb[0].mxu0
        %v1742 = vadd.f32 %v1517, %v1741
        %v1743 = vpop.f32.mrb[0].mxu0
        %1744 = vmatprep.mubr.f32.mxu0 %v1115
        %1745 = vmatmul.mubr.f32.gmra.mrb[0].mxu0 %v1114
        %v1746 = vpop.f32.mrb[0].mxu0
        %v1747 = vadd.f32 %v1522, %v1746
        %v1748 = vpop.f32.mrb[0].mxu0
        %1749 = vmatprep.mubr.f32.mxu0 %v1124
        %1750 = vmatmul.mubr.f32.gmra.mrb[0].mxu0 %v1123
        %v1751 = vpop.f32.mrb[0].mxu0
        %v1752 = vadd.f32 %v1527, %v1751
        %v1753 = vpop.f32.mrb[0].mxu0
        %1754 = vmatprep.mubr.f32.mxu0 %v1133
        %1755 = vmatmul.mubr.f32.gmra.mrb[0].mxu0 %v1132
        %v1756 = vpop.f32.mrb[0].mxu0
        %v1757 = vadd.f32 %v1532, %v1756
        %v1758 = vpop.f32.mrb[0].mxu0
        %1759 = vmatprep.mubr.f32.mxu0 %v1142
        %1760 = vmatmul.mubr.f32.gmra.mrb[0].mxu0 %v1141
        %v1761 = vpop.f32.mrb[0].mxu0
        %v1762 = vadd.f32 %v1537, %v1761
        %v1763 = vpop.f32.mrb[0].mxu0
        %1764 = vmatprep.mubr.f32.mxu0 %v1151
        %1765 = vmatmul.mubr.f32.gmra.mrb[0].mxu0 %v1150
        %v1766 = vpop.f32.mrb[0].mxu0
        %v1767 = vadd.f32 %v1542, %v1766
        %v1768 = vpop.f32.mrb[0].mxu0
        %1769 = vmatprep.mubr.f32.mxu0 %v1160
        %1770 = vmatmul.mubr.f32.gmra.mrb[0].mxu0 %v1159
        %v1771 = vpop.f32.mrb[0].mxu0
        %v1772 = vadd.f32 %v1547, %v1771
        %v1773 = vpop.f32.mrb[0].mxu0
        %1774 = vmatprep.mubr.f32.mxu0 %v1169
        %1775 = vmatmul.mubr.f32.gmra.mrb[0].mxu0 %v1168
        %v1776 = vpop.f32.mrb[0].mxu0
        %v1777 = vadd.f32 %v1552, %v1776
        %v1778 = vpop.f32.mrb[0].mxu0
        %1779 = vmatprep.mubr.f32.mxu0 %v1178
        %1780 = vmatmul.mubr.f32.gmra.mrb[0].mxu0 %v1177
        %v1781 = vpop.f32.mrb[0].mxu0
        %v1782 = vadd.f32 %v1557, %v1781
        %v1783 = vpop.f32.mrb[0].mxu0
        %1784 = vdwg.mxu0
        %1785 = vmatprep.subr.mxu0 0.0
        %1786 = vmatpush1.msra.mxu0 %v1248
        %1787 = vmatprep.subr.mxu0 0.0
        %1788 = vmatpush1.msra.mxu0 %v1249
        %1789 = vmatprep.subr.mxu0 0.0
        %1790 = vmatpush1.msra.mxu0 %v1250
        %1791 = vmatprep.subr.mxu0 0.0
        %1792 = vmatpush1.msra.mxu0 %v1251
        %1793 = vmatprep.subr.mxu0 0.0
        %1794 = vmatpush1.msra.mxu0 %v1252
        %1795 = vmatprep.subr.mxu0 0.0
        %1796 = vmatpush1.msra.mxu0 %v1253
        %1797 = vmatprep.subr.mxu0 0.0
        %1798 = vmatpush1.msra.mxu0 %v1254
        %1799 = vmatprep.subr.mxu0 0.0
        %1800 = vmatpush1.msra.mxu0 %v1255
        %1801 = vmatprep.subr.mxu0 0.0
        %1802 = vmatpush1.msra.mxu0 %v1256
        %1803 = vmatprep.subr.mxu0 0.0
        %1804 = vmatpush1.msra.mxu0 %v1257
        %1805 = vmatprep.subr.mxu0 0.0
        %1806 = vmatpush1.msra.mxu0 %v1258
        %1807 = vmatprep.subr.mxu0 0.0
        %1808 = vmatpush1.msra.mxu0 %v1259
        %1809 = vmatprep.subr.mxu0 0.0
        %1810 = vmatpush1.msra.mxu0 %v1260
        %1811 = vmatprep.subr.mxu0 0.0
        %1812 = vmatpush1.msra.mxu0 %v1261
        %1813 = vmatprep.subr.mxu0 0.0
        %1814 = vmatpush1.msra.mxu0 %v1262
        %1815 = vmatprep.subr.mxu0 0.0
        %1816 = vmatpush1.msra.mxu0 %v1263
        %1817 = vmatprep.subr.mxu0 0.0
        %1818 = vmatpush1.msra.mxu0 %v1264
        %1819 = vmatprep.subr.mxu0 0.0
        %1820 = vmatpush1.msra.mxu0 %v1265
        %1821 = vmatprep.subr.mxu0 0.0
        %1822 = vmatpush1.msra.mxu0 %v1266
        %1823 = vmatprep.subr.mxu0 0.0
        %1824 = vmatpush1.msra.mxu0 %v1267
        %1825 = vmatprep.subr.mxu0 0.0
        %1826 = vmatpush1.msra.mxu0 %v1268
        %1827 = vmatprep.subr.mxu0 0.0
        %1828 = vmatpush1.msra.mxu0 %v1269
        %1829 = vmatprep.subr.mxu0 0.0
        %1830 = vmatpush1.msra.mxu0 %v1270
        %1831 = vmatprep.subr.mxu0 0.0
        %1832 = vmatpush1.msra.mxu0 %v1271
        %1833 = vmatprep.subr.mxu0 0.0
        %1834 = vmatpush1.msra.mxu0 %v1272
        %1835 = vmatprep.subr.mxu0 0.0
        %1836 = vmatpush1.msra.mxu0 %v1273
        %1837 = vmatprep.subr.mxu0 0.0
        %1838 = vmatpush1.msra.mxu0 %v1274
        %1839 = vmatprep.subr.mxu0 0.0
        %1840 = vmatpush1.msra.mxu0 %v1275
        %1841 = vmatprep.subr.mxu0 0.0
        %1842 = vmatpush1.msra.mxu0 %v1276
        %1843 = vmatprep.subr.mxu0 0.0
        %1844 = vmatpush1.msra.mxu0 %v1277
        %1845 = vmatprep.subr.mxu0 0.0
        %1846 = vmatpush1.msra.mxu0 %v1278
        %1847 = vmatprep.subr.mxu0 0.0
        %1848 = vmatpush1.msra.mxu0 %v1279
        %1849 = vmatprep.mubr.f32.mxu0 %v901
        %1850 = vmatmul.mubr.f32.gmra.mrb[0].mxu0 %v900
        %v1851 = vpop.f32.mrb[0].mxu0
        %v1852 = vadd.f32 %v1627, %v1851
        %v1853 = vpop.f32.mrb[0].mxu0
        %1854 = vmatprep.mubr.f32.mxu0 %v910
        %1855 = vmatmul.mubr.f32.gmra.mrb[0].mxu0 %v909
        %v1856 = vpop.f32.mrb[0].mxu0
        %v1857 = vadd.f32 %v1632, %v1856
        %v1858 = vpop.f32.mrb[0].mxu0
        %1859 = vmatprep.mubr.f32.mxu0 %v919
        %1860 = vmatmul.mubr.f32.gmra.mrb[0].mxu0 %v918
        %v1861 = vpop.f32.mrb[0].mxu0
        %v1862 = vadd.f32 %v1637, %v1861
        %v1863 = vpop.f32.mrb[0].mxu0
        %1864 = vmatprep.mubr.f32.mxu0 %v928
        %1865 = vmatmul.mubr.f32.gmra.mrb[0].mxu0 %v927
        %v1866 = vpop.f32.mrb[0].mxu0
        %v1867 = vadd.f32 %v1642, %v1866
        %v1868 = vpop.f32.mrb[0].mxu0
        %1869 = vmatprep.mubr.f32.mxu0 %v937
        %1870 = vmatmul.mubr.f32.gmra.mrb[0].mxu0 %v936
        %v1871 = vpop.f32.mrb[0].mxu0
        %v1872 = vadd.f32 %v1647, %v1871
        %v1873 = vpop.f32.mrb[0].mxu0
        %1874 = vmatprep.mubr.f32.mxu0 %v946
        %1875 = vmatmul.mubr.f32.gmra.mrb[0].mxu0 %v945
        %v1876 = vpop.f32.mrb[0].mxu0
        %v1877 = vadd.f32 %v1652, %v1876
        %v1878 = vpop.f32.mrb[0].mxu0
        %1879 = vmatprep.mubr.f32.mxu0 %v955
        %1880 = vmatmul.mubr.f32.gmra.mrb[0].mxu0 %v954
        %v1881 = vpop.f32.mrb[0].mxu0
        %v1882 = vadd.f32 %v1657, %v1881
        %v1883 = vpop.f32.mrb[0].mxu0
        %1884 = vmatprep.mubr.f32.mxu0 %v964
        %1885 = vmatmul.mubr.f32.gmra.mrb[0].mxu0 %v963
        %v1886 = vpop.f32.mrb[0].mxu0
        %v1887 = vadd.f32 %v1662, %v1886
        %v1888 = vpop.f32.mrb[0].mxu0
        %1889 = vmatprep.mubr.f32.mxu0 %v973
        %1890 = vmatmul.mubr.f32.gmra.mrb[0].mxu0 %v972
        %v1891 = vpop.f32.mrb[0].mxu0
        %v1892 = vadd.f32 %v1667, %v1891
        %v1893 = vpop.f32.mrb[0].mxu0
        %1894 = vmatprep.mubr.f32.mxu0 %v982
        %1895 = vmatmul.mubr.f32.gmra.mrb[0].mxu0 %v981
        %v1896 = vpop.f32.mrb[0].mxu0
        %v1897 = vadd.f32 %v1672, %v1896
        %v1898 = vpop.f32.mrb[0].mxu0
        %1899 = vmatprep.mubr.f32.mxu0 %v991
        %1900 = vmatmul.mubr.f32.gmra.mrb[0].mxu0 %v990
        %v1901 = vpop.f32.mrb[0].mxu0
        %v1902 = vadd.f32 %v1677, %v1901
        %v1903 = vpop.f32.mrb[0].mxu0
        %1904 = vmatprep.mubr.f32.mxu0 %v1000
        %1905 = vmatmul.mubr.f32.gmra.mrb[0].mxu0 %v999
        %v1906 = vpop.f32.mrb[0].mxu0
        %v1907 = vadd.f32 %v1682, %v1906
        %v1908 = vpop.f32.mrb[0].mxu0
        %1909 = vmatprep.mubr.f32.mxu0 %v1009
        %1910 = vmatmul.mubr.f32.gmra.mrb[0].mxu0 %v1008
        %v1911 = vpop.f32.mrb[0].mxu0
        %v1912 = vadd.f32 %v1687, %v1911
        %v1913 = vpop.f32.mrb[0].mxu0
        %1914 = vmatprep.mubr.f32.mxu0 %v1018
        %1915 = vmatmul.mubr.f32.gmra.mrb[0].mxu0 %v1017
        %v1916 = vpop.f32.mrb[0].mxu0
        %v1917 = vadd.f32 %v1692, %v1916
        %v1918 = vpop.f32.mrb[0].mxu0
        %1919 = vmatprep.mubr.f32.mxu0 %v1027
        %1920 = vmatmul.mubr.f32.gmra.mrb[0].mxu0 %v1026
        %v1921 = vpop.f32.mrb[0].mxu0
        %v1922 = vadd.f32 %v1697, %v1921
        %v1923 = vpop.f32.mrb[0].mxu0
        %1924 = vmatprep.mubr.f32.mxu0 %v1036
        %1925 = vmatmul.mubr.f32.gmra.mrb[0].mxu0 %v1035
        %v1926 = vpop.f32.mrb[0].mxu0
        %v1927 = vadd.f32 %v1702, %v1926
        %v1928 = vpop.f32.mrb[0].mxu0
        %1929 = vmatprep.mubr.f32.mxu0 %v1045
        %1930 = vmatmul.mubr.f32.gmra.mrb[0].mxu0 %v1044
        %v1931 = vpop.f32.mrb[0].mxu0
        %v1932 = vadd.f32 %v1707, %v1931
        %v1933 = vpop.f32.mrb[0].mxu0
        %1934 = vmatprep.mubr.f32.mxu0 %v1054
        %1935 = vmatmul.mubr.f32.gmra.mrb[0].mxu0 %v1053
        %v1936 = vpop.f32.mrb[0].mxu0
        %v1937 = vadd.f32 %v1712, %v1936
        %v1938 = vpop.f32.mrb[0].mxu0
        %1939 = vmatprep.mubr.f32.mxu0 %v1063
        %1940 = vmatmul.mubr.f32.gmra.mrb[0].mxu0 %v1062
        %v1941 = vpop.f32.mrb[0].mxu0
        %v1942 = vadd.f32 %v1717, %v1941
        %v1943 = vpop.f32.mrb[0].mxu0
        %1944 = vmatprep.mubr.f32.mxu0 %v1072
        %1945 = vmatmul.mubr.f32.gmra.mrb[0].mxu0 %v1071
        %v1946 = vpop.f32.mrb[0].mxu0
        %v1947 = vadd.f32 %v1722, %v1946
        %v1948 = vpop.f32.mrb[0].mxu0
        %1949 = vmatprep.mubr.f32.mxu0 %v1081
        %1950 = vmatmul.mubr.f32.gmra.mrb[0].mxu0 %v1080
        %v1951 = vpop.f32.mrb[0].mxu0
        %v1952 = vadd.f32 %v1727, %v1951
        %v1953 = vpop.f32.mrb[0].mxu0
        %1954 = vmatprep.mubr.f32.mxu0 %v1090
        %1955 = vmatmul.mubr.f32.gmra.mrb[0].mxu0 %v1089
        %v1956 = vpop.f32.mrb[0].mxu0
        %v1957 = vadd.f32 %v1732, %v1956
        %v1958 = vpop.f32.mrb[0].mxu0
        %1959 = vmatprep.mubr.f32.mxu0 %v1099
        %1960 = vmatmul.mubr.f32.gmra.mrb[0].mxu0 %v1098
        %v1961 = vpop.f32.mrb[0].mxu0
        %v1962 = vadd.f32 %v1737, %v1961
        %v1963 = vpop.f32.mrb[0].mxu0
        %1964 = vmatprep.mubr.f32.mxu0 %v1108
        %1965 = vmatmul.mubr.f32.gmra.mrb[0].mxu0 %v1107
        %v1966 = vpop.f32.mrb[0].mxu0
        %v1967 = vadd.f32 %v1742, %v1966
        %v1968 = vpop.f32.mrb[0].mxu0
        %1969 = vmatprep.mubr.f32.mxu0 %v1117
        %1970 = vmatmul.mubr.f32.gmra.mrb[0].mxu0 %v1116
        %v1971 = vpop.f32.mrb[0].mxu0
        %v1972 = vadd.f32 %v1747, %v1971
        %v1973 = vpop.f32.mrb[0].mxu0
        %1974 = vmatprep.mubr.f32.mxu0 %v1126
        %1975 = vmatmul.mubr.f32.gmra.mrb[0].mxu0 %v1125
        %v1976 = vpop.f32.mrb[0].mxu0
        %v1977 = vadd.f32 %v1752, %v1976
        %v1978 = vpop.f32.mrb[0].mxu0
        %1979 = vmatprep.mubr.f32.mxu0 %v1135
        %1980 = vmatmul.mubr.f32.gmra.mrb[0].mxu0 %v1134
        %v1981 = vpop.f32.mrb[0].mxu0
        %v1982 = vadd.f32 %v1757, %v1981
        %v1983 = vpop.f32.mrb[0].mxu0
        %1984 = vmatprep.mubr.f32.mxu0 %v1144
        %1985 = vmatmul.mubr.f32.gmra.mrb[0].mxu0 %v1143
        %v1986 = vpop.f32.mrb[0].mxu0
        %v1987 = vadd.f32 %v1762, %v1986
        %v1988 = vpop.f32.mrb[0].mxu0
        %1989 = vmatprep.mubr.f32.mxu0 %v1153
        %1990 = vmatmul.mubr.f32.gmra.mrb[0].mxu0 %v1152
        %v1991 = vpop.f32.mrb[0].mxu0
        %v1992 = vadd.f32 %v1767, %v1991
        %v1993 = vpop.f32.mrb[0].mxu0
        %1994 = vmatprep.mubr.f32.mxu0 %v1162
        %1995 = vmatmul.mubr.f32.gmra.mrb[0].mxu0 %v1161
        %v1996 = vpop.f32.mrb[0].mxu0
        %v1997 = vadd.f32 %v1772, %v1996
        %v1998 = vpop.f32.mrb[0].mxu0
        %1999 = vmatprep.mubr.f32.mxu0 %v1171
        %2000 = vmatmul.mubr.f32.gmra.mrb[0].mxu0 %v1170
        %v2001 = vpop.f32.mrb[0].mxu0
        %v2002 = vadd.f32 %v1777, %v2001
        %v2003 = vpop.f32.mrb[0].mxu0
        %2004 = vmatprep.mubr.f32.mxu0 %v1180
        %2005 = vmatmul.mubr.f32.gmra.mrb[0].mxu0 %v1179
        %v2006 = vpop.f32.mrb[0].mxu0
        %v2007 = vadd.f32 %v1782, %v2006
        %v2008 = vpop.f32.mrb[0].mxu0
        %2009 = vdwg.mxu0
        %2010 = vmatprep.subr.mxu0 0.0
        %2011 = vmatpush1.msra.mxu0 %v1280
        %2012 = vmatprep.subr.mxu0 0.0
        %2013 = vmatpush1.msra.mxu0 %v1281
        %2014 = vmatprep.subr.mxu0 0.0
        %2015 = vmatpush1.msra.mxu0 %v1282
        %2016 = vmatprep.subr.mxu0 0.0
        %2017 = vmatpush1.msra.mxu0 %v1283
        %2018 = vmatprep.subr.mxu0 0.0
        %2019 = vmatpush1.msra.mxu0 %v1284
        %2020 = vmatprep.subr.mxu0 0.0
        %2021 = vmatpush1.msra.mxu0 %v1285
        %2022 = vmatprep.subr.mxu0 0.0
        %2023 = vmatpush1.msra.mxu0 %v1286
        %2024 = vmatprep.subr.mxu0 0.0
        %2025 = vmatpush1.msra.mxu0 %v1287
        %2026 = vmatprep.subr.mxu0 0.0
        %2027 = vmatpush1.msra.mxu0 %v1288
        %2028 = vmatprep.subr.mxu0 0.0
        %2029 = vmatpush1.msra.mxu0 %v1289
        %2030 = vmatprep.subr.mxu0 0.0
        %2031 = vmatpush1.msra.mxu0 %v1290
        %2032 = vmatprep.subr.mxu0 0.0
        %2033 = vmatpush1.msra.mxu0 %v1291
        %2034 = vmatprep.subr.mxu0 0.0
        %2035 = vmatpush1.msra.mxu0 %v1292
        %2036 = vmatprep.subr.mxu0 0.0
        %2037 = vmatpush1.msra.mxu0 %v1293
        %2038 = vmatprep.subr.mxu0 0.0
        %2039 = vmatpush1.msra.mxu0 %v1294
        %2040 = vmatprep.subr.mxu0 0.0
        %2041 = vmatpush1.msra.mxu0 %v1295
        %2042 = vmatprep.subr.mxu0 0.0
        %2043 = vmatpush1.msra.mxu0 %v1296
        %2044 = vmatprep.subr.mxu0 0.0
        %2045 = vmatpush1.msra.mxu0 %v1297
        %2046 = vmatprep.subr.mxu0 0.0
        %2047 = vmatpush1.msra.mxu0 %v1298
        %2048 = vmatprep.subr.mxu0 0.0
        %2049 = vmatpush1.msra.mxu0 %v1299
        %2050 = vmatprep.subr.mxu0 0.0
        %2051 = vmatpush1.msra.mxu0 %v1300
        %2052 = vmatprep.subr.mxu0 0.0
        %2053 = vmatpush1.msra.mxu0 %v1301
        %2054 = vmatprep.subr.mxu0 0.0
        %2055 = vmatpush1.msra.mxu0 %v1302
        %2056 = vmatprep.subr.mxu0 0.0
        %2057 = vmatpush1.msra.mxu0 %v1303
        %2058 = vmatprep.subr.mxu0 0.0
        %2059 = vmatpush1.msra.mxu0 %v1304
        %2060 = vmatprep.subr.mxu0 0.0
        %2061 = vmatpush1.msra.mxu0 %v1305
        %2062 = vmatprep.subr.mxu0 0.0
        %2063 = vmatpush1.msra.mxu0 %v1306
        %2064 = vmatprep.subr.mxu0 0.0
        %2065 = vmatpush1.msra.mxu0 %v1307
        %2066 = vmatprep.subr.mxu0 0.0
        %2067 = vmatpush1.msra.mxu0 %v1308
        %2068 = vmatprep.subr.mxu0 0.0
        %2069 = vmatpush1.msra.mxu0 %v1309
        %2070 = vmatprep.subr.mxu0 0.0
        %2071 = vmatpush1.msra.mxu0 %v1310
        %2072 = vmatprep.subr.mxu0 0.0
        %2073 = vmatpush1.msra.mxu0 %v1311
        %2074 = vmatprep.mubr.f32.mxu0 %v903
        %2075 = vmatmul.mubr.f32.gmra.mrb[0].mxu0 %v902
        %v2076 = vpop.f32.mrb[0].mxu0
        %v2077 = vadd.f32 %v1852, %v2076
        %v2078 = vpop.f32.mrb[0].mxu0
        %2079 = vmatprep.mubr.f32.mxu0 %v912
        %2080 = vmatmul.mubr.f32.gmra.mrb[0].mxu0 %v911
        %v2081 = vpop.f32.mrb[0].mxu0
        %v2082 = vadd.f32 %v1857, %v2081
        %v2083 = vpop.f32.mrb[0].mxu0
        %2084 = vmatprep.mubr.f32.mxu0 %v921
        %2085 = vmatmul.mubr.f32.gmra.mrb[0].mxu0 %v920
        %v2086 = vpop.f32.mrb[0].mxu0
        %v2087 = vadd.f32 %v1862, %v2086
        %v2088 = vpop.f32.mrb[0].mxu0
        %2089 = vmatprep.mubr.f32.mxu0 %v930
        %2090 = vmatmul.mubr.f32.gmra.mrb[0].mxu0 %v929
        %v2091 = vpop.f32.mrb[0].mxu0
        %v2092 = vadd.f32 %v1867, %v2091
        %v2093 = vpop.f32.mrb[0].mxu0
        %2094 = vmatprep.mubr.f32.mxu0 %v939
        %2095 = vmatmul.mubr.f32.gmra.mrb[0].mxu0 %v938
        %v2096 = vpop.f32.mrb[0].mxu0
        %v2097 = vadd.f32 %v1872, %v2096
        %v2098 = vpop.f32.mrb[0].mxu0
        %2099 = vmatprep.mubr.f32.mxu0 %v948
        %2100 = vmatmul.mubr.f32.gmra.mrb[0].mxu0 %v947
        %v2101 = vpop.f32.mrb[0].mxu0
        %v2102 = vadd.f32 %v1877, %v2101
        %v2103 = vpop.f32.mrb[0].mxu0
        %2104 = vmatprep.mubr.f32.mxu0 %v957
        %2105 = vmatmul.mubr.f32.gmra.mrb[0].mxu0 %v956
        %v2106 = vpop.f32.mrb[0].mxu0
        %v2107 = vadd.f32 %v1882, %v2106
        %v2108 = vpop.f32.mrb[0].mxu0
        %2109 = vmatprep.mubr.f32.mxu0 %v966
        %2110 = vmatmul.mubr.f32.gmra.mrb[0].mxu0 %v965
        %v2111 = vpop.f32.mrb[0].mxu0
        %v2112 = vadd.f32 %v1887, %v2111
        %v2113 = vpop.f32.mrb[0].mxu0
        %2114 = vmatprep.mubr.f32.mxu0 %v975
        %2115 = vmatmul.mubr.f32.gmra.mrb[0].mxu0 %v974
        %v2116 = vpop.f32.mrb[0].mxu0
        %v2117 = vadd.f32 %v1892, %v2116
        %v2118 = vpop.f32.mrb[0].mxu0
        %2119 = vmatprep.mubr.f32.mxu0 %v984
        %2120 = vmatmul.mubr.f32.gmra.mrb[0].mxu0 %v983
        %v2121 = vpop.f32.mrb[0].mxu0
        %v2122 = vadd.f32 %v1897, %v2121
        %v2123 = vpop.f32.mrb[0].mxu0
        %2124 = vmatprep.mubr.f32.mxu0 %v993
        %2125 = vmatmul.mubr.f32.gmra.mrb[0].mxu0 %v992
        %v2126 = vpop.f32.mrb[0].mxu0
        %v2127 = vadd.f32 %v1902, %v2126
        %v2128 = vpop.f32.mrb[0].mxu0
        %2129 = vmatprep.mubr.f32.mxu0 %v1002
        %2130 = vmatmul.mubr.f32.gmra.mrb[0].mxu0 %v1001
        %v2131 = vpop.f32.mrb[0].mxu0
        %v2132 = vadd.f32 %v1907, %v2131
        %v2133 = vpop.f32.mrb[0].mxu0
        %2134 = vmatprep.mubr.f32.mxu0 %v1011
        %2135 = vmatmul.mubr.f32.gmra.mrb[0].mxu0 %v1010
        %v2136 = vpop.f32.mrb[0].mxu0
        %v2137 = vadd.f32 %v1912, %v2136
        %v2138 = vpop.f32.mrb[0].mxu0
        %2139 = vmatprep.mubr.f32.mxu0 %v1020
        %2140 = vmatmul.mubr.f32.gmra.mrb[0].mxu0 %v1019
        %v2141 = vpop.f32.mrb[0].mxu0
        %v2142 = vadd.f32 %v1917, %v2141
        %v2143 = vpop.f32.mrb[0].mxu0
        %2144 = vmatprep.mubr.f32.mxu0 %v1029
        %2145 = vmatmul.mubr.f32.gmra.mrb[0].mxu0 %v1028
        %v2146 = vpop.f32.mrb[0].mxu0
        %v2147 = vadd.f32 %v1922, %v2146
        %v2148 = vpop.f32.mrb[0].mxu0
        %2149 = vmatprep.mubr.f32.mxu0 %v1038
        %2150 = vmatmul.mubr.f32.gmra.mrb[0].mxu0 %v1037
        %v2151 = vpop.f32.mrb[0].mxu0
        %v2152 = vadd.f32 %v1927, %v2151
        %v2153 = vpop.f32.mrb[0].mxu0
        %2154 = vmatprep.mubr.f32.mxu0 %v1047
        %2155 = vmatmul.mubr.f32.gmra.mrb[0].mxu0 %v1046
        %v2156 = vpop.f32.mrb[0].mxu0
        %v2157 = vadd.f32 %v1932, %v2156
        %v2158 = vpop.f32.mrb[0].mxu0
        %2159 = vmatprep.mubr.f32.mxu0 %v1056
        %2160 = vmatmul.mubr.f32.gmra.mrb[0].mxu0 %v1055
        %v2161 = vpop.f32.mrb[0].mxu0
        %v2162 = vadd.f32 %v1937, %v2161
        %v2163 = vpop.f32.mrb[0].mxu0
        %2164 = vmatprep.mubr.f32.mxu0 %v1065
        %2165 = vmatmul.mubr.f32.gmra.mrb[0].mxu0 %v1064
        %v2166 = vpop.f32.mrb[0].mxu0
        %v2167 = vadd.f32 %v1942, %v2166
        %v2168 = vpop.f32.mrb[0].mxu0
        %2169 = vmatprep.mubr.f32.mxu0 %v1074
        %2170 = vmatmul.mubr.f32.gmra.mrb[0].mxu0 %v1073
        %v2171 = vpop.f32.mrb[0].mxu0
        %v2172 = vadd.f32 %v1947, %v2171
        %v2173 = vpop.f32.mrb[0].mxu0
        %2174 = vmatprep.mubr.f32.mxu0 %v1083
        %2175 = vmatmul.mubr.f32.gmra.mrb[0].mxu0 %v1082
        %v2176 = vpop.f32.mrb[0].mxu0
        %v2177 = vadd.f32 %v1952, %v2176
        %v2178 = vpop.f32.mrb[0].mxu0
        %2179 = vmatprep.mubr.f32.mxu0 %v1092
        %2180 = vmatmul.mubr.f32.gmra.mrb[0].mxu0 %v1091
        %v2181 = vpop.f32.mrb[0].mxu0
        %v2182 = vadd.f32 %v1957, %v2181
        %v2183 = vpop.f32.mrb[0].mxu0
        %2184 = vmatprep.mubr.f32.mxu0 %v1101
        %2185 = vmatmul.mubr.f32.gmra.mrb[0].mxu0 %v1100
        %v2186 = vpop.f32.mrb[0].mxu0
        %v2187 = vadd.f32 %v1962, %v2186
        %v2188 = vpop.f32.mrb[0].mxu0
        %2189 = vmatprep.mubr.f32.mxu0 %v1110
        %2190 = vmatmul.mubr.f32.gmra.mrb[0].mxu0 %v1109
        %v2191 = vpop.f32.mrb[0].mxu0
        %v2192 = vadd.f32 %v1967, %v2191
        %v2193 = vpop.f32.mrb[0].mxu0
        %2194 = vmatprep.mubr.f32.mxu0 %v1119
        %2195 = vmatmul.mubr.f32.gmra.mrb[0].mxu0 %v1118
        %v2196 = vpop.f32.mrb[0].mxu0
        %v2197 = vadd.f32 %v1972, %v2196
        %v2198 = vpop.f32.mrb[0].mxu0
        %2199 = vmatprep.mubr.f32.mxu0 %v1128
        %2200 = vmatmul.mubr.f32.gmra.mrb[0].mxu0 %v1127
        %v2201 = vpop.f32.mrb[0].mxu0
        %v2202 = vadd.f32 %v1977, %v2201
        %v2203 = vpop.f32.mrb[0].mxu0
        %2204 = vmatprep.mubr.f32.mxu0 %v1137
        %2205 = vmatmul.mubr.f32.gmra.mrb[0].mxu0 %v1136
        %v2206 = vpop.f32.mrb[0].mxu0
        %v2207 = vadd.f32 %v1982, %v2206
        %v2208 = vpop.f32.mrb[0].mxu0
        %2209 = vmatprep.mubr.f32.mxu0 %v1146
        %2210 = vmatmul.mubr.f32.gmra.mrb[0].mxu0 %v1145
        %v2211 = vpop.f32.mrb[0].mxu0
        %v2212 = vadd.f32 %v1987, %v2211
        %v2213 = vpop.f32.mrb[0].mxu0
        %2214 = vmatprep.mubr.f32.mxu0 %v1155
        %2215 = vmatmul.mubr.f32.gmra.mrb[0].mxu0 %v1154
        %v2216 = vpop.f32.mrb[0].mxu0
        %v2217 = vadd.f32 %v1992, %v2216
        %v2218 = vpop.f32.mrb[0].mxu0
        %2219 = vmatprep.mubr.f32.mxu0 %v1164
        %2220 = vmatmul.mubr.f32.gmra.mrb[0].mxu0 %v1163
        %v2221 = vpop.f32.mrb[0].mxu0
        %v2222 = vadd.f32 %v1997, %v2221
        %v2223 = vpop.f32.mrb[0].mxu0
        %2224 = vmatprep.mubr.f32.mxu0 %v1173
        %2225 = vmatmul.mubr.f32.gmra.mrb[0].mxu0 %v1172
        %v2226 = vpop.f32.mrb[0].mxu0
        %v2227 = vadd.f32 %v2002, %v2226
        %v2228 = vpop.f32.mrb[0].mxu0
        %2229 = vmatprep.mubr.f32.mxu0 %v1182
        %2230 = vmatmul.mubr.f32.gmra.mrb[0].mxu0 %v1181
        %v2231 = vpop.f32.mrb[0].mxu0
        %v2232 = vadd.f32 %v2007, %v2231
        %v2233 = vpop.f32.mrb[0].mxu0
        %2234 = vdwg.mxu0
        %2235 = vmatprep.subr.mxu0 0.0
        %2236 = vmatpush1.msra.mxu0 %v1312
        %2237 = vmatprep.subr.mxu0 0.0
        %2238 = vmatpush1.msra.mxu0 %v1313
        %2239 = vmatprep.subr.mxu0 0.0
        %2240 = vmatpush1.msra.mxu0 %v1314
        %2241 = vmatprep.subr.mxu0 0.0
        %2242 = vmatpush1.msra.mxu0 %v1315
        %2243 = vmatprep.subr.mxu0 0.0
        %2244 = vmatpush1.msra.mxu0 %v1316
        %2245 = vmatprep.subr.mxu0 0.0
        %2246 = vmatpush1.msra.mxu0 %v1317
        %2247 = vmatprep.subr.mxu0 0.0
        %2248 = vmatpush1.msra.mxu0 %v1318
        %2249 = vmatprep.subr.mxu0 0.0
        %2250 = vmatpush1.msra.mxu0 %v1319
        %2251 = vmatprep.subr.mxu0 0.0
        %2252 = vmatpush1.msra.mxu0 %v1320
        %2253 = vmatprep.subr.mxu0 0.0
        %2254 = vmatpush1.msra.mxu0 %v1321
        %2255 = vmatprep.subr.mxu0 0.0
        %2256 = vmatpush1.msra.mxu0 %v1322
        %2257 = vmatprep.subr.mxu0 0.0
        %2258 = vmatpush1.msra.mxu0 %v1323
        %2259 = vmatprep.subr.mxu0 0.0
        %2260 = vmatpush1.msra.mxu0 %v1324
        %2261 = vmatprep.subr.mxu0 0.0
        %2262 = vmatpush1.msra.mxu0 %v1325
        %2263 = vmatprep.subr.mxu0 0.0
        %2264 = vmatpush1.msra.mxu0 %v1326
        %2265 = vmatprep.subr.mxu0 0.0
        %2266 = vmatpush1.msra.mxu0 %v1327
        %2267 = vmatprep.subr.mxu0 0.0
        %2268 = vmatpush1.msra.mxu0 0.0
        %2269 = vmatprep.subr.mxu0 0.0
        %2270 = vmatpush1.msra.mxu0 0.0
        %2271 = vmatprep.subr.mxu0 0.0
        %2272 = vmatpush1.msra.mxu0 0.0
        %2273 = vmatprep.subr.mxu0 0.0
        %2274 = vmatpush1.msra.mxu0 0.0
        %2275 = vmatprep.subr.mxu0 0.0
        %2276 = vmatpush1.msra.mxu0 0.0
        %2277 = vmatprep.subr.mxu0 0.0
        %2278 = vmatpush1.msra.mxu0 0.0
        %2279 = vmatprep.subr.mxu0 0.0
        %2280 = vmatpush1.msra.mxu0 0.0
        %2281 = vmatprep.subr.mxu0 0.0
        %2282 = vmatpush1.msra.mxu0 0.0
        %2283 = vmatprep.subr.mxu0 0.0
        %2284 = vmatpush1.msra.mxu0 0.0
        %2285 = vmatprep.subr.mxu0 0.0
        %2286 = vmatpush1.msra.mxu0 0.0
        %2287 = vmatprep.subr.mxu0 0.0
        %2288 = vmatpush1.msra.mxu0 0.0
        %2289 = vmatprep.subr.mxu0 0.0
        %2290 = vmatpush1.msra.mxu0 0.0
        %2291 = vmatprep.subr.mxu0 0.0
        %2292 = vmatpush1.msra.mxu0 0.0
        %2293 = vmatprep.subr.mxu0 0.0
        %2294 = vmatpush1.msra.mxu0 0.0
        %2295 = vmatprep.subr.mxu0 0.0
        %2296 = vmatpush1.msra.mxu0 0.0
        %2297 = vmatprep.subr.mxu0 0.0
        %2298 = vmatpush1.msra.mxu0 0.0
        %2299 = vmatprep.mubr.f32.mxu0 0.0
        %2300 = vmatmul.mubr.f32.gmra.mrb[0].mxu0 %v904
        %v2301 = vpop.f32.mrb[0].mxu0
        %v2302 = vadd.f32 %v2077, %v2301
        %v2303 = vpop.f32.mrb[0].mxu0
        %2304 = vmatprep.mubr.f32.mxu0 0.0
        %2305 = vmatmul.mubr.f32.gmra.mrb[0].mxu0 %v913
        %v2306 = vpop.f32.mrb[0].mxu0
        %v2307 = vadd.f32 %v2082, %v2306
        %v2308 = vpop.f32.mrb[0].mxu0
        %2309 = vmatprep.mubr.f32.mxu0 0.0
        %2310 = vmatmul.mubr.f32.gmra.mrb[0].mxu0 %v922
        %v2311 = vpop.f32.mrb[0].mxu0
        %v2312 = vadd.f32 %v2087, %v2311
        %v2313 = vpop.f32.mrb[0].mxu0
        %2314 = vmatprep.mubr.f32.mxu0 0.0
        %2315 = vmatmul.mubr.f32.gmra.mrb[0].mxu0 %v931
        %v2316 = vpop.f32.mrb[0].mxu0
        %v2317 = vadd.f32 %v2092, %v2316
        %v2318 = vpop.f32.mrb[0].mxu0
        %2319 = vmatprep.mubr.f32.mxu0 0.0
        %2320 = vmatmul.mubr.f32.gmra.mrb[0].mxu0 %v940
        %v2321 = vpop.f32.mrb[0].mxu0
        %v2322 = vadd.f32 %v2097, %v2321
        %v2323 = vpop.f32.mrb[0].mxu0
        %2324 = vmatprep.mubr.f32.mxu0 0.0
        %2325 = vmatmul.mubr.f32.gmra.mrb[0].mxu0 %v949
        %v2326 = vpop.f32.mrb[0].mxu0
        %v2327 = vadd.f32 %v2102, %v2326
        %v2328 = vpop.f32.mrb[0].mxu0
        %2329 = vmatprep.mubr.f32.mxu0 0.0
        %2330 = vmatmul.mubr.f32.gmra.mrb[0].mxu0 %v958
        %v2331 = vpop.f32.mrb[0].mxu0
        %v2332 = vadd.f32 %v2107, %v2331
        %v2333 = vpop.f32.mrb[0].mxu0
        %2334 = vmatprep.mubr.f32.mxu0 0.0
        %2335 = vmatmul.mubr.f32.gmra.mrb[0].mxu0 %v967
        %v2336 = vpop.f32.mrb[0].mxu0
        %v2337 = vadd.f32 %v2112, %v2336
        %v2338 = vpop.f32.mrb[0].mxu0
        %2339 = vmatprep.mubr.f32.mxu0 0.0
        %2340 = vmatmul.mubr.f32.gmra.mrb[0].mxu0 %v976
        %v2341 = vpop.f32.mrb[0].mxu0
        %v2342 = vadd.f32 %v2117, %v2341
        %v2343 = vpop.f32.mrb[0].mxu0
        %2344 = vmatprep.mubr.f32.mxu0 0.0
        %2345 = vmatmul.mubr.f32.gmra.mrb[0].mxu0 %v985
        %v2346 = vpop.f32.mrb[0].mxu0
        %v2347 = vadd.f32 %v2122, %v2346
        %v2348 = vpop.f32.mrb[0].mxu0
        %2349 = vmatprep.mubr.f32.mxu0 0.0
        %2350 = vmatmul.mubr.f32.gmra.mrb[0].mxu0 %v994
        %v2351 = vpop.f32.mrb[0].mxu0
        %v2352 = vadd.f32 %v2127, %v2351
        %v2353 = vpop.f32.mrb[0].mxu0
        %2354 = vmatprep.mubr.f32.mxu0 0.0
        %2355 = vmatmul.mubr.f32.gmra.mrb[0].mxu0 %v1003
        %v2356 = vpop.f32.mrb[0].mxu0
        %v2357 = vadd.f32 %v2132, %v2356
        %v2358 = vpop.f32.mrb[0].mxu0
        %2359 = vmatprep.mubr.f32.mxu0 0.0
        %2360 = vmatmul.mubr.f32.gmra.mrb[0].mxu0 %v1012
        %v2361 = vpop.f32.mrb[0].mxu0
        %v2362 = vadd.f32 %v2137, %v2361
        %v2363 = vpop.f32.mrb[0].mxu0
        %2364 = vmatprep.mubr.f32.mxu0 0.0
        %2365 = vmatmul.mubr.f32.gmra.mrb[0].mxu0 %v1021
        %v2366 = vpop.f32.mrb[0].mxu0
        %v2367 = vadd.f32 %v2142, %v2366
        %v2368 = vpop.f32.mrb[0].mxu0
        %2369 = vmatprep.mubr.f32.mxu0 0.0
        %2370 = vmatmul.mubr.f32.gmra.mrb[0].mxu0 %v1030
        %v2371 = vpop.f32.mrb[0].mxu0
        %v2372 = vadd.f32 %v2147, %v2371
        %v2373 = vpop.f32.mrb[0].mxu0
        %2374 = vmatprep.mubr.f32.mxu0 0.0
        %2375 = vmatmul.mubr.f32.gmra.mrb[0].mxu0 %v1039
        %v2376 = vpop.f32.mrb[0].mxu0
        %v2377 = vadd.f32 %v2152, %v2376
        %v2378 = vpop.f32.mrb[0].mxu0
        %2379 = vmatprep.mubr.f32.mxu0 0.0
        %2380 = vmatmul.mubr.f32.gmra.mrb[0].mxu0 %v1048
        %v2381 = vpop.f32.mrb[0].mxu0
        %v2382 = vadd.f32 %v2157, %v2381
        %v2383 = vpop.f32.mrb[0].mxu0
        %2384 = vmatprep.mubr.f32.mxu0 0.0
        %2385 = vmatmul.mubr.f32.gmra.mrb[0].mxu0 %v1057
        %v2386 = vpop.f32.mrb[0].mxu0
        %v2387 = vadd.f32 %v2162, %v2386
        %v2388 = vpop.f32.mrb[0].mxu0
        %2389 = vmatprep.mubr.f32.mxu0 0.0
        %2390 = vmatmul.mubr.f32.gmra.mrb[0].mxu0 %v1066
        %v2391 = vpop.f32.mrb[0].mxu0
        %v2392 = vadd.f32 %v2167, %v2391
        %v2393 = vpop.f32.mrb[0].mxu0
        %2394 = vmatprep.mubr.f32.mxu0 0.0
        %2395 = vmatmul.mubr.f32.gmra.mrb[0].mxu0 %v1075
        %v2396 = vpop.f32.mrb[0].mxu0
        %v2397 = vadd.f32 %v2172, %v2396
        %v2398 = vpop.f32.mrb[0].mxu0
        %2399 = vmatprep.mubr.f32.mxu0 0.0
        %2400 = vmatmul.mubr.f32.gmra.mrb[0].mxu0 %v1084
        %v2401 = vpop.f32.mrb[0].mxu0
        %v2402 = vadd.f32 %v2177, %v2401
        %v2403 = vpop.f32.mrb[0].mxu0
        %2404 = vmatprep.mubr.f32.mxu0 0.0
        %2405 = vmatmul.mubr.f32.gmra.mrb[0].mxu0 %v1093
        %v2406 = vpop.f32.mrb[0].mxu0
        %v2407 = vadd.f32 %v2182, %v2406
        %v2408 = vpop.f32.mrb[0].mxu0
        %2409 = vmatprep.mubr.f32.mxu0 0.0
        %2410 = vmatmul.mubr.f32.gmra.mrb[0].mxu0 %v1102
        %v2411 = vpop.f32.mrb[0].mxu0
        %v2412 = vadd.f32 %v2187, %v2411
        %v2413 = vpop.f32.mrb[0].mxu0
        %2414 = vmatprep.mubr.f32.mxu0 0.0
        %2415 = vmatmul.mubr.f32.gmra.mrb[0].mxu0 %v1111
        %v2416 = vpop.f32.mrb[0].mxu0
        %v2417 = vadd.f32 %v2192, %v2416
        %v2418 = vpop.f32.mrb[0].mxu0
        %2419 = vmatprep.mubr.f32.mxu0 0.0
        %2420 = vmatmul.mubr.f32.gmra.mrb[0].mxu0 %v1120
        %v2421 = vpop.f32.mrb[0].mxu0
        %v2422 = vadd.f32 %v2197, %v2421
        %v2423 = vpop.f32.mrb[0].mxu0
        %2424 = vmatprep.mubr.f32.mxu0 0.0
        %2425 = vmatmul.mubr.f32.gmra.mrb[0].mxu0 %v1129
        %v2426 = vpop.f32.mrb[0].mxu0
        %v2427 = vadd.f32 %v2202, %v2426
        %v2428 = vpop.f32.mrb[0].mxu0
        %2429 = vmatprep.mubr.f32.mxu0 0.0
        %2430 = vmatmul.mubr.f32.gmra.mrb[0].mxu0 %v1138
        %v2431 = vpop.f32.mrb[0].mxu0
        %v2432 = vadd.f32 %v2207, %v2431
        %v2433 = vpop.f32.mrb[0].mxu0
        %2434 = vmatprep.mubr.f32.mxu0 0.0
        %2435 = vmatmul.mubr.f32.gmra.mrb[0].mxu0 %v1147
        %v2436 = vpop.f32.mrb[0].mxu0
        %v2437 = vadd.f32 %v2212, %v2436
        %v2438 = vpop.f32.mrb[0].mxu0
        %2439 = vmatprep.mubr.f32.mxu0 0.0
        %2440 = vmatmul.mubr.f32.gmra.mrb[0].mxu0 %v1156
        %v2441 = vpop.f32.mrb[0].mxu0
        %v2442 = vadd.f32 %v2217, %v2441
        %v2443 = vpop.f32.mrb[0].mxu0
        %2444 = vmatprep.mubr.f32.mxu0 0.0
        %2445 = vmatmul.mubr.f32.gmra.mrb[0].mxu0 %v1165
        %v2446 = vpop.f32.mrb[0].mxu0
        %v2447 = vadd.f32 %v2222, %v2446
        %v2448 = vpop.f32.mrb[0].mxu0
        %2449 = vmatprep.mubr.f32.mxu0 0.0
        %2450 = vmatmul.mubr.f32.gmra.mrb[0].mxu0 %v1174
        %v2451 = vpop.f32.mrb[0].mxu0
        %v2452 = vadd.f32 %v2227, %v2451
        %v2453 = vpop.f32.mrb[0].mxu0
        %2454 = vmatprep.mubr.f32.mxu0 0.0
        %2455 = vmatmul.mubr.f32.gmra.mrb[0].mxu0 %v1183
        %v2456 = vpop.f32.mrb[0].mxu0
        %v2457 = vadd.f32 %v2232, %v2456
        %v2458 = vpop.f32.mrb[0].mxu0
        %2459 = vdwg.mxu0
        %v2460 = vmax.f32 %v2302, 0.0
        %v2461 = vmax.f32 %v2307, 0.0
        %v2462 = vmax.f32 %v2312, 0.0
        %v2463 = vmax.f32 %v2317, 0.0
        %v2464 = vmax.f32 %v2322, 0.0
        %v2465 = vmax.f32 %v2327, 0.0
        %v2466 = vmax.f32 %v2332, 0.0
        %v2467 = vmax.f32 %v2337, 0.0
        %v2468 = vmax.f32 %v2342, 0.0
        %v2469 = vmax.f32 %v2347, 0.0
        %v2470 = vmax.f32 %v2352, 0.0
        %v2471 = vmax.f32 %v2357, 0.0
        %v2472 = vmax.f32 %v2362, 0.0
        %v2473 = vmax.f32 %v2367, 0.0
        %v2474 = vmax.f32 %v2372, 0.0
        %v2475 = vmax.f32 %v2377, 0.0
        %v2476 = vmax.f32 %v2382, 0.0
        %v2477 = vmax.f32 %v2387, 0.0
        %v2478 = vmax.f32 %v2392, 0.0
        %v2479 = vmax.f32 %v2397, 0.0
        %v2480 = vmax.f32 %v2402, 0.0
        %v2481 = vmax.f32 %v2407, 0.0
        %v2482 = vmax.f32 %v2412, 0.0
        %v2483 = vmax.f32 %v2417, 0.0
        %v2484 = vmax.f32 %v2422, 0.0
        %v2485 = vmax.f32 %v2427, 0.0
        %v2486 = vmax.f32 %v2432, 0.0
        %v2487 = vmax.f32 %v2437, 0.0
        %v2488 = vmax.f32 %v2442, 0.0
        %v2489 = vmax.f32 %v2447, 0.0
        %v2490 = vmax.f32 %v2452, 0.0
        %v2491 = vmax.f32 %v2457, 0.0
        %2492 = vst [vmem:[%s285 + $0x1] sm:$0xff] %v2460
        %2493 = vst [vmem:[%s285 + $0x9] sm:$0xff] %v2461
        %2494 = vst [vmem:[%s285 + $0x19] sm:$0xff] %v2462
        %2495 = vst [vmem:[%s285 + $0x21] sm:$0xff] %v2463
        %2496 = vst [vmem:[%s285 + $0x31] sm:$0xff] %v2464
        %2497 = vst [vmem:[%s285 + $0x39] sm:$0xff] %v2465
        %2498 = vst [vmem:[%s285 + $0x49] sm:$0xff] %v2466
        %2499 = vst [vmem:[%s285 + $0x51] sm:$0xff] %v2467
        %2500 = vst [vmem:[%s285 + $0x61] sm:$0xff] %v2468
        %2501 = vst [vmem:[%s285 + $0x69] sm:$0xff] %v2469
        %2502 = vst [vmem:[%s285 + $0x79] sm:$0xff] %v2470
        %2503 = vst [vmem:[%s285 + $0x81] sm:$0xff] %v2471
        %2504 = vst [vmem:[%s285 + $0x91] sm:$0xff] %v2472
        %2505 = vst [vmem:[%s285 + $0x99] sm:$0xff] %v2473
        %2506 = vst [vmem:[%s285 + $0xa9] sm:$0xff] %v2474
        %2507 = vst [vmem:[%s285 + $0xb1] sm:$0xff] %v2475
        %2508 = vst [vmem:[%s285 + $0xc1] sm:$0xff] %v2476
        %2509 = vst [vmem:[%s285 + $0xc9] sm:$0xff] %v2477
        %2510 = vst [vmem:[%s285 + $0xd9] sm:$0xff] %v2478
        %2511 = vst [vmem:[%s285 + $0xe1] sm:$0xff] %v2479
        %2512 = vst [vmem:[%s285 + $0xf1] sm:$0xff] %v2480
        %2513 = vst [vmem:[%s285 + $0xf9] sm:$0xff] %v2481
        %2514 = vst [vmem:[%s285 + $0x109] sm:$0xff] %v2482
        %2515 = vst [vmem:[%s285 + $0x111] sm:$0xff] %v2483
        %2516 = vst [vmem:[%s285 + $0x121] sm:$0xff] %v2484
        %2517 = vst [vmem:[%s285 + $0x129] sm:$0xff] %v2485
        %2518 = vst [vmem:[%s285 + $0x139] sm:$0xff] %v2486
        %2519 = vst [vmem:[%s285 + $0x141] sm:$0xff] %v2487
        %2520 = vst [vmem:[%s285 + $0x151] sm:$0xff] %v2488
        %2521 = vst [vmem:[%s285 + $0x159] sm:$0xff] %v2489
        %2522 = vst [vmem:[%s285 + $0x169] sm:$0xff] %v2490
        %2523 = vst [vmem:[%s285 + $0x171] sm:$0xff] %v2491
        %v2524 = vld [vmem:[#allocation2] sm:$0xff]
        %v2525 = vld [vmem:[#allocation2 + $0x8] sm:$0xff]
        %v2526 = vld [vmem:[#allocation2 + $0x18] sm:$0xff]
        %v2527 = vld [vmem:[#allocation2 + $0x20] sm:$0xff]
        %v2528 = vld [vmem:[#allocation2 + $0x30] sm:$0xff]
        %v2529 = vld [vmem:[#allocation2 + $0x38] sm:$0xff]
        %v2530 = vld [vmem:[#allocation2 + $0x48] sm:$0xff]
        %v2531 = vld [vmem:[#allocation2 + $0x50] sm:$0xff]
        %v2532 = vld [vmem:[#allocation2 + $0x60] sm:$0xff]
        %v2533 = vld [vmem:[#allocation2 + $0x68] sm:$0xff]
        %v2534 = vld [vmem:[#allocation2 + $0x78] sm:$0xff]
        %v2535 = vld [vmem:[#allocation2 + $0x80] sm:$0xff]
        %v2536 = vld [vmem:[#allocation2 + $0x90] sm:$0xff]
        %v2537 = vld [vmem:[#allocation2 + $0x98] sm:$0xff]
        %v2538 = vld [vmem:[#allocation2 + $0xa8] sm:$0xff]
        %v2539 = vld [vmem:[#allocation2 + $0xb0] sm:$0xff]
        %v2540 = vld [vmem:[#allocation2 + $0xc0] sm:$0xff]
        %v2541 = vld [vmem:[#allocation2 + $0xc8] sm:$0xff]
        %v2542 = vld [vmem:[#allocation2 + $0xd8] sm:$0xff]
        %v2543 = vld [vmem:[#allocation2 + $0xe0] sm:$0xff]
        %v2544 = vld [vmem:[#allocation2 + $0xf0] sm:$0xff]
        %v2545 = vld [vmem:[#allocation2 + $0xf8] sm:$0xff]
        %v2546 = vld [vmem:[#allocation2 + $0x108] sm:$0xff]
        %v2547 = vld [vmem:[#allocation2 + $0x110] sm:$0xff]
        %v2548 = vld [vmem:[#allocation2 + $0x120] sm:$0xff]
        %v2549 = vld [vmem:[#allocation2 + $0x128] sm:$0xff]
        %v2550 = vld [vmem:[#allocation2 + $0x138] sm:$0xff]
        %v2551 = vld [vmem:[#allocation2 + $0x140] sm:$0xff]
        %v2552 = vld [vmem:[#allocation2 + $0x150] sm:$0xff]
        %v2553 = vld [vmem:[#allocation2 + $0x158] sm:$0xff]
        %v2554 = vld [vmem:[#allocation2 + $0x168] sm:$0xff]
        %v2555 = vld [vmem:[#allocation2 + $0x170] sm:$0xff]
        %2556 = vst [vmem:[#allocation3] sm:$0xff] %v2524
        %2557 = vst [vmem:[#allocation3 + $0x48] sm:$0xff] %v2525
        %2558 = vst [vmem:[#allocation3 + $0x90] sm:$0xff] %v2526
        %2559 = vst [vmem:[#allocation3 + $0xd8] sm:$0xff] %v2527
        %2560 = vst [vmem:[#allocation3 + $0x120] sm:$0xff] %v2528
        %2561 = vst [vmem:[#allocation3 + $0x168] sm:$0xff] %v2529
        %2562 = vst [vmem:[#allocation3 + $0x1b0] sm:$0xff] %v2530
        %2563 = vst [vmem:[#allocation3 + $0x1f8] sm:$0xff] %v2531
        %2564 = vst [vmem:[#allocation3 + $0x240] sm:$0xff] %v2532
        %2565 = vst [vmem:[#allocation3 + $0x288] sm:$0xff] %v2533
        %2566 = vst [vmem:[#allocation3 + $0x2d0] sm:$0xff] %v2534
        %2567 = vst [vmem:[#allocation3 + $0x318] sm:$0xff] %v2535
        %2568 = vst [vmem:[#allocation3 + $0x360] sm:$0xff] %v2536
        %2569 = vst [vmem:[#allocation3 + $0x3a8] sm:$0xff] %v2537
        %2570 = vst [vmem:[#allocation3 + $0x3f0] sm:$0xff] %v2538
        %2571 = vst [vmem:[#allocation3 + $0x438] sm:$0xff] %v2539
        %2572 = vst [vmem:[#allocation3 + $0x480] sm:$0xff] %v2540
        %2573 = vst [vmem:[#allocation3 + $0x4c8] sm:$0xff] %v2541
        %2574 = vst [vmem:[#allocation3 + $0x510] sm:$0xff] %v2542
        %2575 = vst [vmem:[#allocation3 + $0x558] sm:$0xff] %v2543
        %2576 = vst [vmem:[#allocation3 + $0x5a0] sm:$0xff] %v2544
        %2577 = vst [vmem:[#allocation3 + $0x5e8] sm:$0xff] %v2545
        %2578 = vst [vmem:[#allocation3 + $0x630] sm:$0xff] %v2546
        %2579 = vst [vmem:[#allocation3 + $0x678] sm:$0xff] %v2547
        %2580 = vst [vmem:[#allocation3 + $0x6c0] sm:$0xff] %v2548
        %2581 = vst [vmem:[#allocation3 + $0x708] sm:$0xff] %v2549
        %2582 = vst [vmem:[#allocation3 + $0x750] sm:$0xff] %v2550
        %2583 = vst [vmem:[#allocation3 + $0x798] sm:$0xff] %v2551
        %2584 = vst [vmem:[#allocation3 + $0x7e0] sm:$0xff] %v2552
        %2585 = vst [vmem:[#allocation3 + $0x828] sm:$0xff] %v2553
        %2586 = vst [vmem:[#allocation3 + $0x870] sm:$0xff] %v2554
        %2587 = vst [vmem:[#allocation3 + $0x8b8] sm:$0xff] %v2555
        %v2588 = vld [vmem:[#allocation2 + $0x1] sm:$0xff]
        %v2589 = vld [vmem:[#allocation2 + $0x9] sm:$0xff]
        %v2590 = vld [vmem:[#allocation2 + $0x19] sm:$0xff]
        %v2591 = vld [vmem:[#allocation2 + $0x21] sm:$0xff]
        %v2592 = vld [vmem:[#allocation2 + $0x31] sm:$0xff]
        %v2593 = vld [vmem:[#allocation2 + $0x39] sm:$0xff]
        %v2594 = vld [vmem:[#allocation2 + $0x49] sm:$0xff]
        %v2595 = vld [vmem:[#allocation2 + $0x51] sm:$0xff]
        %v2596 = vld [vmem:[#allocation2 + $0x61] sm:$0xff]
        %v2597 = vld [vmem:[#allocation2 + $0x69] sm:$0xff]
        %v2598 = vld [vmem:[#allocation2 + $0x79] sm:$0xff]
        %v2599 = vld [vmem:[#allocation2 + $0x81] sm:$0xff]
        %v2600 = vld [vmem:[#allocation2 + $0x91] sm:$0xff]
        %v2601 = vld [vmem:[#allocation2 + $0x99] sm:$0xff]
        %v2602 = vld [vmem:[#allocation2 + $0xa9] sm:$0xff]
        %v2603 = vld [vmem:[#allocation2 + $0xb1] sm:$0xff]
        %v2604 = vld [vmem:[#allocation2 + $0xc1] sm:$0xff]
        %v2605 = vld [vmem:[#allocation2 + $0xc9] sm:$0xff]
        %v2606 = vld [vmem:[#allocation2 + $0xd9] sm:$0xff]
        %v2607 = vld [vmem:[#allocation2 + $0xe1] sm:$0xff]
        %v2608 = vld [vmem:[#allocation2 + $0xf1] sm:$0xff]
        %v2609 = vld [vmem:[#allocation2 + $0xf9] sm:$0xff]
        %v2610 = vld [vmem:[#allocation2 + $0x109] sm:$0xff]
        %v2611 = vld [vmem:[#allocation2 + $0x111] sm:$0xff]
        %v2612 = vld [vmem:[#allocation2 + $0x121] sm:$0xff]
        %v2613 = vld [vmem:[#allocation2 + $0x129] sm:$0xff]
        %v2614 = vld [vmem:[#allocation2 + $0x139] sm:$0xff]
        %v2615 = vld [vmem:[#allocation2 + $0x141] sm:$0xff]
        %v2616 = vld [vmem:[#allocation2 + $0x151] sm:$0xff]
        %v2617 = vld [vmem:[#allocation2 + $0x159] sm:$0xff]
        %v2618 = vld [vmem:[#allocation2 + $0x169] sm:$0xff]
        %v2619 = vld [vmem:[#allocation2 + $0x171] sm:$0xff]
        %2620 = vst [vmem:[#allocation3 + $0x8] sm:$0xff] %v2588
        %2621 = vst [vmem:[#allocation3 + $0x50] sm:$0xff] %v2589
        %2622 = vst [vmem:[#allocation3 + $0x98] sm:$0xff] %v2590
        %2623 = vst [vmem:[#allocation3 + $0xe0] sm:$0xff] %v2591
        %2624 = vst [vmem:[#allocation3 + $0x128] sm:$0xff] %v2592
        %2625 = vst [vmem:[#allocation3 + $0x170] sm:$0xff] %v2593
        %2626 = vst [vmem:[#allocation3 + $0x1b8] sm:$0xff] %v2594
        %2627 = vst [vmem:[#allocation3 + $0x200] sm:$0xff] %v2595
        %2628 = vst [vmem:[#allocation3 + $0x248] sm:$0xff] %v2596
        %2629 = vst [vmem:[#allocation3 + $0x290] sm:$0xff] %v2597
        %2630 = vst [vmem:[#allocation3 + $0x2d8] sm:$0xff] %v2598
        %2631 = vst [vmem:[#allocation3 + $0x320] sm:$0xff] %v2599
        %2632 = vst [vmem:[#allocation3 + $0x368] sm:$0xff] %v2600
        %2633 = vst [vmem:[#allocation3 + $0x3b0] sm:$0xff] %v2601
        %2634 = vst [vmem:[#allocation3 + $0x3f8] sm:$0xff] %v2602
        %2635 = vst [vmem:[#allocation3 + $0x440] sm:$0xff] %v2603
        %2636 = vst [vmem:[#allocation3 + $0x488] sm:$0xff] %v2604
        %2637 = vst [vmem:[#allocation3 + $0x4d0] sm:$0xff] %v2605
        %2638 = vst [vmem:[#allocation3 + $0x518] sm:$0xff] %v2606
        %2639 = vst [vmem:[#allocation3 + $0x560] sm:$0xff] %v2607
        %2640 = vst [vmem:[#allocation3 + $0x5a8] sm:$0xff] %v2608
        %2641 = vst [vmem:[#allocation3 + $0x5f0] sm:$0xff] %v2609
        %2642 = vst [vmem:[#allocation3 + $0x638] sm:$0xff] %v2610
        %2643 = vst [vmem:[#allocation3 + $0x680] sm:$0xff] %v2611
        %2644 = vst [vmem:[#allocation3 + $0x6c8] sm:$0xff] %v2612
        %2645 = vst [vmem:[#allocation3 + $0x710] sm:$0xff] %v2613
        %2646 = vst [vmem:[#allocation3 + $0x758] sm:$0xff] %v2614
        %2647 = vst [vmem:[#allocation3 + $0x7a0] sm:$0xff] %v2615
        %2648 = vst [vmem:[#allocation3 + $0x7e8] sm:$0xff] %v2616
        %2649 = vst [vmem:[#allocation3 + $0x830] sm:$0xff] %v2617
        %2650 = vst [vmem:[#allocation3 + $0x878] sm:$0xff] %v2618
        %2651 = vst [vmem:[#allocation3 + $0x8c0] sm:$0xff] %v2619
        %v2652 = vld [vmem:[#allocation2 + $0x2] sm:$0xff]
        %v2653 = vld [vmem:[#allocation2 + $0xa] sm:$0xff]
        %v2654 = vld [vmem:[#allocation2 + $0x1a] sm:$0xff]
        %v2655 = vld [vmem:[#allocation2 + $0x22] sm:$0xff]
        %v2656 = vld [vmem:[#allocation2 + $0x32] sm:$0xff]
        %v2657 = vld [vmem:[#allocation2 + $0x3a] sm:$0xff]
        %v2658 = vld [vmem:[#allocation2 + $0x4a] sm:$0xff]
        %v2659 = vld [vmem:[#allocation2 + $0x52] sm:$0xff]
        %v2660 = vld [vmem:[#allocation2 + $0x62] sm:$0xff]
        %v2661 = vld [vmem:[#allocation2 + $0x6a] sm:$0xff]
        %v2662 = vld [vmem:[#allocation2 + $0x7a] sm:$0xff]
        %v2663 = vld [vmem:[#allocation2 + $0x82] sm:$0xff]
        %v2664 = vld [vmem:[#allocation2 + $0x92] sm:$0xff]
        %v2665 = vld [vmem:[#allocation2 + $0x9a] sm:$0xff]
        %v2666 = vld [vmem:[#allocation2 + $0xaa] sm:$0xff]
        %v2667 = vld [vmem:[#allocation2 + $0xb2] sm:$0xff]
        %v2668 = vld [vmem:[#allocation2 + $0xc2] sm:$0xff]
        %v2669 = vld [vmem:[#allocation2 + $0xca] sm:$0xff]
        %v2670 = vld [vmem:[#allocation2 + $0xda] sm:$0xff]
        %v2671 = vld [vmem:[#allocation2 + $0xe2] sm:$0xff]
        %v2672 = vld [vmem:[#allocation2 + $0xf2] sm:$0xff]
        %v2673 = vld [vmem:[#allocation2 + $0xfa] sm:$0xff]
        %v2674 = vld [vmem:[#allocation2 + $0x10a] sm:$0xff]
        %v2675 = vld [vmem:[#allocation2 + $0x112] sm:$0xff]
        %v2676 = vld [vmem:[#allocation2 + $0x122] sm:$0xff]
        %v2677 = vld [vmem:[#allocation2 + $0x12a] sm:$0xff]
        %v2678 = vld [vmem:[#allocation2 + $0x13a] sm:$0xff]
        %v2679 = vld [vmem:[#allocation2 + $0x142] sm:$0xff]
        %v2680 = vld [vmem:[#allocation2 + $0x152] sm:$0xff]
        %v2681 = vld [vmem:[#allocation2 + $0x15a] sm:$0xff]
        %v2682 = vld [vmem:[#allocation2 + $0x16a] sm:$0xff]
        %v2683 = vld [vmem:[#allocation2 + $0x172] sm:$0xff]
        %2684 = vst [vmem:[#allocation3 + $0x10] sm:$0xff] %v2652
        %2685 = vst [vmem:[#allocation3 + $0x58] sm:$0xff] %v2653
        %2686 = vst [vmem:[#allocation3 + $0xa0] sm:$0xff] %v2654
        %2687 = vst [vmem:[#allocation3 + $0xe8] sm:$0xff] %v2655
        %2688 = vst [vmem:[#allocation3 + $0x130] sm:$0xff] %v2656
        %2689 = vst [vmem:[#allocation3 + $0x178] sm:$0xff] %v2657
        %2690 = vst [vmem:[#allocation3 + $0x1c0] sm:$0xff] %v2658
        %2691 = vst [vmem:[#allocation3 + $0x208] sm:$0xff] %v2659
        %2692 = vst [vmem:[#allocation3 + $0x250] sm:$0xff] %v2660
        %2693 = vst [vmem:[#allocation3 + $0x298] sm:$0xff] %v2661
        %2694 = vst [vmem:[#allocation3 + $0x2e0] sm:$0xff] %v2662
        %2695 = vst [vmem:[#allocation3 + $0x328] sm:$0xff] %v2663
        %2696 = vst [vmem:[#allocation3 + $0x370] sm:$0xff] %v2664
        %2697 = vst [vmem:[#allocation3 + $0x3b8] sm:$0xff] %v2665
        %2698 = vst [vmem:[#allocation3 + $0x400] sm:$0xff] %v2666
        %2699 = vst [vmem:[#allocation3 + $0x448] sm:$0xff] %v2667
        %2700 = vst [vmem:[#allocation3 + $0x490] sm:$0xff] %v2668
        %2701 = vst [vmem:[#allocation3 + $0x4d8] sm:$0xff] %v2669
        %2702 = vst [vmem:[#allocation3 + $0x520] sm:$0xff] %v2670
        %2703 = vst [vmem:[#allocation3 + $0x568] sm:$0xff] %v2671
        %2704 = vst [vmem:[#allocation3 + $0x5b0] sm:$0xff] %v2672
        %2705 = vst [vmem:[#allocation3 + $0x5f8] sm:$0xff] %v2673
        %2706 = vst [vmem:[#allocation3 + $0x640] sm:$0xff] %v2674
        %2707 = vst [vmem:[#allocation3 + $0x688] sm:$0xff] %v2675
        %2708 = vst [vmem:[#allocation3 + $0x6d0] sm:$0xff] %v2676
        %2709 = vst [vmem:[#allocation3 + $0x718] sm:$0xff] %v2677
        %2710 = vst [vmem:[#allocation3 + $0x760] sm:$0xff] %v2678
        %2711 = vst [vmem:[#allocation3 + $0x7a8] sm:$0xff] %v2679
        %2712 = vst [vmem:[#allocation3 + $0x7f0] sm:$0xff] %v2680
        %2713 = vst [vmem:[#allocation3 + $0x838] sm:$0xff] %v2681
        %2714 = vst [vmem:[#allocation3 + $0x880] sm:$0xff] %v2682
        %2715 = vst [vmem:[#allocation3 + $0x8c8] sm:$0xff] %v2683
        %v2716 = vld [vmem:[%s285] sm:$0xff]
        %v2717 = vld [vmem:[%s285 + $0x8] sm:$0xff]
        %v2718 = vld [vmem:[%s285 + $0x18] sm:$0xff]
        %v2719 = vld [vmem:[%s285 + $0x20] sm:$0xff]
        %v2720 = vld [vmem:[%s285 + $0x30] sm:$0xff]
        %v2721 = vld [vmem:[%s285 + $0x38] sm:$0xff]
        %v2722 = vld [vmem:[%s285 + $0x48] sm:$0xff]
        %v2723 = vld [vmem:[%s285 + $0x50] sm:$0xff]
        %v2724 = vld [vmem:[%s285 + $0x60] sm:$0xff]
        %v2725 = vld [vmem:[%s285 + $0x68] sm:$0xff]
        %v2726 = vld [vmem:[%s285 + $0x78] sm:$0xff]
        %v2727 = vld [vmem:[%s285 + $0x80] sm:$0xff]
        %v2728 = vld [vmem:[%s285 + $0x90] sm:$0xff]
        %v2729 = vld [vmem:[%s285 + $0x98] sm:$0xff]
        %v2730 = vld [vmem:[%s285 + $0xa8] sm:$0xff]
        %v2731 = vld [vmem:[%s285 + $0xb0] sm:$0xff]
        %v2732 = vld [vmem:[%s285 + $0xc0] sm:$0xff]
        %v2733 = vld [vmem:[%s285 + $0xc8] sm:$0xff]
        %v2734 = vld [vmem:[%s285 + $0xd8] sm:$0xff]
        %v2735 = vld [vmem:[%s285 + $0xe0] sm:$0xff]
        %v2736 = vld [vmem:[%s285 + $0xf0] sm:$0xff]
        %v2737 = vld [vmem:[%s285 + $0xf8] sm:$0xff]
        %v2738 = vld [vmem:[%s285 + $0x108] sm:$0xff]
        %v2739 = vld [vmem:[%s285 + $0x110] sm:$0xff]
        %v2740 = vld [vmem:[%s285 + $0x120] sm:$0xff]
        %v2741 = vld [vmem:[%s285 + $0x128] sm:$0xff]
        %v2742 = vld [vmem:[%s285 + $0x138] sm:$0xff]
        %v2743 = vld [vmem:[%s285 + $0x140] sm:$0xff]
        %v2744 = vld [vmem:[%s285 + $0x150] sm:$0xff]
        %v2745 = vld [vmem:[%s285 + $0x158] sm:$0xff]
        %v2746 = vld [vmem:[%s285 + $0x168] sm:$0xff]
        %v2747 = vld [vmem:[%s285 + $0x170] sm:$0xff]
        %2748 = vst [vmem:[#allocation3 + $0x18] sm:$0xff] %v2716
        %2749 = vst [vmem:[#allocation3 + $0x60] sm:$0xff] %v2717
        %2750 = vst [vmem:[#allocation3 + $0xa8] sm:$0xff] %v2718
        %2751 = vst [vmem:[#allocation3 + $0xf0] sm:$0xff] %v2719
        %2752 = vst [vmem:[#allocation3 + $0x138] sm:$0xff] %v2720
        %2753 = vst [vmem:[#allocation3 + $0x180] sm:$0xff] %v2721
        %2754 = vst [vmem:[#allocation3 + $0x1c8] sm:$0xff] %v2722
        %2755 = vst [vmem:[#allocation3 + $0x210] sm:$0xff] %v2723
        %2756 = vst [vmem:[#allocation3 + $0x258] sm:$0xff] %v2724
        %2757 = vst [vmem:[#allocation3 + $0x2a0] sm:$0xff] %v2725
        %2758 = vst [vmem:[#allocation3 + $0x2e8] sm:$0xff] %v2726
        %2759 = vst [vmem:[#allocation3 + $0x330] sm:$0xff] %v2727
        %2760 = vst [vmem:[#allocation3 + $0x378] sm:$0xff] %v2728
        %2761 = vst [vmem:[#allocation3 + $0x3c0] sm:$0xff] %v2729
        %2762 = vst [vmem:[#allocation3 + $0x408] sm:$0xff] %v2730
        %2763 = vst [vmem:[#allocation3 + $0x450] sm:$0xff] %v2731
        %2764 = vst [vmem:[#allocation3 + $0x498] sm:$0xff] %v2732
        %2765 = vst [vmem:[#allocation3 + $0x4e0] sm:$0xff] %v2733
        %2766 = vst [vmem:[#allocation3 + $0x528] sm:$0xff] %v2734
        %2767 = vst [vmem:[#allocation3 + $0x570] sm:$0xff] %v2735
        %2768 = vst [vmem:[#allocation3 + $0x5b8] sm:$0xff] %v2736
        %2769 = vst [vmem:[#allocation3 + $0x600] sm:$0xff] %v2737
        %2770 = vst [vmem:[#allocation3 + $0x648] sm:$0xff] %v2738
        %2771 = vst [vmem:[#allocation3 + $0x690] sm:$0xff] %v2739
        %2772 = vst [vmem:[#allocation3 + $0x6d8] sm:$0xff] %v2740
        %2773 = vst [vmem:[#allocation3 + $0x720] sm:$0xff] %v2741
        %2774 = vst [vmem:[#allocation3 + $0x768] sm:$0xff] %v2742
        %2775 = vst [vmem:[#allocation3 + $0x7b0] sm:$0xff] %v2743
        %2776 = vst [vmem:[#allocation3 + $0x7f8] sm:$0xff] %v2744
        %2777 = vst [vmem:[#allocation3 + $0x840] sm:$0xff] %v2745
        %2778 = vst [vmem:[#allocation3 + $0x888] sm:$0xff] %v2746
        %2779 = vst [vmem:[#allocation3 + $0x8d0] sm:$0xff] %v2747
        %v2780 = vld [vmem:[%s285 + $0x1] sm:$0xff]
        %v2781 = vld [vmem:[%s285 + $0x9] sm:$0xff]
        %v2782 = vld [vmem:[%s285 + $0x19] sm:$0xff]
        %v2783 = vld [vmem:[%s285 + $0x21] sm:$0xff]
        %v2784 = vld [vmem:[%s285 + $0x31] sm:$0xff]
        %v2785 = vld [vmem:[%s285 + $0x39] sm:$0xff]
        %v2786 = vld [vmem:[%s285 + $0x49] sm:$0xff]
        %v2787 = vld [vmem:[%s285 + $0x51] sm:$0xff]
        %v2788 = vld [vmem:[%s285 + $0x61] sm:$0xff]
        %v2789 = vld [vmem:[%s285 + $0x69] sm:$0xff]
        %v2790 = vld [vmem:[%s285 + $0x79] sm:$0xff]
        %v2791 = vld [vmem:[%s285 + $0x81] sm:$0xff]
        %v2792 = vld [vmem:[%s285 + $0x91] sm:$0xff]
        %v2793 = vld [vmem:[%s285 + $0x99] sm:$0xff]
        %v2794 = vld [vmem:[%s285 + $0xa9] sm:$0xff]
        %v2795 = vld [vmem:[%s285 + $0xb1] sm:$0xff]
        %v2796 = vld [vmem:[%s285 + $0xc1] sm:$0xff]
        %v2797 = vld [vmem:[%s285 + $0xc9] sm:$0xff]
        %v2798 = vld [vmem:[%s285 + $0xd9] sm:$0xff]
        %v2799 = vld [vmem:[%s285 + $0xe1] sm:$0xff]
        %v2800 = vld [vmem:[%s285 + $0xf1] sm:$0xff]
        %v2801 = vld [vmem:[%s285 + $0xf9] sm:$0xff]
        %v2802 = vld [vmem:[%s285 + $0x109] sm:$0xff]
        %v2803 = vld [vmem:[%s285 + $0x111] sm:$0xff]
        %v2804 = vld [vmem:[%s285 + $0x121] sm:$0xff]
        %v2805 = vld [vmem:[%s285 + $0x129] sm:$0xff]
        %v2806 = vld [vmem:[%s285 + $0x139] sm:$0xff]
        %v2807 = vld [vmem:[%s285 + $0x141] sm:$0xff]
        %v2808 = vld [vmem:[%s285 + $0x151] sm:$0xff]
        %v2809 = vld [vmem:[%s285 + $0x159] sm:$0xff]
        %v2810 = vld [vmem:[%s285 + $0x169] sm:$0xff]
        %v2811 = vld [vmem:[%s285 + $0x171] sm:$0xff]
        %2812 = vst [vmem:[#allocation3 + $0x20] sm:$0xff] %v2780
        %2813 = vst [vmem:[#allocation3 + $0x68] sm:$0xff] %v2781
        %2814 = vst [vmem:[#allocation3 + $0xb0] sm:$0xff] %v2782
        %2815 = vst [vmem:[#allocation3 + $0xf8] sm:$0xff] %v2783
        %2816 = vst [vmem:[#allocation3 + $0x140] sm:$0xff] %v2784
        %2817 = vst [vmem:[#allocation3 + $0x188] sm:$0xff] %v2785
        %2818 = vst [vmem:[#allocation3 + $0x1d0] sm:$0xff] %v2786
        %2819 = vst [vmem:[#allocation3 + $0x218] sm:$0xff] %v2787
        %2820 = vst [vmem:[#allocation3 + $0x260] sm:$0xff] %v2788
        %2821 = vst [vmem:[#allocation3 + $0x2a8] sm:$0xff] %v2789
        %2822 = vst [vmem:[#allocation3 + $0x2f0] sm:$0xff] %v2790
        %2823 = vst [vmem:[#allocation3 + $0x338] sm:$0xff] %v2791
        %2824 = vst [vmem:[#allocation3 + $0x380] sm:$0xff] %v2792
        %2825 = vst [vmem:[#allocation3 + $0x3c8] sm:$0xff] %v2793
        %2826 = vst [vmem:[#allocation3 + $0x410] sm:$0xff] %v2794
        %2827 = vst [vmem:[#allocation3 + $0x458] sm:$0xff] %v2795
        %2828 = vst [vmem:[#allocation3 + $0x4a0] sm:$0xff] %v2796
        %2829 = vst [vmem:[#allocation3 + $0x4e8] sm:$0xff] %v2797
        %2830 = vst [vmem:[#allocation3 + $0x530] sm:$0xff] %v2798
        %2831 = vst [vmem:[#allocation3 + $0x578] sm:$0xff] %v2799
        %2832 = vst [vmem:[#allocation3 + $0x5c0] sm:$0xff] %v2800
        %2833 = vst [vmem:[#allocation3 + $0x608] sm:$0xff] %v2801
        %2834 = vst [vmem:[#allocation3 + $0x650] sm:$0xff] %v2802
        %2835 = vst [vmem:[#allocation3 + $0x698] sm:$0xff] %v2803
        %2836 = vst [vmem:[#allocation3 + $0x6e0] sm:$0xff] %v2804
        %2837 = vst [vmem:[#allocation3 + $0x728] sm:$0xff] %v2805
        %2838 = vst [vmem:[#allocation3 + $0x770] sm:$0xff] %v2806
        %2839 = vst [vmem:[#allocation3 + $0x7b8] sm:$0xff] %v2807
        %2840 = vst [vmem:[#allocation3 + $0x800] sm:$0xff] %v2808
        %2841 = vst [vmem:[#allocation3 + $0x848] sm:$0xff] %v2809
        %2842 = vst [vmem:[#allocation3 + $0x890] sm:$0xff] %v2810
        %2843 = vst [vmem:[#allocation3 + $0x8d8] sm:$0xff] %v2811
        %v2844 = vld [vmem:[%s285 + $0x2] sm:$0xff]
        %v2845 = vld [vmem:[%s285 + $0xa] sm:$0xff]
        %v2846 = vld [vmem:[%s285 + $0x1a] sm:$0xff]
        %v2847 = vld [vmem:[%s285 + $0x22] sm:$0xff]
        %v2848 = vld [vmem:[%s285 + $0x32] sm:$0xff]
        %v2849 = vld [vmem:[%s285 + $0x3a] sm:$0xff]
        %v2850 = vld [vmem:[%s285 + $0x4a] sm:$0xff]
        %v2851 = vld [vmem:[%s285 + $0x52] sm:$0xff]
        %v2852 = vld [vmem:[%s285 + $0x62] sm:$0xff]
        %v2853 = vld [vmem:[%s285 + $0x6a] sm:$0xff]
        %v2854 = vld [vmem:[%s285 + $0x7a] sm:$0xff]
        %v2855 = vld [vmem:[%s285 + $0x82] sm:$0xff]
        %v2856 = vld [vmem:[%s285 + $0x92] sm:$0xff]
        %v2857 = vld [vmem:[%s285 + $0x9a] sm:$0xff]
        %v2858 = vld [vmem:[%s285 + $0xaa] sm:$0xff]
        %v2859 = vld [vmem:[%s285 + $0xb2] sm:$0xff]
        %v2860 = vld [vmem:[%s285 + $0xc2] sm:$0xff]
        %v2861 = vld [vmem:[%s285 + $0xca] sm:$0xff]
        %v2862 = vld [vmem:[%s285 + $0xda] sm:$0xff]
        %v2863 = vld [vmem:[%s285 + $0xe2] sm:$0xff]
        %v2864 = vld [vmem:[%s285 + $0xf2] sm:$0xff]
        %v2865 = vld [vmem:[%s285 + $0xfa] sm:$0xff]
        %v2866 = vld [vmem:[%s285 + $0x10a] sm:$0xff]
        %v2867 = vld [vmem:[%s285 + $0x112] sm:$0xff]
        %v2868 = vld [vmem:[%s285 + $0x122] sm:$0xff]
        %v2869 = vld [vmem:[%s285 + $0x12a] sm:$0xff]
        %v2870 = vld [vmem:[%s285 + $0x13a] sm:$0xff]
        %v2871 = vld [vmem:[%s285 + $0x142] sm:$0xff]
        %v2872 = vld [vmem:[%s285 + $0x152] sm:$0xff]
        %v2873 = vld [vmem:[%s285 + $0x15a] sm:$0xff]
        %v2874 = vld [vmem:[%s285 + $0x16a] sm:$0xff]
        %v2875 = vld [vmem:[%s285 + $0x172] sm:$0xff]
        %2876 = vst [vmem:[#allocation3 + $0x28] sm:$0xff] %v2844
        %2877 = vst [vmem:[#allocation3 + $0x70] sm:$0xff] %v2845
        %2878 = vst [vmem:[#allocation3 + $0xb8] sm:$0xff] %v2846
        %2879 = vst [vmem:[#allocation3 + $0x100] sm:$0xff] %v2847
        %2880 = vst [vmem:[#allocation3 + $0x148] sm:$0xff] %v2848
        %2881 = vst [vmem:[#allocation3 + $0x190] sm:$0xff] %v2849
        %2882 = vst [vmem:[#allocation3 + $0x1d8] sm:$0xff] %v2850
        %2883 = vst [vmem:[#allocation3 + $0x220] sm:$0xff] %v2851
        %2884 = vst [vmem:[#allocation3 + $0x268] sm:$0xff] %v2852
        %2885 = vst [vmem:[#allocation3 + $0x2b0] sm:$0xff] %v2853
        %2886 = vst [vmem:[#allocation3 + $0x2f8] sm:$0xff] %v2854
        %2887 = vst [vmem:[#allocation3 + $0x340] sm:$0xff] %v2855
        %2888 = vst [vmem:[#allocation3 + $0x388] sm:$0xff] %v2856
        %2889 = vst [vmem:[#allocation3 + $0x3d0] sm:$0xff] %v2857
        %2890 = vst [vmem:[#allocation3 + $0x418] sm:$0xff] %v2858
        %2891 = vst [vmem:[#allocation3 + $0x460] sm:$0xff] %v2859
        %2892 = vst [vmem:[#allocation3 + $0x4a8] sm:$0xff] %v2860
        %2893 = vst [vmem:[#allocation3 + $0x4f0] sm:$0xff] %v2861
        %2894 = vst [vmem:[#allocation3 + $0x538] sm:$0xff] %v2862
        %2895 = vst [vmem:[#allocation3 + $0x580] sm:$0xff] %v2863
        %2896 = vst [vmem:[#allocation3 + $0x5c8] sm:$0xff] %v2864
        %2897 = vst [vmem:[#allocation3 + $0x610] sm:$0xff] %v2865
        %2898 = vst [vmem:[#allocation3 + $0x658] sm:$0xff] %v2866
        %2899 = vst [vmem:[#allocation3 + $0x6a0] sm:$0xff] %v2867
        %2900 = vst [vmem:[#allocation3 + $0x6e8] sm:$0xff] %v2868
        %2901 = vst [vmem:[#allocation3 + $0x730] sm:$0xff] %v2869
        %2902 = vst [vmem:[#allocation3 + $0x778] sm:$0xff] %v2870
        %2903 = vst [vmem:[#allocation3 + $0x7c0] sm:$0xff] %v2871
        %2904 = vst [vmem:[#allocation3 + $0x808] sm:$0xff] %v2872
        %2905 = vst [vmem:[#allocation3 + $0x850] sm:$0xff] %v2873
        %2906 = vst [vmem:[#allocation3 + $0x898] sm:$0xff] %v2874
        %2907 = vst [vmem:[#allocation3 + $0x8e0] sm:$0xff] %v2875
        %v2908 = vld [vmem:[%s703] sm:$0xff]
        %v2909 = vld [vmem:[%s703 + $0x8] sm:$0xff]
        %v2910 = vld [vmem:[%s703 + $0x18] sm:$0xff]
        %v2911 = vld [vmem:[%s703 + $0x20] sm:$0xff]
        %v2912 = vld [vmem:[%s703 + $0x30] sm:$0xff]
        %v2913 = vld [vmem:[%s703 + $0x38] sm:$0xff]
        %v2914 = vld [vmem:[%s703 + $0x48] sm:$0xff]
        %v2915 = vld [vmem:[%s703 + $0x50] sm:$0xff]
        %v2916 = vld [vmem:[%s703 + $0x60] sm:$0xff]
        %v2917 = vld [vmem:[%s703 + $0x68] sm:$0xff]
        %v2918 = vld [vmem:[%s703 + $0x78] sm:$0xff]
        %v2919 = vld [vmem:[%s703 + $0x80] sm:$0xff]
        %v2920 = vld [vmem:[%s703 + $0x90] sm:$0xff]
        %v2921 = vld [vmem:[%s703 + $0x98] sm:$0xff]
        %v2922 = vld [vmem:[%s703 + $0xa8] sm:$0xff]
        %v2923 = vld [vmem:[%s703 + $0xb0] sm:$0xff]
        %v2924 = vld [vmem:[%s703 + $0xc0] sm:$0xff]
        %v2925 = vld [vmem:[%s703 + $0xc8] sm:$0xff]
        %v2926 = vld [vmem:[%s703 + $0xd8] sm:$0xff]
        %v2927 = vld [vmem:[%s703 + $0xe0] sm:$0xff]
        %v2928 = vld [vmem:[%s703 + $0xf0] sm:$0xff]
        %v2929 = vld [vmem:[%s703 + $0xf8] sm:$0xff]
        %v2930 = vld [vmem:[%s703 + $0x108] sm:$0xff]
        %v2931 = vld [vmem:[%s703 + $0x110] sm:$0xff]
        %v2932 = vld [vmem:[%s703 + $0x120] sm:$0xff]
        %v2933 = vld [vmem:[%s703 + $0x128] sm:$0xff]
        %v2934 = vld [vmem:[%s703 + $0x138] sm:$0xff]
        %v2935 = vld [vmem:[%s703 + $0x140] sm:$0xff]
        %v2936 = vld [vmem:[%s703 + $0x150] sm:$0xff]
        %v2937 = vld [vmem:[%s703 + $0x158] sm:$0xff]
        %v2938 = vld [vmem:[%s703 + $0x168] sm:$0xff]
        %v2939 = vld [vmem:[%s703 + $0x170] sm:$0xff]
        %2940 = vst [vmem:[#allocation3 + $0x30] sm:$0xff] %v2908
        %2941 = vst [vmem:[#allocation3 + $0x78] sm:$0xff] %v2909
        %2942 = vst [vmem:[#allocation3 + $0xc0] sm:$0xff] %v2910
        %2943 = vst [vmem:[#allocation3 + $0x108] sm:$0xff] %v2911
        %2944 = vst [vmem:[#allocation3 + $0x150] sm:$0xff] %v2912
        %2945 = vst [vmem:[#allocation3 + $0x198] sm:$0xff] %v2913
        %2946 = vst [vmem:[#allocation3 + $0x1e0] sm:$0xff] %v2914
        %2947 = vst [vmem:[#allocation3 + $0x228] sm:$0xff] %v2915
        %2948 = vst [vmem:[#allocation3 + $0x270] sm:$0xff] %v2916
        %2949 = vst [vmem:[#allocation3 + $0x2b8] sm:$0xff] %v2917
        %2950 = vst [vmem:[#allocation3 + $0x300] sm:$0xff] %v2918
        %2951 = vst [vmem:[#allocation3 + $0x348] sm:$0xff] %v2919
        %2952 = vst [vmem:[#allocation3 + $0x390] sm:$0xff] %v2920
        %2953 = vst [vmem:[#allocation3 + $0x3d8] sm:$0xff] %v2921
        %2954 = vst [vmem:[#allocation3 + $0x420] sm:$0xff] %v2922
        %2955 = vst [vmem:[#allocation3 + $0x468] sm:$0xff] %v2923
        %2956 = vst [vmem:[#allocation3 + $0x4b0] sm:$0xff] %v2924
        %2957 = vst [vmem:[#allocation3 + $0x4f8] sm:$0xff] %v2925
        %2958 = vst [vmem:[#allocation3 + $0x540] sm:$0xff] %v2926
        %2959 = vst [vmem:[#allocation3 + $0x588] sm:$0xff] %v2927
        %2960 = vst [vmem:[#allocation3 + $0x5d0] sm:$0xff] %v2928
        %2961 = vst [vmem:[#allocation3 + $0x618] sm:$0xff] %v2929
        %2962 = vst [vmem:[#allocation3 + $0x660] sm:$0xff] %v2930
        %2963 = vst [vmem:[#allocation3 + $0x6a8] sm:$0xff] %v2931
        %2964 = vst [vmem:[#allocation3 + $0x6f0] sm:$0xff] %v2932
        %2965 = vst [vmem:[#allocation3 + $0x738] sm:$0xff] %v2933
        %2966 = vst [vmem:[#allocation3 + $0x780] sm:$0xff] %v2934
        %2967 = vst [vmem:[#allocation3 + $0x7c8] sm:$0xff] %v2935
        %2968 = vst [vmem:[#allocation3 + $0x810] sm:$0xff] %v2936
        %2969 = vst [vmem:[#allocation3 + $0x858] sm:$0xff] %v2937
        %2970 = vst [vmem:[#allocation3 + $0x8a0] sm:$0xff] %v2938
        %2971 = vst [vmem:[#allocation3 + $0x8e8] sm:$0xff] %v2939
        %v2972 = vld [vmem:[%s703 + $0x1] sm:$0xff]
        %v2973 = vld [vmem:[%s703 + $0x9] sm:$0xff]
        %v2974 = vld [vmem:[%s703 + $0x19] sm:$0xff]
        %v2975 = vld [vmem:[%s703 + $0x21] sm:$0xff]
        %v2976 = vld [vmem:[%s703 + $0x31] sm:$0xff]
        %v2977 = vld [vmem:[%s703 + $0x39] sm:$0xff]
        %v2978 = vld [vmem:[%s703 + $0x49] sm:$0xff]
        %v2979 = vld [vmem:[%s703 + $0x51] sm:$0xff]
        %v2980 = vld [vmem:[%s703 + $0x61] sm:$0xff]
        %v2981 = vld [vmem:[%s703 + $0x69] sm:$0xff]
        %v2982 = vld [vmem:[%s703 + $0x79] sm:$0xff]
        %v2983 = vld [vmem:[%s703 + $0x81] sm:$0xff]
        %v2984 = vld [vmem:[%s703 + $0x91] sm:$0xff]
        %v2985 = vld [vmem:[%s703 + $0x99] sm:$0xff]
        %v2986 = vld [vmem:[%s703 + $0xa9] sm:$0xff]
        %v2987 = vld [vmem:[%s703 + $0xb1] sm:$0xff]
        %v2988 = vld [vmem:[%s703 + $0xc1] sm:$0xff]
        %v2989 = vld [vmem:[%s703 + $0xc9] sm:$0xff]
        %v2990 = vld [vmem:[%s703 + $0xd9] sm:$0xff]
        %v2991 = vld [vmem:[%s703 + $0xe1] sm:$0xff]
        %v2992 = vld [vmem:[%s703 + $0xf1] sm:$0xff]
        %v2993 = vld [vmem:[%s703 + $0xf9] sm:$0xff]
        %v2994 = vld [vmem:[%s703 + $0x109] sm:$0xff]
        %v2995 = vld [vmem:[%s703 + $0x111] sm:$0xff]
        %v2996 = vld [vmem:[%s703 + $0x121] sm:$0xff]
        %v2997 = vld [vmem:[%s703 + $0x129] sm:$0xff]
        %v2998 = vld [vmem:[%s703 + $0x139] sm:$0xff]
        %v2999 = vld [vmem:[%s703 + $0x141] sm:$0xff]
        %v3000 = vld [vmem:[%s703 + $0x151] sm:$0xff]
        %v3001 = vld [vmem:[%s703 + $0x159] sm:$0xff]
        %v3002 = vld [vmem:[%s703 + $0x169] sm:$0xff]
        %v3003 = vld [vmem:[%s703 + $0x171] sm:$0xff]
        %3004 = vst [vmem:[#allocation3 + $0x38] sm:$0xff] %v2972
        %3005 = vst [vmem:[#allocation3 + $0x80] sm:$0xff] %v2973
        %3006 = vst [vmem:[#allocation3 + $0xc8] sm:$0xff] %v2974
        %3007 = vst [vmem:[#allocation3 + $0x110] sm:$0xff] %v2975
        %3008 = vst [vmem:[#allocation3 + $0x158] sm:$0xff] %v2976
        %3009 = vst [vmem:[#allocation3 + $0x1a0] sm:$0xff] %v2977
        %3010 = vst [vmem:[#allocation3 + $0x1e8] sm:$0xff] %v2978
        %3011 = vst [vmem:[#allocation3 + $0x230] sm:$0xff] %v2979
        %3012 = vst [vmem:[#allocation3 + $0x278] sm:$0xff] %v2980
        %3013 = vst [vmem:[#allocation3 + $0x2c0] sm:$0xff] %v2981
        %3014 = vst [vmem:[#allocation3 + $0x308] sm:$0xff] %v2982
        %3015 = vst [vmem:[#allocation3 + $0x350] sm:$0xff] %v2983
        %3016 = vst [vmem:[#allocation3 + $0x398] sm:$0xff] %v2984
        %3017 = vst [vmem:[#allocation3 + $0x3e0] sm:$0xff] %v2985
        %3018 = vst [vmem:[#allocation3 + $0x428] sm:$0xff] %v2986
        %3019 = vst [vmem:[#allocation3 + $0x470] sm:$0xff] %v2987
        %3020 = vst [vmem:[#allocation3 + $0x4b8] sm:$0xff] %v2988
        %3021 = vst [vmem:[#allocation3 + $0x500] sm:$0xff] %v2989
        %3022 = vst [vmem:[#allocation3 + $0x548] sm:$0xff] %v2990
        %3023 = vst [vmem:[#allocation3 + $0x590] sm:$0xff] %v2991
        %3024 = vst [vmem:[#allocation3 + $0x5d8] sm:$0xff] %v2992
        %3025 = vst [vmem:[#allocation3 + $0x620] sm:$0xff] %v2993
        %3026 = vst [vmem:[#allocation3 + $0x668] sm:$0xff] %v2994
        %3027 = vst [vmem:[#allocation3 + $0x6b0] sm:$0xff] %v2995
        %3028 = vst [vmem:[#allocation3 + $0x6f8] sm:$0xff] %v2996
        %3029 = vst [vmem:[#allocation3 + $0x740] sm:$0xff] %v2997
        %3030 = vst [vmem:[#allocation3 + $0x788] sm:$0xff] %v2998
        %3031 = vst [vmem:[#allocation3 + $0x7d0] sm:$0xff] %v2999
        %3032 = vst [vmem:[#allocation3 + $0x818] sm:$0xff] %v3000
        %3033 = vst [vmem:[#allocation3 + $0x860] sm:$0xff] %v3001
        %3034 = vst [vmem:[#allocation3 + $0x8a8] sm:$0xff] %v3002
        %3035 = vst [vmem:[#allocation3 + $0x8f0] sm:$0xff] %v3003
        %v3036 = vld [vmem:[%s703 + $0x2] sm:$0xff]
        %v3037 = vld [vmem:[%s703 + $0xa] sm:$0xff]
        %v3038 = vld [vmem:[%s703 + $0x1a] sm:$0xff]
        %v3039 = vld [vmem:[%s703 + $0x22] sm:$0xff]
        %v3040 = vld [vmem:[%s703 + $0x32] sm:$0xff]
        %v3041 = vld [vmem:[%s703 + $0x3a] sm:$0xff]
        %v3042 = vld [vmem:[%s703 + $0x4a] sm:$0xff]
        %v3043 = vld [vmem:[%s703 + $0x52] sm:$0xff]
        %v3044 = vld [vmem:[%s703 + $0x62] sm:$0xff]
        %v3045 = vld [vmem:[%s703 + $0x6a] sm:$0xff]
        %v3046 = vld [vmem:[%s703 + $0x7a] sm:$0xff]
        %v3047 = vld [vmem:[%s703 + $0x82] sm:$0xff]
        %v3048 = vld [vmem:[%s703 + $0x92] sm:$0xff]
        %v3049 = vld [vmem:[%s703 + $0x9a] sm:$0xff]
        %v3050 = vld [vmem:[%s703 + $0xaa] sm:$0xff]
        %v3051 = vld [vmem:[%s703 + $0xb2] sm:$0xff]
        %v3052 = vld [vmem:[%s703 + $0xc2] sm:$0xff]
        %v3053 = vld [vmem:[%s703 + $0xca] sm:$0xff]
        %v3054 = vld [vmem:[%s703 + $0xda] sm:$0xff]
        %v3055 = vld [vmem:[%s703 + $0xe2] sm:$0xff]
        %v3056 = vld [vmem:[%s703 + $0xf2] sm:$0xff]
        %v3057 = vld [vmem:[%s703 + $0xfa] sm:$0xff]
        %v3058 = vld [vmem:[%s703 + $0x10a] sm:$0xff]
        %v3059 = vld [vmem:[%s703 + $0x112] sm:$0xff]
        %v3060 = vld [vmem:[%s703 + $0x122] sm:$0xff]
        %v3061 = vld [vmem:[%s703 + $0x12a] sm:$0xff]
        %v3062 = vld [vmem:[%s703 + $0x13a] sm:$0xff]
        %v3063 = vld [vmem:[%s703 + $0x142] sm:$0xff]
        %v3064 = vld [vmem:[%s703 + $0x152] sm:$0xff]
        %v3065 = vld [vmem:[%s703 + $0x15a] sm:$0xff]
        %v3066 = vld [vmem:[%s703 + $0x16a] sm:$0xff]
        %v3067 = vld [vmem:[%s703 + $0x172] sm:$0xff]
        %3068 = vst [vmem:[#allocation3 + $0x40] sm:$0xff] %v3036
        %3069 = vst [vmem:[#allocation3 + $0x88] sm:$0xff] %v3037
        %3070 = vst [vmem:[#allocation3 + $0xd0] sm:$0xff] %v3038
        %3071 = vst [vmem:[#allocation3 + $0x118] sm:$0xff] %v3039
        %3072 = vst [vmem:[#allocation3 + $0x160] sm:$0xff] %v3040
        %3073 = vst [vmem:[#allocation3 + $0x1a8] sm:$0xff] %v3041
        %3074 = vst [vmem:[#allocation3 + $0x1f0] sm:$0xff] %v3042
        %3075 = vst [vmem:[#allocation3 + $0x238] sm:$0xff] %v3043
        %3076 = vst [vmem:[#allocation3 + $0x280] sm:$0xff] %v3044
        %3077 = vst [vmem:[#allocation3 + $0x2c8] sm:$0xff] %v3045
        %3078 = vst [vmem:[#allocation3 + $0x310] sm:$0xff] %v3046
        %3079 = vst [vmem:[#allocation3 + $0x358] sm:$0xff] %v3047
        %3080 = vst [vmem:[#allocation3 + $0x3a0] sm:$0xff] %v3048
        %3081 = vst [vmem:[#allocation3 + $0x3e8] sm:$0xff] %v3049
        %3082 = vst [vmem:[#allocation3 + $0x430] sm:$0xff] %v3050
        %3083 = vst [vmem:[#allocation3 + $0x478] sm:$0xff] %v3051
        %3084 = vst [vmem:[#allocation3 + $0x4c0] sm:$0xff] %v3052
        %3085 = vst [vmem:[#allocation3 + $0x508] sm:$0xff] %v3053
        %3086 = vst [vmem:[#allocation3 + $0x550] sm:$0xff] %v3054
        %3087 = vst [vmem:[#allocation3 + $0x598] sm:$0xff] %v3055
        %3088 = vst [vmem:[#allocation3 + $0x5e0] sm:$0xff] %v3056
        %3089 = vst [vmem:[#allocation3 + $0x628] sm:$0xff] %v3057
        %3090 = vst [vmem:[#allocation3 + $0x670] sm:$0xff] %v3058
        %3091 = vst [vmem:[#allocation3 + $0x6b8] sm:$0xff] %v3059
        %3092 = vst [vmem:[#allocation3 + $0x700] sm:$0xff] %v3060
        %3093 = vst [vmem:[#allocation3 + $0x748] sm:$0xff] %v3061
        %3094 = vst [vmem:[#allocation3 + $0x790] sm:$0xff] %v3062
        %3095 = vst [vmem:[#allocation3 + $0x7d8] sm:$0xff] %v3063
        %3096 = vst [vmem:[#allocation3 + $0x820] sm:$0xff] %v3064
        %3097 = vst [vmem:[#allocation3 + $0x868] sm:$0xff] %v3065
        %3098 = vst [vmem:[#allocation3 + $0x8b0] sm:$0xff] %v3066
        %3099 = vst [vmem:[#allocation3 + $0x8f8] sm:$0xff] %v3067
        %v3100 = vld [vmem:[#allocation3] sm:$0xff]
        %v3101 = vld [vmem:[#allocation3 + $0x8] sm:$0xff]
        %v3102 = vld [vmem:[#allocation3 + $0x10] sm:$0xff]
        %v3103 = vld [vmem:[#allocation3 + $0x18] sm:$0xff]
        %v3104 = vld [vmem:[#allocation3 + $0x20] sm:$0xff]
        %v3105 = vld [vmem:[#allocation3 + $0x28] sm:$0xff]
        %v3106 = vld [vmem:[#allocation3 + $0x30] sm:$0xff]
        %v3107 = vld [vmem:[#allocation3 + $0x38] sm:$0xff]
        %v3108 = vld [vmem:[#allocation3 + $0x40] sm:$0xff]
        %v3109 = vld [vmem:[#allocation3 + $0x48] sm:$0xff]
        %v3110 = vld [vmem:[#allocation3 + $0x50] sm:$0xff]
        %v3111 = vld [vmem:[#allocation3 + $0x58] sm:$0xff]
        %v3112 = vld [vmem:[#allocation3 + $0x60] sm:$0xff]
        %v3113 = vld [vmem:[#allocation3 + $0x68] sm:$0xff]
        %v3114 = vld [vmem:[#allocation3 + $0x70] sm:$0xff]
        %v3115 = vld [vmem:[#allocation3 + $0x78] sm:$0xff]
        %v3116 = vld [vmem:[#allocation3 + $0x80] sm:$0xff]
        %v3117 = vld [vmem:[#allocation3 + $0x88] sm:$0xff]
        %v3118 = vld [vmem:[#allocation3 + $0x90] sm:$0xff]
        %v3119 = vld [vmem:[#allocation3 + $0x98] sm:$0xff]
        %v3120 = vld [vmem:[#allocation3 + $0xa0] sm:$0xff]
        %v3121 = vld [vmem:[#allocation3 + $0xa8] sm:$0xff]
        %v3122 = vld [vmem:[#allocation3 + $0xb0] sm:$0xff]
        %v3123 = vld [vmem:[#allocation3 + $0xb8] sm:$0xff]
        %v3124 = vld [vmem:[#allocation3 + $0xc0] sm:$0xff]
        %v3125 = vld [vmem:[#allocation3 + $0xc8] sm:$0xff]
        %v3126 = vld [vmem:[#allocation3 + $0xd0] sm:$0xff]
        %v3127 = vld [vmem:[#allocation3 + $0xd8] sm:$0xff]
        %v3128 = vld [vmem:[#allocation3 + $0xe0] sm:$0xff]
        %v3129 = vld [vmem:[#allocation3 + $0xe8] sm:$0xff]
        %v3130 = vld [vmem:[#allocation3 + $0xf0] sm:$0xff]
        %v3131 = vld [vmem:[#allocation3 + $0xf8] sm:$0xff]
        %v3132 = vld [vmem:[#allocation3 + $0x100] sm:$0xff]
        %v3133 = vld [vmem:[#allocation3 + $0x108] sm:$0xff]
        %v3134 = vld [vmem:[#allocation3 + $0x110] sm:$0xff]
        %v3135 = vld [vmem:[#allocation3 + $0x118] sm:$0xff]
        %v3136 = vld [vmem:[#allocation3 + $0x120] sm:$0xff]
        %v3137 = vld [vmem:[#allocation3 + $0x128] sm:$0xff]
        %v3138 = vld [vmem:[#allocation3 + $0x130] sm:$0xff]
        %v3139 = vld [vmem:[#allocation3 + $0x138] sm:$0xff]
        %v3140 = vld [vmem:[#allocation3 + $0x140] sm:$0xff]
        %v3141 = vld [vmem:[#allocation3 + $0x148] sm:$0xff]
        %v3142 = vld [vmem:[#allocation3 + $0x150] sm:$0xff]
        %v3143 = vld [vmem:[#allocation3 + $0x158] sm:$0xff]
        %v3144 = vld [vmem:[#allocation3 + $0x160] sm:$0xff]
        %v3145 = vld [vmem:[#allocation3 + $0x168] sm:$0xff]
        %v3146 = vld [vmem:[#allocation3 + $0x170] sm:$0xff]
        %v3147 = vld [vmem:[#allocation3 + $0x178] sm:$0xff]
        %v3148 = vld [vmem:[#allocation3 + $0x180] sm:$0xff]
        %v3149 = vld [vmem:[#allocation3 + $0x188] sm:$0xff]
        %v3150 = vld [vmem:[#allocation3 + $0x190] sm:$0xff]
        %v3151 = vld [vmem:[#allocation3 + $0x198] sm:$0xff]
        %v3152 = vld [vmem:[#allocation3 + $0x1a0] sm:$0xff]
        %v3153 = vld [vmem:[#allocation3 + $0x1a8] sm:$0xff]
        %v3154 = vld [vmem:[#allocation3 + $0x1b0] sm:$0xff]
        %v3155 = vld [vmem:[#allocation3 + $0x1b8] sm:$0xff]
        %v3156 = vld [vmem:[#allocation3 + $0x1c0] sm:$0xff]
        %v3157 = vld [vmem:[#allocation3 + $0x1c8] sm:$0xff]
        %v3158 = vld [vmem:[#allocation3 + $0x1d0] sm:$0xff]
        %v3159 = vld [vmem:[#allocation3 + $0x1d8] sm:$0xff]
        %v3160 = vld [vmem:[#allocation3 + $0x1e0] sm:$0xff]
        %v3161 = vld [vmem:[#allocation3 + $0x1e8] sm:$0xff]
        %v3162 = vld [vmem:[#allocation3 + $0x1f0] sm:$0xff]
        %v3163 = vld [vmem:[#allocation3 + $0x1f8] sm:$0xff]
        %v3164 = vld [vmem:[#allocation3 + $0x200] sm:$0xff]
        %v3165 = vld [vmem:[#allocation3 + $0x208] sm:$0xff]
        %v3166 = vld [vmem:[#allocation3 + $0x210] sm:$0xff]
        %v3167 = vld [vmem:[#allocation3 + $0x218] sm:$0xff]
        %v3168 = vld [vmem:[#allocation3 + $0x220] sm:$0xff]
        %v3169 = vld [vmem:[#allocation3 + $0x228] sm:$0xff]
        %v3170 = vld [vmem:[#allocation3 + $0x230] sm:$0xff]
        %v3171 = vld [vmem:[#allocation3 + $0x238] sm:$0xff]
        %v3172 = vld [vmem:[#allocation3 + $0x240] sm:$0xff]
        %v3173 = vld [vmem:[#allocation3 + $0x248] sm:$0xff]
        %v3174 = vld [vmem:[#allocation3 + $0x250] sm:$0xff]
        %v3175 = vld [vmem:[#allocation3 + $0x258] sm:$0xff]
        %v3176 = vld [vmem:[#allocation3 + $0x260] sm:$0xff]
        %v3177 = vld [vmem:[#allocation3 + $0x268] sm:$0xff]
        %v3178 = vld [vmem:[#allocation3 + $0x270] sm:$0xff]
        %v3179 = vld [vmem:[#allocation3 + $0x278] sm:$0xff]
        %v3180 = vld [vmem:[#allocation3 + $0x280] sm:$0xff]
        %v3181 = vld [vmem:[#allocation3 + $0x288] sm:$0xff]
        %v3182 = vld [vmem:[#allocation3 + $0x290] sm:$0xff]
        %v3183 = vld [vmem:[#allocation3 + $0x298] sm:$0xff]
        %v3184 = vld [vmem:[#allocation3 + $0x2a0] sm:$0xff]
        %v3185 = vld [vmem:[#allocation3 + $0x2a8] sm:$0xff]
        %v3186 = vld [vmem:[#allocation3 + $0x2b0] sm:$0xff]
        %v3187 = vld [vmem:[#allocation3 + $0x2b8] sm:$0xff]
        %v3188 = vld [vmem:[#allocation3 + $0x2c0] sm:$0xff]
        %v3189 = vld [vmem:[#allocation3 + $0x2c8] sm:$0xff]
        %v3190 = vld [vmem:[#allocation3 + $0x2d0] sm:$0xff]
        %v3191 = vld [vmem:[#allocation3 + $0x2d8] sm:$0xff]
        %v3192 = vld [vmem:[#allocation3 + $0x2e0] sm:$0xff]
        %v3193 = vld [vmem:[#allocation3 + $0x2e8] sm:$0xff]
        %v3194 = vld [vmem:[#allocation3 + $0x2f0] sm:$0xff]
        %v3195 = vld [vmem:[#allocation3 + $0x2f8] sm:$0xff]
        %v3196 = vld [vmem:[#allocation3 + $0x300] sm:$0xff]
        %v3197 = vld [vmem:[#allocation3 + $0x308] sm:$0xff]
        %v3198 = vld [vmem:[#allocation3 + $0x310] sm:$0xff]
        %v3199 = vld [vmem:[#allocation3 + $0x318] sm:$0xff]
        %v3200 = vld [vmem:[#allocation3 + $0x320] sm:$0xff]
        %v3201 = vld [vmem:[#allocation3 + $0x328] sm:$0xff]
        %v3202 = vld [vmem:[#allocation3 + $0x330] sm:$0xff]
        %v3203 = vld [vmem:[#allocation3 + $0x338] sm:$0xff]
        %v3204 = vld [vmem:[#allocation3 + $0x340] sm:$0xff]
        %v3205 = vld [vmem:[#allocation3 + $0x348] sm:$0xff]
        %v3206 = vld [vmem:[#allocation3 + $0x350] sm:$0xff]
        %v3207 = vld [vmem:[#allocation3 + $0x358] sm:$0xff]
        %v3208 = vld [vmem:[#allocation3 + $0x360] sm:$0xff]
        %v3209 = vld [vmem:[#allocation3 + $0x368] sm:$0xff]
        %v3210 = vld [vmem:[#allocation3 + $0x370] sm:$0xff]
        %v3211 = vld [vmem:[#allocation3 + $0x378] sm:$0xff]
        %v3212 = vld [vmem:[#allocation3 + $0x380] sm:$0xff]
        %v3213 = vld [vmem:[#allocation3 + $0x388] sm:$0xff]
        %v3214 = vld [vmem:[#allocation3 + $0x390] sm:$0xff]
        %v3215 = vld [vmem:[#allocation3 + $0x398] sm:$0xff]
        %v3216 = vld [vmem:[#allocation3 + $0x3a0] sm:$0xff]
        %v3217 = vld [vmem:[#allocation3 + $0x3a8] sm:$0xff]
        %v3218 = vld [vmem:[#allocation3 + $0x3b0] sm:$0xff]
        %v3219 = vld [vmem:[#allocation3 + $0x3b8] sm:$0xff]
        %v3220 = vld [vmem:[#allocation3 + $0x3c0] sm:$0xff]
        %v3221 = vld [vmem:[#allocation3 + $0x3c8] sm:$0xff]
        %v3222 = vld [vmem:[#allocation3 + $0x3d0] sm:$0xff]
        %v3223 = vld [vmem:[#allocation3 + $0x3d8] sm:$0xff]
        %v3224 = vld [vmem:[#allocation3 + $0x3e0] sm:$0xff]
        %v3225 = vld [vmem:[#allocation3 + $0x3e8] sm:$0xff]
        %v3226 = vld [vmem:[#allocation3 + $0x3f0] sm:$0xff]
        %v3227 = vld [vmem:[#allocation3 + $0x3f8] sm:$0xff]
        %v3228 = vld [vmem:[#allocation3 + $0x400] sm:$0xff]
        %v3229 = vld [vmem:[#allocation3 + $0x408] sm:$0xff]
        %v3230 = vld [vmem:[#allocation3 + $0x410] sm:$0xff]
        %v3231 = vld [vmem:[#allocation3 + $0x418] sm:$0xff]
        %v3232 = vld [vmem:[#allocation3 + $0x420] sm:$0xff]
        %v3233 = vld [vmem:[#allocation3 + $0x428] sm:$0xff]
        %v3234 = vld [vmem:[#allocation3 + $0x430] sm:$0xff]
        %v3235 = vld [vmem:[#allocation3 + $0x438] sm:$0xff]
        %v3236 = vld [vmem:[#allocation3 + $0x440] sm:$0xff]
        %v3237 = vld [vmem:[#allocation3 + $0x448] sm:$0xff]
        %v3238 = vld [vmem:[#allocation3 + $0x450] sm:$0xff]
        %v3239 = vld [vmem:[#allocation3 + $0x458] sm:$0xff]
        %v3240 = vld [vmem:[#allocation3 + $0x460] sm:$0xff]
        %v3241 = vld [vmem:[#allocation3 + $0x468] sm:$0xff]
        %v3242 = vld [vmem:[#allocation3 + $0x470] sm:$0xff]
        %v3243 = vld [vmem:[#allocation3 + $0x478] sm:$0xff]
        %v3244 = vld [vmem:[#allocation3 + $0x480] sm:$0xff]
        %v3245 = vld [vmem:[#allocation3 + $0x488] sm:$0xff]
        %v3246 = vld [vmem:[#allocation3 + $0x490] sm:$0xff]
        %v3247 = vld [vmem:[#allocation3 + $0x498] sm:$0xff]
        %v3248 = vld [vmem:[#allocation3 + $0x4a0] sm:$0xff]
        %v3249 = vld [vmem:[#allocation3 + $0x4a8] sm:$0xff]
        %v3250 = vld [vmem:[#allocation3 + $0x4b0] sm:$0xff]
        %v3251 = vld [vmem:[#allocation3 + $0x4b8] sm:$0xff]
        %v3252 = vld [vmem:[#allocation3 + $0x4c0] sm:$0xff]
        %v3253 = vld [vmem:[#allocation3 + $0x4c8] sm:$0xff]
        %v3254 = vld [vmem:[#allocation3 + $0x4d0] sm:$0xff]
        %v3255 = vld [vmem:[#allocation3 + $0x4d8] sm:$0xff]
        %v3256 = vld [vmem:[#allocation3 + $0x4e0] sm:$0xff]
        %v3257 = vld [vmem:[#allocation3 + $0x4e8] sm:$0xff]
        %v3258 = vld [vmem:[#allocation3 + $0x4f0] sm:$0xff]
        %v3259 = vld [vmem:[#allocation3 + $0x4f8] sm:$0xff]
        %v3260 = vld [vmem:[#allocation3 + $0x500] sm:$0xff]
        %v3261 = vld [vmem:[#allocation3 + $0x508] sm:$0xff]
        %v3262 = vld [vmem:[#allocation3 + $0x510] sm:$0xff]
        %v3263 = vld [vmem:[#allocation3 + $0x518] sm:$0xff]
        %v3264 = vld [vmem:[#allocation3 + $0x520] sm:$0xff]
        %v3265 = vld [vmem:[#allocation3 + $0x528] sm:$0xff]
        %v3266 = vld [vmem:[#allocation3 + $0x530] sm:$0xff]
        %v3267 = vld [vmem:[#allocation3 + $0x538] sm:$0xff]
        %v3268 = vld [vmem:[#allocation3 + $0x540] sm:$0xff]
        %v3269 = vld [vmem:[#allocation3 + $0x548] sm:$0xff]
        %v3270 = vld [vmem:[#allocation3 + $0x550] sm:$0xff]
        %v3271 = vld [vmem:[#allocation3 + $0x558] sm:$0xff]
        %v3272 = vld [vmem:[#allocation3 + $0x560] sm:$0xff]
        %v3273 = vld [vmem:[#allocation3 + $0x568] sm:$0xff]
        %v3274 = vld [vmem:[#allocation3 + $0x570] sm:$0xff]
        %v3275 = vld [vmem:[#allocation3 + $0x578] sm:$0xff]
        %v3276 = vld [vmem:[#allocation3 + $0x580] sm:$0xff]
        %v3277 = vld [vmem:[#allocation3 + $0x588] sm:$0xff]
        %v3278 = vld [vmem:[#allocation3 + $0x590] sm:$0xff]
        %v3279 = vld [vmem:[#allocation3 + $0x598] sm:$0xff]
        %v3280 = vld [vmem:[#allocation3 + $0x5a0] sm:$0xff]
        %v3281 = vld [vmem:[#allocation3 + $0x5a8] sm:$0xff]
        %v3282 = vld [vmem:[#allocation3 + $0x5b0] sm:$0xff]
        %v3283 = vld [vmem:[#allocation3 + $0x5b8] sm:$0xff]
        %v3284 = vld [vmem:[#allocation3 + $0x5c0] sm:$0xff]
        %v3285 = vld [vmem:[#allocation3 + $0x5c8] sm:$0xff]
        %v3286 = vld [vmem:[#allocation3 + $0x5d0] sm:$0xff]
        %v3287 = vld [vmem:[#allocation3 + $0x5d8] sm:$0xff]
        %v3288 = vld [vmem:[#allocation3 + $0x5e0] sm:$0xff]
        %v3289 = vld [vmem:[#allocation3 + $0x5e8] sm:$0xff]
        %v3290 = vld [vmem:[#allocation3 + $0x5f0] sm:$0xff]
        %v3291 = vld [vmem:[#allocation3 + $0x5f8] sm:$0xff]
        %v3292 = vld [vmem:[#allocation3 + $0x600] sm:$0xff]
        %v3293 = vld [vmem:[#allocation3 + $0x608] sm:$0xff]
        %v3294 = vld [vmem:[#allocation3 + $0x610] sm:$0xff]
        %v3295 = vld [vmem:[#allocation3 + $0x618] sm:$0xff]
        %v3296 = vld [vmem:[#allocation3 + $0x620] sm:$0xff]
        %v3297 = vld [vmem:[#allocation3 + $0x628] sm:$0xff]
        %v3298 = vld [vmem:[#allocation3 + $0x630] sm:$0xff]
        %v3299 = vld [vmem:[#allocation3 + $0x638] sm:$0xff]
        %v3300 = vld [vmem:[#allocation3 + $0x640] sm:$0xff]
        %v3301 = vld [vmem:[#allocation3 + $0x648] sm:$0xff]
        %v3302 = vld [vmem:[#allocation3 + $0x650] sm:$0xff]
        %v3303 = vld [vmem:[#allocation3 + $0x658] sm:$0xff]
        %v3304 = vld [vmem:[#allocation3 + $0x660] sm:$0xff]
        %v3305 = vld [vmem:[#allocation3 + $0x668] sm:$0xff]
        %v3306 = vld [vmem:[#allocation3 + $0x670] sm:$0xff]
        %v3307 = vld [vmem:[#allocation3 + $0x678] sm:$0xff]
        %v3308 = vld [vmem:[#allocation3 + $0x680] sm:$0xff]
        %v3309 = vld [vmem:[#allocation3 + $0x688] sm:$0xff]
        %v3310 = vld [vmem:[#allocation3 + $0x690] sm:$0xff]
        %v3311 = vld [vmem:[#allocation3 + $0x698] sm:$0xff]
        %v3312 = vld [vmem:[#allocation3 + $0x6a0] sm:$0xff]
        %v3313 = vld [vmem:[#allocation3 + $0x6a8] sm:$0xff]
        %v3314 = vld [vmem:[#allocation3 + $0x6b0] sm:$0xff]
        %v3315 = vld [vmem:[#allocation3 + $0x6b8] sm:$0xff]
        %v3316 = vld [vmem:[#allocation3 + $0x6c0] sm:$0xff]
        %v3317 = vld [vmem:[#allocation3 + $0x6c8] sm:$0xff]
        %v3318 = vld [vmem:[#allocation3 + $0x6d0] sm:$0xff]
        %v3319 = vld [vmem:[#allocation3 + $0x6d8] sm:$0xff]
        %v3320 = vld [vmem:[#allocation3 + $0x6e0] sm:$0xff]
        %v3321 = vld [vmem:[#allocation3 + $0x6e8] sm:$0xff]
        %v3322 = vld [vmem:[#allocation3 + $0x6f0] sm:$0xff]
        %v3323 = vld [vmem:[#allocation3 + $0x6f8] sm:$0xff]
        %v3324 = vld [vmem:[#allocation3 + $0x700] sm:$0xff]
        %v3325 = vld [vmem:[#allocation3 + $0x708] sm:$0xff]
        %v3326 = vld [vmem:[#allocation3 + $0x710] sm:$0xff]
        %v3327 = vld [vmem:[#allocation3 + $0x718] sm:$0xff]
        %v3328 = vld [vmem:[#allocation3 + $0x720] sm:$0xff]
        %v3329 = vld [vmem:[#allocation3 + $0x728] sm:$0xff]
        %v3330 = vld [vmem:[#allocation3 + $0x730] sm:$0xff]
        %v3331 = vld [vmem:[#allocation3 + $0x738] sm:$0xff]
        %v3332 = vld [vmem:[#allocation3 + $0x740] sm:$0xff]
        %v3333 = vld [vmem:[#allocation3 + $0x748] sm:$0xff]
        %v3334 = vld [vmem:[#allocation3 + $0x750] sm:$0xff]
        %v3335 = vld [vmem:[#allocation3 + $0x758] sm:$0xff]
        %v3336 = vld [vmem:[#allocation3 + $0x760] sm:$0xff]
        %v3337 = vld [vmem:[#allocation3 + $0x768] sm:$0xff]
        %v3338 = vld [vmem:[#allocation3 + $0x770] sm:$0xff]
        %v3339 = vld [vmem:[#allocation3 + $0x778] sm:$0xff]
        %v3340 = vld [vmem:[#allocation3 + $0x780] sm:$0xff]
        %v3341 = vld [vmem:[#allocation3 + $0x788] sm:$0xff]
        %v3342 = vld [vmem:[#allocation3 + $0x790] sm:$0xff]
        %v3343 = vld [vmem:[#allocation3 + $0x798] sm:$0xff]
        %v3344 = vld [vmem:[#allocation3 + $0x7a0] sm:$0xff]
        %v3345 = vld [vmem:[#allocation3 + $0x7a8] sm:$0xff]
        %v3346 = vld [vmem:[#allocation3 + $0x7b0] sm:$0xff]
        %v3347 = vld [vmem:[#allocation3 + $0x7b8] sm:$0xff]
        %v3348 = vld [vmem:[#allocation3 + $0x7c0] sm:$0xff]
        %v3349 = vld [vmem:[#allocation3 + $0x7c8] sm:$0xff]
        %v3350 = vld [vmem:[#allocation3 + $0x7d0] sm:$0xff]
        %v3351 = vld [vmem:[#allocation3 + $0x7d8] sm:$0xff]
        %v3352 = vld [vmem:[#allocation3 + $0x7e0] sm:$0xff]
        %v3353 = vld [vmem:[#allocation3 + $0x7e8] sm:$0xff]
        %v3354 = vld [vmem:[#allocation3 + $0x7f0] sm:$0xff]
        %v3355 = vld [vmem:[#allocation3 + $0x7f8] sm:$0xff]
        %v3356 = vld [vmem:[#allocation3 + $0x800] sm:$0xff]
        %v3357 = vld [vmem:[#allocation3 + $0x808] sm:$0xff]
        %v3358 = vld [vmem:[#allocation3 + $0x810] sm:$0xff]
        %v3359 = vld [vmem:[#allocation3 + $0x818] sm:$0xff]
        %v3360 = vld [vmem:[#allocation3 + $0x820] sm:$0xff]
        %v3361 = vld [vmem:[#allocation3 + $0x828] sm:$0xff]
        %v3362 = vld [vmem:[#allocation3 + $0x830] sm:$0xff]
        %v3363 = vld [vmem:[#allocation3 + $0x838] sm:$0xff]
        %v3364 = vld [vmem:[#allocation3 + $0x840] sm:$0xff]
        %v3365 = vld [vmem:[#allocation3 + $0x848] sm:$0xff]
        %v3366 = vld [vmem:[#allocation3 + $0x850] sm:$0xff]
        %v3367 = vld [vmem:[#allocation3 + $0x858] sm:$0xff]
        %v3368 = vld [vmem:[#allocation3 + $0x860] sm:$0xff]
        %v3369 = vld [vmem:[#allocation3 + $0x868] sm:$0xff]
        %v3370 = vld [vmem:[#allocation3 + $0x870] sm:$0xff]
        %v3371 = vld [vmem:[#allocation3 + $0x878] sm:$0xff]
        %v3372 = vld [vmem:[#allocation3 + $0x880] sm:$0xff]
        %v3373 = vld [vmem:[#allocation3 + $0x888] sm:$0xff]
        %v3374 = vld [vmem:[#allocation3 + $0x890] sm:$0xff]
        %v3375 = vld [vmem:[#allocation3 + $0x898] sm:$0xff]
        %v3376 = vld [vmem:[#allocation3 + $0x8a0] sm:$0xff]
        %v3377 = vld [vmem:[#allocation3 + $0x8a8] sm:$0xff]
        %v3378 = vld [vmem:[#allocation3 + $0x8b0] sm:$0xff]
        %v3379 = vld [vmem:[#allocation3 + $0x8b8] sm:$0xff]
        %v3380 = vld [vmem:[#allocation3 + $0x8c0] sm:$0xff]
        %v3381 = vld [vmem:[#allocation3 + $0x8c8] sm:$0xff]
        %v3382 = vld [vmem:[#allocation3 + $0x8d0] sm:$0xff]
        %v3383 = vld [vmem:[#allocation3 + $0x8d8] sm:$0xff]
        %v3384 = vld [vmem:[#allocation3 + $0x8e0] sm:$0xff]
        %v3385 = vld [vmem:[#allocation3 + $0x8e8] sm:$0xff]
        %v3386 = vld [vmem:[#allocation3 + $0x8f0] sm:$0xff]
        %v3387 = vld [vmem:[#allocation3 + $0x8f8] sm:$0xff]
        %s3388 = scalar_lea.vmem [#allocation4], 1152
        %v3389 = vld [vmem:[%s3388] sm:$0xff]
        %v3390 = vld [vmem:[%s3388 + $0x8] sm:$0xff]
        %v3391 = vld [vmem:[%s3388 + $0x10] sm:$0xff]
        %v3392 = vld [vmem:[%s3388 + $0x18] sm:$0xff]
        %v3393 = vld [vmem:[%s3388 + $0x20] sm:$0xff]
        %v3394 = vld [vmem:[%s3388 + $0x28] sm:$0xff]
        %v3395 = vld [vmem:[%s3388 + $0x30] sm:$0xff]
        %v3396 = vld [vmem:[%s3388 + $0x38] sm:$0xff]
        %v3397 = vld [vmem:[%s3388 + $0x40] sm:$0xff]
        %v3398 = vld [vmem:[%s3388 + $0x48] sm:$0xff]
        %v3399 = vld [vmem:[%s3388 + $0x50] sm:$0xff]
        %v3400 = vld [vmem:[%s3388 + $0x58] sm:$0xff]
        %v3401 = vld [vmem:[%s3388 + $0x60] sm:$0xff]
        %v3402 = vld [vmem:[%s3388 + $0x68] sm:$0xff]
        %v3403 = vld [vmem:[%s3388 + $0x70] sm:$0xff]
        %v3404 = vld [vmem:[%s3388 + $0x78] sm:$0xff]
        %v3405 = vld [vmem:[%s3388 + $0x80] sm:$0xff]
        %v3406 = vld [vmem:[%s3388 + $0x88] sm:$0xff]
        %v3407 = vld [vmem:[%s3388 + $0x90] sm:$0xff]
        %v3408 = vld [vmem:[%s3388 + $0x98] sm:$0xff]
        %v3409 = vld [vmem:[%s3388 + $0xa0] sm:$0xff]
        %v3410 = vld [vmem:[%s3388 + $0xa8] sm:$0xff]
        %v3411 = vld [vmem:[%s3388 + $0xb0] sm:$0xff]
        %v3412 = vld [vmem:[%s3388 + $0xb8] sm:$0xff]
        %v3413 = vld [vmem:[%s3388 + $0xc0] sm:$0xff]
        %v3414 = vld [vmem:[%s3388 + $0xc8] sm:$0xff]
        %v3415 = vld [vmem:[%s3388 + $0xd0] sm:$0xff]
        %v3416 = vld [vmem:[%s3388 + $0xd8] sm:$0xff]
        %v3417 = vld [vmem:[%s3388 + $0xe0] sm:$0xff]
        %v3418 = vld [vmem:[%s3388 + $0xe8] sm:$0xff]
        %v3419 = vld [vmem:[%s3388 + $0xf0] sm:$0xff]
        %v3420 = vld [vmem:[%s3388 + $0xf8] sm:$0xff]
        %v3421 = vld [vmem:[%s3388 + $0x100] sm:$0xff]
        %v3422 = vld [vmem:[%s3388 + $0x108] sm:$0xff]
        %v3423 = vld [vmem:[%s3388 + $0x110] sm:$0xff]
        %v3424 = vld [vmem:[%s3388 + $0x118] sm:$0xff]
        %v3425 = vld [vmem:[%s3388 + $0x120] sm:$0xff]
        %v3426 = vld [vmem:[%s3388 + $0x128] sm:$0xff]
        %v3427 = vld [vmem:[%s3388 + $0x130] sm:$0xff]
        %v3428 = vld [vmem:[%s3388 + $0x138] sm:$0xff]
        %v3429 = vld [vmem:[%s3388 + $0x140] sm:$0xff]
        %v3430 = vld [vmem:[%s3388 + $0x148] sm:$0xff]
        %v3431 = vld [vmem:[%s3388 + $0x150] sm:$0xff]
        %v3432 = vld [vmem:[%s3388 + $0x158] sm:$0xff]
        %v3433 = vld [vmem:[%s3388 + $0x160] sm:$0xff]
        %v3434 = vld [vmem:[%s3388 + $0x168] sm:$0xff]
        %v3435 = vld [vmem:[%s3388 + $0x170] sm:$0xff]
        %v3436 = vld [vmem:[%s3388 + $0x178] sm:$0xff]
        %v3437 = vld [vmem:[%s3388 + $0x180] sm:$0xff]
        %v3438 = vld [vmem:[%s3388 + $0x188] sm:$0xff]
        %v3439 = vld [vmem:[%s3388 + $0x190] sm:$0xff]
        %v3440 = vld [vmem:[%s3388 + $0x198] sm:$0xff]
        %v3441 = vld [vmem:[%s3388 + $0x1a0] sm:$0xff]
        %v3442 = vld [vmem:[%s3388 + $0x1a8] sm:$0xff]
        %v3443 = vld [vmem:[%s3388 + $0x1b0] sm:$0xff]
        %v3444 = vld [vmem:[%s3388 + $0x1b8] sm:$0xff]
        %v3445 = vld [vmem:[%s3388 + $0x1c0] sm:$0xff]
        %v3446 = vld [vmem:[%s3388 + $0x1c8] sm:$0xff]
        %v3447 = vld [vmem:[%s3388 + $0x1d0] sm:$0xff]
        %v3448 = vld [vmem:[%s3388 + $0x1d8] sm:$0xff]
        %v3449 = vld [vmem:[%s3388 + $0x1e0] sm:$0xff]
        %v3450 = vld [vmem:[%s3388 + $0x1e8] sm:$0xff]
        %v3451 = vld [vmem:[%s3388 + $0x1f0] sm:$0xff]
        %v3452 = vld [vmem:[%s3388 + $0x1f8] sm:$0xff]
        %v3453 = vld [vmem:[%s3388 + $0x200] sm:$0xff]
        %v3454 = vld [vmem:[%s3388 + $0x208] sm:$0xff]
        %v3455 = vld [vmem:[%s3388 + $0x210] sm:$0xff]
        %v3456 = vld [vmem:[%s3388 + $0x218] sm:$0xff]
        %v3457 = vld [vmem:[%s3388 + $0x220] sm:$0xff]
        %v3458 = vld [vmem:[%s3388 + $0x228] sm:$0xff]
        %v3459 = vld [vmem:[%s3388 + $0x230] sm:$0xff]
        %v3460 = vld [vmem:[%s3388 + $0x238] sm:$0xff]
        %v3461 = vld [vmem:[%s3388 + $0x240] sm:$0xff]
        %v3462 = vld [vmem:[%s3388 + $0x248] sm:$0xff]
        %v3463 = vld [vmem:[%s3388 + $0x250] sm:$0xff]
        %v3464 = vld [vmem:[%s3388 + $0x258] sm:$0xff]
        %v3465 = vld [vmem:[%s3388 + $0x260] sm:$0xff]
        %v3466 = vld [vmem:[%s3388 + $0x268] sm:$0xff]
        %v3467 = vld [vmem:[%s3388 + $0x270] sm:$0xff]
        %v3468 = vld [vmem:[%s3388 + $0x278] sm:$0xff]
        %v3469 = vld [vmem:[%s3388 + $0x280] sm:$0xff]
        %v3470 = vld [vmem:[%s3388 + $0x288] sm:$0xff]
        %v3471 = vld [vmem:[%s3388 + $0x290] sm:$0xff]
        %v3472 = vld [vmem:[%s3388 + $0x298] sm:$0xff]
        %v3473 = vld [vmem:[%s3388 + $0x2a0] sm:$0xff]
        %v3474 = vld [vmem:[%s3388 + $0x2a8] sm:$0xff]
        %v3475 = vld [vmem:[%s3388 + $0x2b0] sm:$0xff]
        %v3476 = vld [vmem:[%s3388 + $0x2b8] sm:$0xff]
        %v3477 = vld [vmem:[%s3388 + $0x2c0] sm:$0xff]
        %v3478 = vld [vmem:[%s3388 + $0x2c8] sm:$0xff]
        %v3479 = vld [vmem:[%s3388 + $0x2d0] sm:$0xff]
        %v3480 = vld [vmem:[%s3388 + $0x2d8] sm:$0xff]
        %v3481 = vld [vmem:[%s3388 + $0x2e0] sm:$0xff]
        %v3482 = vld [vmem:[%s3388 + $0x2e8] sm:$0xff]
        %v3483 = vld [vmem:[%s3388 + $0x2f0] sm:$0xff]
        %v3484 = vld [vmem:[%s3388 + $0x2f8] sm:$0xff]
        %v3485 = vld [vmem:[%s3388 + $0x300] sm:$0xff]
        %v3486 = vld [vmem:[%s3388 + $0x308] sm:$0xff]
        %v3487 = vld [vmem:[%s3388 + $0x310] sm:$0xff]
        %v3488 = vld [vmem:[%s3388 + $0x318] sm:$0xff]
        %v3489 = vld [vmem:[%s3388 + $0x320] sm:$0xff]
        %v3490 = vld [vmem:[%s3388 + $0x328] sm:$0xff]
        %v3491 = vld [vmem:[%s3388 + $0x330] sm:$0xff]
        %v3492 = vld [vmem:[%s3388 + $0x338] sm:$0xff]
        %v3493 = vld [vmem:[%s3388 + $0x340] sm:$0xff]
        %v3494 = vld [vmem:[%s3388 + $0x348] sm:$0xff]
        %v3495 = vld [vmem:[%s3388 + $0x350] sm:$0xff]
        %v3496 = vld [vmem:[%s3388 + $0x358] sm:$0xff]
        %v3497 = vld [vmem:[%s3388 + $0x360] sm:$0xff]
        %v3498 = vld [vmem:[%s3388 + $0x368] sm:$0xff]
        %v3499 = vld [vmem:[%s3388 + $0x370] sm:$0xff]
        %v3500 = vld [vmem:[%s3388 + $0x378] sm:$0xff]
        %v3501 = vld [vmem:[%s3388 + $0x380] sm:$0xff]
        %v3502 = vld [vmem:[%s3388 + $0x388] sm:$0xff]
        %v3503 = vld [vmem:[%s3388 + $0x390] sm:$0xff]
        %v3504 = vld [vmem:[%s3388 + $0x398] sm:$0xff]
        %v3505 = vld [vmem:[%s3388 + $0x3a0] sm:$0xff]
        %v3506 = vld [vmem:[%s3388 + $0x3a8] sm:$0xff]
        %v3507 = vld [vmem:[%s3388 + $0x3b0] sm:$0xff]
        %v3508 = vld [vmem:[%s3388 + $0x3b8] sm:$0xff]
        %v3509 = vld [vmem:[%s3388 + $0x3c0] sm:$0xff]
        %v3510 = vld [vmem:[%s3388 + $0x3c8] sm:$0xff]
        %v3511 = vld [vmem:[%s3388 + $0x3d0] sm:$0xff]
        %v3512 = vld [vmem:[%s3388 + $0x3d8] sm:$0xff]
        %v3513 = vld [vmem:[%s3388 + $0x3e0] sm:$0xff]
        %v3514 = vld [vmem:[%s3388 + $0x3e8] sm:$0xff]
        %v3515 = vld [vmem:[%s3388 + $0x3f0] sm:$0xff]
        %v3516 = vld [vmem:[%s3388 + $0x3f8] sm:$0xff]
        %v3517 = vld [vmem:[%s3388 + $0x400] sm:$0xff]
        %v3518 = vld [vmem:[%s3388 + $0x408] sm:$0xff]
        %v3519 = vld [vmem:[%s3388 + $0x410] sm:$0xff]
        %v3520 = vld [vmem:[%s3388 + $0x418] sm:$0xff]
        %v3521 = vld [vmem:[%s3388 + $0x420] sm:$0xff]
        %v3522 = vld [vmem:[%s3388 + $0x428] sm:$0xff]
        %v3523 = vld [vmem:[%s3388 + $0x430] sm:$0xff]
        %v3524 = vld [vmem:[%s3388 + $0x438] sm:$0xff]
        %v3525 = vld [vmem:[%s3388 + $0x440] sm:$0xff]
        %v3526 = vld [vmem:[%s3388 + $0x448] sm:$0xff]
        %v3527 = vld [vmem:[%s3388 + $0x450] sm:$0xff]
        %v3528 = vld [vmem:[%s3388 + $0x458] sm:$0xff]
        %v3529 = vld [vmem:[%s3388 + $0x460] sm:$0xff]
        %v3530 = vld [vmem:[%s3388 + $0x468] sm:$0xff]
        %v3531 = vld [vmem:[%s3388 + $0x470] sm:$0xff]
        %v3532 = vld [vmem:[%s3388 + $0x478] sm:$0xff]
        %s3533 = scalar_lea.vmem [#allocation7], 1
        %v3534 = vld [vmem:[%s3533] sm:$0x1]
        %v3536 = vlaneseq
        %v3537 = vshrl.u32 %v3536, 7
        %v3538 = vsub.s32 0, %v3537
        %v3539 = vrot.slane %v3534, %v3538
        %3541 = vmatprep.subr.mxu0 0.0
        %3542 = vmatpush1.msra.mxu0 %v3389
        %3543 = vmatprep.subr.mxu0 0.0
        %3544 = vmatpush1.msra.mxu0 %v3390
        %3545 = vmatprep.subr.mxu0 0.0
        %3546 = vmatpush1.msra.mxu0 %v3391
        %3547 = vmatprep.subr.mxu0 0.0
        %3548 = vmatpush1.msra.mxu0 %v3392
        %3549 = vmatprep.subr.mxu0 0.0
        %3550 = vmatpush1.msra.mxu0 %v3393
        %3551 = vmatprep.subr.mxu0 0.0
        %3552 = vmatpush1.msra.mxu0 %v3394
        %3553 = vmatprep.subr.mxu0 0.0
        %3554 = vmatpush1.msra.mxu0 %v3395
        %3555 = vmatprep.subr.mxu0 0.0
        %3556 = vmatpush1.msra.mxu0 %v3396
        %3557 = vmatprep.subr.mxu0 0.0
        %3558 = vmatpush1.msra.mxu0 %v3397
        %3559 = vmatprep.subr.mxu0 0.0
        %3560 = vmatpush1.msra.mxu0 %v3398
        %3561 = vmatprep.subr.mxu0 0.0
        %3562 = vmatpush1.msra.mxu0 %v3399
        %3563 = vmatprep.subr.mxu0 0.0
        %3564 = vmatpush1.msra.mxu0 %v3400
        %3565 = vmatprep.subr.mxu0 0.0
        %3566 = vmatpush1.msra.mxu0 %v3401
        %3567 = vmatprep.subr.mxu0 0.0
        %3568 = vmatpush1.msra.mxu0 %v3402
        %3569 = vmatprep.subr.mxu0 0.0
        %3570 = vmatpush1.msra.mxu0 %v3403
        %3571 = vmatprep.subr.mxu0 0.0
        %3572 = vmatpush1.msra.mxu0 %v3404
        %3573 = vmatprep.subr.mxu0 0.0
        %3574 = vmatpush1.msra.mxu0 %v3405
        %3575 = vmatprep.subr.mxu0 0.0
        %3576 = vmatpush1.msra.mxu0 %v3406
        %3577 = vmatprep.subr.mxu0 0.0
        %3578 = vmatpush1.msra.mxu0 %v3407
        %3579 = vmatprep.subr.mxu0 0.0
        %3580 = vmatpush1.msra.mxu0 %v3408
        %3581 = vmatprep.subr.mxu0 0.0
        %3582 = vmatpush1.msra.mxu0 %v3409
        %3583 = vmatprep.subr.mxu0 0.0
        %3584 = vmatpush1.msra.mxu0 %v3410
        %3585 = vmatprep.subr.mxu0 0.0
        %3586 = vmatpush1.msra.mxu0 %v3411
        %3587 = vmatprep.subr.mxu0 0.0
        %3588 = vmatpush1.msra.mxu0 %v3412
        %3589 = vmatprep.subr.mxu0 0.0
        %3590 = vmatpush1.msra.mxu0 %v3413
        %3591 = vmatprep.subr.mxu0 0.0
        %3592 = vmatpush1.msra.mxu0 %v3414
        %3593 = vmatprep.subr.mxu0 0.0
        %3594 = vmatpush1.msra.mxu0 %v3415
        %3595 = vmatprep.subr.mxu0 0.0
        %3596 = vmatpush1.msra.mxu0 %v3416
        %3597 = vmatprep.subr.mxu0 0.0
        %3598 = vmatpush1.msra.mxu0 %v3417
        %3599 = vmatprep.subr.mxu0 0.0
        %3600 = vmatpush1.msra.mxu0 %v3418
        %3601 = vmatprep.subr.mxu0 0.0
        %3602 = vmatpush1.msra.mxu0 %v3419
        %3603 = vmatprep.subr.mxu0 0.0
        %3604 = vmatpush1.msra.mxu0 %v3420
        %3605 = vmatprep.mubr.f32.mxu0 %v3101
        %3606 = vmatmul.mubr.f32.gmra.mrb[0].mxu0 %v3100
        %v3607 = vpop.f32.mrb[0].mxu0
        %v3608 = vadd.f32 %v3539, %v3607
        %v3609 = vpop.f32.mrb[0].mxu0
        %3610 = vmatprep.mubr.f32.mxu0 %v3110
        %3611 = vmatmul.mubr.f32.gmra.mrb[0].mxu0 %v3109
        %v3612 = vpop.f32.mrb[0].mxu0
        %v3613 = vadd.f32 %v3539, %v3612
        %v3614 = vpop.f32.mrb[0].mxu0
        %3615 = vmatprep.mubr.f32.mxu0 %v3119
        %3616 = vmatmul.mubr.f32.gmra.mrb[0].mxu0 %v3118
        %v3617 = vpop.f32.mrb[0].mxu0
        %v3618 = vadd.f32 %v3539, %v3617
        %v3619 = vpop.f32.mrb[0].mxu0
        %3620 = vmatprep.mubr.f32.mxu0 %v3128
        %3621 = vmatmul.mubr.f32.gmra.mrb[0].mxu0 %v3127
        %v3622 = vpop.f32.mrb[0].mxu0
        %v3623 = vadd.f32 %v3539, %v3622
        %v3624 = vpop.f32.mrb[0].mxu0
        %3625 = vmatprep.mubr.f32.mxu0 %v3137
        %3626 = vmatmul.mubr.f32.gmra.mrb[0].mxu0 %v3136
        %v3627 = vpop.f32.mrb[0].mxu0
        %v3628 = vadd.f32 %v3539, %v3627
        %v3629 = vpop.f32.mrb[0].mxu0
        %3630 = vmatprep.mubr.f32.mxu0 %v3146
        %3631 = vmatmul.mubr.f32.gmra.mrb[0].mxu0 %v3145
        %v3632 = vpop.f32.mrb[0].mxu0
        %v3633 = vadd.f32 %v3539, %v3632
        %v3634 = vpop.f32.mrb[0].mxu0
        %3635 = vmatprep.mubr.f32.mxu0 %v3155
        %3636 = vmatmul.mubr.f32.gmra.mrb[0].mxu0 %v3154
        %v3637 = vpop.f32.mrb[0].mxu0
        %v3638 = vadd.f32 %v3539, %v3637
        %v3639 = vpop.f32.mrb[0].mxu0
        %3640 = vmatprep.mubr.f32.mxu0 %v3164
        %3641 = vmatmul.mubr.f32.gmra.mrb[0].mxu0 %v3163
        %v3642 = vpop.f32.mrb[0].mxu0
        %v3643 = vadd.f32 %v3539, %v3642
        %v3644 = vpop.f32.mrb[0].mxu0
        %3645 = vmatprep.mubr.f32.mxu0 %v3173
        %3646 = vmatmul.mubr.f32.gmra.mrb[0].mxu0 %v3172
        %v3647 = vpop.f32.mrb[0].mxu0
        %v3648 = vadd.f32 %v3539, %v3647
        %v3649 = vpop.f32.mrb[0].mxu0
        %3650 = vmatprep.mubr.f32.mxu0 %v3182
        %3651 = vmatmul.mubr.f32.gmra.mrb[0].mxu0 %v3181
        %v3652 = vpop.f32.mrb[0].mxu0
        %v3653 = vadd.f32 %v3539, %v3652
        %v3654 = vpop.f32.mrb[0].mxu0
        %3655 = vmatprep.mubr.f32.mxu0 %v3191
        %3656 = vmatmul.mubr.f32.gmra.mrb[0].mxu0 %v3190
        %v3657 = vpop.f32.mrb[0].mxu0
        %v3658 = vadd.f32 %v3539, %v3657
        %v3659 = vpop.f32.mrb[0].mxu0
        %3660 = vmatprep.mubr.f32.mxu0 %v3200
        %3661 = vmatmul.mubr.f32.gmra.mrb[0].mxu0 %v3199
        %v3662 = vpop.f32.mrb[0].mxu0
        %v3663 = vadd.f32 %v3539, %v3662
        %v3664 = vpop.f32.mrb[0].mxu0
        %3665 = vmatprep.mubr.f32.mxu0 %v3209
        %3666 = vmatmul.mubr.f32.gmra.mrb[0].mxu0 %v3208
        %v3667 = vpop.f32.mrb[0].mxu0
        %v3668 = vadd.f32 %v3539, %v3667
        %v3669 = vpop.f32.mrb[0].mxu0
        %3670 = vmatprep.mubr.f32.mxu0 %v3218
        %3671 = vmatmul.mubr.f32.gmra.mrb[0].mxu0 %v3217
        %v3672 = vpop.f32.mrb[0].mxu0
        %v3673 = vadd.f32 %v3539, %v3672
        %v3674 = vpop.f32.mrb[0].mxu0
        %3675 = vmatprep.mubr.f32.mxu0 %v3227
        %3676 = vmatmul.mubr.f32.gmra.mrb[0].mxu0 %v3226
        %v3677 = vpop.f32.mrb[0].mxu0
        %v3678 = vadd.f32 %v3539, %v3677
        %v3679 = vpop.f32.mrb[0].mxu0
        %3680 = vmatprep.mubr.f32.mxu0 %v3236
        %3681 = vmatmul.mubr.f32.gmra.mrb[0].mxu0 %v3235
        %v3682 = vpop.f32.mrb[0].mxu0
        %v3683 = vadd.f32 %v3539, %v3682
        %v3684 = vpop.f32.mrb[0].mxu0
        %3685 = vmatprep.mubr.f32.mxu0 %v3245
        %3686 = vmatmul.mubr.f32.gmra.mrb[0].mxu0 %v3244
        %v3687 = vpop.f32.mrb[0].mxu0
        %v3688 = vadd.f32 %v3539, %v3687
        %v3689 = vpop.f32.mrb[0].mxu0
        %3690 = vmatprep.mubr.f32.mxu0 %v3254
        %3691 = vmatmul.mubr.f32.gmra.mrb[0].mxu0 %v3253
        %v3692 = vpop.f32.mrb[0].mxu0
        %v3693 = vadd.f32 %v3539, %v3692
        %v3694 = vpop.f32.mrb[0].mxu0
        %3695 = vmatprep.mubr.f32.mxu0 %v3263
        %3696 = vmatmul.mubr.f32.gmra.mrb[0].mxu0 %v3262
        %v3697 = vpop.f32.mrb[0].mxu0
        %v3698 = vadd.f32 %v3539, %v3697
        %v3699 = vpop.f32.mrb[0].mxu0
        %3700 = vmatprep.mubr.f32.mxu0 %v3272
        %3701 = vmatmul.mubr.f32.gmra.mrb[0].mxu0 %v3271
        %v3702 = vpop.f32.mrb[0].mxu0
        %v3703 = vadd.f32 %v3539, %v3702
        %v3704 = vpop.f32.mrb[0].mxu0
        %3705 = vmatprep.mubr.f32.mxu0 %v3281
        %3706 = vmatmul.mubr.f32.gmra.mrb[0].mxu0 %v3280
        %v3707 = vpop.f32.mrb[0].mxu0
        %v3708 = vadd.f32 %v3539, %v3707
        %v3709 = vpop.f32.mrb[0].mxu0
        %3710 = vmatprep.mubr.f32.mxu0 %v3290
        %3711 = vmatmul.mubr.f32.gmra.mrb[0].mxu0 %v3289
        %v3712 = vpop.f32.mrb[0].mxu0
        %v3713 = vadd.f32 %v3539, %v3712
        %v3714 = vpop.f32.mrb[0].mxu0
        %3715 = vmatprep.mubr.f32.mxu0 %v3299
        %3716 = vmatmul.mubr.f32.gmra.mrb[0].mxu0 %v3298
        %v3717 = vpop.f32.mrb[0].mxu0
        %v3718 = vadd.f32 %v3539, %v3717
        %v3719 = vpop.f32.mrb[0].mxu0
        %3720 = vmatprep.mubr.f32.mxu0 %v3308
        %3721 = vmatmul.mubr.f32.gmra.mrb[0].mxu0 %v3307
        %v3722 = vpop.f32.mrb[0].mxu0
        %v3723 = vadd.f32 %v3539, %v3722
        %v3724 = vpop.f32.mrb[0].mxu0
        %3725 = vmatprep.mubr.f32.mxu0 %v3317
        %3726 = vmatmul.mubr.f32.gmra.mrb[0].mxu0 %v3316
        %v3727 = vpop.f32.mrb[0].mxu0
        %v3728 = vadd.f32 %v3539, %v3727
        %v3729 = vpop.f32.mrb[0].mxu0
        %3730 = vmatprep.mubr.f32.mxu0 %v3326
        %3731 = vmatmul.mubr.f32.gmra.mrb[0].mxu0 %v3325
        %v3732 = vpop.f32.mrb[0].mxu0
        %v3733 = vadd.f32 %v3539, %v3732
        %v3734 = vpop.f32.mrb[0].mxu0
        %3735 = vmatprep.mubr.f32.mxu0 %v3335
        %3736 = vmatmul.mubr.f32.gmra.mrb[0].mxu0 %v3334
        %v3737 = vpop.f32.mrb[0].mxu0
        %v3738 = vadd.f32 %v3539, %v3737
        %v3739 = vpop.f32.mrb[0].mxu0
        %3740 = vmatprep.mubr.f32.mxu0 %v3344
        %3741 = vmatmul.mubr.f32.gmra.mrb[0].mxu0 %v3343
        %v3742 = vpop.f32.mrb[0].mxu0
        %v3743 = vadd.f32 %v3539, %v3742
        %v3744 = vpop.f32.mrb[0].mxu0
        %3745 = vmatprep.mubr.f32.mxu0 %v3353
        %3746 = vmatmul.mubr.f32.gmra.mrb[0].mxu0 %v3352
        %v3747 = vpop.f32.mrb[0].mxu0
        %v3748 = vadd.f32 %v3539, %v3747
        %v3749 = vpop.f32.mrb[0].mxu0
        %3750 = vmatprep.mubr.f32.mxu0 %v3362
        %3751 = vmatmul.mubr.f32.gmra.mrb[0].mxu0 %v3361
        %v3752 = vpop.f32.mrb[0].mxu0
        %v3753 = vadd.f32 %v3539, %v3752
        %v3754 = vpop.f32.mrb[0].mxu0
        %3755 = vmatprep.mubr.f32.mxu0 %v3371
        %3756 = vmatmul.mubr.f32.gmra.mrb[0].mxu0 %v3370
        %v3757 = vpop.f32.mrb[0].mxu0
        %v3758 = vadd.f32 %v3539, %v3757
        %v3759 = vpop.f32.mrb[0].mxu0
        %3760 = vmatprep.mubr.f32.mxu0 %v3380
        %3761 = vmatmul.mubr.f32.gmra.mrb[0].mxu0 %v3379
        %v3762 = vpop.f32.mrb[0].mxu0
        %v3763 = vadd.f32 %v3539, %v3762
        %v3764 = vpop.f32.mrb[0].mxu0
        %3765 = vdwg.mxu0
        %3766 = vmatprep.subr.mxu0 0.0
        %3767 = vmatpush1.msra.mxu0 %v3421
        %3768 = vmatprep.subr.mxu0 0.0
        %3769 = vmatpush1.msra.mxu0 %v3422
        %3770 = vmatprep.subr.mxu0 0.0
        %3771 = vmatpush1.msra.mxu0 %v3423
        %3772 = vmatprep.subr.mxu0 0.0
        %3773 = vmatpush1.msra.mxu0 %v3424
        %3774 = vmatprep.subr.mxu0 0.0
        %3775 = vmatpush1.msra.mxu0 %v3425
        %3776 = vmatprep.subr.mxu0 0.0
        %3777 = vmatpush1.msra.mxu0 %v3426
        %3778 = vmatprep.subr.mxu0 0.0
        %3779 = vmatpush1.msra.mxu0 %v3427
        %3780 = vmatprep.subr.mxu0 0.0
        %3781 = vmatpush1.msra.mxu0 %v3428
        %3782 = vmatprep.subr.mxu0 0.0
        %3783 = vmatpush1.msra.mxu0 %v3429
        %3784 = vmatprep.subr.mxu0 0.0
        %3785 = vmatpush1.msra.mxu0 %v3430
        %3786 = vmatprep.subr.mxu0 0.0
        %3787 = vmatpush1.msra.mxu0 %v3431
        %3788 = vmatprep.subr.mxu0 0.0
        %3789 = vmatpush1.msra.mxu0 %v3432
        %3790 = vmatprep.subr.mxu0 0.0
        %3791 = vmatpush1.msra.mxu0 %v3433
        %3792 = vmatprep.subr.mxu0 0.0
        %3793 = vmatpush1.msra.mxu0 %v3434
        %3794 = vmatprep.subr.mxu0 0.0
        %3795 = vmatpush1.msra.mxu0 %v3435
        %3796 = vmatprep.subr.mxu0 0.0
        %3797 = vmatpush1.msra.mxu0 %v3436
        %3798 = vmatprep.subr.mxu0 0.0
        %3799 = vmatpush1.msra.mxu0 %v3437
        %3800 = vmatprep.subr.mxu0 0.0
        %3801 = vmatpush1.msra.mxu0 %v3438
        %3802 = vmatprep.subr.mxu0 0.0
        %3803 = vmatpush1.msra.mxu0 %v3439
        %3804 = vmatprep.subr.mxu0 0.0
        %3805 = vmatpush1.msra.mxu0 %v3440
        %3806 = vmatprep.subr.mxu0 0.0
        %3807 = vmatpush1.msra.mxu0 %v3441
        %3808 = vmatprep.subr.mxu0 0.0
        %3809 = vmatpush1.msra.mxu0 %v3442
        %3810 = vmatprep.subr.mxu0 0.0
        %3811 = vmatpush1.msra.mxu0 %v3443
        %3812 = vmatprep.subr.mxu0 0.0
        %3813 = vmatpush1.msra.mxu0 %v3444
        %3814 = vmatprep.subr.mxu0 0.0
        %3815 = vmatpush1.msra.mxu0 %v3445
        %3816 = vmatprep.subr.mxu0 0.0
        %3817 = vmatpush1.msra.mxu0 %v3446
        %3818 = vmatprep.subr.mxu0 0.0
        %3819 = vmatpush1.msra.mxu0 %v3447
        %3820 = vmatprep.subr.mxu0 0.0
        %3821 = vmatpush1.msra.mxu0 %v3448
        %3822 = vmatprep.subr.mxu0 0.0
        %3823 = vmatpush1.msra.mxu0 %v3449
        %3824 = vmatprep.subr.mxu0 0.0
        %3825 = vmatpush1.msra.mxu0 %v3450
        %3826 = vmatprep.subr.mxu0 0.0
        %3827 = vmatpush1.msra.mxu0 %v3451
        %3828 = vmatprep.subr.mxu0 0.0
        %3829 = vmatpush1.msra.mxu0 %v3452
        %3830 = vmatprep.mubr.f32.mxu0 %v3103
        %3831 = vmatmul.mubr.f32.gmra.mrb[0].mxu0 %v3102
        %v3832 = vpop.f32.mrb[0].mxu0
        %v3833 = vadd.f32 %v3608, %v3832
        %v3834 = vpop.f32.mrb[0].mxu0
        %3835 = vmatprep.mubr.f32.mxu0 %v3112
        %3836 = vmatmul.mubr.f32.gmra.mrb[0].mxu0 %v3111
        %v3837 = vpop.f32.mrb[0].mxu0
        %v3838 = vadd.f32 %v3613, %v3837
        %v3839 = vpop.f32.mrb[0].mxu0
        %3840 = vmatprep.mubr.f32.mxu0 %v3121
        %3841 = vmatmul.mubr.f32.gmra.mrb[0].mxu0 %v3120
        %v3842 = vpop.f32.mrb[0].mxu0
        %v3843 = vadd.f32 %v3618, %v3842
        %v3844 = vpop.f32.mrb[0].mxu0
        %3845 = vmatprep.mubr.f32.mxu0 %v3130
        %3846 = vmatmul.mubr.f32.gmra.mrb[0].mxu0 %v3129
        %v3847 = vpop.f32.mrb[0].mxu0
        %v3848 = vadd.f32 %v3623, %v3847
        %v3849 = vpop.f32.mrb[0].mxu0
        %3850 = vmatprep.mubr.f32.mxu0 %v3139
        %3851 = vmatmul.mubr.f32.gmra.mrb[0].mxu0 %v3138
        %v3852 = vpop.f32.mrb[0].mxu0
        %v3853 = vadd.f32 %v3628, %v3852
        %v3854 = vpop.f32.mrb[0].mxu0
        %3855 = vmatprep.mubr.f32.mxu0 %v3148
        %3856 = vmatmul.mubr.f32.gmra.mrb[0].mxu0 %v3147
        %v3857 = vpop.f32.mrb[0].mxu0
        %v3858 = vadd.f32 %v3633, %v3857
        %v3859 = vpop.f32.mrb[0].mxu0
        %3860 = vmatprep.mubr.f32.mxu0 %v3157
        %3861 = vmatmul.mubr.f32.gmra.mrb[0].mxu0 %v3156
        %v3862 = vpop.f32.mrb[0].mxu0
        %v3863 = vadd.f32 %v3638, %v3862
        %v3864 = vpop.f32.mrb[0].mxu0
        %3865 = vmatprep.mubr.f32.mxu0 %v3166
        %3866 = vmatmul.mubr.f32.gmra.mrb[0].mxu0 %v3165
        %v3867 = vpop.f32.mrb[0].mxu0
        %v3868 = vadd.f32 %v3643, %v3867
        %v3869 = vpop.f32.mrb[0].mxu0
        %3870 = vmatprep.mubr.f32.mxu0 %v3175
        %3871 = vmatmul.mubr.f32.gmra.mrb[0].mxu0 %v3174
        %v3872 = vpop.f32.mrb[0].mxu0
        %v3873 = vadd.f32 %v3648, %v3872
        %v3874 = vpop.f32.mrb[0].mxu0
        %3875 = vmatprep.mubr.f32.mxu0 %v3184
        %3876 = vmatmul.mubr.f32.gmra.mrb[0].mxu0 %v3183
        %v3877 = vpop.f32.mrb[0].mxu0
        %v3878 = vadd.f32 %v3653, %v3877
        %v3879 = vpop.f32.mrb[0].mxu0
        %3880 = vmatprep.mubr.f32.mxu0 %v3193
        %3881 = vmatmul.mubr.f32.gmra.mrb[0].mxu0 %v3192
        %v3882 = vpop.f32.mrb[0].mxu0
        %v3883 = vadd.f32 %v3658, %v3882
        %v3884 = vpop.f32.mrb[0].mxu0
        %3885 = vmatprep.mubr.f32.mxu0 %v3202
        %3886 = vmatmul.mubr.f32.gmra.mrb[0].mxu0 %v3201
        %v3887 = vpop.f32.mrb[0].mxu0
        %v3888 = vadd.f32 %v3663, %v3887
        %v3889 = vpop.f32.mrb[0].mxu0
        %3890 = vmatprep.mubr.f32.mxu0 %v3211
        %3891 = vmatmul.mubr.f32.gmra.mrb[0].mxu0 %v3210
        %v3892 = vpop.f32.mrb[0].mxu0
        %v3893 = vadd.f32 %v3668, %v3892
        %v3894 = vpop.f32.mrb[0].mxu0
        %3895 = vmatprep.mubr.f32.mxu0 %v3220
        %3896 = vmatmul.mubr.f32.gmra.mrb[0].mxu0 %v3219
        %v3897 = vpop.f32.mrb[0].mxu0
        %v3898 = vadd.f32 %v3673, %v3897
        %v3899 = vpop.f32.mrb[0].mxu0
        %3900 = vmatprep.mubr.f32.mxu0 %v3229
        %3901 = vmatmul.mubr.f32.gmra.mrb[0].mxu0 %v3228
        %v3902 = vpop.f32.mrb[0].mxu0
        %v3903 = vadd.f32 %v3678, %v3902
        %v3904 = vpop.f32.mrb[0].mxu0
        %3905 = vmatprep.mubr.f32.mxu0 %v3238
        %3906 = vmatmul.mubr.f32.gmra.mrb[0].mxu0 %v3237
        %v3907 = vpop.f32.mrb[0].mxu0
        %v3908 = vadd.f32 %v3683, %v3907
        %v3909 = vpop.f32.mrb[0].mxu0
        %3910 = vmatprep.mubr.f32.mxu0 %v3247
        %3911 = vmatmul.mubr.f32.gmra.mrb[0].mxu0 %v3246
        %v3912 = vpop.f32.mrb[0].mxu0
        %v3913 = vadd.f32 %v3688, %v3912
        %v3914 = vpop.f32.mrb[0].mxu0
        %3915 = vmatprep.mubr.f32.mxu0 %v3256
        %3916 = vmatmul.mubr.f32.gmra.mrb[0].mxu0 %v3255
        %v3917 = vpop.f32.mrb[0].mxu0
        %v3918 = vadd.f32 %v3693, %v3917
        %v3919 = vpop.f32.mrb[0].mxu0
        %3920 = vmatprep.mubr.f32.mxu0 %v3265
        %3921 = vmatmul.mubr.f32.gmra.mrb[0].mxu0 %v3264
        %v3922 = vpop.f32.mrb[0].mxu0
        %v3923 = vadd.f32 %v3698, %v3922
        %v3924 = vpop.f32.mrb[0].mxu0
        %3925 = vmatprep.mubr.f32.mxu0 %v3274
        %3926 = vmatmul.mubr.f32.gmra.mrb[0].mxu0 %v3273
        %v3927 = vpop.f32.mrb[0].mxu0
        %v3928 = vadd.f32 %v3703, %v3927
        %v3929 = vpop.f32.mrb[0].mxu0
        %3930 = vmatprep.mubr.f32.mxu0 %v3283
        %3931 = vmatmul.mubr.f32.gmra.mrb[0].mxu0 %v3282
        %v3932 = vpop.f32.mrb[0].mxu0
        %v3933 = vadd.f32 %v3708, %v3932
        %v3934 = vpop.f32.mrb[0].mxu0
        %3935 = vmatprep.mubr.f32.mxu0 %v3292
        %3936 = vmatmul.mubr.f32.gmra.mrb[0].mxu0 %v3291
        %v3937 = vpop.f32.mrb[0].mxu0
        %v3938 = vadd.f32 %v3713, %v3937
        %v3939 = vpop.f32.mrb[0].mxu0
        %3940 = vmatprep.mubr.f32.mxu0 %v3301
        %3941 = vmatmul.mubr.f32.gmra.mrb[0].mxu0 %v3300
        %v3942 = vpop.f32.mrb[0].mxu0
        %v3943 = vadd.f32 %v3718, %v3942
        %v3944 = vpop.f32.mrb[0].mxu0
        %3945 = vmatprep.mubr.f32.mxu0 %v3310
        %3946 = vmatmul.mubr.f32.gmra.mrb[0].mxu0 %v3309
        %v3947 = vpop.f32.mrb[0].mxu0
        %v3948 = vadd.f32 %v3723, %v3947
        %v3949 = vpop.f32.mrb[0].mxu0
        %3950 = vmatprep.mubr.f32.mxu0 %v3319
        %3951 = vmatmul.mubr.f32.gmra.mrb[0].mxu0 %v3318
        %v3952 = vpop.f32.mrb[0].mxu0
        %v3953 = vadd.f32 %v3728, %v3952
        %v3954 = vpop.f32.mrb[0].mxu0
        %3955 = vmatprep.mubr.f32.mxu0 %v3328
        %3956 = vmatmul.mubr.f32.gmra.mrb[0].mxu0 %v3327
        %v3957 = vpop.f32.mrb[0].mxu0
        %v3958 = vadd.f32 %v3733, %v3957
        %v3959 = vpop.f32.mrb[0].mxu0
        %3960 = vmatprep.mubr.f32.mxu0 %v3337
        %3961 = vmatmul.mubr.f32.gmra.mrb[0].mxu0 %v3336
        %v3962 = vpop.f32.mrb[0].mxu0
        %v3963 = vadd.f32 %v3738, %v3962
        %v3964 = vpop.f32.mrb[0].mxu0
        %3965 = vmatprep.mubr.f32.mxu0 %v3346
        %3966 = vmatmul.mubr.f32.gmra.mrb[0].mxu0 %v3345
        %v3967 = vpop.f32.mrb[0].mxu0
        %v3968 = vadd.f32 %v3743, %v3967
        %v3969 = vpop.f32.mrb[0].mxu0
        %3970 = vmatprep.mubr.f32.mxu0 %v3355
        %3971 = vmatmul.mubr.f32.gmra.mrb[0].mxu0 %v3354
        %v3972 = vpop.f32.mrb[0].mxu0
        %v3973 = vadd.f32 %v3748, %v3972
        %v3974 = vpop.f32.mrb[0].mxu0
        %3975 = vmatprep.mubr.f32.mxu0 %v3364
        %3976 = vmatmul.mubr.f32.gmra.mrb[0].mxu0 %v3363
        %v3977 = vpop.f32.mrb[0].mxu0
        %v3978 = vadd.f32 %v3753, %v3977
        %v3979 = vpop.f32.mrb[0].mxu0
        %3980 = vmatprep.mubr.f32.mxu0 %v3373
        %3981 = vmatmul.mubr.f32.gmra.mrb[0].mxu0 %v3372
        %v3982 = vpop.f32.mrb[0].mxu0
        %v3983 = vadd.f32 %v3758, %v3982
        %v3984 = vpop.f32.mrb[0].mxu0
        %3985 = vmatprep.mubr.f32.mxu0 %v3382
        %3986 = vmatmul.mubr.f32.gmra.mrb[0].mxu0 %v3381
        %v3987 = vpop.f32.mrb[0].mxu0
        %v3988 = vadd.f32 %v3763, %v3987
        %v3989 = vpop.f32.mrb[0].mxu0
        %3990 = vdwg.mxu0
        %3991 = vmatprep.subr.mxu0 0.0
        %3992 = vmatpush1.msra.mxu0 %v3453
        %3993 = vmatprep.subr.mxu0 0.0
        %3994 = vmatpush1.msra.mxu0 %v3454
        %3995 = vmatprep.subr.mxu0 0.0
        %3996 = vmatpush1.msra.mxu0 %v3455
        %3997 = vmatprep.subr.mxu0 0.0
        %3998 = vmatpush1.msra.mxu0 %v3456
        %3999 = vmatprep.subr.mxu0 0.0
        %4000 = vmatpush1.msra.mxu0 %v3457
        %4001 = vmatprep.subr.mxu0 0.0
        %4002 = vmatpush1.msra.mxu0 %v3458
        %4003 = vmatprep.subr.mxu0 0.0
        %4004 = vmatpush1.msra.mxu0 %v3459
        %4005 = vmatprep.subr.mxu0 0.0
        %4006 = vmatpush1.msra.mxu0 %v3460
        %4007 = vmatprep.subr.mxu0 0.0
        %4008 = vmatpush1.msra.mxu0 %v3461
        %4009 = vmatprep.subr.mxu0 0.0
        %4010 = vmatpush1.msra.mxu0 %v3462
        %4011 = vmatprep.subr.mxu0 0.0
        %4012 = vmatpush1.msra.mxu0 %v3463
        %4013 = vmatprep.subr.mxu0 0.0
        %4014 = vmatpush1.msra.mxu0 %v3464
        %4015 = vmatprep.subr.mxu0 0.0
        %4016 = vmatpush1.msra.mxu0 %v3465
        %4017 = vmatprep.subr.mxu0 0.0
        %4018 = vmatpush1.msra.mxu0 %v3466
        %4019 = vmatprep.subr.mxu0 0.0
        %4020 = vmatpush1.msra.mxu0 %v3467
        %4021 = vmatprep.subr.mxu0 0.0
        %4022 = vmatpush1.msra.mxu0 %v3468
        %4023 = vmatprep.subr.mxu0 0.0
        %4024 = vmatpush1.msra.mxu0 %v3469
        %4025 = vmatprep.subr.mxu0 0.0
        %4026 = vmatpush1.msra.mxu0 %v3470
        %4027 = vmatprep.subr.mxu0 0.0
        %4028 = vmatpush1.msra.mxu0 %v3471
        %4029 = vmatprep.subr.mxu0 0.0
        %4030 = vmatpush1.msra.mxu0 %v3472
        %4031 = vmatprep.subr.mxu0 0.0
        %4032 = vmatpush1.msra.mxu0 %v3473
        %4033 = vmatprep.subr.mxu0 0.0
        %4034 = vmatpush1.msra.mxu0 %v3474
        %4035 = vmatprep.subr.mxu0 0.0
        %4036 = vmatpush1.msra.mxu0 %v3475
        %4037 = vmatprep.subr.mxu0 0.0
        %4038 = vmatpush1.msra.mxu0 %v3476
        %4039 = vmatprep.subr.mxu0 0.0
        %4040 = vmatpush1.msra.mxu0 %v3477
        %4041 = vmatprep.subr.mxu0 0.0
        %4042 = vmatpush1.msra.mxu0 %v3478
        %4043 = vmatprep.subr.mxu0 0.0
        %4044 = vmatpush1.msra.mxu0 %v3479
        %4045 = vmatprep.subr.mxu0 0.0
        %4046 = vmatpush1.msra.mxu0 %v3480
        %4047 = vmatprep.subr.mxu0 0.0
        %4048 = vmatpush1.msra.mxu0 %v3481
        %4049 = vmatprep.subr.mxu0 0.0
        %4050 = vmatpush1.msra.mxu0 %v3482
        %4051 = vmatprep.subr.mxu0 0.0
        %4052 = vmatpush1.msra.mxu0 %v3483
        %4053 = vmatprep.subr.mxu0 0.0
        %4054 = vmatpush1.msra.mxu0 %v3484
        %4055 = vmatprep.mubr.f32.mxu0 %v3105
        %4056 = vmatmul.mubr.f32.gmra.mrb[0].mxu0 %v3104
        %v4057 = vpop.f32.mrb[0].mxu0
        %v4058 = vadd.f32 %v3833, %v4057
        %v4059 = vpop.f32.mrb[0].mxu0
        %4060 = vmatprep.mubr.f32.mxu0 %v3114
        %4061 = vmatmul.mubr.f32.gmra.mrb[0].mxu0 %v3113
        %v4062 = vpop.f32.mrb[0].mxu0
        %v4063 = vadd.f32 %v3838, %v4062
        %v4064 = vpop.f32.mrb[0].mxu0
        %4065 = vmatprep.mubr.f32.mxu0 %v3123
        %4066 = vmatmul.mubr.f32.gmra.mrb[0].mxu0 %v3122
        %v4067 = vpop.f32.mrb[0].mxu0
        %v4068 = vadd.f32 %v3843, %v4067
        %v4069 = vpop.f32.mrb[0].mxu0
        %4070 = vmatprep.mubr.f32.mxu0 %v3132
        %4071 = vmatmul.mubr.f32.gmra.mrb[0].mxu0 %v3131
        %v4072 = vpop.f32.mrb[0].mxu0
        %v4073 = vadd.f32 %v3848, %v4072
        %v4074 = vpop.f32.mrb[0].mxu0
        %4075 = vmatprep.mubr.f32.mxu0 %v3141
        %4076 = vmatmul.mubr.f32.gmra.mrb[0].mxu0 %v3140
        %v4077 = vpop.f32.mrb[0].mxu0
        %v4078 = vadd.f32 %v3853, %v4077
        %v4079 = vpop.f32.mrb[0].mxu0
        %4080 = vmatprep.mubr.f32.mxu0 %v3150
        %4081 = vmatmul.mubr.f32.gmra.mrb[0].mxu0 %v3149
        %v4082 = vpop.f32.mrb[0].mxu0
        %v4083 = vadd.f32 %v3858, %v4082
        %v4084 = vpop.f32.mrb[0].mxu0
        %4085 = vmatprep.mubr.f32.mxu0 %v3159
        %4086 = vmatmul.mubr.f32.gmra.mrb[0].mxu0 %v3158
        %v4087 = vpop.f32.mrb[0].mxu0
        %v4088 = vadd.f32 %v3863, %v4087
        %v4089 = vpop.f32.mrb[0].mxu0
        %4090 = vmatprep.mubr.f32.mxu0 %v3168
        %4091 = vmatmul.mubr.f32.gmra.mrb[0].mxu0 %v3167
        %v4092 = vpop.f32.mrb[0].mxu0
        %v4093 = vadd.f32 %v3868, %v4092
        %v4094 = vpop.f32.mrb[0].mxu0
        %4095 = vmatprep.mubr.f32.mxu0 %v3177
        %4096 = vmatmul.mubr.f32.gmra.mrb[0].mxu0 %v3176
        %v4097 = vpop.f32.mrb[0].mxu0
        %v4098 = vadd.f32 %v3873, %v4097
        %v4099 = vpop.f32.mrb[0].mxu0
        %4100 = vmatprep.mubr.f32.mxu0 %v3186
        %4101 = vmatmul.mubr.f32.gmra.mrb[0].mxu0 %v3185
        %v4102 = vpop.f32.mrb[0].mxu0
        %v4103 = vadd.f32 %v3878, %v4102
        %v4104 = vpop.f32.mrb[0].mxu0
        %4105 = vmatprep.mubr.f32.mxu0 %v3195
        %4106 = vmatmul.mubr.f32.gmra.mrb[0].mxu0 %v3194
        %v4107 = vpop.f32.mrb[0].mxu0
        %v4108 = vadd.f32 %v3883, %v4107
        %v4109 = vpop.f32.mrb[0].mxu0
        %4110 = vmatprep.mubr.f32.mxu0 %v3204
        %4111 = vmatmul.mubr.f32.gmra.mrb[0].mxu0 %v3203
        %v4112 = vpop.f32.mrb[0].mxu0
        %v4113 = vadd.f32 %v3888, %v4112
        %v4114 = vpop.f32.mrb[0].mxu0
        %4115 = vmatprep.mubr.f32.mxu0 %v3213
        %4116 = vmatmul.mubr.f32.gmra.mrb[0].mxu0 %v3212
        %v4117 = vpop.f32.mrb[0].mxu0
        %v4118 = vadd.f32 %v3893, %v4117
        %v4119 = vpop.f32.mrb[0].mxu0
        %4120 = vmatprep.mubr.f32.mxu0 %v3222
        %4121 = vmatmul.mubr.f32.gmra.mrb[0].mxu0 %v3221
        %v4122 = vpop.f32.mrb[0].mxu0
        %v4123 = vadd.f32 %v3898, %v4122
        %v4124 = vpop.f32.mrb[0].mxu0
        %4125 = vmatprep.mubr.f32.mxu0 %v3231
        %4126 = vmatmul.mubr.f32.gmra.mrb[0].mxu0 %v3230
        %v4127 = vpop.f32.mrb[0].mxu0
        %v4128 = vadd.f32 %v3903, %v4127
        %v4129 = vpop.f32.mrb[0].mxu0
        %4130 = vmatprep.mubr.f32.mxu0 %v3240
        %4131 = vmatmul.mubr.f32.gmra.mrb[0].mxu0 %v3239
        %v4132 = vpop.f32.mrb[0].mxu0
        %v4133 = vadd.f32 %v3908, %v4132
        %v4134 = vpop.f32.mrb[0].mxu0
        %4135 = vmatprep.mubr.f32.mxu0 %v3249
        %4136 = vmatmul.mubr.f32.gmra.mrb[0].mxu0 %v3248
        %v4137 = vpop.f32.mrb[0].mxu0
        %v4138 = vadd.f32 %v3913, %v4137
        %v4139 = vpop.f32.mrb[0].mxu0
        %4140 = vmatprep.mubr.f32.mxu0 %v3258
        %4141 = vmatmul.mubr.f32.gmra.mrb[0].mxu0 %v3257
        %v4142 = vpop.f32.mrb[0].mxu0
        %v4143 = vadd.f32 %v3918, %v4142
        %v4144 = vpop.f32.mrb[0].mxu0
        %4145 = vmatprep.mubr.f32.mxu0 %v3267
        %4146 = vmatmul.mubr.f32.gmra.mrb[0].mxu0 %v3266
        %v4147 = vpop.f32.mrb[0].mxu0
        %v4148 = vadd.f32 %v3923, %v4147
        %v4149 = vpop.f32.mrb[0].mxu0
        %4150 = vmatprep.mubr.f32.mxu0 %v3276
        %4151 = vmatmul.mubr.f32.gmra.mrb[0].mxu0 %v3275
        %v4152 = vpop.f32.mrb[0].mxu0
        %v4153 = vadd.f32 %v3928, %v4152
        %v4154 = vpop.f32.mrb[0].mxu0
        %4155 = vmatprep.mubr.f32.mxu0 %v3285
        %4156 = vmatmul.mubr.f32.gmra.mrb[0].mxu0 %v3284
        %v4157 = vpop.f32.mrb[0].mxu0
        %v4158 = vadd.f32 %v3933, %v4157
        %v4159 = vpop.f32.mrb[0].mxu0
        %4160 = vmatprep.mubr.f32.mxu0 %v3294
        %4161 = vmatmul.mubr.f32.gmra.mrb[0].mxu0 %v3293
        %v4162 = vpop.f32.mrb[0].mxu0
        %v4163 = vadd.f32 %v3938, %v4162
        %v4164 = vpop.f32.mrb[0].mxu0
        %4165 = vmatprep.mubr.f32.mxu0 %v3303
        %4166 = vmatmul.mubr.f32.gmra.mrb[0].mxu0 %v3302
        %v4167 = vpop.f32.mrb[0].mxu0
        %v4168 = vadd.f32 %v3943, %v4167
        %v4169 = vpop.f32.mrb[0].mxu0
        %4170 = vmatprep.mubr.f32.mxu0 %v3312
        %4171 = vmatmul.mubr.f32.gmra.mrb[0].mxu0 %v3311
        %v4172 = vpop.f32.mrb[0].mxu0
        %v4173 = vadd.f32 %v3948, %v4172
        %v4174 = vpop.f32.mrb[0].mxu0
        %4175 = vmatprep.mubr.f32.mxu0 %v3321
        %4176 = vmatmul.mubr.f32.gmra.mrb[0].mxu0 %v3320
        %v4177 = vpop.f32.mrb[0].mxu0
        %v4178 = vadd.f32 %v3953, %v4177
        %v4179 = vpop.f32.mrb[0].mxu0
        %4180 = vmatprep.mubr.f32.mxu0 %v3330
        %4181 = vmatmul.mubr.f32.gmra.mrb[0].mxu0 %v3329
        %v4182 = vpop.f32.mrb[0].mxu0
        %v4183 = vadd.f32 %v3958, %v4182
        %v4184 = vpop.f32.mrb[0].mxu0
        %4185 = vmatprep.mubr.f32.mxu0 %v3339
        %4186 = vmatmul.mubr.f32.gmra.mrb[0].mxu0 %v3338
        %v4187 = vpop.f32.mrb[0].mxu0
        %v4188 = vadd.f32 %v3963, %v4187
        %v4189 = vpop.f32.mrb[0].mxu0
        %4190 = vmatprep.mubr.f32.mxu0 %v3348
        %4191 = vmatmul.mubr.f32.gmra.mrb[0].mxu0 %v3347
        %v4192 = vpop.f32.mrb[0].mxu0
        %v4193 = vadd.f32 %v3968, %v4192
        %v4194 = vpop.f32.mrb[0].mxu0
        %4195 = vmatprep.mubr.f32.mxu0 %v3357
        %4196 = vmatmul.mubr.f32.gmra.mrb[0].mxu0 %v3356
        %v4197 = vpop.f32.mrb[0].mxu0
        %v4198 = vadd.f32 %v3973, %v4197
        %v4199 = vpop.f32.mrb[0].mxu0
        %4200 = vmatprep.mubr.f32.mxu0 %v3366
        %4201 = vmatmul.mubr.f32.gmra.mrb[0].mxu0 %v3365
        %v4202 = vpop.f32.mrb[0].mxu0
        %v4203 = vadd.f32 %v3978, %v4202
        %v4204 = vpop.f32.mrb[0].mxu0
        %4205 = vmatprep.mubr.f32.mxu0 %v3375
        %4206 = vmatmul.mubr.f32.gmra.mrb[0].mxu0 %v3374
        %v4207 = vpop.f32.mrb[0].mxu0
        %v4208 = vadd.f32 %v3983, %v4207
        %v4209 = vpop.f32.mrb[0].mxu0
        %4210 = vmatprep.mubr.f32.mxu0 %v3384
        %4211 = vmatmul.mubr.f32.gmra.mrb[0].mxu0 %v3383
        %v4212 = vpop.f32.mrb[0].mxu0
        %v4213 = vadd.f32 %v3988, %v4212
        %v4214 = vpop.f32.mrb[0].mxu0
        %4215 = vdwg.mxu0
        %4216 = vmatprep.subr.mxu0 0.0
        %4217 = vmatpush1.msra.mxu0 %v3485
        %4218 = vmatprep.subr.mxu0 0.0
        %4219 = vmatpush1.msra.mxu0 %v3486
        %4220 = vmatprep.subr.mxu0 0.0
        %4221 = vmatpush1.msra.mxu0 %v3487
        %4222 = vmatprep.subr.mxu0 0.0
        %4223 = vmatpush1.msra.mxu0 %v3488
        %4224 = vmatprep.subr.mxu0 0.0
        %4225 = vmatpush1.msra.mxu0 %v3489
        %4226 = vmatprep.subr.mxu0 0.0
        %4227 = vmatpush1.msra.mxu0 %v3490
        %4228 = vmatprep.subr.mxu0 0.0
        %4229 = vmatpush1.msra.mxu0 %v3491
        %4230 = vmatprep.subr.mxu0 0.0
        %4231 = vmatpush1.msra.mxu0 %v3492
        %4232 = vmatprep.subr.mxu0 0.0
        %4233 = vmatpush1.msra.mxu0 %v3493
        %4234 = vmatprep.subr.mxu0 0.0
        %4235 = vmatpush1.msra.mxu0 %v3494
        %4236 = vmatprep.subr.mxu0 0.0
        %4237 = vmatpush1.msra.mxu0 %v3495
        %4238 = vmatprep.subr.mxu0 0.0
        %4239 = vmatpush1.msra.mxu0 %v3496
        %4240 = vmatprep.subr.mxu0 0.0
        %4241 = vmatpush1.msra.mxu0 %v3497
        %4242 = vmatprep.subr.mxu0 0.0
        %4243 = vmatpush1.msra.mxu0 %v3498
        %4244 = vmatprep.subr.mxu0 0.0
        %4245 = vmatpush1.msra.mxu0 %v3499
        %4246 = vmatprep.subr.mxu0 0.0
        %4247 = vmatpush1.msra.mxu0 %v3500
        %4248 = vmatprep.subr.mxu0 0.0
        %4249 = vmatpush1.msra.mxu0 %v3501
        %4250 = vmatprep.subr.mxu0 0.0
        %4251 = vmatpush1.msra.mxu0 %v3502
        %4252 = vmatprep.subr.mxu0 0.0
        %4253 = vmatpush1.msra.mxu0 %v3503
        %4254 = vmatprep.subr.mxu0 0.0
        %4255 = vmatpush1.msra.mxu0 %v3504
        %4256 = vmatprep.subr.mxu0 0.0
        %4257 = vmatpush1.msra.mxu0 %v3505
        %4258 = vmatprep.subr.mxu0 0.0
        %4259 = vmatpush1.msra.mxu0 %v3506
        %4260 = vmatprep.subr.mxu0 0.0
        %4261 = vmatpush1.msra.mxu0 %v3507
        %4262 = vmatprep.subr.mxu0 0.0
        %4263 = vmatpush1.msra.mxu0 %v3508
        %4264 = vmatprep.subr.mxu0 0.0
        %4265 = vmatpush1.msra.mxu0 %v3509
        %4266 = vmatprep.subr.mxu0 0.0
        %4267 = vmatpush1.msra.mxu0 %v3510
        %4268 = vmatprep.subr.mxu0 0.0
        %4269 = vmatpush1.msra.mxu0 %v3511
        %4270 = vmatprep.subr.mxu0 0.0
        %4271 = vmatpush1.msra.mxu0 %v3512
        %4272 = vmatprep.subr.mxu0 0.0
        %4273 = vmatpush1.msra.mxu0 %v3513
        %4274 = vmatprep.subr.mxu0 0.0
        %4275 = vmatpush1.msra.mxu0 %v3514
        %4276 = vmatprep.subr.mxu0 0.0
        %4277 = vmatpush1.msra.mxu0 %v3515
        %4278 = vmatprep.subr.mxu0 0.0
        %4279 = vmatpush1.msra.mxu0 %v3516
        %4280 = vmatprep.mubr.f32.mxu0 %v3107
        %4281 = vmatmul.mubr.f32.gmra.mrb[0].mxu0 %v3106
        %v4282 = vpop.f32.mrb[0].mxu0
        %v4283 = vadd.f32 %v4058, %v4282
        %v4284 = vpop.f32.mrb[0].mxu0
        %4285 = vmatprep.mubr.f32.mxu0 %v3116
        %4286 = vmatmul.mubr.f32.gmra.mrb[0].mxu0 %v3115
        %v4287 = vpop.f32.mrb[0].mxu0
        %v4288 = vadd.f32 %v4063, %v4287
        %v4289 = vpop.f32.mrb[0].mxu0
        %4290 = vmatprep.mubr.f32.mxu0 %v3125
        %4291 = vmatmul.mubr.f32.gmra.mrb[0].mxu0 %v3124
        %v4292 = vpop.f32.mrb[0].mxu0
        %v4293 = vadd.f32 %v4068, %v4292
        %v4294 = vpop.f32.mrb[0].mxu0
        %4295 = vmatprep.mubr.f32.mxu0 %v3134
        %4296 = vmatmul.mubr.f32.gmra.mrb[0].mxu0 %v3133
        %v4297 = vpop.f32.mrb[0].mxu0
        %v4298 = vadd.f32 %v4073, %v4297
        %v4299 = vpop.f32.mrb[0].mxu0
        %4300 = vmatprep.mubr.f32.mxu0 %v3143
        %4301 = vmatmul.mubr.f32.gmra.mrb[0].mxu0 %v3142
        %v4302 = vpop.f32.mrb[0].mxu0
        %v4303 = vadd.f32 %v4078, %v4302
        %v4304 = vpop.f32.mrb[0].mxu0
        %4305 = vmatprep.mubr.f32.mxu0 %v3152
        %4306 = vmatmul.mubr.f32.gmra.mrb[0].mxu0 %v3151
        %v4307 = vpop.f32.mrb[0].mxu0
        %v4308 = vadd.f32 %v4083, %v4307
        %v4309 = vpop.f32.mrb[0].mxu0
        %4310 = vmatprep.mubr.f32.mxu0 %v3161
        %4311 = vmatmul.mubr.f32.gmra.mrb[0].mxu0 %v3160
        %v4312 = vpop.f32.mrb[0].mxu0
        %v4313 = vadd.f32 %v4088, %v4312
        %v4314 = vpop.f32.mrb[0].mxu0
        %4315 = vmatprep.mubr.f32.mxu0 %v3170
        %4316 = vmatmul.mubr.f32.gmra.mrb[0].mxu0 %v3169
        %v4317 = vpop.f32.mrb[0].mxu0
        %v4318 = vadd.f32 %v4093, %v4317
        %v4319 = vpop.f32.mrb[0].mxu0
        %4320 = vmatprep.mubr.f32.mxu0 %v3179
        %4321 = vmatmul.mubr.f32.gmra.mrb[0].mxu0 %v3178
        %v4322 = vpop.f32.mrb[0].mxu0
        %v4323 = vadd.f32 %v4098, %v4322
        %v4324 = vpop.f32.mrb[0].mxu0
        %4325 = vmatprep.mubr.f32.mxu0 %v3188
        %4326 = vmatmul.mubr.f32.gmra.mrb[0].mxu0 %v3187
        %v4327 = vpop.f32.mrb[0].mxu0
        %v4328 = vadd.f32 %v4103, %v4327
        %v4329 = vpop.f32.mrb[0].mxu0
        %4330 = vmatprep.mubr.f32.mxu0 %v3197
        %4331 = vmatmul.mubr.f32.gmra.mrb[0].mxu0 %v3196
        %v4332 = vpop.f32.mrb[0].mxu0
        %v4333 = vadd.f32 %v4108, %v4332
        %v4334 = vpop.f32.mrb[0].mxu0
        %4335 = vmatprep.mubr.f32.mxu0 %v3206
        %4336 = vmatmul.mubr.f32.gmra.mrb[0].mxu0 %v3205
        %v4337 = vpop.f32.mrb[0].mxu0
        %v4338 = vadd.f32 %v4113, %v4337
        %v4339 = vpop.f32.mrb[0].mxu0
        %4340 = vmatprep.mubr.f32.mxu0 %v3215
        %4341 = vmatmul.mubr.f32.gmra.mrb[0].mxu0 %v3214
        %v4342 = vpop.f32.mrb[0].mxu0
        %v4343 = vadd.f32 %v4118, %v4342
        %v4344 = vpop.f32.mrb[0].mxu0
        %4345 = vmatprep.mubr.f32.mxu0 %v3224
        %4346 = vmatmul.mubr.f32.gmra.mrb[0].mxu0 %v3223
        %v4347 = vpop.f32.mrb[0].mxu0
        %v4348 = vadd.f32 %v4123, %v4347
        %v4349 = vpop.f32.mrb[0].mxu0
        %4350 = vmatprep.mubr.f32.mxu0 %v3233
        %4351 = vmatmul.mubr.f32.gmra.mrb[0].mxu0 %v3232
        %v4352 = vpop.f32.mrb[0].mxu0
        %v4353 = vadd.f32 %v4128, %v4352
        %v4354 = vpop.f32.mrb[0].mxu0
        %4355 = vmatprep.mubr.f32.mxu0 %v3242
        %4356 = vmatmul.mubr.f32.gmra.mrb[0].mxu0 %v3241
        %v4357 = vpop.f32.mrb[0].mxu0
        %v4358 = vadd.f32 %v4133, %v4357
        %v4359 = vpop.f32.mrb[0].mxu0
        %4360 = vmatprep.mubr.f32.mxu0 %v3251
        %4361 = vmatmul.mubr.f32.gmra.mrb[0].mxu0 %v3250
        %v4362 = vpop.f32.mrb[0].mxu0
        %v4363 = vadd.f32 %v4138, %v4362
        %v4364 = vpop.f32.mrb[0].mxu0
        %4365 = vmatprep.mubr.f32.mxu0 %v3260
        %4366 = vmatmul.mubr.f32.gmra.mrb[0].mxu0 %v3259
        %v4367 = vpop.f32.mrb[0].mxu0
        %v4368 = vadd.f32 %v4143, %v4367
        %v4369 = vpop.f32.mrb[0].mxu0
        %4370 = vmatprep.mubr.f32.mxu0 %v3269
        %4371 = vmatmul.mubr.f32.gmra.mrb[0].mxu0 %v3268
        %v4372 = vpop.f32.mrb[0].mxu0
        %v4373 = vadd.f32 %v4148, %v4372
        %v4374 = vpop.f32.mrb[0].mxu0
        %4375 = vmatprep.mubr.f32.mxu0 %v3278
        %4376 = vmatmul.mubr.f32.gmra.mrb[0].mxu0 %v3277
        %v4377 = vpop.f32.mrb[0].mxu0
        %v4378 = vadd.f32 %v4153, %v4377
        %v4379 = vpop.f32.mrb[0].mxu0
        %4380 = vmatprep.mubr.f32.mxu0 %v3287
        %4381 = vmatmul.mubr.f32.gmra.mrb[0].mxu0 %v3286
        %v4382 = vpop.f32.mrb[0].mxu0
        %v4383 = vadd.f32 %v4158, %v4382
        %v4384 = vpop.f32.mrb[0].mxu0
        %4385 = vmatprep.mubr.f32.mxu0 %v3296
        %4386 = vmatmul.mubr.f32.gmra.mrb[0].mxu0 %v3295
        %v4387 = vpop.f32.mrb[0].mxu0
        %v4388 = vadd.f32 %v4163, %v4387
        %v4389 = vpop.f32.mrb[0].mxu0
        %4390 = vmatprep.mubr.f32.mxu0 %v3305
        %4391 = vmatmul.mubr.f32.gmra.mrb[0].mxu0 %v3304
        %v4392 = vpop.f32.mrb[0].mxu0
        %v4393 = vadd.f32 %v4168, %v4392
        %v4394 = vpop.f32.mrb[0].mxu0
        %4395 = vmatprep.mubr.f32.mxu0 %v3314
        %4396 = vmatmul.mubr.f32.gmra.mrb[0].mxu0 %v3313
        %v4397 = vpop.f32.mrb[0].mxu0
        %v4398 = vadd.f32 %v4173, %v4397
        %v4399 = vpop.f32.mrb[0].mxu0
        %4400 = vmatprep.mubr.f32.mxu0 %v3323
        %4401 = vmatmul.mubr.f32.gmra.mrb[0].mxu0 %v3322
        %v4402 = vpop.f32.mrb[0].mxu0
        %v4403 = vadd.f32 %v4178, %v4402
        %v4404 = vpop.f32.mrb[0].mxu0
        %4405 = vmatprep.mubr.f32.mxu0 %v3332
        %4406 = vmatmul.mubr.f32.gmra.mrb[0].mxu0 %v3331
        %v4407 = vpop.f32.mrb[0].mxu0
        %v4408 = vadd.f32 %v4183, %v4407
        %v4409 = vpop.f32.mrb[0].mxu0
        %4410 = vmatprep.mubr.f32.mxu0 %v3341
        %4411 = vmatmul.mubr.f32.gmra.mrb[0].mxu0 %v3340
        %v4412 = vpop.f32.mrb[0].mxu0
        %v4413 = vadd.f32 %v4188, %v4412
        %v4414 = vpop.f32.mrb[0].mxu0
        %4415 = vmatprep.mubr.f32.mxu0 %v3350
        %4416 = vmatmul.mubr.f32.gmra.mrb[0].mxu0 %v3349
        %v4417 = vpop.f32.mrb[0].mxu0
        %v4418 = vadd.f32 %v4193, %v4417
        %v4419 = vpop.f32.mrb[0].mxu0
        %4420 = vmatprep.mubr.f32.mxu0 %v3359
        %4421 = vmatmul.mubr.f32.gmra.mrb[0].mxu0 %v3358
        %v4422 = vpop.f32.mrb[0].mxu0
        %v4423 = vadd.f32 %v4198, %v4422
        %v4424 = vpop.f32.mrb[0].mxu0
        %4425 = vmatprep.mubr.f32.mxu0 %v3368
        %4426 = vmatmul.mubr.f32.gmra.mrb[0].mxu0 %v3367
        %v4427 = vpop.f32.mrb[0].mxu0
        %v4428 = vadd.f32 %v4203, %v4427
        %v4429 = vpop.f32.mrb[0].mxu0
        %4430 = vmatprep.mubr.f32.mxu0 %v3377
        %4431 = vmatmul.mubr.f32.gmra.mrb[0].mxu0 %v3376
        %v4432 = vpop.f32.mrb[0].mxu0
        %v4433 = vadd.f32 %v4208, %v4432
        %v4434 = vpop.f32.mrb[0].mxu0
        %4435 = vmatprep.mubr.f32.mxu0 %v3386
        %4436 = vmatmul.mubr.f32.gmra.mrb[0].mxu0 %v3385
        %v4437 = vpop.f32.mrb[0].mxu0
        %v4438 = vadd.f32 %v4213, %v4437
        %v4439 = vpop.f32.mrb[0].mxu0
        %4440 = vdwg.mxu0
        %4441 = vmatprep.subr.mxu0 0.0
        %4442 = vmatpush1.msra.mxu0 %v3517
        %4443 = vmatprep.subr.mxu0 0.0
        %4444 = vmatpush1.msra.mxu0 %v3518
        %4445 = vmatprep.subr.mxu0 0.0
        %4446 = vmatpush1.msra.mxu0 %v3519
        %4447 = vmatprep.subr.mxu0 0.0
        %4448 = vmatpush1.msra.mxu0 %v3520
        %4449 = vmatprep.subr.mxu0 0.0
        %4450 = vmatpush1.msra.mxu0 %v3521
        %4451 = vmatprep.subr.mxu0 0.0
        %4452 = vmatpush1.msra.mxu0 %v3522
        %4453 = vmatprep.subr.mxu0 0.0
        %4454 = vmatpush1.msra.mxu0 %v3523
        %4455 = vmatprep.subr.mxu0 0.0
        %4456 = vmatpush1.msra.mxu0 %v3524
        %4457 = vmatprep.subr.mxu0 0.0
        %4458 = vmatpush1.msra.mxu0 %v3525
        %4459 = vmatprep.subr.mxu0 0.0
        %4460 = vmatpush1.msra.mxu0 %v3526
        %4461 = vmatprep.subr.mxu0 0.0
        %4462 = vmatpush1.msra.mxu0 %v3527
        %4463 = vmatprep.subr.mxu0 0.0
        %4464 = vmatpush1.msra.mxu0 %v3528
        %4465 = vmatprep.subr.mxu0 0.0
        %4466 = vmatpush1.msra.mxu0 %v3529
        %4467 = vmatprep.subr.mxu0 0.0
        %4468 = vmatpush1.msra.mxu0 %v3530
        %4469 = vmatprep.subr.mxu0 0.0
        %4470 = vmatpush1.msra.mxu0 %v3531
        %4471 = vmatprep.subr.mxu0 0.0
        %4472 = vmatpush1.msra.mxu0 %v3532
        %4473 = vmatprep.subr.mxu0 0.0
        %4474 = vmatpush1.msra.mxu0 0.0
        %4475 = vmatprep.subr.mxu0 0.0
        %4476 = vmatpush1.msra.mxu0 0.0
        %4477 = vmatprep.subr.mxu0 0.0
        %4478 = vmatpush1.msra.mxu0 0.0
        %4479 = vmatprep.subr.mxu0 0.0
        %4480 = vmatpush1.msra.mxu0 0.0
        %4481 = vmatprep.subr.mxu0 0.0
        %4482 = vmatpush1.msra.mxu0 0.0
        %4483 = vmatprep.subr.mxu0 0.0
        %4484 = vmatpush1.msra.mxu0 0.0
        %4485 = vmatprep.subr.mxu0 0.0
        %4486 = vmatpush1.msra.mxu0 0.0
        %4487 = vmatprep.subr.mxu0 0.0
        %4488 = vmatpush1.msra.mxu0 0.0
        %4489 = vmatprep.subr.mxu0 0.0
        %4490 = vmatpush1.msra.mxu0 0.0
        %4491 = vmatprep.subr.mxu0 0.0
        %4492 = vmatpush1.msra.mxu0 0.0
        %4493 = vmatprep.subr.mxu0 0.0
        %4494 = vmatpush1.msra.mxu0 0.0
        %4495 = vmatprep.subr.mxu0 0.0
        %4496 = vmatpush1.msra.mxu0 0.0
        %4497 = vmatprep.subr.mxu0 0.0
        %4498 = vmatpush1.msra.mxu0 0.0
        %4499 = vmatprep.subr.mxu0 0.0
        %4500 = vmatpush1.msra.mxu0 0.0
        %4501 = vmatprep.subr.mxu0 0.0
        %4502 = vmatpush1.msra.mxu0 0.0
        %4503 = vmatprep.subr.mxu0 0.0
        %4504 = vmatpush1.msra.mxu0 0.0
        %4505 = vmatprep.mubr.f32.mxu0 0.0
        %4506 = vmatmul.mubr.f32.gmra.mrb[0].mxu0 %v3108
        %v4507 = vpop.f32.mrb[0].mxu0
        %v4508 = vadd.f32 %v4283, %v4507
        %v4509 = vpop.f32.mrb[0].mxu0
        %4510 = vmatprep.mubr.f32.mxu0 0.0
        %4511 = vmatmul.mubr.f32.gmra.mrb[0].mxu0 %v3117
        %v4512 = vpop.f32.mrb[0].mxu0
        %v4513 = vadd.f32 %v4288, %v4512
        %v4514 = vpop.f32.mrb[0].mxu0
        %4515 = vmatprep.mubr.f32.mxu0 0.0
        %4516 = vmatmul.mubr.f32.gmra.mrb[0].mxu0 %v3126
        %v4517 = vpop.f32.mrb[0].mxu0
        %v4518 = vadd.f32 %v4293, %v4517
        %v4519 = vpop.f32.mrb[0].mxu0
        %4520 = vmatprep.mubr.f32.mxu0 0.0
        %4521 = vmatmul.mubr.f32.gmra.mrb[0].mxu0 %v3135
        %v4522 = vpop.f32.mrb[0].mxu0
        %v4523 = vadd.f32 %v4298, %v4522
        %v4524 = vpop.f32.mrb[0].mxu0
        %4525 = vmatprep.mubr.f32.mxu0 0.0
        %4526 = vmatmul.mubr.f32.gmra.mrb[0].mxu0 %v3144
        %v4527 = vpop.f32.mrb[0].mxu0
        %v4528 = vadd.f32 %v4303, %v4527
        %v4529 = vpop.f32.mrb[0].mxu0
        %4530 = vmatprep.mubr.f32.mxu0 0.0
        %4531 = vmatmul.mubr.f32.gmra.mrb[0].mxu0 %v3153
        %v4532 = vpop.f32.mrb[0].mxu0
        %v4533 = vadd.f32 %v4308, %v4532
        %v4534 = vpop.f32.mrb[0].mxu0
        %4535 = vmatprep.mubr.f32.mxu0 0.0
        %4536 = vmatmul.mubr.f32.gmra.mrb[0].mxu0 %v3162
        %v4537 = vpop.f32.mrb[0].mxu0
        %v4538 = vadd.f32 %v4313, %v4537
        %v4539 = vpop.f32.mrb[0].mxu0
        %4540 = vmatprep.mubr.f32.mxu0 0.0
        %4541 = vmatmul.mubr.f32.gmra.mrb[0].mxu0 %v3171
        %v4542 = vpop.f32.mrb[0].mxu0
        %v4543 = vadd.f32 %v4318, %v4542
        %v4544 = vpop.f32.mrb[0].mxu0
        %4545 = vmatprep.mubr.f32.mxu0 0.0
        %4546 = vmatmul.mubr.f32.gmra.mrb[0].mxu0 %v3180
        %v4547 = vpop.f32.mrb[0].mxu0
        %v4548 = vadd.f32 %v4323, %v4547
        %v4549 = vpop.f32.mrb[0].mxu0
        %4550 = vmatprep.mubr.f32.mxu0 0.0
        %4551 = vmatmul.mubr.f32.gmra.mrb[0].mxu0 %v3189
        %v4552 = vpop.f32.mrb[0].mxu0
        %v4553 = vadd.f32 %v4328, %v4552
        %v4554 = vpop.f32.mrb[0].mxu0
        %4555 = vmatprep.mubr.f32.mxu0 0.0
        %4556 = vmatmul.mubr.f32.gmra.mrb[0].mxu0 %v3198
        %v4557 = vpop.f32.mrb[0].mxu0
        %v4558 = vadd.f32 %v4333, %v4557
        %v4559 = vpop.f32.mrb[0].mxu0
        %4560 = vmatprep.mubr.f32.mxu0 0.0
        %4561 = vmatmul.mubr.f32.gmra.mrb[0].mxu0 %v3207
        %v4562 = vpop.f32.mrb[0].mxu0
        %v4563 = vadd.f32 %v4338, %v4562
        %v4564 = vpop.f32.mrb[0].mxu0
        %4565 = vmatprep.mubr.f32.mxu0 0.0
        %4566 = vmatmul.mubr.f32.gmra.mrb[0].mxu0 %v3216
        %v4567 = vpop.f32.mrb[0].mxu0
        %v4568 = vadd.f32 %v4343, %v4567
        %v4569 = vpop.f32.mrb[0].mxu0
        %4570 = vmatprep.mubr.f32.mxu0 0.0
        %4571 = vmatmul.mubr.f32.gmra.mrb[0].mxu0 %v3225
        %v4572 = vpop.f32.mrb[0].mxu0
        %v4573 = vadd.f32 %v4348, %v4572
        %v4574 = vpop.f32.mrb[0].mxu0
        %4575 = vmatprep.mubr.f32.mxu0 0.0
        %4576 = vmatmul.mubr.f32.gmra.mrb[0].mxu0 %v3234
        %v4577 = vpop.f32.mrb[0].mxu0
        %v4578 = vadd.f32 %v4353, %v4577
        %v4579 = vpop.f32.mrb[0].mxu0
        %4580 = vmatprep.mubr.f32.mxu0 0.0
        %4581 = vmatmul.mubr.f32.gmra.mrb[0].mxu0 %v3243
        %v4582 = vpop.f32.mrb[0].mxu0
        %v4583 = vadd.f32 %v4358, %v4582
        %v4584 = vpop.f32.mrb[0].mxu0
        %4585 = vmatprep.mubr.f32.mxu0 0.0
        %4586 = vmatmul.mubr.f32.gmra.mrb[0].mxu0 %v3252
        %v4587 = vpop.f32.mrb[0].mxu0
        %v4588 = vadd.f32 %v4363, %v4587
        %v4589 = vpop.f32.mrb[0].mxu0
        %4590 = vmatprep.mubr.f32.mxu0 0.0
        %4591 = vmatmul.mubr.f32.gmra.mrb[0].mxu0 %v3261
        %v4592 = vpop.f32.mrb[0].mxu0
        %v4593 = vadd.f32 %v4368, %v4592
        %v4594 = vpop.f32.mrb[0].mxu0
        %4595 = vmatprep.mubr.f32.mxu0 0.0
        %4596 = vmatmul.mubr.f32.gmra.mrb[0].mxu0 %v3270
        %v4597 = vpop.f32.mrb[0].mxu0
        %v4598 = vadd.f32 %v4373, %v4597
        %v4599 = vpop.f32.mrb[0].mxu0
        %4600 = vmatprep.mubr.f32.mxu0 0.0
        %4601 = vmatmul.mubr.f32.gmra.mrb[0].mxu0 %v3279
        %v4602 = vpop.f32.mrb[0].mxu0
        %v4603 = vadd.f32 %v4378, %v4602
        %v4604 = vpop.f32.mrb[0].mxu0
        %4605 = vmatprep.mubr.f32.mxu0 0.0
        %4606 = vmatmul.mubr.f32.gmra.mrb[0].mxu0 %v3288
        %v4607 = vpop.f32.mrb[0].mxu0
        %v4608 = vadd.f32 %v4383, %v4607
        %v4609 = vpop.f32.mrb[0].mxu0
        %4610 = vmatprep.mubr.f32.mxu0 0.0
        %4611 = vmatmul.mubr.f32.gmra.mrb[0].mxu0 %v3297
        %v4612 = vpop.f32.mrb[0].mxu0
        %v4613 = vadd.f32 %v4388, %v4612
        %v4614 = vpop.f32.mrb[0].mxu0
        %4615 = vmatprep.mubr.f32.mxu0 0.0
        %4616 = vmatmul.mubr.f32.gmra.mrb[0].mxu0 %v3306
        %v4617 = vpop.f32.mrb[0].mxu0
        %v4618 = vadd.f32 %v4393, %v4617
        %v4619 = vpop.f32.mrb[0].mxu0
        %4620 = vmatprep.mubr.f32.mxu0 0.0
        %4621 = vmatmul.mubr.f32.gmra.mrb[0].mxu0 %v3315
        %v4622 = vpop.f32.mrb[0].mxu0
        %v4623 = vadd.f32 %v4398, %v4622
        %v4624 = vpop.f32.mrb[0].mxu0
        %4625 = vmatprep.mubr.f32.mxu0 0.0
        %4626 = vmatmul.mubr.f32.gmra.mrb[0].mxu0 %v3324
        %v4627 = vpop.f32.mrb[0].mxu0
        %v4628 = vadd.f32 %v4403, %v4627
        %v4629 = vpop.f32.mrb[0].mxu0
        %4630 = vmatprep.mubr.f32.mxu0 0.0
        %4631 = vmatmul.mubr.f32.gmra.mrb[0].mxu0 %v3333
        %v4632 = vpop.f32.mrb[0].mxu0
        %v4633 = vadd.f32 %v4408, %v4632
        %v4634 = vpop.f32.mrb[0].mxu0
        %4635 = vmatprep.mubr.f32.mxu0 0.0
        %4636 = vmatmul.mubr.f32.gmra.mrb[0].mxu0 %v3342
        %v4637 = vpop.f32.mrb[0].mxu0
        %v4638 = vadd.f32 %v4413, %v4637
        %v4639 = vpop.f32.mrb[0].mxu0
        %4640 = vmatprep.mubr.f32.mxu0 0.0
        %4641 = vmatmul.mubr.f32.gmra.mrb[0].mxu0 %v3351
        %v4642 = vpop.f32.mrb[0].mxu0
        %v4643 = vadd.f32 %v4418, %v4642
        %v4644 = vpop.f32.mrb[0].mxu0
        %4645 = vmatprep.mubr.f32.mxu0 0.0
        %4646 = vmatmul.mubr.f32.gmra.mrb[0].mxu0 %v3360
        %v4647 = vpop.f32.mrb[0].mxu0
        %v4648 = vadd.f32 %v4423, %v4647
        %v4649 = vpop.f32.mrb[0].mxu0
        %4650 = vmatprep.mubr.f32.mxu0 0.0
        %4651 = vmatmul.mubr.f32.gmra.mrb[0].mxu0 %v3369
        %v4652 = vpop.f32.mrb[0].mxu0
        %v4653 = vadd.f32 %v4428, %v4652
        %v4654 = vpop.f32.mrb[0].mxu0
        %4655 = vmatprep.mubr.f32.mxu0 0.0
        %4656 = vmatmul.mubr.f32.gmra.mrb[0].mxu0 %v3378
        %v4657 = vpop.f32.mrb[0].mxu0
        %v4658 = vadd.f32 %v4433, %v4657
        %v4659 = vpop.f32.mrb[0].mxu0
        %4660 = vmatprep.mubr.f32.mxu0 0.0
        %4661 = vmatmul.mubr.f32.gmra.mrb[0].mxu0 %v3387
        %v4662 = vpop.f32.mrb[0].mxu0
        %v4663 = vadd.f32 %v4438, %v4662
        %v4664 = vpop.f32.mrb[0].mxu0
        %4665 = vdwg.mxu0
        %v4666 = vmax.f32 %v4508, 0.0
        %v4667 = vmax.f32 %v4513, 0.0
        %v4668 = vmax.f32 %v4518, 0.0
        %v4669 = vmax.f32 %v4523, 0.0
        %v4670 = vmax.f32 %v4528, 0.0
        %v4671 = vmax.f32 %v4533, 0.0
        %v4672 = vmax.f32 %v4538, 0.0
        %v4673 = vmax.f32 %v4543, 0.0
        %v4674 = vmax.f32 %v4548, 0.0
        %v4675 = vmax.f32 %v4553, 0.0
        %v4676 = vmax.f32 %v4558, 0.0
        %v4677 = vmax.f32 %v4563, 0.0
        %v4678 = vmax.f32 %v4568, 0.0
        %v4679 = vmax.f32 %v4573, 0.0
        %v4680 = vmax.f32 %v4578, 0.0
        %v4681 = vmax.f32 %v4583, 0.0
        %v4682 = vmax.f32 %v4588, 0.0
        %v4683 = vmax.f32 %v4593, 0.0
        %v4684 = vmax.f32 %v4598, 0.0
        %v4685 = vmax.f32 %v4603, 0.0
        %v4686 = vmax.f32 %v4608, 0.0
        %v4687 = vmax.f32 %v4613, 0.0
        %v4688 = vmax.f32 %v4618, 0.0
        %v4689 = vmax.f32 %v4623, 0.0
        %v4690 = vmax.f32 %v4628, 0.0
        %v4691 = vmax.f32 %v4633, 0.0
        %v4692 = vmax.f32 %v4638, 0.0
        %v4693 = vmax.f32 %v4643, 0.0
        %v4694 = vmax.f32 %v4648, 0.0
        %v4695 = vmax.f32 %v4653, 0.0
        %v4696 = vmax.f32 %v4658, 0.0
        %v4697 = vmax.f32 %v4663, 0.0
        %v4730 = vcombine.high %v4666, %v4666
        %v4732 = vunpack.c.l.s4 1983009808
        %v4733 = vunpack.c.0.s8 %v4732
        %v4734 = vlaneseq
        %v4735 = vshrl.u32 %v4734, 7
        %v4736 = vsub.s32 %v4733, %v4735
        %v4737 = vrot.slane %v4666, %v4736
        %v4739 = vunpack.c.l.s4 1983009808
        %v4740 = vunpack.c.0.s8 %v4739
        %v4741 = vlaneseq
        %v4742 = vshrl.u32 %v4741, 7
        %v4743 = vsub.s32 %v4740, %v4742
        %v4744 = vrot.slane %v4730, %v4743
        %v4745 = vcombine.high %v4737, %v4737
        %v4746 = vcombine.high %v4744, %v4744
        %v4747 = vcombine.high %v4667, %v4667
        %v4749 = vunpack.c.l.s4 1983009808
        %v4750 = vunpack.c.0.s8 %v4749
        %v4751 = vlaneseq
        %v4752 = vshrl.u32 %v4751, 7
        %v4753 = vsub.s32 %v4750, %v4752
        %v4754 = vrot.slane %v4667, %v4753
        %v4756 = vunpack.c.l.s4 1983009808
        %v4757 = vunpack.c.0.s8 %v4756
        %v4758 = vlaneseq
        %v4759 = vshrl.u32 %v4758, 7
        %v4760 = vsub.s32 %v4757, %v4759
        %v4761 = vrot.slane %v4747, %v4760
        %v4762 = vcombine.high %v4754, %v4754
        %v4763 = vcombine.high %v4761, %v4761
        %v4764 = vcombine.high %v4668, %v4668
        %v4766 = vunpack.c.l.s4 1983009808
        %v4767 = vunpack.c.0.s8 %v4766
        %v4768 = vlaneseq
        %v4769 = vshrl.u32 %v4768, 7
        %v4770 = vsub.s32 %v4767, %v4769
        %v4771 = vrot.slane %v4668, %v4770
        %v4773 = vunpack.c.l.s4 1983009808
        %v4774 = vunpack.c.0.s8 %v4773
        %v4775 = vlaneseq
        %v4776 = vshrl.u32 %v4775, 7
        %v4777 = vsub.s32 %v4774, %v4776
        %v4778 = vrot.slane %v4764, %v4777
        %v4779 = vcombine.high %v4771, %v4771
        %v4780 = vcombine.high %v4778, %v4778
        %v4781 = vcombine.high %v4669, %v4669
        %v4783 = vunpack.c.l.s4 1983009808
        %v4784 = vunpack.c.0.s8 %v4783
        %v4785 = vlaneseq
        %v4786 = vshrl.u32 %v4785, 7
        %v4787 = vsub.s32 %v4784, %v4786
        %v4788 = vrot.slane %v4669, %v4787
        %v4790 = vunpack.c.l.s4 1983009808
        %v4791 = vunpack.c.0.s8 %v4790
        %v4792 = vlaneseq
        %v4793 = vshrl.u32 %v4792, 7
        %v4794 = vsub.s32 %v4791, %v4793
        %v4795 = vrot.slane %v4781, %v4794
        %v4796 = vcombine.high %v4788, %v4788
        %v4797 = vcombine.high %v4795, %v4795
        %v4798 = vcombine.high %v4670, %v4670
        %v4800 = vunpack.c.l.s4 1983009808
        %v4801 = vunpack.c.0.s8 %v4800
        %v4802 = vlaneseq
        %v4803 = vshrl.u32 %v4802, 7
        %v4804 = vsub.s32 %v4801, %v4803
        %v4805 = vrot.slane %v4670, %v4804
        %v4807 = vunpack.c.l.s4 1983009808
        %v4808 = vunpack.c.0.s8 %v4807
        %v4809 = vlaneseq
        %v4810 = vshrl.u32 %v4809, 7
        %v4811 = vsub.s32 %v4808, %v4810
        %v4812 = vrot.slane %v4798, %v4811
        %v4813 = vcombine.high %v4805, %v4805
        %v4814 = vcombine.high %v4812, %v4812
        %v4815 = vcombine.high %v4671, %v4671
        %v4817 = vunpack.c.l.s4 1983009808
        %v4818 = vunpack.c.0.s8 %v4817
        %v4819 = vlaneseq
        %v4820 = vshrl.u32 %v4819, 7
        %v4821 = vsub.s32 %v4818, %v4820
        %v4822 = vrot.slane %v4671, %v4821
        %v4824 = vunpack.c.l.s4 1983009808
        %v4825 = vunpack.c.0.s8 %v4824
        %v4826 = vlaneseq
        %v4827 = vshrl.u32 %v4826, 7
        %v4828 = vsub.s32 %v4825, %v4827
        %v4829 = vrot.slane %v4815, %v4828
        %v4830 = vcombine.high %v4822, %v4822
        %v4831 = vcombine.high %v4829, %v4829
        %v4832 = vcombine.high %v4672, %v4672
        %v4834 = vunpack.c.l.s4 1983009808
        %v4835 = vunpack.c.0.s8 %v4834
        %v4836 = vlaneseq
        %v4837 = vshrl.u32 %v4836, 7
        %v4838 = vsub.s32 %v4835, %v4837
        %v4839 = vrot.slane %v4672, %v4838
        %v4841 = vunpack.c.l.s4 1983009808
        %v4842 = vunpack.c.0.s8 %v4841
        %v4843 = vlaneseq
        %v4844 = vshrl.u32 %v4843, 7
        %v4845 = vsub.s32 %v4842, %v4844
        %v4846 = vrot.slane %v4832, %v4845
        %v4847 = vcombine.high %v4839, %v4839
        %v4848 = vcombine.high %v4846, %v4846
        %v4849 = vcombine.high %v4673, %v4673
        %v4851 = vunpack.c.l.s4 1983009808
        %v4852 = vunpack.c.0.s8 %v4851
        %v4853 = vlaneseq
        %v4854 = vshrl.u32 %v4853, 7
        %v4855 = vsub.s32 %v4852, %v4854
        %v4856 = vrot.slane %v4673, %v4855
        %v4858 = vunpack.c.l.s4 1983009808
        %v4859 = vunpack.c.0.s8 %v4858
        %v4860 = vlaneseq
        %v4861 = vshrl.u32 %v4860, 7
        %v4862 = vsub.s32 %v4859, %v4861
        %v4863 = vrot.slane %v4849, %v4862
        %v4864 = vcombine.high %v4856, %v4856
        %v4865 = vcombine.high %v4863, %v4863
        %v4866 = vcombine.high %v4674, %v4674
        %v4868 = vunpack.c.l.s4 1983009808
        %v4869 = vunpack.c.0.s8 %v4868
        %v4870 = vlaneseq
        %v4871 = vshrl.u32 %v4870, 7
        %v4872 = vsub.s32 %v4869, %v4871
        %v4873 = vrot.slane %v4674, %v4872
        %v4875 = vunpack.c.l.s4 1983009808
        %v4876 = vunpack.c.0.s8 %v4875
        %v4877 = vlaneseq
        %v4878 = vshrl.u32 %v4877, 7
        %v4879 = vsub.s32 %v4876, %v4878
        %v4880 = vrot.slane %v4866, %v4879
        %v4881 = vcombine.high %v4873, %v4873
        %v4882 = vcombine.high %v4880, %v4880
        %v4883 = vcombine.high %v4675, %v4675
        %v4885 = vunpack.c.l.s4 1983009808
        %v4886 = vunpack.c.0.s8 %v4885
        %v4887 = vlaneseq
        %v4888 = vshrl.u32 %v4887, 7
        %v4889 = vsub.s32 %v4886, %v4888
        %v4890 = vrot.slane %v4675, %v4889
        %v4892 = vunpack.c.l.s4 1983009808
        %v4893 = vunpack.c.0.s8 %v4892
        %v4894 = vlaneseq
        %v4895 = vshrl.u32 %v4894, 7
        %v4896 = vsub.s32 %v4893, %v4895
        %v4897 = vrot.slane %v4883, %v4896
        %v4898 = vcombine.high %v4890, %v4890
        %v4899 = vcombine.high %v4897, %v4897
        %v4900 = vcombine.high %v4676, %v4676
        %v4902 = vunpack.c.l.s4 1983009808
        %v4903 = vunpack.c.0.s8 %v4902
        %v4904 = vlaneseq
        %v4905 = vshrl.u32 %v4904, 7
        %v4906 = vsub.s32 %v4903, %v4905
        %v4907 = vrot.slane %v4676, %v4906
        %v4909 = vunpack.c.l.s4 1983009808
        %v4910 = vunpack.c.0.s8 %v4909
        %v4911 = vlaneseq
        %v4912 = vshrl.u32 %v4911, 7
        %v4913 = vsub.s32 %v4910, %v4912
        %v4914 = vrot.slane %v4900, %v4913
        %v4915 = vcombine.high %v4907, %v4907
        %v4916 = vcombine.high %v4914, %v4914
        %v4917 = vcombine.high %v4677, %v4677
        %v4919 = vunpack.c.l.s4 1983009808
        %v4920 = vunpack.c.0.s8 %v4919
        %v4921 = vlaneseq
        %v4922 = vshrl.u32 %v4921, 7
        %v4923 = vsub.s32 %v4920, %v4922
        %v4924 = vrot.slane %v4677, %v4923
        %v4926 = vunpack.c.l.s4 1983009808
        %v4927 = vunpack.c.0.s8 %v4926
        %v4928 = vlaneseq
        %v4929 = vshrl.u32 %v4928, 7
        %v4930 = vsub.s32 %v4927, %v4929
        %v4931 = vrot.slane %v4917, %v4930
        %v4932 = vcombine.high %v4924, %v4924
        %v4933 = vcombine.high %v4931, %v4931
        %v4934 = vcombine.high %v4678, %v4678
        %v4936 = vunpack.c.l.s4 1983009808
        %v4937 = vunpack.c.0.s8 %v4936
        %v4938 = vlaneseq
        %v4939 = vshrl.u32 %v4938, 7
        %v4940 = vsub.s32 %v4937, %v4939
        %v4941 = vrot.slane %v4678, %v4940
        %v4943 = vunpack.c.l.s4 1983009808
        %v4944 = vunpack.c.0.s8 %v4943
        %v4945 = vlaneseq
        %v4946 = vshrl.u32 %v4945, 7
        %v4947 = vsub.s32 %v4944, %v4946
        %v4948 = vrot.slane %v4934, %v4947
        %v4949 = vcombine.high %v4941, %v4941
        %v4950 = vcombine.high %v4948, %v4948
        %v4951 = vcombine.high %v4679, %v4679
        %v4953 = vunpack.c.l.s4 1983009808
        %v4954 = vunpack.c.0.s8 %v4953
        %v4955 = vlaneseq
        %v4956 = vshrl.u32 %v4955, 7
        %v4957 = vsub.s32 %v4954, %v4956
        %v4958 = vrot.slane %v4679, %v4957
        %v4960 = vunpack.c.l.s4 1983009808
        %v4961 = vunpack.c.0.s8 %v4960
        %v4962 = vlaneseq
        %v4963 = vshrl.u32 %v4962, 7
        %v4964 = vsub.s32 %v4961, %v4963
        %v4965 = vrot.slane %v4951, %v4964
        %v4966 = vcombine.high %v4958, %v4958
        %v4967 = vcombine.high %v4965, %v4965
        %v4968 = vcombine.high %v4680, %v4680
        %v4970 = vunpack.c.l.s4 1983009808
        %v4971 = vunpack.c.0.s8 %v4970
        %v4972 = vlaneseq
        %v4973 = vshrl.u32 %v4972, 7
        %v4974 = vsub.s32 %v4971, %v4973
        %v4975 = vrot.slane %v4680, %v4974
        %v4977 = vunpack.c.l.s4 1983009808
        %v4978 = vunpack.c.0.s8 %v4977
        %v4979 = vlaneseq
        %v4980 = vshrl.u32 %v4979, 7
        %v4981 = vsub.s32 %v4978, %v4980
        %v4982 = vrot.slane %v4968, %v4981
        %v4983 = vcombine.high %v4975, %v4975
        %v4984 = vcombine.high %v4982, %v4982
        %v4985 = vcombine.high %v4681, %v4681
        %v4987 = vunpack.c.l.s4 1983009808
        %v4988 = vunpack.c.0.s8 %v4987
        %v4989 = vlaneseq
        %v4990 = vshrl.u32 %v4989, 7
        %v4991 = vsub.s32 %v4988, %v4990
        %v4992 = vrot.slane %v4681, %v4991
        %v4994 = vunpack.c.l.s4 1983009808
        %v4995 = vunpack.c.0.s8 %v4994
        %v4996 = vlaneseq
        %v4997 = vshrl.u32 %v4996, 7
        %v4998 = vsub.s32 %v4995, %v4997
        %v4999 = vrot.slane %v4985, %v4998
        %v5000 = vcombine.high %v4992, %v4992
        %v5001 = vcombine.high %v4999, %v4999
        %v5002 = vcombine.high %v4682, %v4682
        %v5004 = vunpack.c.l.s4 1983009808
        %v5005 = vunpack.c.0.s8 %v5004
        %v5006 = vlaneseq
        %v5007 = vshrl.u32 %v5006, 7
        %v5008 = vsub.s32 %v5005, %v5007
        %v5009 = vrot.slane %v4682, %v5008
        %v5011 = vunpack.c.l.s4 1983009808
        %v5012 = vunpack.c.0.s8 %v5011
        %v5013 = vlaneseq
        %v5014 = vshrl.u32 %v5013, 7
        %v5015 = vsub.s32 %v5012, %v5014
        %v5016 = vrot.slane %v5002, %v5015
        %v5017 = vcombine.high %v5009, %v5009
        %v5018 = vcombine.high %v5016, %v5016
        %v5019 = vcombine.high %v4683, %v4683
        %v5021 = vunpack.c.l.s4 1983009808
        %v5022 = vunpack.c.0.s8 %v5021
        %v5023 = vlaneseq
        %v5024 = vshrl.u32 %v5023, 7
        %v5025 = vsub.s32 %v5022, %v5024
        %v5026 = vrot.slane %v4683, %v5025
        %v5028 = vunpack.c.l.s4 1983009808
        %v5029 = vunpack.c.0.s8 %v5028
        %v5030 = vlaneseq
        %v5031 = vshrl.u32 %v5030, 7
        %v5032 = vsub.s32 %v5029, %v5031
        %v5033 = vrot.slane %v5019, %v5032
        %v5034 = vcombine.high %v5026, %v5026
        %v5035 = vcombine.high %v5033, %v5033
        %v5036 = vcombine.high %v4684, %v4684
        %v5038 = vunpack.c.l.s4 1983009808
        %v5039 = vunpack.c.0.s8 %v5038
        %v5040 = vlaneseq
        %v5041 = vshrl.u32 %v5040, 7
        %v5042 = vsub.s32 %v5039, %v5041
        %v5043 = vrot.slane %v4684, %v5042
        %v5045 = vunpack.c.l.s4 1983009808
        %v5046 = vunpack.c.0.s8 %v5045
        %v5047 = vlaneseq
        %v5048 = vshrl.u32 %v5047, 7
        %v5049 = vsub.s32 %v5046, %v5048
        %v5050 = vrot.slane %v5036, %v5049
        %v5051 = vcombine.high %v5043, %v5043
        %v5052 = vcombine.high %v5050, %v5050
        %v5053 = vcombine.high %v4685, %v4685
        %v5055 = vunpack.c.l.s4 1983009808
        %v5056 = vunpack.c.0.s8 %v5055
        %v5057 = vlaneseq
        %v5058 = vshrl.u32 %v5057, 7
        %v5059 = vsub.s32 %v5056, %v5058
        %v5060 = vrot.slane %v4685, %v5059
        %v5062 = vunpack.c.l.s4 1983009808
        %v5063 = vunpack.c.0.s8 %v5062
        %v5064 = vlaneseq
        %v5065 = vshrl.u32 %v5064, 7
        %v5066 = vsub.s32 %v5063, %v5065
        %v5067 = vrot.slane %v5053, %v5066
        %v5068 = vcombine.high %v5060, %v5060
        %v5069 = vcombine.high %v5067, %v5067
        %v5070 = vcombine.high %v4686, %v4686
        %v5072 = vunpack.c.l.s4 1983009808
        %v5073 = vunpack.c.0.s8 %v5072
        %v5074 = vlaneseq
        %v5075 = vshrl.u32 %v5074, 7
        %v5076 = vsub.s32 %v5073, %v5075
        %v5077 = vrot.slane %v4686, %v5076
        %v5079 = vunpack.c.l.s4 1983009808
        %v5080 = vunpack.c.0.s8 %v5079
        %v5081 = vlaneseq
        %v5082 = vshrl.u32 %v5081, 7
        %v5083 = vsub.s32 %v5080, %v5082
        %v5084 = vrot.slane %v5070, %v5083
        %v5085 = vcombine.high %v5077, %v5077
        %v5086 = vcombine.high %v5084, %v5084
        %v5087 = vcombine.high %v4687, %v4687
        %v5089 = vunpack.c.l.s4 1983009808
        %v5090 = vunpack.c.0.s8 %v5089
        %v5091 = vlaneseq
        %v5092 = vshrl.u32 %v5091, 7
        %v5093 = vsub.s32 %v5090, %v5092
        %v5094 = vrot.slane %v4687, %v5093
        %v5096 = vunpack.c.l.s4 1983009808
        %v5097 = vunpack.c.0.s8 %v5096
        %v5098 = vlaneseq
        %v5099 = vshrl.u32 %v5098, 7
        %v5100 = vsub.s32 %v5097, %v5099
        %v5101 = vrot.slane %v5087, %v5100
        %v5102 = vcombine.high %v5094, %v5094
        %v5103 = vcombine.high %v5101, %v5101
        %v5104 = vcombine.high %v4688, %v4688
        %v5106 = vunpack.c.l.s4 1983009808
        %v5107 = vunpack.c.0.s8 %v5106
        %v5108 = vlaneseq
        %v5109 = vshrl.u32 %v5108, 7
        %v5110 = vsub.s32 %v5107, %v5109
        %v5111 = vrot.slane %v4688, %v5110
        %v5113 = vunpack.c.l.s4 1983009808
        %v5114 = vunpack.c.0.s8 %v5113
        %v5115 = vlaneseq
        %v5116 = vshrl.u32 %v5115, 7
        %v5117 = vsub.s32 %v5114, %v5116
        %v5118 = vrot.slane %v5104, %v5117
        %v5119 = vcombine.high %v5111, %v5111
        %v5120 = vcombine.high %v5118, %v5118
        %v5121 = vcombine.high %v4689, %v4689
        %v5123 = vunpack.c.l.s4 1983009808
        %v5124 = vunpack.c.0.s8 %v5123
        %v5125 = vlaneseq
        %v5126 = vshrl.u32 %v5125, 7
        %v5127 = vsub.s32 %v5124, %v5126
        %v5128 = vrot.slane %v4689, %v5127
        %v5130 = vunpack.c.l.s4 1983009808
        %v5131 = vunpack.c.0.s8 %v5130
        %v5132 = vlaneseq
        %v5133 = vshrl.u32 %v5132, 7
        %v5134 = vsub.s32 %v5131, %v5133
        %v5135 = vrot.slane %v5121, %v5134
        %v5136 = vcombine.high %v5128, %v5128
        %v5137 = vcombine.high %v5135, %v5135
        %v5138 = vcombine.high %v4690, %v4690
        %v5140 = vunpack.c.l.s4 1983009808
        %v5141 = vunpack.c.0.s8 %v5140
        %v5142 = vlaneseq
        %v5143 = vshrl.u32 %v5142, 7
        %v5144 = vsub.s32 %v5141, %v5143
        %v5145 = vrot.slane %v4690, %v5144
        %v5147 = vunpack.c.l.s4 1983009808
        %v5148 = vunpack.c.0.s8 %v5147
        %v5149 = vlaneseq
        %v5150 = vshrl.u32 %v5149, 7
        %v5151 = vsub.s32 %v5148, %v5150
        %v5152 = vrot.slane %v5138, %v5151
        %v5153 = vcombine.high %v5145, %v5145
        %v5154 = vcombine.high %v5152, %v5152
        %v5155 = vcombine.high %v4691, %v4691
        %v5157 = vunpack.c.l.s4 1983009808
        %v5158 = vunpack.c.0.s8 %v5157
        %v5159 = vlaneseq
        %v5160 = vshrl.u32 %v5159, 7
        %v5161 = vsub.s32 %v5158, %v5160
        %v5162 = vrot.slane %v4691, %v5161
        %v5164 = vunpack.c.l.s4 1983009808
        %v5165 = vunpack.c.0.s8 %v5164
        %v5166 = vlaneseq
        %v5167 = vshrl.u32 %v5166, 7
        %v5168 = vsub.s32 %v5165, %v5167
        %v5169 = vrot.slane %v5155, %v5168
        %v5170 = vcombine.high %v5162, %v5162
        %v5171 = vcombine.high %v5169, %v5169
        %v5172 = vcombine.high %v4692, %v4692
        %v5174 = vunpack.c.l.s4 1983009808
        %v5175 = vunpack.c.0.s8 %v5174
        %v5176 = vlaneseq
        %v5177 = vshrl.u32 %v5176, 7
        %v5178 = vsub.s32 %v5175, %v5177
        %v5179 = vrot.slane %v4692, %v5178
        %v5181 = vunpack.c.l.s4 1983009808
        %v5182 = vunpack.c.0.s8 %v5181
        %v5183 = vlaneseq
        %v5184 = vshrl.u32 %v5183, 7
        %v5185 = vsub.s32 %v5182, %v5184
        %v5186 = vrot.slane %v5172, %v5185
        %v5187 = vcombine.high %v5179, %v5179
        %v5188 = vcombine.high %v5186, %v5186
        %v5189 = vcombine.high %v4693, %v4693
        %v5191 = vunpack.c.l.s4 1983009808
        %v5192 = vunpack.c.0.s8 %v5191
        %v5193 = vlaneseq
        %v5194 = vshrl.u32 %v5193, 7
        %v5195 = vsub.s32 %v5192, %v5194
        %v5196 = vrot.slane %v4693, %v5195
        %v5198 = vunpack.c.l.s4 1983009808
        %v5199 = vunpack.c.0.s8 %v5198
        %v5200 = vlaneseq
        %v5201 = vshrl.u32 %v5200, 7
        %v5202 = vsub.s32 %v5199, %v5201
        %v5203 = vrot.slane %v5189, %v5202
        %v5204 = vcombine.high %v5196, %v5196
        %v5205 = vcombine.high %v5203, %v5203
        %v5206 = vcombine.high %v4694, %v4694
        %v5208 = vunpack.c.l.s4 1983009808
        %v5209 = vunpack.c.0.s8 %v5208
        %v5210 = vlaneseq
        %v5211 = vshrl.u32 %v5210, 7
        %v5212 = vsub.s32 %v5209, %v5211
        %v5213 = vrot.slane %v4694, %v5212
        %v5215 = vunpack.c.l.s4 1983009808
        %v5216 = vunpack.c.0.s8 %v5215
        %v5217 = vlaneseq
        %v5218 = vshrl.u32 %v5217, 7
        %v5219 = vsub.s32 %v5216, %v5218
        %v5220 = vrot.slane %v5206, %v5219
        %v5221 = vcombine.high %v5213, %v5213
        %v5222 = vcombine.high %v5220, %v5220
        %v5223 = vcombine.high %v4695, %v4695
        %v5225 = vunpack.c.l.s4 1983009808
        %v5226 = vunpack.c.0.s8 %v5225
        %v5227 = vlaneseq
        %v5228 = vshrl.u32 %v5227, 7
        %v5229 = vsub.s32 %v5226, %v5228
        %v5230 = vrot.slane %v4695, %v5229
        %v5232 = vunpack.c.l.s4 1983009808
        %v5233 = vunpack.c.0.s8 %v5232
        %v5234 = vlaneseq
        %v5235 = vshrl.u32 %v5234, 7
        %v5236 = vsub.s32 %v5233, %v5235
        %v5237 = vrot.slane %v5223, %v5236
        %v5238 = vcombine.high %v5230, %v5230
        %v5239 = vcombine.high %v5237, %v5237
        %v5240 = vcombine.high %v4696, %v4696
        %v5242 = vunpack.c.l.s4 1983009808
        %v5243 = vunpack.c.0.s8 %v5242
        %v5244 = vlaneseq
        %v5245 = vshrl.u32 %v5244, 7
        %v5246 = vsub.s32 %v5243, %v5245
        %v5247 = vrot.slane %v4696, %v5246
        %v5249 = vunpack.c.l.s4 1983009808
        %v5250 = vunpack.c.0.s8 %v5249
        %v5251 = vlaneseq
        %v5252 = vshrl.u32 %v5251, 7
        %v5253 = vsub.s32 %v5250, %v5252
        %v5254 = vrot.slane %v5240, %v5253
        %v5255 = vcombine.high %v5247, %v5247
        %v5256 = vcombine.high %v5254, %v5254
        %v5257 = vcombine.high %v4697, %v4697
        %v5259 = vunpack.c.l.s4 1983009808
        %v5260 = vunpack.c.0.s8 %v5259
        %v5261 = vlaneseq
        %v5262 = vshrl.u32 %v5261, 7
        %v5263 = vsub.s32 %v5260, %v5262
        %v5264 = vrot.slane %v4697, %v5263
        %v5266 = vunpack.c.l.s4 1983009808
        %v5267 = vunpack.c.0.s8 %v5266
        %v5268 = vlaneseq
        %v5269 = vshrl.u32 %v5268, 7
        %v5270 = vsub.s32 %v5267, %v5269
        %v5271 = vrot.slane %v5257, %v5270
        %v5272 = vcombine.high %v5264, %v5264
        %v5273 = vcombine.high %v5271, %v5271
        %vm5402 = vcmask 1041408
        %v5403 = vsel %vm5402, %v4737, -inf
        %v5404 = vsel %vm5402, %v4771, -inf
        %v5405 = vmax.f32 %v5403, %v5404
        %v5406 = vrot.slane %v5405, 4
        %v5407 = vmax.f32 %v5405, %v5406
        %v5408 = vrot.slane %v5407, 2
        %v5409 = vmax.f32 %v5407, %v5408
        %v5410 = vrot.slane %v5409, 1
        %v5411 = vmax.f32 %v5409, %v5410
        %v5412 = vsel %vm5402, %v4745, -inf
        %v5413 = vsel %vm5402, %v4779, -inf
        %v5414 = vmax.f32 %v5412, %v5413
        %v5415 = vrot.slane %v5414, 4
        %v5416 = vmax.f32 %v5414, %v5415
        %v5417 = vrot.slane %v5416, 2
        %v5418 = vmax.f32 %v5416, %v5417
        %v5419 = vrot.slane %v5418, 1
        %v5420 = vmax.f32 %v5418, %v5419
        %v5421 = vsel %vm5402, %v4744, -inf
        %v5422 = vsel %vm5402, %v4778, -inf
        %v5423 = vmax.f32 %v5421, %v5422
        %v5424 = vrot.slane %v5423, 4
        %v5425 = vmax.f32 %v5423, %v5424
        %v5426 = vrot.slane %v5425, 2
        %v5427 = vmax.f32 %v5425, %v5426
        %v5428 = vrot.slane %v5427, 1
        %v5429 = vmax.f32 %v5427, %v5428
        %v5430 = vsel %vm5402, %v4746, -inf
        %v5431 = vsel %vm5402, %v4780, -inf
        %v5432 = vmax.f32 %v5430, %v5431
        %v5433 = vrot.slane %v5432, 4
        %v5434 = vmax.f32 %v5432, %v5433
        %v5435 = vrot.slane %v5434, 2
        %v5436 = vmax.f32 %v5434, %v5435
        %v5437 = vrot.slane %v5436, 1
        %v5438 = vmax.f32 %v5436, %v5437
        %v5439 = vsel %vm5402, %v4754, -inf
        %v5440 = vsel %vm5402, %v4788, -inf
        %v5441 = vmax.f32 %v5439, %v5440
        %v5442 = vrot.slane %v5441, 4
        %v5443 = vmax.f32 %v5441, %v5442
        %v5444 = vrot.slane %v5443, 2
        %v5445 = vmax.f32 %v5443, %v5444
        %v5446 = vrot.slane %v5445, 1
        %v5447 = vmax.f32 %v5445, %v5446
        %v5448 = vsel %vm5402, %v4762, -inf
        %v5449 = vsel %vm5402, %v4796, -inf
        %v5450 = vmax.f32 %v5448, %v5449
        %v5451 = vrot.slane %v5450, 4
        %v5452 = vmax.f32 %v5450, %v5451
        %v5453 = vrot.slane %v5452, 2
        %v5454 = vmax.f32 %v5452, %v5453
        %v5455 = vrot.slane %v5454, 1
        %v5456 = vmax.f32 %v5454, %v5455
        %v5457 = vsel %vm5402, %v4761, -inf
        %v5458 = vsel %vm5402, %v4795, -inf
        %v5459 = vmax.f32 %v5457, %v5458
        %v5460 = vrot.slane %v5459, 4
        %v5461 = vmax.f32 %v5459, %v5460
        %v5462 = vrot.slane %v5461, 2
        %v5463 = vmax.f32 %v5461, %v5462
        %v5464 = vrot.slane %v5463, 1
        %v5465 = vmax.f32 %v5463, %v5464
        %v5466 = vsel %vm5402, %v4763, -inf
        %v5467 = vsel %vm5402, %v4797, -inf
        %v5468 = vmax.f32 %v5466, %v5467
        %v5469 = vrot.slane %v5468, 4
        %v5470 = vmax.f32 %v5468, %v5469
        %v5471 = vrot.slane %v5470, 2
        %v5472 = vmax.f32 %v5470, %v5471
        %v5473 = vrot.slane %v5472, 1
        %v5474 = vmax.f32 %v5472, %v5473
        %v5475 = vsel %vm5402, %v4805, -inf
        %v5476 = vsel %vm5402, %v4839, -inf
        %v5477 = vmax.f32 %v5475, %v5476
        %v5478 = vrot.slane %v5477, 4
        %v5479 = vmax.f32 %v5477, %v5478
        %v5480 = vrot.slane %v5479, 2
        %v5481 = vmax.f32 %v5479, %v5480
        %v5482 = vrot.slane %v5481, 1
        %v5483 = vmax.f32 %v5481, %v5482
        %v5484 = vsel %vm5402, %v4813, -inf
        %v5485 = vsel %vm5402, %v4847, -inf
        %v5486 = vmax.f32 %v5484, %v5485
        %v5487 = vrot.slane %v5486, 4
        %v5488 = vmax.f32 %v5486, %v5487
        %v5489 = vrot.slane %v5488, 2
        %v5490 = vmax.f32 %v5488, %v5489
        %v5491 = vrot.slane %v5490, 1
        %v5492 = vmax.f32 %v5490, %v5491
        %v5493 = vsel %vm5402, %v4812, -inf
        %v5494 = vsel %vm5402, %v4846, -inf
        %v5495 = vmax.f32 %v5493, %v5494
        %v5496 = vrot.slane %v5495, 4
        %v5497 = vmax.f32 %v5495, %v5496
        %v5498 = vrot.slane %v5497, 2
        %v5499 = vmax.f32 %v5497, %v5498
        %v5500 = vrot.slane %v5499, 1
        %v5501 = vmax.f32 %v5499, %v5500
        %v5502 = vsel %vm5402, %v4814, -inf
        %v5503 = vsel %vm5402, %v4848, -inf
        %v5504 = vmax.f32 %v5502, %v5503
        %v5505 = vrot.slane %v5504, 4
        %v5506 = vmax.f32 %v5504, %v5505
        %v5507 = vrot.slane %v5506, 2
        %v5508 = vmax.f32 %v5506, %v5507
        %v5509 = vrot.slane %v5508, 1
        %v5510 = vmax.f32 %v5508, %v5509
        %v5511 = vsel %vm5402, %v4822, -inf
        %v5512 = vsel %vm5402, %v4856, -inf
        %v5513 = vmax.f32 %v5511, %v5512
        %v5514 = vrot.slane %v5513, 4
        %v5515 = vmax.f32 %v5513, %v5514
        %v5516 = vrot.slane %v5515, 2
        %v5517 = vmax.f32 %v5515, %v5516
        %v5518 = vrot.slane %v5517, 1
        %v5519 = vmax.f32 %v5517, %v5518
        %v5520 = vsel %vm5402, %v4830, -inf
        %v5521 = vsel %vm5402, %v4864, -inf
        %v5522 = vmax.f32 %v5520, %v5521
        %v5523 = vrot.slane %v5522, 4
        %v5524 = vmax.f32 %v5522, %v5523
        %v5525 = vrot.slane %v5524, 2
        %v5526 = vmax.f32 %v5524, %v5525
        %v5527 = vrot.slane %v5526, 1
        %v5528 = vmax.f32 %v5526, %v5527
        %v5529 = vsel %vm5402, %v4829, -inf
        %v5530 = vsel %vm5402, %v4863, -inf
        %v5531 = vmax.f32 %v5529, %v5530
        %v5532 = vrot.slane %v5531, 4
        %v5533 = vmax.f32 %v5531, %v5532
        %v5534 = vrot.slane %v5533, 2
        %v5535 = vmax.f32 %v5533, %v5534
        %v5536 = vrot.slane %v5535, 1
        %v5537 = vmax.f32 %v5535, %v5536
        %v5538 = vsel %vm5402, %v4831, -inf
        %v5539 = vsel %vm5402, %v4865, -inf
        %v5540 = vmax.f32 %v5538, %v5539
        %v5541 = vrot.slane %v5540, 4
        %v5542 = vmax.f32 %v5540, %v5541
        %v5543 = vrot.slane %v5542, 2
        %v5544 = vmax.f32 %v5542, %v5543
        %v5545 = vrot.slane %v5544, 1
        %v5546 = vmax.f32 %v5544, %v5545
        %v5547 = vsel %vm5402, %v4873, -inf
        %v5548 = vsel %vm5402, %v4907, -inf
        %v5549 = vmax.f32 %v5547, %v5548
        %v5550 = vrot.slane %v5549, 4
        %v5551 = vmax.f32 %v5549, %v5550
        %v5552 = vrot.slane %v5551, 2
        %v5553 = vmax.f32 %v5551, %v5552
        %v5554 = vrot.slane %v5553, 1
        %v5555 = vmax.f32 %v5553, %v5554
        %v5556 = vsel %vm5402, %v4881, -inf
        %v5557 = vsel %vm5402, %v4915, -inf
        %v5558 = vmax.f32 %v5556, %v5557
        %v5559 = vrot.slane %v5558, 4
        %v5560 = vmax.f32 %v5558, %v5559
        %v5561 = vrot.slane %v5560, 2
        %v5562 = vmax.f32 %v5560, %v5561
        %v5563 = vrot.slane %v5562, 1
        %v5564 = vmax.f32 %v5562, %v5563
        %v5565 = vsel %vm5402, %v4880, -inf
        %v5566 = vsel %vm5402, %v4914, -inf
        %v5567 = vmax.f32 %v5565, %v5566
        %v5568 = vrot.slane %v5567, 4
        %v5569 = vmax.f32 %v5567, %v5568
        %v5570 = vrot.slane %v5569, 2
        %v5571 = vmax.f32 %v5569, %v5570
        %v5572 = vrot.slane %v5571, 1
        %v5573 = vmax.f32 %v5571, %v5572
        %v5574 = vsel %vm5402, %v4882, -inf
        %v5575 = vsel %vm5402, %v4916, -inf
        %v5576 = vmax.f32 %v5574, %v5575
        %v5577 = vrot.slane %v5576, 4
        %v5578 = vmax.f32 %v5576, %v5577
        %v5579 = vrot.slane %v5578, 2
        %v5580 = vmax.f32 %v5578, %v5579
        %v5581 = vrot.slane %v5580, 1
        %v5582 = vmax.f32 %v5580, %v5581
        %v5583 = vsel %vm5402, %v4890, -inf
        %v5584 = vsel %vm5402, %v4924, -inf
        %v5585 = vmax.f32 %v5583, %v5584
        %v5586 = vrot.slane %v5585, 4
        %v5587 = vmax.f32 %v5585, %v5586
        %v5588 = vrot.slane %v5587, 2
        %v5589 = vmax.f32 %v5587, %v5588
        %v5590 = vrot.slane %v5589, 1
        %v5591 = vmax.f32 %v5589, %v5590
        %v5592 = vsel %vm5402, %v4898, -inf
        %v5593 = vsel %vm5402, %v4932, -inf
        %v5594 = vmax.f32 %v5592, %v5593
        %v5595 = vrot.slane %v5594, 4
        %v5596 = vmax.f32 %v5594, %v5595
        %v5597 = vrot.slane %v5596, 2
        %v5598 = vmax.f32 %v5596, %v5597
        %v5599 = vrot.slane %v5598, 1
        %v5600 = vmax.f32 %v5598, %v5599
        %v5601 = vsel %vm5402, %v4897, -inf
        %v5602 = vsel %vm5402, %v4931, -inf
        %v5603 = vmax.f32 %v5601, %v5602
        %v5604 = vrot.slane %v5603, 4
        %v5605 = vmax.f32 %v5603, %v5604
        %v5606 = vrot.slane %v5605, 2
        %v5607 = vmax.f32 %v5605, %v5606
        %v5608 = vrot.slane %v5607, 1
        %v5609 = vmax.f32 %v5607, %v5608
        %v5610 = vsel %vm5402, %v4899, -inf
        %v5611 = vsel %vm5402, %v4933, -inf
        %v5612 = vmax.f32 %v5610, %v5611
        %v5613 = vrot.slane %v5612, 4
        %v5614 = vmax.f32 %v5612, %v5613
        %v5615 = vrot.slane %v5614, 2
        %v5616 = vmax.f32 %v5614, %v5615
        %v5617 = vrot.slane %v5616, 1
        %v5618 = vmax.f32 %v5616, %v5617
        %v5619 = vsel %vm5402, %v4941, -inf
        %v5620 = vsel %vm5402, %v4975, -inf
        %v5621 = vmax.f32 %v5619, %v5620
        %v5622 = vrot.slane %v5621, 4
        %v5623 = vmax.f32 %v5621, %v5622
        %v5624 = vrot.slane %v5623, 2
        %v5625 = vmax.f32 %v5623, %v5624
        %v5626 = vrot.slane %v5625, 1
        %v5627 = vmax.f32 %v5625, %v5626
        %v5628 = vsel %vm5402, %v4949, -inf
        %v5629 = vsel %vm5402, %v4983, -inf
        %v5630 = vmax.f32 %v5628, %v5629
        %v5631 = vrot.slane %v5630, 4
        %v5632 = vmax.f32 %v5630, %v5631
        %v5633 = vrot.slane %v5632, 2
        %v5634 = vmax.f32 %v5632, %v5633
        %v5635 = vrot.slane %v5634, 1
        %v5636 = vmax.f32 %v5634, %v5635
        %v5637 = vsel %vm5402, %v4948, -inf
        %v5638 = vsel %vm5402, %v4982, -inf
        %v5639 = vmax.f32 %v5637, %v5638
        %v5640 = vrot.slane %v5639, 4
        %v5641 = vmax.f32 %v5639, %v5640
        %v5642 = vrot.slane %v5641, 2
        %v5643 = vmax.f32 %v5641, %v5642
        %v5644 = vrot.slane %v5643, 1
        %v5645 = vmax.f32 %v5643, %v5644
        %v5646 = vsel %vm5402, %v4950, -inf
        %v5647 = vsel %vm5402, %v4984, -inf
        %v5648 = vmax.f32 %v5646, %v5647
        %v5649 = vrot.slane %v5648, 4
        %v5650 = vmax.f32 %v5648, %v5649
        %v5651 = vrot.slane %v5650, 2
        %v5652 = vmax.f32 %v5650, %v5651
        %v5653 = vrot.slane %v5652, 1
        %v5654 = vmax.f32 %v5652, %v5653
        %v5655 = vsel %vm5402, %v4958, -inf
        %v5656 = vsel %vm5402, %v4992, -inf
        %v5657 = vmax.f32 %v5655, %v5656
        %v5658 = vrot.slane %v5657, 4
        %v5659 = vmax.f32 %v5657, %v5658
        %v5660 = vrot.slane %v5659, 2
        %v5661 = vmax.f32 %v5659, %v5660
        %v5662 = vrot.slane %v5661, 1
        %v5663 = vmax.f32 %v5661, %v5662
        %v5664 = vsel %vm5402, %v4966, -inf
        %v5665 = vsel %vm5402, %v5000, -inf
        %v5666 = vmax.f32 %v5664, %v5665
        %v5667 = vrot.slane %v5666, 4
        %v5668 = vmax.f32 %v5666, %v5667
        %v5669 = vrot.slane %v5668, 2
        %v5670 = vmax.f32 %v5668, %v5669
        %v5671 = vrot.slane %v5670, 1
        %v5672 = vmax.f32 %v5670, %v5671
        %v5673 = vsel %vm5402, %v4965, -inf
        %v5674 = vsel %vm5402, %v4999, -inf
        %v5675 = vmax.f32 %v5673, %v5674
        %v5676 = vrot.slane %v5675, 4
        %v5677 = vmax.f32 %v5675, %v5676
        %v5678 = vrot.slane %v5677, 2
        %v5679 = vmax.f32 %v5677, %v5678
        %v5680 = vrot.slane %v5679, 1
        %v5681 = vmax.f32 %v5679, %v5680
        %v5682 = vsel %vm5402, %v4967, -inf
        %v5683 = vsel %vm5402, %v5001, -inf
        %v5684 = vmax.f32 %v5682, %v5683
        %v5685 = vrot.slane %v5684, 4
        %v5686 = vmax.f32 %v5684, %v5685
        %v5687 = vrot.slane %v5686, 2
        %v5688 = vmax.f32 %v5686, %v5687
        %v5689 = vrot.slane %v5688, 1
        %v5690 = vmax.f32 %v5688, %v5689
        %v5691 = vsel %vm5402, %v5009, -inf
        %v5692 = vsel %vm5402, %v5043, -inf
        %v5693 = vmax.f32 %v5691, %v5692
        %v5694 = vrot.slane %v5693, 4
        %v5695 = vmax.f32 %v5693, %v5694
        %v5696 = vrot.slane %v5695, 2
        %v5697 = vmax.f32 %v5695, %v5696
        %v5698 = vrot.slane %v5697, 1
        %v5699 = vmax.f32 %v5697, %v5698
        %v5700 = vsel %vm5402, %v5017, -inf
        %v5701 = vsel %vm5402, %v5051, -inf
        %v5702 = vmax.f32 %v5700, %v5701
        %v5703 = vrot.slane %v5702, 4
        %v5704 = vmax.f32 %v5702, %v5703
        %v5705 = vrot.slane %v5704, 2
        %v5706 = vmax.f32 %v5704, %v5705
        %v5707 = vrot.slane %v5706, 1
        %v5708 = vmax.f32 %v5706, %v5707
        %v5709 = vsel %vm5402, %v5016, -inf
        %v5710 = vsel %vm5402, %v5050, -inf
        %v5711 = vmax.f32 %v5709, %v5710
        %v5712 = vrot.slane %v5711, 4
        %v5713 = vmax.f32 %v5711, %v5712
        %v5714 = vrot.slane %v5713, 2
        %v5715 = vmax.f32 %v5713, %v5714
        %v5716 = vrot.slane %v5715, 1
        %v5717 = vmax.f32 %v5715, %v5716
        %v5718 = vsel %vm5402, %v5018, -inf
        %v5719 = vsel %vm5402, %v5052, -inf
        %v5720 = vmax.f32 %v5718, %v5719
        %v5721 = vrot.slane %v5720, 4
        %v5722 = vmax.f32 %v5720, %v5721
        %v5723 = vrot.slane %v5722, 2
        %v5724 = vmax.f32 %v5722, %v5723
        %v5725 = vrot.slane %v5724, 1
        %v5726 = vmax.f32 %v5724, %v5725
        %v5727 = vsel %vm5402, %v5026, -inf
        %v5728 = vsel %vm5402, %v5060, -inf
        %v5729 = vmax.f32 %v5727, %v5728
        %v5730 = vrot.slane %v5729, 4
        %v5731 = vmax.f32 %v5729, %v5730
        %v5732 = vrot.slane %v5731, 2
        %v5733 = vmax.f32 %v5731, %v5732
        %v5734 = vrot.slane %v5733, 1
        %v5735 = vmax.f32 %v5733, %v5734
        %v5736 = vsel %vm5402, %v5034, -inf
        %v5737 = vsel %vm5402, %v5068, -inf
        %v5738 = vmax.f32 %v5736, %v5737
        %v5739 = vrot.slane %v5738, 4
        %v5740 = vmax.f32 %v5738, %v5739
        %v5741 = vrot.slane %v5740, 2
        %v5742 = vmax.f32 %v5740, %v5741
        %v5743 = vrot.slane %v5742, 1
        %v5744 = vmax.f32 %v5742, %v5743
        %v5745 = vsel %vm5402, %v5033, -inf
        %v5746 = vsel %vm5402, %v5067, -inf
        %v5747 = vmax.f32 %v5745, %v5746
        %v5748 = vrot.slane %v5747, 4
        %v5749 = vmax.f32 %v5747, %v5748
        %v5750 = vrot.slane %v5749, 2
        %v5751 = vmax.f32 %v5749, %v5750
        %v5752 = vrot.slane %v5751, 1
        %v5753 = vmax.f32 %v5751, %v5752
        %v5754 = vsel %vm5402, %v5035, -inf
        %v5755 = vsel %vm5402, %v5069, -inf
        %v5756 = vmax.f32 %v5754, %v5755
        %v5757 = vrot.slane %v5756, 4
        %v5758 = vmax.f32 %v5756, %v5757
        %v5759 = vrot.slane %v5758, 2
        %v5760 = vmax.f32 %v5758, %v5759
        %v5761 = vrot.slane %v5760, 1
        %v5762 = vmax.f32 %v5760, %v5761
        %v5763 = vsel %vm5402, %v5077, -inf
        %v5764 = vsel %vm5402, %v5111, -inf
        %v5765 = vmax.f32 %v5763, %v5764
        %v5766 = vrot.slane %v5765, 4
        %v5767 = vmax.f32 %v5765, %v5766
        %v5768 = vrot.slane %v5767, 2
        %v5769 = vmax.f32 %v5767, %v5768
        %v5770 = vrot.slane %v5769, 1
        %v5771 = vmax.f32 %v5769, %v5770
        %v5772 = vsel %vm5402, %v5085, -inf
        %v5773 = vsel %vm5402, %v5119, -inf
        %v5774 = vmax.f32 %v5772, %v5773
        %v5775 = vrot.slane %v5774, 4
        %v5776 = vmax.f32 %v5774, %v5775
        %v5777 = vrot.slane %v5776, 2
        %v5778 = vmax.f32 %v5776, %v5777
        %v5779 = vrot.slane %v5778, 1
        %v5780 = vmax.f32 %v5778, %v5779
        %v5781 = vsel %vm5402, %v5084, -inf
        %v5782 = vsel %vm5402, %v5118, -inf
        %v5783 = vmax.f32 %v5781, %v5782
        %v5784 = vrot.slane %v5783, 4
        %v5785 = vmax.f32 %v5783, %v5784
        %v5786 = vrot.slane %v5785, 2
        %v5787 = vmax.f32 %v5785, %v5786
        %v5788 = vrot.slane %v5787, 1
        %v5789 = vmax.f32 %v5787, %v5788
        %v5790 = vsel %vm5402, %v5086, -inf
        %v5791 = vsel %vm5402, %v5120, -inf
        %v5792 = vmax.f32 %v5790, %v5791
        %v5793 = vrot.slane %v5792, 4
        %v5794 = vmax.f32 %v5792, %v5793
        %v5795 = vrot.slane %v5794, 2
        %v5796 = vmax.f32 %v5794, %v5795
        %v5797 = vrot.slane %v5796, 1
        %v5798 = vmax.f32 %v5796, %v5797
        %v5799 = vsel %vm5402, %v5094, -inf
        %v5800 = vsel %vm5402, %v5128, -inf
        %v5801 = vmax.f32 %v5799, %v5800
        %v5802 = vrot.slane %v5801, 4
        %v5803 = vmax.f32 %v5801, %v5802
        %v5804 = vrot.slane %v5803, 2
        %v5805 = vmax.f32 %v5803, %v5804
        %v5806 = vrot.slane %v5805, 1
        %v5807 = vmax.f32 %v5805, %v5806
        %v5808 = vsel %vm5402, %v5102, -inf
        %v5809 = vsel %vm5402, %v5136, -inf
        %v5810 = vmax.f32 %v5808, %v5809
        %v5811 = vrot.slane %v5810, 4
        %v5812 = vmax.f32 %v5810, %v5811
        %v5813 = vrot.slane %v5812, 2
        %v5814 = vmax.f32 %v5812, %v5813
        %v5815 = vrot.slane %v5814, 1
        %v5816 = vmax.f32 %v5814, %v5815
        %v5817 = vsel %vm5402, %v5101, -inf
        %v5818 = vsel %vm5402, %v5135, -inf
        %v5819 = vmax.f32 %v5817, %v5818
        %v5820 = vrot.slane %v5819, 4
        %v5821 = vmax.f32 %v5819, %v5820
        %v5822 = vrot.slane %v5821, 2
        %v5823 = vmax.f32 %v5821, %v5822
        %v5824 = vrot.slane %v5823, 1
        %v5825 = vmax.f32 %v5823, %v5824
        %v5826 = vsel %vm5402, %v5103, -inf
        %v5827 = vsel %vm5402, %v5137, -inf
        %v5828 = vmax.f32 %v5826, %v5827
        %v5829 = vrot.slane %v5828, 4
        %v5830 = vmax.f32 %v5828, %v5829
        %v5831 = vrot.slane %v5830, 2
        %v5832 = vmax.f32 %v5830, %v5831
        %v5833 = vrot.slane %v5832, 1
        %v5834 = vmax.f32 %v5832, %v5833
        %v5835 = vsel %vm5402, %v5145, -inf
        %v5836 = vsel %vm5402, %v5179, -inf
        %v5837 = vmax.f32 %v5835, %v5836
        %v5838 = vrot.slane %v5837, 4
        %v5839 = vmax.f32 %v5837, %v5838
        %v5840 = vrot.slane %v5839, 2
        %v5841 = vmax.f32 %v5839, %v5840
        %v5842 = vrot.slane %v5841, 1
        %v5843 = vmax.f32 %v5841, %v5842
        %v5844 = vsel %vm5402, %v5153, -inf
        %v5845 = vsel %vm5402, %v5187, -inf
        %v5846 = vmax.f32 %v5844, %v5845
        %v5847 = vrot.slane %v5846, 4
        %v5848 = vmax.f32 %v5846, %v5847
        %v5849 = vrot.slane %v5848, 2
        %v5850 = vmax.f32 %v5848, %v5849
        %v5851 = vrot.slane %v5850, 1
        %v5852 = vmax.f32 %v5850, %v5851
        %v5853 = vsel %vm5402, %v5152, -inf
        %v5854 = vsel %vm5402, %v5186, -inf
        %v5855 = vmax.f32 %v5853, %v5854
        %v5856 = vrot.slane %v5855, 4
        %v5857 = vmax.f32 %v5855, %v5856
        %v5858 = vrot.slane %v5857, 2
        %v5859 = vmax.f32 %v5857, %v5858
        %v5860 = vrot.slane %v5859, 1
        %v5861 = vmax.f32 %v5859, %v5860
        %v5862 = vsel %vm5402, %v5154, -inf
        %v5863 = vsel %vm5402, %v5188, -inf
        %v5864 = vmax.f32 %v5862, %v5863
        %v5865 = vrot.slane %v5864, 4
        %v5866 = vmax.f32 %v5864, %v5865
        %v5867 = vrot.slane %v5866, 2
        %v5868 = vmax.f32 %v5866, %v5867
        %v5869 = vrot.slane %v5868, 1
        %v5870 = vmax.f32 %v5868, %v5869
        %v5871 = vsel %vm5402, %v5162, -inf
        %v5872 = vsel %vm5402, %v5196, -inf
        %v5873 = vmax.f32 %v5871, %v5872
        %v5874 = vrot.slane %v5873, 4
        %v5875 = vmax.f32 %v5873, %v5874
        %v5876 = vrot.slane %v5875, 2
        %v5877 = vmax.f32 %v5875, %v5876
        %v5878 = vrot.slane %v5877, 1
        %v5879 = vmax.f32 %v5877, %v5878
        %v5880 = vsel %vm5402, %v5170, -inf
        %v5881 = vsel %vm5402, %v5204, -inf
        %v5882 = vmax.f32 %v5880, %v5881
        %v5883 = vrot.slane %v5882, 4
        %v5884 = vmax.f32 %v5882, %v5883
        %v5885 = vrot.slane %v5884, 2
        %v5886 = vmax.f32 %v5884, %v5885
        %v5887 = vrot.slane %v5886, 1
        %v5888 = vmax.f32 %v5886, %v5887
        %v5889 = vsel %vm5402, %v5169, -inf
        %v5890 = vsel %vm5402, %v5203, -inf
        %v5891 = vmax.f32 %v5889, %v5890
        %v5892 = vrot.slane %v5891, 4
        %v5893 = vmax.f32 %v5891, %v5892
        %v5894 = vrot.slane %v5893, 2
        %v5895 = vmax.f32 %v5893, %v5894
        %v5896 = vrot.slane %v5895, 1
        %v5897 = vmax.f32 %v5895, %v5896
        %v5898 = vsel %vm5402, %v5171, -inf
        %v5899 = vsel %vm5402, %v5205, -inf
        %v5900 = vmax.f32 %v5898, %v5899
        %v5901 = vrot.slane %v5900, 4
        %v5902 = vmax.f32 %v5900, %v5901
        %v5903 = vrot.slane %v5902, 2
        %v5904 = vmax.f32 %v5902, %v5903
        %v5905 = vrot.slane %v5904, 1
        %v5906 = vmax.f32 %v5904, %v5905
        %v5907 = vsel %vm5402, %v5213, -inf
        %v5908 = vsel %vm5402, %v5247, -inf
        %v5909 = vmax.f32 %v5907, %v5908
        %v5910 = vrot.slane %v5909, 4
        %v5911 = vmax.f32 %v5909, %v5910
        %v5912 = vrot.slane %v5911, 2
        %v5913 = vmax.f32 %v5911, %v5912
        %v5914 = vrot.slane %v5913, 1
        %v5915 = vmax.f32 %v5913, %v5914
        %v5916 = vsel %vm5402, %v5221, -inf
        %v5917 = vsel %vm5402, %v5255, -inf
        %v5918 = vmax.f32 %v5916, %v5917
        %v5919 = vrot.slane %v5918, 4
        %v5920 = vmax.f32 %v5918, %v5919
        %v5921 = vrot.slane %v5920, 2
        %v5922 = vmax.f32 %v5920, %v5921
        %v5923 = vrot.slane %v5922, 1
        %v5924 = vmax.f32 %v5922, %v5923
        %v5925 = vsel %vm5402, %v5220, -inf
        %v5926 = vsel %vm5402, %v5254, -inf
        %v5927 = vmax.f32 %v5925, %v5926
        %v5928 = vrot.slane %v5927, 4
        %v5929 = vmax.f32 %v5927, %v5928
        %v5930 = vrot.slane %v5929, 2
        %v5931 = vmax.f32 %v5929, %v5930
        %v5932 = vrot.slane %v5931, 1
        %v5933 = vmax.f32 %v5931, %v5932
        %v5934 = vsel %vm5402, %v5222, -inf
        %v5935 = vsel %vm5402, %v5256, -inf
        %v5936 = vmax.f32 %v5934, %v5935
        %v5937 = vrot.slane %v5936, 4
        %v5938 = vmax.f32 %v5936, %v5937
        %v5939 = vrot.slane %v5938, 2
        %v5940 = vmax.f32 %v5938, %v5939
        %v5941 = vrot.slane %v5940, 1
        %v5942 = vmax.f32 %v5940, %v5941
        %v5943 = vsel %vm5402, %v5230, -inf
        %v5944 = vsel %vm5402, %v5264, -inf
        %v5945 = vmax.f32 %v5943, %v5944
        %v5946 = vrot.slane %v5945, 4
        %v5947 = vmax.f32 %v5945, %v5946
        %v5948 = vrot.slane %v5947, 2
        %v5949 = vmax.f32 %v5947, %v5948
        %v5950 = vrot.slane %v5949, 1
        %v5951 = vmax.f32 %v5949, %v5950
        %v5952 = vsel %vm5402, %v5238, -inf
        %v5953 = vsel %vm5402, %v5272, -inf
        %v5954 = vmax.f32 %v5952, %v5953
        %v5955 = vrot.slane %v5954, 4
        %v5956 = vmax.f32 %v5954, %v5955
        %v5957 = vrot.slane %v5956, 2
        %v5958 = vmax.f32 %v5956, %v5957
        %v5959 = vrot.slane %v5958, 1
        %v5960 = vmax.f32 %v5958, %v5959
        %v5961 = vsel %vm5402, %v5237, -inf
        %v5962 = vsel %vm5402, %v5271, -inf
        %v5963 = vmax.f32 %v5961, %v5962
        %v5964 = vrot.slane %v5963, 4
        %v5965 = vmax.f32 %v5963, %v5964
        %v5966 = vrot.slane %v5965, 2
        %v5967 = vmax.f32 %v5965, %v5966
        %v5968 = vrot.slane %v5967, 1
        %v5969 = vmax.f32 %v5967, %v5968
        %v5970 = vsel %vm5402, %v5239, -inf
        %v5971 = vsel %vm5402, %v5273, -inf
        %v5972 = vmax.f32 %v5970, %v5971
        %v5973 = vrot.slane %v5972, 4
        %v5974 = vmax.f32 %v5972, %v5973
        %v5975 = vrot.slane %v5974, 2
        %v5976 = vmax.f32 %v5974, %v5975
        %v5977 = vrot.slane %v5976, 1
        %v5978 = vmax.f32 %v5976, %v5977
        %vm6043 = vcmask 1041409
        %v6044 = vsel %vm6043, %v5420, %v5411
        %vm6045 = vcmask 1042434
        %v6046 = vsel %vm6045, %v5429, %v6044
        %vm6047 = vcmask 1043459
        %v6048 = vsel %vm6047, %v5438, %v6046
        %vm6049 = vcmask 1044484
        %v6050 = vsel %vm6049, %v5447, %v6048
        %vm6051 = vcmask 1045509
        %v6052 = vsel %vm6051, %v5456, %v6050
        %vm6053 = vcmask 1046534
        %v6054 = vsel %vm6053, %v5465, %v6052
        %vm6055 = vcmask 1047559
        %v6056 = vsel %vm6055, %v5474, %v6054
        %v6057 = vsel %vm6043, %v5492, %v5483
        %v6058 = vsel %vm6045, %v5501, %v6057
        %v6059 = vsel %vm6047, %v5510, %v6058
        %v6060 = vsel %vm6049, %v5519, %v6059
        %v6061 = vsel %vm6051, %v5528, %v6060
        %v6062 = vsel %vm6053, %v5537, %v6061
        %v6063 = vsel %vm6055, %v5546, %v6062
        %v6064 = vsel %vm6043, %v5564, %v5555
        %v6065 = vsel %vm6045, %v5573, %v6064
        %v6066 = vsel %vm6047, %v5582, %v6065
        %v6067 = vsel %vm6049, %v5591, %v6066
        %v6068 = vsel %vm6051, %v5600, %v6067
        %v6069 = vsel %vm6053, %v5609, %v6068
        %v6070 = vsel %vm6055, %v5618, %v6069
        %v6071 = vsel %vm6043, %v5636, %v5627
        %v6072 = vsel %vm6045, %v5645, %v6071
        %v6073 = vsel %vm6047, %v5654, %v6072
        %v6074 = vsel %vm6049, %v5663, %v6073
        %v6075 = vsel %vm6051, %v5672, %v6074
        %v6076 = vsel %vm6053, %v5681, %v6075
        %v6077 = vsel %vm6055, %v5690, %v6076
        %v6078 = vsel %vm6043, %v5708, %v5699
        %v6079 = vsel %vm6045, %v5717, %v6078
        %v6080 = vsel %vm6047, %v5726, %v6079
        %v6081 = vsel %vm6049, %v5735, %v6080
        %v6082 = vsel %vm6051, %v5744, %v6081
        %v6083 = vsel %vm6053, %v5753, %v6082
        %v6084 = vsel %vm6055, %v5762, %v6083
        %v6085 = vsel %vm6043, %v5780, %v5771
        %v6086 = vsel %vm6045, %v5789, %v6085
        %v6087 = vsel %vm6047, %v5798, %v6086
        %v6088 = vsel %vm6049, %v5807, %v6087
        %v6089 = vsel %vm6051, %v5816, %v6088
        %v6090 = vsel %vm6053, %v5825, %v6089
        %v6091 = vsel %vm6055, %v5834, %v6090
        %v6092 = vsel %vm6043, %v5852, %v5843
        %v6093 = vsel %vm6045, %v5861, %v6092
        %v6094 = vsel %vm6047, %v5870, %v6093
        %v6095 = vsel %vm6049, %v5879, %v6094
        %v6096 = vsel %vm6051, %v5888, %v6095
        %v6097 = vsel %vm6053, %v5897, %v6096
        %v6098 = vsel %vm6055, %v5906, %v6097
        %v6099 = vsel %vm6043, %v5924, %v5915
        %v6100 = vsel %vm6045, %v5933, %v6099
        %v6101 = vsel %vm6047, %v5942, %v6100
        %v6102 = vsel %vm6049, %v5951, %v6101
        %v6103 = vsel %vm6051, %v5960, %v6102
        %v6104 = vsel %vm6053, %v5969, %v6103
        %v6105 = vsel %vm6055, %v5978, %v6104
        %6114 = vst [vmem:[%s193] sm:$0xff] %v6056
        %6115 = vst [vmem:[%s193 + $0x8] sm:$0xff] %v6063
        %6116 = vst [vmem:[%s193 + $0x10] sm:$0xff] %v6070
        %6117 = vst [vmem:[%s193 + $0x18] sm:$0xff] %v6077
        %6118 = vst [vmem:[%s193 + $0x20] sm:$0xff] %v6084
        %6119 = vst [vmem:[%s193 + $0x28] sm:$0xff] %v6091
        %6120 = vst [vmem:[%s193 + $0x30] sm:$0xff] %v6098
        %6121 = vst [vmem:[%s193 + $0x38] sm:$0xff] %v6105
        %s6122 = sand.u32 %s95, 1
        %s6123 = scalar_lea.sflag [#allocation6], %s6122
        %s6124 = sand.u32 %s95, 1
        %s6125 = smul.addr %s6124, 64
        %s6126 = scalar_lea.vmem [#allocation9], %s6125
        // Predicated region
        $region41: #{tpu_custom_call.1} parent=31 // pred_check
          %p6127 = pneg %p105
        $region42: #{tpu_custom_call.1} parent=31 // pred_check_branch
          %6129 = sbr.rel (%p6127) target = $region44
        $region43: #{tpu_custom_call.1} parent=31 // pred_region
          %s6131 = ssub.s32 1024, 1024
          %6132 = vsyncadd %s6123, %s6131
          %s6133 = smul.addr %s19, 8
          %s6134 = smul.addr %s6133, 128
          %s6135 = scalar_lea.hbm %s3, %s6134
          %s6136 = sshll.u32 %s6126, 4
          %s6137 = int_to_ptr.vmem [resolvable:$true] %s6136
          %6142 = dma.vmem_to_hbm [thread:$0]  %s6137, 1024, %s6135, %s6123, 128, 128, 8
        $region44: #{tpu_custom_call.1} parent=31 // pred_fallthru
          _
      $region32: #{tpu_custom_call.1} parent=5 // pred_fallthru
        _
      %p6143 = scmp.le.s32.totalorder 2, %s14
      // Predicated region
      $region45: #{tpu_custom_call.1} parent=5 // pred_check
        %p6144 = pneg %p6143
      $region46: #{tpu_custom_call.1} parent=5 // pred_check_branch
        %6146 = sbr.rel (%p6144) target = $region48
      $region47: #{tpu_custom_call.1} parent=5 // pred_region
        %s6147 = ssub.s32 %s14, 2
        // Predicated region
        $region49: #{tpu_custom_call.1} parent=47 // pred_check
          %p6148 = pneg %p111
        $region50: #{tpu_custom_call.1} parent=47 // pred_check_branch
          %6150 = sbr.rel (%p6148) target = $region52
        $region51: #{tpu_custom_call.1} parent=47 // pred_region
          %s6151 = sand.u32 %s96, 1
          %s6152 = scalar_lea.sflag [#allocation6], %s6151
          %s6153 = sand.u32 %s96, 1
          %s6154 = smul.addr %s6153, 64
          %s6155 = scalar_lea.vmem [#allocation9], %s6154
          %6156 = dma.done %s6152, 1024
        $region52: #{tpu_custom_call.1} parent=47 // pred_fallthru
          _
      $region48: #{tpu_custom_call.1} parent=5 // pred_fallthru
        _
    $region6: #{tpu_custom_call.1} parent=1 // loop_footer
      %s18 = sadd.s32 1, %s14
    $region7: #{tpu_custom_call.1} parent=1 // loop_footer_branch
      %13 = sbr.rel target = $region3
    $region8: #{tpu_custom_call.1} parent=1 // loop_exit
      _
    %6157 = vsyncpa [#allocation5], 1
    %s6158 = scalar_lea.sflag [#allocation5], 1
    %6159 = vsyncpa %s6158, 1
    %6160 = vsyncpa [#allocation8], 1
    %6161 = vsyncpa [#allocation6], 1
    %s6162 = scalar_lea.sflag [#allocation6], 1
    %6163 = vsyncpa %s6162, 1

</llo_original>
